<compile_context>
chip_gen: v6e
topology: v6e:2x2x1
jax: 0.10.0
libtpu: 0.0.40
codegen_flags: <defaults>
</compile_context>

<pallas_src>
import functools
import math

import jax
import jax.numpy as jnp
from jax.experimental import pallas as pl
from jax.experimental.pallas import tpu as pltpu

BN_EPS = 1e-5

_CP_PARALLEL = pltpu.CompilerParams(
    dimension_semantics=("parallel",), vmem_limit_bytes=32 * 1024 * 1024)
_CP_SERIAL = pltpu.CompilerParams(
    dimension_semantics=("arbitrary",), vmem_limit_bytes=32 * 1024 * 1024)


# ----------------------------- Pallas kernels -----------------------------

def _matmul_bias_relu_kernel(x_ref, w_ref, b_ref, o_ref):
    # x: (tm, K) bf16, w: (K, N) bf16, b: (1, N) f32, o: (tm, N) bf16
    y = jnp.dot(x_ref[...], w_ref[...], preferred_element_type=jnp.float32)
    o_ref[...] = jnp.maximum(y + b_ref[...], 0.0).astype(o_ref.dtype)


def matmul_bias_relu(x, w, b):
    """relu(x @ w + b) with an M-tiled grid (BN already folded into w/b)."""
    M, K = x.shape
    N = w.shape[1]
    tm = M
    for cand in (512, 256, 128, 64, 8):
        if M % cand == 0:
            tm = cand
            break
    return pl.pallas_call(
        _matmul_bias_relu_kernel,
        out_shape=jax.ShapeDtypeStruct((M, N), jnp.bfloat16),
        grid=(M // tm,),
        in_specs=[
            pl.BlockSpec((tm, K), lambda i: (i, 0)),
            pl.BlockSpec((K, N), lambda i: (0, 0)),
            pl.BlockSpec((1, N), lambda i: (0, 0)),
        ],
        out_specs=pl.BlockSpec((tm, N), lambda i: (i, 0)),
        compiler_params=_CP_PARALLEL,
    )(x, w, b)


def _dw_accum_padded(xp_ref, w9, oh, ow):
    """Depthwise 3x3 stride-1 from a padded (B, H+2, W+2, C) ref via 9 shifted reads (f32)."""
    acc = None
    for k in range(9):
        di, dj = divmod(k, 3)
        patch = xp_ref[:, di:di + oh, dj:dj + ow, :].astype(jnp.float32)
        term = patch * w9[k]                       # w9[k]: (1, 1, 1, C)
        acc = term if acc is None else acc + term
    return acc                                     # (B, oh, ow, C) f32


def _pw_epilogue(y2d_f32, pww_ref, pwb_ref):
    """Pointwise 1x1 (MXU) + bias + ReLU.  y2d: (M, C) f32 -> (M, C2) f32."""
    y = y2d_f32.astype(pww_ref.dtype)              # bf16 for the MXU
    z = jnp.dot(y, pww_ref[...], preferred_element_type=jnp.float32)
    return jnp.maximum(z + pwb_ref[...], 0.0)


def _block_pad_kernel(xp_ref, dww_ref, dwb_ref, pww_ref, pwb_ref, o_ref, *, oh, ow):
    # Fused: depthwise(3x3, s1) + bias + ReLU + pointwise(1x1) + bias + ReLU.
    B = xp_ref.shape[0]
    C = xp_ref.shape[-1]
    acc = _dw_accum_padded(xp_ref, dww_ref[...], oh, ow)
    acc = jnp.maximum(acc + dwb_ref[...], 0.0)
    z = _pw_epilogue(acc.reshape(B * oh * ow, C), pww_ref, pwb_ref)
    o_ref[...] = z.astype(o_ref.dtype)


def _block_patch_kernel(xs_ref, dww_ref, dwb_ref, pww_ref, pwb_ref, o_ref):
    # Fused dw+pw for stride-2 blocks; xs: (9, M, C) pre-gathered strided views.
    acc = None
    for k in range(9):
        term = xs_ref[k].astype(jnp.float32) * dww_ref[k]     # (M, C) * (1, C)
        acc = term if acc is None else acc + term
    acc = jnp.maximum(acc + dwb_ref[...], 0.0)
    z = _pw_epilogue(acc, pww_ref, pwb_ref)
    o_ref[...] = z.astype(o_ref.dtype)


def _block_pad_head_kernel(xp_ref, dww_ref, dwb_ref, pww_ref, pwb_ref,
                           fcw_ref, fcb_ref, o_ref, *, oh, ow):
    # Last block fused with avgpool(1,1) + flatten + dense + softmax.
    B = xp_ref.shape[0]
    C = xp_ref.shape[-1]
    acc = _dw_accum_padded(xp_ref, dww_ref[...], oh, ow)
    acc = jnp.maximum(acc + dwb_ref[...], 0.0)
    z = _pw_epilogue(acc.reshape(B * oh * ow, C), pww_ref, pwb_ref)   # (B*oh*ow, C2) f32
    C2 = z.shape[-1]
    if oh * ow == 1:
        pooled = z                                                    # avgpool over 1x1 = identity
    else:
        pooled = jnp.mean(z.reshape(B, oh * ow, C2), axis=1)          # adaptive avg pool (1,1)
    logits = jnp.dot(pooled, fcw_ref[...], preferred_element_type=jnp.float32) + fcb_ref[...]
    m = jnp.max(logits, axis=-1, keepdims=True)                       # softmax(dim=1)
    e = jnp.exp(logits - m)
    o_ref[...] = (e / jnp.sum(e, axis=-1, keepdims=True)).astype(o_ref.dtype)


# ----------------------------- kernel wrappers -----------------------------

def fused_block_pad(xp, dw_w9, dw_b, pw_w, pw_b):
    B, HP, WP, C = xp.shape
    oh, ow = HP - 2, WP - 2
    C2 = pw_w.shape[1]
    M = B * oh * ow
    kern = functools.partial(_block_pad_kernel, oh=oh, ow=ow)
    return pl.pallas_call(
        kern,
        out_shape=jax.ShapeDtypeStruct((M, C2), jnp.bfloat16),
        grid=(1,),
        in_specs=[
            pl.BlockSpec((B, HP, WP, C), lambda i: (0, 0, 0, 0)),
            pl.BlockSpec((9, 1, 1, 1, C), lambda i: (0, 0, 0, 0, 0)),
            pl.BlockSpec((1, 1, 1, C), lambda i: (0, 0, 0, 0)),
            pl.BlockSpec((C, C2), lambda i: (0, 0)),
            pl.BlockSpec((1, C2), lambda i: (0, 0)),
        ],
        out_specs=pl.BlockSpec((M, C2), lambda i: (0, 0)),
        compiler_params=_CP_SERIAL,
    )(xp, dw_w9, dw_b, pw_w, pw_b)


def fused_block_patches(xs, dw_w, dw_b, pw_w, pw_b):
    K9, M, C = xs.shape
    C2 = pw_w.shape[1]
    return pl.pallas_call(
        _block_patch_kernel,
        out_shape=jax.ShapeDtypeStruct((M, C2), jnp.bfloat16),
        grid=(1,),
        in_specs=[
            pl.BlockSpec((K9, M, C), lambda i: (0, 0, 0)),
            pl.BlockSpec((K9, 1, C), lambda i: (0, 0, 0)),
            pl.BlockSpec((1, C), lambda i: (0, 0)),
            pl.BlockSpec((C, C2), lambda i: (0, 0)),
            pl.BlockSpec((1, C2), lambda i: (0, 0)),
        ],
        out_specs=pl.BlockSpec((M, C2), lambda i: (0, 0)),
        compiler_params=_CP_SERIAL,
    )(xs, dw_w, dw_b, pw_w, pw_b)


def fused_block_pad_head(xp, dw_w9, dw_b, pw_w, pw_b, fc_w, fc_b):
    B, HP, WP, C = xp.shape
    oh, ow = HP - 2, WP - 2
    C2 = pw_w.shape[1]
    NC = fc_w.shape[1]
    kern = functools.partial(_block_pad_head_kernel, oh=oh, ow=ow)
    return pl.pallas_call(
        kern,
        out_shape=jax.ShapeDtypeStruct((B, NC), jnp.float32),
        grid=(1,),
        in_specs=[
            pl.BlockSpec((B, HP, WP, C), lambda i: (0, 0, 0, 0)),
            pl.BlockSpec((9, 1, 1, 1, C), lambda i: (0, 0, 0, 0, 0)),
            pl.BlockSpec((1, 1, 1, C), lambda i: (0, 0, 0, 0)),
            pl.BlockSpec((C, C2), lambda i: (0, 0)),
            pl.BlockSpec((1, C2), lambda i: (0, 0)),
            pl.BlockSpec((C2, NC), lambda i: (0, 0)),
            pl.BlockSpec((1, NC), lambda i: (0, 0)),
        ],
        out_specs=pl.BlockSpec((B, NC), lambda i: (0, 0)),
        compiler_params=_CP_SERIAL,
    )(xp, dw_w9, dw_b, pw_w, pw_b, fc_w, fc_b)


# ----------------------------- plain-JAX glue -----------------------------

def _extract_patches(x, k, stride, pad):
    """x: (B, H, W, C) -> (k*k, B, OH, OW, C) shifted/strided views (zero-padded)."""
    B, H, W, C = x.shape
    xp = jnp.pad(x, ((0, 0), (pad, pad), (pad, pad), (0, 0)))
    OH = (H + 2 * pad - k) // stride + 1
    OW = (W + 2 * pad - k) // stride + 1
    pats = []
    for i in range(k):
        for j in range(k):
            pats.append(xp[:, i:i + stride * (OH - 1) + 1:stride,
                           j:j + stride * (OW - 1) + 1:stride, :])
    return jnp.stack(pats, axis=0), OH, OW


def _fold_bn(w, b, eps=BN_EPS):
    """Fold eval-mode BN (gamma=1, beta=0, mean=0, var=1) into conv weight/bias."""
    c = w.shape[0]                                  # torch layout: out-channels on axis 0
    gamma = jnp.ones((c,), jnp.float32)
    beta = jnp.zeros((c,), jnp.float32)
    mean = jnp.zeros((c,), jnp.float32)
    var = jnp.ones((c,), jnp.float32)
    scale = gamma * jax.lax.rsqrt(var + eps)
    shift = beta - mean * scale
    w_f = w.astype(jnp.float32) * scale.reshape((c,) + (1,) * (w.ndim - 1))
    b_f = b.astype(jnp.float32) * scale + shift
    return w_f, b_f


# per-block config: (depthwise stride, pointwise channel multiplier), blocks 2..14
_BLOCK_SPEC = [(1, 2), (2, 2), (1, 1), (2, 2), (1, 1), (2, 2),
               (1, 1), (1, 1), (1, 1), (1, 1), (1, 1), (2, 2), (1, 1)]


def init_params(seed=0, num_classes=2, num_filters=8):
    key = jax.random.PRNGKey(seed)
    keys = iter(jax.random.split(key, 4 * len(_BLOCK_SPEC) + 8))

    def kaiming_uniform(k, shape, fan_in):
        # matches nn.init.kaiming_uniform_(a=0): bound = sqrt(2) * sqrt(3 / fan_in)
        bound = math.sqrt(6.0 / fan_in)
        return jax.random.uniform(k, shape, jnp.float32, -bound, bound)

    nf = num_filters
    params = {
        "conv1_w": kaiming_uniform(next(keys), (nf, 3, 3, 3), 3 * 9),   # (Cout, Cin, kh, kw)
        "conv1_b": jnp.zeros((nf,), jnp.float32),
        "blocks": [],
    }
    c = nf
    for stride, mult in _BLOCK_SPEC:
        cout = c * mult
        params["blocks"].append({
            "stride": stride, "cin": c, "cout": cout,
            "dw_w": kaiming_uniform(next(keys), (c, 1, 3, 3), 9),        # groups=c depthwise
            "dw_b": jnp.zeros((c,), jnp.float32),
            "pw_w": kaiming_uniform(next(keys), (cout, c, 1, 1), c),
            "pw_b": jnp.zeros((cout,), jnp.float32),
        })
        c = cout
    params["dense_w"] = kaiming_uniform(next(keys), (num_classes, c), c)  # (out, in) torch layout
    params["dense_b"] = jnp.zeros((num_classes,), jnp.float32)
    params["final_c"] = c
    return params


def mobilenet_v1_forward(params, x_nchw):
    """x_nchw: (B, 3, H, W) -> (B, num_classes) softmax probabilities (f32)."""
    x = jnp.transpose(x_nchw, (0, 2, 3, 1)).astype(jnp.bfloat16)     # NCHW -> NHWC, bf16 storage
    B = x.shape[0]

    # conv1: 3x3 stride-2 standard conv via im2col (tiny, K=27) + M-tiled fused matmul kernel.
    w1, b1 = _fold_bn(params["conv1_w"], params["conv1_b"])
    cout, cin = w1.shape[0], w1.shape[1]
    pats, OH, OW = _extract_patches(x, 3, 2, 1)                      # (9, B, OH, OW, 3)
    cols = jnp.transpose(pats, (1, 2, 3, 0, 4)).reshape(B * OH * OW, 9 * cin)
    wmat = jnp.transpose(w1, (2, 3, 1, 0)).reshape(9 * cin, cout)    # rows ordered (kh, kw, cin)
    x = matmul_bias_relu(cols.astype(jnp.bfloat16), wmat.astype(jnp.bfloat16),
                         b1.reshape(1, cout))
    x = x.reshape(B, OH, OW, cout)

    blocks = params["blocks"]
    assert blocks[-1]["stride"] == 1  # last block is stride 1 -> fused head variant below

    def block_weights(blk):
        c, c2 = blk["cin"], blk["cout"]
        dw_w, dw_b = _fold_bn(blk["dw_w"], blk["dw_b"])
        pw_w, pw_b = _fold_bn(blk["pw_w"], blk["pw_b"])
        dw9 = jnp.transpose(dw_w.reshape(c, 9), (1, 0))              # (9, c), tap order (kh, kw)
        pw_mat = pw_w.reshape(c2, c).T.astype(jnp.bfloat16)          # (c, c2)
        return dw9, dw_b, pw_mat, pw_b.reshape(1, c2)

    # blocks 2..13: fused depthwise+pointwise kernels
    for blk in blocks[:-1]:
        c, c2, stride = blk["cin"], blk["cout"], blk["stride"]
        dw9, dw_b, pw_mat, pw_b2 = block_weights(blk)
        if stride == 1:
            xp = jnp.pad(x, ((0, 0), (1, 1), (1, 1), (0, 0)))        # halo pad, no 9x im2col
            oh, ow = x.shape[1], x.shape[2]
            y = fused_block_pad(xp, dw9.reshape(9, 1, 1, 1, c),
                                dw_b.reshape(1, 1, 1, c), pw_mat, pw_b2)
        else:
            pats, oh, ow = _extract_patches(x, 3, stride, 1)         # only the 4 tiny s2 blocks
            xs = pats.reshape(9, B * oh * ow, c)
            y = fused_block_patches(xs, dw9.reshape(9, 1, c),
                                    dw_b.reshape(1, c), pw_mat, pw_b2)
        x = y.reshape(B, oh, ow, c2)

    # block 14 fused with avgpool + flatten + dense + softmax
    blk = blocks[-1]
    c, c2 = blk["cin"], blk["cout"]
    dw9, dw_b, pw_mat, pw_b2 = block_weights(blk)
    xp = jnp.pad(x, ((0, 0), (1, 1), (1, 1), (0, 0)))
    fc_w = params["dense_w"].T.astype(jnp.float32)                   # (c2, num_classes)
    fc_b = params["dense_b"].reshape(1, -1).astype(jnp.float32)
    out = fused_block_pad_head(xp, dw9.reshape(9, 1, 1, 1, c),
                               dw_b.reshape(1, 1, 1, c), pw_mat, pw_b2, fc_w, fc_b)
    return out


if __name__ == "__main__":
    key = jax.random.PRNGKey(0)
    # NCHW, matching the PyTorch module (3 input channels required by conv1)
    x = jax.random.normal(key, (2, 3, 32, 32), dtype=jnp.float32)
    params = init_params(seed=0, num_classes=2, num_filters=8)

    fwd = jax.jit(lambda inp: mobilenet_v1_forward(params, inp))
    out = jax.block_until_ready(fwd(x))

    assert out.shape == (2, 2), out.shape
    assert bool(jnp.all(jnp.isfinite(out)))
    # softmax rows should sum to ~1
    assert bool(jnp.allclose(jnp.sum(out, axis=1), 1.0, atol=1e-4))
    print("KERNEL_OK")
</pallas_src>

<mosaic_0001>
module attributes {stable_mosaic.version = 11 : i64} {
  func.func @_matmul_bias_relu_kernel(%arg0: i32, %arg1: memref<512x27xbf16, #tpu.memory_space<vmem>>, %arg2: memref<27x8xbf16, #tpu.memory_space<vmem>>, %arg3: memref<1x8xf32, #tpu.memory_space<vmem>>, %arg4: memref<512x8xbf16, #tpu.memory_space<vmem>>) attributes {dimension_semantics = [#tpu.dimension_semantics<parallel>], iteration_bounds = array<i64: 1>, scalar_prefetch = 0 : i64, scratch_operands = 0 : i64, tpu.core_type = #tpu.core_type<tc>, window_params = [{transform_indices = @transform_0, window_bounds = array<i64: 512, 27>}, {pipeline_mode = #tpu.pipeline_mode<synchronous>, transform_indices = @transform_1, window_bounds = array<i64: 27, 8>}, {pipeline_mode = #tpu.pipeline_mode<synchronous>, transform_indices = @transform_2, window_bounds = array<i64: 1, 8>}, {transform_indices = @transform_3, window_bounds = array<i64: 512, 8>}]} {
    %c0 = arith.constant 0 : index
    %c0_0 = arith.constant 0 : index
    %0 = vector.load %arg1[%c0, %c0_0] : memref<512x27xbf16, #tpu.memory_space<vmem>>, vector<512x27xbf16>
    %c0_1 = arith.constant 0 : index
    %c0_2 = arith.constant 0 : index
    %1 = vector.load %arg2[%c0_1, %c0_2] : memref<27x8xbf16, #tpu.memory_space<vmem>>, vector<27x8xbf16>
    %cst = arith.constant dense<0.000000e+00> : vector<512x8xf32>
    %2 = tpu.matmul %0, %1, %cst {dimension_numbers = #tpu.dot_dimension_numbers<[1], [0], [0], [1], [0, 0, 1, 1], [], []>} : vector<512x27xbf16>, vector<27x8xbf16>, vector<512x8xf32> -> vector<512x8xf32>
    %c0_3 = arith.constant 0 : index
    %c0_4 = arith.constant 0 : index
    %3 = vector.load %arg3[%c0_3, %c0_4] : memref<1x8xf32, #tpu.memory_space<vmem>>, vector<1x8xf32>
    %4 = vector.broadcast %3 : vector<1x8xf32> to vector<512x8xf32>
    %5 = arith.addf %2, %4 : vector<512x8xf32>
    %cst_5 = arith.constant 0.000000e+00 : f32
    %6 = vector.broadcast %cst_5 : f32 to vector<512x8xf32>
    %7 = arith.maximumf %5, %6 : vector<512x8xf32>
    %8 = arith.truncf %7 : vector<512x8xf32> to vector<512x8xbf16>
    %c0_6 = arith.constant 0 : index
    %c0_7 = arith.constant 0 : index
    %9 = vector.load %arg4[%c0_6, %c0_7] : memref<512x8xbf16, #tpu.memory_space<vmem>>, vector<512x8xbf16>
    tpu.vector_store %arg4[%c0_6, %c0_7], %8 {strides = array<i32>} : memref<512x8xbf16, #tpu.memory_space<vmem>>, vector<512x8xbf16>,
    return
  }
  func.func @transform_0(%arg0: i32) -> (i32, i32) {
    %c0_i32 = arith.constant 0 : i32
    %c0_i32_0 = arith.constant 0 : i32
    return %arg0, %c0_i32 : i32, i32
  }
  func.func @transform_1(%arg0: i32) -> (i32, i32) {
    %c0_i32 = arith.constant 0 : i32
    %c0_i32_0 = arith.constant 0 : i32
    %c0_i32_1 = arith.constant 0 : i32
    return %c0_i32, %c0_i32_0 : i32, i32
  }
  func.func @transform_2(%arg0: i32) -> (i32, i32) {
    %c0_i32 = arith.constant 0 : i32
    %c0_i32_0 = arith.constant 0 : i32
    %c0_i32_1 = arith.constant 0 : i32
    return %c0_i32, %c0_i32_0 : i32, i32
  }
  func.func @transform_3(%arg0: i32) -> (i32, i32) {
    %c0_i32 = arith.constant 0 : i32
    %c0_i32_0 = arith.constant 0 : i32
    return %arg0, %c0_i32 : i32, i32
  }
}

module attributes {stable_mosaic.version = 11 : i64} {
  func.func @_block_pad_kernel(%arg0: i32, %arg1: memref<2x18x18x8xbf16, #tpu.memory_space<vmem>>, %arg2: memref<9x1x1x1x8xf32, #tpu.memory_space<vmem>>, %arg3: memref<1x1x1x8xf32, #tpu.memory_space<vmem>>, %arg4: memref<8x16xbf16, #tpu.memory_space<vmem>>, %arg5: memref<1x16xf32, #tpu.memory_space<vmem>>, %arg6: memref<512x16xbf16, #tpu.memory_space<vmem>>) attributes {dimension_semantics = [#tpu.dimension_semantics<arbitrary>], iteration_bounds = array<i64: 1>, scalar_prefetch = 0 : i64, scratch_operands = 0 : i64, tpu.core_type = #tpu.core_type<tc>, window_params = [{pipeline_mode = #tpu.pipeline_mode<synchronous>, transform_indices = @transform_0, window_bounds = array<i64: 2, 18, 18, 8>}, {pipeline_mode = #tpu.pipeline_mode<synchronous>, transform_indices = @transform_1, window_bounds = array<i64: 9, 1, 1, 1, 8>}, {pipeline_mode = #tpu.pipeline_mode<synchronous>, transform_indices = @transform_2, window_bounds = array<i64: 1, 1, 1, 8>}, {pipeline_mode = #tpu.pipeline_mode<synchronous>, transform_indices = @transform_3, window_bounds = array<i64: 8, 16>}, {pipeline_mode = #tpu.pipeline_mode<synchronous>, transform_indices = @transform_4, window_bounds = array<i64: 1, 16>}, {pipeline_mode = #tpu.pipeline_mode<synchronous>, transform_indices = @transform_5, window_bounds = array<i64: 512, 16>}]} {
    %c0 = arith.constant 0 : index
    %c0_0 = arith.constant 0 : index
    %c0_1 = arith.constant 0 : index
    %c0_2 = arith.constant 0 : index
    %c0_3 = arith.constant 0 : index
    %0 = vector.load %arg2[%c0, %c0_0, %c0_1, %c0_2, %c0_3] : memref<9x1x1x1x8xf32, #tpu.memory_space<vmem>>, vector<9x1x1x1x8xf32>
    %c0_4 = arith.constant 0 : index
    %c0_5 = arith.constant 0 : index
    %c0_6 = arith.constant 0 : index
    %c0_7 = arith.constant 0 : index
    %1 = vector.load %arg1[%c0_4, %c0_5, %c0_6, %c0_7] : memref<2x18x18x8xbf16, #tpu.memory_space<vmem>>, vector<2x16x16x8xbf16>
    %2 = arith.extf %1 : vector<2x16x16x8xbf16> to vector<2x16x16x8xf32>
    %3 = vector.extract_strided_slice %0 {offsets = [0, 0, 0, 0, 0], sizes = [1, 1, 1, 1, 8], strides = [1, 1, 1, 1, 1]} : vector<9x1x1x1x8xf32> to vector<1x1x1x1x8xf32>
    %4 = vector.shape_cast %3 : vector<1x1x1x1x8xf32> to vector<1x1x1x8xf32>
    %5 = vector.broadcast %4 : vector<1x1x1x8xf32> to vector<2x16x16x8xf32>
    %6 = arith.mulf %2, %5 : vector<2x16x16x8xf32>
    %c0_8 = arith.constant 0 : index
    %c0_9 = arith.constant 0 : index
    %c1 = arith.constant 1 : index
    %c0_10 = arith.constant 0 : index
    %7 = vector.load %arg1[%c0_8, %c0_9, %c1, %c0_10] : memref<2x18x18x8xbf16, #tpu.memory_space<vmem>>, vector<2x16x16x8xbf16>
    %8 = arith.extf %7 : vector<2x16x16x8xbf16> to vector<2x16x16x8xf32>
    %9 = vector.extract_strided_slice %0 {offsets = [1, 0, 0, 0, 0], sizes = [1, 1, 1, 1, 8], strides = [1, 1, 1, 1, 1]} : vector<9x1x1x1x8xf32> to vector<1x1x1x1x8xf32>
    %10 = vector.shape_cast %9 : vector<1x1x1x1x8xf32> to vector<1x1x1x8xf32>
    %11 = vector.broadcast %10 : vector<1x1x1x8xf32> to vector<2x16x16x8xf32>
    %12 = arith.mulf %8, %11 : vector<2x16x16x8xf32>
    %13 = arith.addf %6, %12 : vector<2x16x16x8xf32>
    %c0_11 = arith.constant 0 : index
    %c0_12 = arith.constant 0 : index
    %c2 = arith.constant 2 : index
    %c0_13 = arith.constant 0 : index
    %14 = vector.load %arg1[%c0_11, %c0_12, %c2, %c0_13] : memref<2x18x18x8xbf16, #tpu.memory_space<vmem>>, vector<2x16x16x8xbf16>
    %15 = arith.extf %14 : vector<2x16x16x8xbf16> to vector<2x16x16x8xf32>
    %16 = vector.extract_strided_slice %0 {offsets = [2, 0, 0, 0, 0], sizes = [1, 1, 1, 1, 8], strides = [1, 1, 1, 1, 1]} : vector<9x1x1x1x8xf32> to vector<1x1x1x1x8xf32>
    %17 = vector.shape_cast %16 : vector<1x1x1x1x8xf32> to vector<1x1x1x8xf32>
    %18 = vector.broadcast %17 : vector<1x1x1x8xf32> to vector<2x16x16x8xf32>
    %19 = arith.mulf %15, %18 : vector<2x16x16x8xf32>
    %20 = arith.addf %13, %19 : vector<2x16x16x8xf32>
    %c0_14 = arith.constant 0 : index
    %c1_15 = arith.constant 1 : index
    %c0_16 = arith.constant 0 : index
    %c0_17 = arith.constant 0 : index
    %21 = vector.load %arg1[%c0_14, %c1_15, %c0_16, %c0_17] : memref<2x18x18x8xbf16, #tpu.memory_space<vmem>>, vector<2x16x16x8xbf16>
    %22 = arith.extf %21 : vector<2x16x16x8xbf16> to vector<2x16x16x8xf32>
    %23 = vector.extract_strided_slice %0 {offsets = [3, 0, 0, 0, 0], sizes = [1, 1, 1, 1, 8], strides = [1, 1, 1, 1, 1]} : vector<9x1x1x1x8xf32> to vector<1x1x1x1x8xf32>
    %24 = vector.shape_cast %23 : vector<1x1x1x1x8xf32> to vector<1x1x1x8xf32>
    %25 = vector.broadcast %24 : vector<1x1x1x8xf32> to vector<2x16x16x8xf32>
    %26 = arith.mulf %22, %25 : vector<2x16x16x8xf32>
    %27 = arith.addf %20, %26 : vector<2x16x16x8xf32>
    %c0_18 = arith.constant 0 : index
    %c1_19 = arith.constant 1 : index
    %c1_20 = arith.constant 1 : index
    %c0_21 = arith.constant 0 : index
    %28 = vector.load %arg1[%c0_18, %c1_19, %c1_20, %c0_21] : memref<2x18x18x8xbf16, #tpu.memory_space<vmem>>, vector<2x16x16x8xbf16>
    %29 = arith.extf %28 : vector<2x16x16x8xbf16> to vector<2x16x16x8xf32>
    %30 = vector.extract_strided_slice %0 {offsets = [4, 0, 0, 0, 0], sizes = [1, 1, 1, 1, 8], strides = [1, 1, 1, 1, 1]} : vector<9x1x1x1x8xf32> to vector<1x1x1x1x8xf32>
    %31 = vector.shape_cast %30 : vector<1x1x1x1x8xf32> to vector<1x1x1x8xf32>
    %32 = vector.broadcast %31 : vector<1x1x1x8xf32> to vector<2x16x16x8xf32>
    %33 = arith.mulf %29, %32 : vector<2x16x16x8xf32>
    %34 = arith.addf %27, %33 : vector<2x16x16x8xf32>
    %c0_22 = arith.constant 0 : index
    %c1_23 = arith.constant 1 : index
    %c2_24 = arith.constant 2 : index
    %c0_25 = arith.constant 0 : index
    %35 = vector.load %arg1[%c0_22, %c1_23, %c2_24, %c0_25] : memref<2x18x18x8xbf16, #tpu.memory_space<vmem>>, vector<2x16x16x8xbf16>
    %36 = arith.extf %35 : vector<2x16x16x8xbf16> to vector<2x16x16x8xf32>
    %37 = vector.extract_strided_slice %0 {offsets = [5, 0, 0, 0, 0], sizes = [1, 1, 1, 1, 8], strides = [1, 1, 1, 1, 1]} : vector<9x1x1x1x8xf32> to vector<1x1x1x1x8xf32>
    %38 = vector.shape_cast %37 : vector<1x1x1x1x8xf32> to vector<1x1x1x8xf32>
    %39 = vector.broadcast %38 : vector<1x1x1x8xf32> to vector<2x16x16x8xf32>
    %40 = arith.mulf %36, %39 : vector<2x16x16x8xf32>
    %41 = arith.addf %34, %40 : vector<2x16x16x8xf32>
    %c0_26 = arith.constant 0 : index
    %c2_27 = arith.constant 2 : index
    %c0_28 = arith.constant 0 : index
    %c0_29 = arith.constant 0 : index
    %42 = vector.load %arg1[%c0_26, %c2_27, %c0_28, %c0_29] : memref<2x18x18x8xbf16, #tpu.memory_space<vmem>>, vector<2x16x16x8xbf16>
    %43 = arith.extf %42 : vector<2x16x16x8xbf16> to vector<2x16x16x8xf32>
    %44 = vector.extract_strided_slice %0 {offsets = [6, 0, 0, 0, 0], sizes = [1, 1, 1, 1, 8], strides = [1, 1, 1, 1, 1]} : vector<9x1x1x1x8xf32> to vector<1x1x1x1x8xf32>
    %45 = vector.shape_cast %44 : vector<1x1x1x1x8xf32> to vector<1x1x1x8xf32>
    %46 = vector.broadcast %45 : vector<1x1x1x8xf32> to vector<2x16x16x8xf32>
    %47 = arith.mulf %43, %46 : vector<2x16x16x8xf32>
    %48 = arith.addf %41, %47 : vector<2x16x16x8xf32>
    %c0_30 = arith.constant 0 : index
    %c2_31 = arith.constant 2 : index
    %c1_32 = arith.constant 1 : index
    %c0_33 = arith.constant 0 : index
    %49 = vector.load %arg1[%c0_30, %c2_31, %c1_32, %c0_33] : memref<2x18x18x8xbf16, #tpu.memory_space<vmem>>, vector<2x16x16x8xbf16>
    %50 = arith.extf %49 : vector<2x16x16x8xbf16> to vector<2x16x16x8xf32>
    %51 = vector.extract_strided_slice %0 {offsets = [7, 0, 0, 0, 0], sizes = [1, 1, 1, 1, 8], strides = [1, 1, 1, 1, 1]} : vector<9x1x1x1x8xf32> to vector<1x1x1x1x8xf32>
    %52 = vector.shape_cast %51 : vector<1x1x1x1x8xf32> to vector<1x1x1x8xf32>
    %53 = vector.broadcast %52 : vector<1x1x1x8xf32> to vector<2x16x16x8xf32>
    %54 = arith.mulf %50, %53 : vector<2x16x16x8xf32>
    %55 = arith.addf %48, %54 : vector<2x16x16x8xf32>
    %c0_34 = arith.constant 0 : index
    %c2_35 = arith.constant 2 : index
    %c2_36 = arith.constant 2 : index
    %c0_37 = arith.constant 0 : index
    %56 = vector.load %arg1[%c0_34, %c2_35, %c2_36, %c0_37] : memref<2x18x18x8xbf16, #tpu.memory_space<vmem>>, vector<2x16x16x8xbf16>
    %57 = arith.extf %56 : vector<2x16x16x8xbf16> to vector<2x16x16x8xf32>
    %58 = vector.extract_strided_slice %0 {offsets = [8, 0, 0, 0, 0], sizes = [1, 1, 1, 1, 8], strides = [1, 1, 1, 1, 1]} : vector<9x1x1x1x8xf32> to vector<1x1x1x1x8xf32>
    %59 = vector.shape_cast %58 : vector<1x1x1x1x8xf32> to vector<1x1x1x8xf32>
    %60 = vector.broadcast %59 : vector<1x1x1x8xf32> to vector<2x16x16x8xf32>
    %61 = arith.mulf %57, %60 : vector<2x16x16x8xf32>
    %62 = arith.addf %55, %61 : vector<2x16x16x8xf32>
    %c0_38 = arith.constant 0 : index
    %c0_39 = arith.constant 0 : index
    %c0_40 = arith.constant 0 : index
    %c0_41 = arith.constant 0 : index
    %63 = vector.load %arg3[%c0_38, %c0_39, %c0_40, %c0_41] : memref<1x1x1x8xf32, #tpu.memory_space<vmem>>, vector<1x1x1x8xf32>
    %64 = vector.broadcast %63 : vector<1x1x1x8xf32> to vector<2x16x16x8xf32>
    %65 = arith.addf %62, %64 : vector<2x16x16x8xf32>
    %cst = arith.constant 0.000000e+00 : f32
    %66 = vector.broadcast %cst : f32 to vector<2x16x16x8xf32>
    %67 = arith.maximumf %65, %66 : vector<2x16x16x8xf32>
    %68 = vector.shape_cast %67 : vector<2x16x16x8xf32> to vector<512x8xf32>
    %69 = arith.truncf %68 : vector<512x8xf32> to vector<512x8xbf16>
    %c0_42 = arith.constant 0 : index
    %c0_43 = arith.constant 0 : index
    %70 = vector.load %arg4[%c0_42, %c0_43] : memref<8x16xbf16, #tpu.memory_space<vmem>>, vector<8x16xbf16>
    %cst_44 = arith.constant dense<0.000000e+00> : vector<512x16xf32>
    %71 = tpu.matmul %69, %70, %cst_44 {dimension_numbers = #tpu.dot_dimension_numbers<[1], [0], [0], [1], [0, 0, 1, 1], [], []>} : vector<512x8xbf16>, vector<8x16xbf16>, vector<512x16xf32> -> vector<512x16xf32>
    %c0_45 = arith.constant 0 : index
    %c0_46 = arith.constant 0 : index
    %72 = vector.load %arg5[%c0_45, %c0_46] : memref<1x16xf32, #tpu.memory_space<vmem>>, vector<1x16xf32>
    %73 = vector.broadcast %72 : vector<1x16xf32> to vector<512x16xf32>
    %74 = arith.addf %71, %73 : vector<512x16xf32>
    %cst_47 = arith.constant 0.000000e+00 : f32
    %75 = vector.broadcast %cst_47 : f32 to vector<512x16xf32>
    %76 = arith.maximumf %74, %75 : vector<512x16xf32>
    %77 = arith.truncf %76 : vector<512x16xf32> to vector<512x16xbf16>
    %c0_48 = arith.constant 0 : index
    %c0_49 = arith.constant 0 : index
    %78 = vector.load %arg6[%c0_48, %c0_49] : memref<512x16xbf16, #tpu.memory_space<vmem>>, vector<512x16xbf16>
    tpu.vector_store %arg6[%c0_48, %c0_49], %77 {strides = array<i32>} : memref<512x16xbf16, #tpu.memory_space<vmem>>, vector<512x16xbf16>,
    return
  }
  func.func @transform_0(%arg0: i32) -> (i32, i32, i32, i32) {
    %c0_i32 = arith.constant 0 : i32
    %c0_i32_0 = arith.constant 0 : i32
    %c0_i32_1 = arith.constant 0 : i32
    %c0_i32_2 = arith.constant 0 : i32
    %c0_i32_3 = arith.constant 0 : i32
    return %c0_i32, %c0_i32_0, %c0_i32_1, %c0_i32_2 : i32, i32, i32, i32
  }
  func.func @transform_1(%arg0: i32) -> (i32, i32, i32, i32, i32) {
    %c0_i32 = arith.constant 0 : i32
    %c0_i32_0 = arith.constant 0 : i32
    %c0_i32_1 = arith.constant 0 : i32
    %c0_i32_2 = arith.constant 0 : i32
    %c0_i32_3 = arith.constant 0 : i32
    %c0_i32_4 = arith.constant 0 : i32
    return %c0_i32, %c0_i32_0, %c0_i32_1, %c0_i32_2, %c0_i32_3 : i32, i32, i32, i32, i32
  }
  func.func @transform_2(%arg0: i32) -> (i32, i32, i32, i32) {
    %c0_i32 = arith.constant 0 : i32
    %c0_i32_0 = arith.constant 0 : i32
    %c0_i32_1 = arith.constant 0 : i32
    %c0_i32_2 = arith.constant 0 : i32
    %c0_i32_3 = arith.constant 0 : i32
    return %c0_i32, %c0_i32_0, %c0_i32_1, %c0_i32_2 : i32, i32, i32, i32
  }
  func.func @transform_3(%arg0: i32) -> (i32, i32) {
    %c0_i32 = arith.constant 0 : i32
    %c0_i32_0 = arith.constant 0 : i32
    %c0_i32_1 = arith.constant 0 : i32
    return %c0_i32, %c0_i32_0 : i32, i32
  }
  func.func @transform_4(%arg0: i32) -> (i32, i32) {
    %c0_i32 = arith.constant 0 : i32
    %c0_i32_0 = arith.constant 0 : i32
    %c0_i32_1 = arith.constant 0 : i32
    return %c0_i32, %c0_i32_0 : i32, i32
  }
  func.func @transform_5(%arg0: i32) -> (i32, i32) {
    %c0_i32 = arith.constant 0 : i32
    %c0_i32_0 = arith.constant 0 : i32
    %c0_i32_1 = arith.constant 0 : i32
    return %c0_i32, %c0_i32_0 : i32, i32
  }
}

module attributes {stable_mosaic.version = 11 : i64} {
  func.func @_block_patch_kernel(%arg0: i32, %arg1: memref<9x128x16xbf16, #tpu.memory_space<vmem>>, %arg2: memref<9x1x16xf32, #tpu.memory_space<vmem>>, %arg3: memref<1x16xf32, #tpu.memory_space<vmem>>, %arg4: memref<16x32xbf16, #tpu.memory_space<vmem>>, %arg5: memref<1x32xf32, #tpu.memory_space<vmem>>, %arg6: memref<128x32xbf16, #tpu.memory_space<vmem>>) attributes {dimension_semantics = [#tpu.dimension_semantics<arbitrary>], iteration_bounds = array<i64: 1>, scalar_prefetch = 0 : i64, scratch_operands = 0 : i64, tpu.core_type = #tpu.core_type<tc>, window_params = [{pipeline_mode = #tpu.pipeline_mode<synchronous>, transform_indices = @transform_0, window_bounds = array<i64: 9, 128, 16>}, {pipeline_mode = #tpu.pipeline_mode<synchronous>, transform_indices = @transform_1, window_bounds = array<i64: 9, 1, 16>}, {pipeline_mode = #tpu.pipeline_mode<synchronous>, transform_indices = @transform_2, window_bounds = array<i64: 1, 16>}, {pipeline_mode = #tpu.pipeline_mode<synchronous>, transform_indices = @transform_3, window_bounds = array<i64: 16, 32>}, {pipeline_mode = #tpu.pipeline_mode<synchronous>, transform_indices = @transform_4, window_bounds = array<i64: 1, 32>}, {pipeline_mode = #tpu.pipeline_mode<synchronous>, transform_indices = @transform_5, window_bounds = array<i64: 128, 32>}]} {
    %c0 = arith.constant 0 : index
    %c0_0 = arith.constant 0 : index
    %c0_1 = arith.constant 0 : index
    %0 = vector.load %arg1[%c0, %c0_0, %c0_1] : memref<9x128x16xbf16, #tpu.memory_space<vmem>>, vector<1x128x16xbf16>
    %1 = vector.shape_cast %0 : vector<1x128x16xbf16> to vector<128x16xbf16>
    %2 = arith.extf %1 : vector<128x16xbf16> to vector<128x16xf32>
    %c0_2 = arith.constant 0 : index
    %c0_3 = arith.constant 0 : index
    %c0_4 = arith.constant 0 : index
    %3 = vector.load %arg2[%c0_2, %c0_3, %c0_4] : memref<9x1x16xf32, #tpu.memory_space<vmem>>, vector<1x1x16xf32>
    %4 = vector.shape_cast %3 : vector<1x1x16xf32> to vector<1x16xf32>
    %5 = vector.broadcast %4 : vector<1x16xf32> to vector<128x16xf32>
    %6 = arith.mulf %2, %5 : vector<128x16xf32>
    %c1 = arith.constant 1 : index
    %c0_5 = arith.constant 0 : index
    %c0_6 = arith.constant 0 : index
    %7 = vector.load %arg1[%c1, %c0_5, %c0_6] : memref<9x128x16xbf16, #tpu.memory_space<vmem>>, vector<1x128x16xbf16>
    %8 = vector.shape_cast %7 : vector<1x128x16xbf16> to vector<128x16xbf16>
    %9 = arith.extf %8 : vector<128x16xbf16> to vector<128x16xf32>
    %c1_7 = arith.constant 1 : index
    %c0_8 = arith.constant 0 : index
    %c0_9 = arith.constant 0 : index
    %10 = vector.load %arg2[%c1_7, %c0_8, %c0_9] : memref<9x1x16xf32, #tpu.memory_space<vmem>>, vector<1x1x16xf32>
    %11 = vector.shape_cast %10 : vector<1x1x16xf32> to vector<1x16xf32>
    %12 = vector.broadcast %11 : vector<1x16xf32> to vector<128x16xf32>
    %13 = arith.mulf %9, %12 : vector<128x16xf32>
    %14 = arith.addf %6, %13 : vector<128x16xf32>
    %c2 = arith.constant 2 : index
    %c0_10 = arith.constant 0 : index
    %c0_11 = arith.constant 0 : index
    %15 = vector.load %arg1[%c2, %c0_10, %c0_11] : memref<9x128x16xbf16, #tpu.memory_space<vmem>>, vector<1x128x16xbf16>
    %16 = vector.shape_cast %15 : vector<1x128x16xbf16> to vector<128x16xbf16>
    %17 = arith.extf %16 : vector<128x16xbf16> to vector<128x16xf32>
    %c2_12 = arith.constant 2 : index
    %c0_13 = arith.constant 0 : index
    %c0_14 = arith.constant 0 : index
    %18 = vector.load %arg2[%c2_12, %c0_13, %c0_14] : memref<9x1x16xf32, #tpu.memory_space<vmem>>, vector<1x1x16xf32>
    %19 = vector.shape_cast %18 : vector<1x1x16xf32> to vector<1x16xf32>
    %20 = vector.broadcast %19 : vector<1x16xf32> to vector<128x16xf32>
    %21 = arith.mulf %17, %20 : vector<128x16xf32>
    %22 = arith.addf %14, %21 : vector<128x16xf32>
    %c3 = arith.constant 3 : index
    %c0_15 = arith.constant 0 : index
    %c0_16 = arith.constant 0 : index
    %23 = vector.load %arg1[%c3, %c0_15, %c0_16] : memref<9x128x16xbf16, #tpu.memory_space<vmem>>, vector<1x128x16xbf16>
    %24 = vector.shape_cast %23 : vector<1x128x16xbf16> to vector<128x16xbf16>
    %25 = arith.extf %24 : vector<128x16xbf16> to vector<128x16xf32>
    %c3_17 = arith.constant 3 : index
    %c0_18 = arith.constant 0 : index
    %c0_19 = arith.constant 0 : index
    %26 = vector.load %arg2[%c3_17, %c0_18, %c0_19] : memref<9x1x16xf32, #tpu.memory_space<vmem>>, vector<1x1x16xf32>
    %27 = vector.shape_cast %26 : vector<1x1x16xf32> to vector<1x16xf32>
    %28 = vector.broadcast %27 : vector<1x16xf32> to vector<128x16xf32>
    %29 = arith.mulf %25, %28 : vector<128x16xf32>
    %30 = arith.addf %22, %29 : vector<128x16xf32>
    %c4 = arith.constant 4 : index
    %c0_20 = arith.constant 0 : index
    %c0_21 = arith.constant 0 : index
    %31 = vector.load %arg1[%c4, %c0_20, %c0_21] : memref<9x128x16xbf16, #tpu.memory_space<vmem>>, vector<1x128x16xbf16>
    %32 = vector.shape_cast %31 : vector<1x128x16xbf16> to vector<128x16xbf16>
    %33 = arith.extf %32 : vector<128x16xbf16> to vector<128x16xf32>
    %c4_22 = arith.constant 4 : index
    %c0_23 = arith.constant 0 : index
    %c0_24 = arith.constant 0 : index
    %34 = vector.load %arg2[%c4_22, %c0_23, %c0_24] : memref<9x1x16xf32, #tpu.memory_space<vmem>>, vector<1x1x16xf32>
    %35 = vector.shape_cast %34 : vector<1x1x16xf32> to vector<1x16xf32>
    %36 = vector.broadcast %35 : vector<1x16xf32> to vector<128x16xf32>
    %37 = arith.mulf %33, %36 : vector<128x16xf32>
    %38 = arith.addf %30, %37 : vector<128x16xf32>
    %c5 = arith.constant 5 : index
    %c0_25 = arith.constant 0 : index
    %c0_26 = arith.constant 0 : index
    %39 = vector.load %arg1[%c5, %c0_25, %c0_26] : memref<9x128x16xbf16, #tpu.memory_space<vmem>>, vector<1x128x16xbf16>
    %40 = vector.shape_cast %39 : vector<1x128x16xbf16> to vector<128x16xbf16>
    %41 = arith.extf %40 : vector<128x16xbf16> to vector<128x16xf32>
    %c5_27 = arith.constant 5 : index
    %c0_28 = arith.constant 0 : index
    %c0_29 = arith.constant 0 : index
    %42 = vector.load %arg2[%c5_27, %c0_28, %c0_29] : memref<9x1x16xf32, #tpu.memory_space<vmem>>, vector<1x1x16xf32>
    %43 = vector.shape_cast %42 : vector<1x1x16xf32> to vector<1x16xf32>
    %44 = vector.broadcast %43 : vector<1x16xf32> to vector<128x16xf32>
    %45 = arith.mulf %41, %44 : vector<128x16xf32>
    %46 = arith.addf %38, %45 : vector<128x16xf32>
    %c6 = arith.constant 6 : index
    %c0_30 = arith.constant 0 : index
    %c0_31 = arith.constant 0 : index
    %47 = vector.load %arg1[%c6, %c0_30, %c0_31] : memref<9x128x16xbf16, #tpu.memory_space<vmem>>, vector<1x128x16xbf16>
    %48 = vector.shape_cast %47 : vector<1x128x16xbf16> to vector<128x16xbf16>
    %49 = arith.extf %48 : vector<128x16xbf16> to vector<128x16xf32>
    %c6_32 = arith.constant 6 : index
    %c0_33 = arith.constant 0 : index
    %c0_34 = arith.constant 0 : index
    %50 = vector.load %arg2[%c6_32, %c0_33, %c0_34] : memref<9x1x16xf32, #tpu.memory_space<vmem>>, vector<1x1x16xf32>
    %51 = vector.shape_cast %50 : vector<1x1x16xf32> to vector<1x16xf32>
    %52 = vector.broadcast %51 : vector<1x16xf32> to vector<128x16xf32>
    %53 = arith.mulf %49, %52 : vector<128x16xf32>
    %54 = arith.addf %46, %53 : vector<128x16xf32>
    %c7 = arith.constant 7 : index
    %c0_35 = arith.constant 0 : index
    %c0_36 = arith.constant 0 : index
    %55 = vector.load %arg1[%c7, %c0_35, %c0_36] : memref<9x128x16xbf16, #tpu.memory_space<vmem>>, vector<1x128x16xbf16>
    %56 = vector.shape_cast %55 : vector<1x128x16xbf16> to vector<128x16xbf16>
    %57 = arith.extf %56 : vector<128x16xbf16> to vector<128x16xf32>
    %c7_37 = arith.constant 7 : index
    %c0_38 = arith.constant 0 : index
    %c0_39 = arith.constant 0 : index
    %58 = vector.load %arg2[%c7_37, %c0_38, %c0_39] : memref<9x1x16xf32, #tpu.memory_space<vmem>>, vector<1x1x16xf32>
    %59 = vector.shape_cast %58 : vector<1x1x16xf32> to vector<1x16xf32>
    %60 = vector.broadcast %59 : vector<1x16xf32> to vector<128x16xf32>
    %61 = arith.mulf %57, %60 : vector<128x16xf32>
    %62 = arith.addf %54, %61 : vector<128x16xf32>
    %c8 = arith.constant 8 : index
    %c0_40 = arith.constant 0 : index
    %c0_41 = arith.constant 0 : index
    %63 = vector.load %arg1[%c8, %c0_40, %c0_41] : memref<9x128x16xbf16, #tpu.memory_space<vmem>>, vector<1x128x16xbf16>
    %64 = vector.shape_cast %63 : vector<1x128x16xbf16> to vector<128x16xbf16>
    %65 = arith.extf %64 : vector<128x16xbf16> to vector<128x16xf32>
    %c8_42 = arith.constant 8 : index
    %c0_43 = arith.constant 0 : index
    %c0_44 = arith.constant 0 : index
    %66 = vector.load %arg2[%c8_42, %c0_43, %c0_44] : memref<9x1x16xf32, #tpu.memory_space<vmem>>, vector<1x1x16xf32>
    %67 = vector.shape_cast %66 : vector<1x1x16xf32> to vector<1x16xf32>
    %68 = vector.broadcast %67 : vector<1x16xf32> to vector<128x16xf32>
    %69 = arith.mulf %65, %68 : vector<128x16xf32>
    %70 = arith.addf %62, %69 : vector<128x16xf32>
    %c0_45 = arith.constant 0 : index
    %c0_46 = arith.constant 0 : index
    %71 = vector.load %arg3[%c0_45, %c0_46] : memref<1x16xf32, #tpu.memory_space<vmem>>, vector<1x16xf32>
    %72 = vector.broadcast %71 : vector<1x16xf32> to vector<128x16xf32>
    %73 = arith.addf %70, %72 : vector<128x16xf32>
    %cst = arith.constant 0.000000e+00 : f32
    %74 = vector.broadcast %cst : f32 to vector<128x16xf32>
    %75 = arith.maximumf %73, %74 : vector<128x16xf32>
    %76 = arith.truncf %75 : vector<128x16xf32> to vector<128x16xbf16>
    %c0_47 = arith.constant 0 : index
    %c0_48 = arith.constant 0 : index
    %77 = vector.load %arg4[%c0_47, %c0_48] : memref<16x32xbf16, #tpu.memory_space<vmem>>, vector<16x32xbf16>
    %cst_49 = arith.constant dense<0.000000e+00> : vector<128x32xf32>
    %78 = tpu.matmul %76, %77, %cst_49 {dimension_numbers = #tpu.dot_dimension_numbers<[1], [0], [0], [1], [0, 0, 1, 1], [], []>} : vector<128x16xbf16>, vector<16x32xbf16>, vector<128x32xf32> -> vector<128x32xf32>
    %c0_50 = arith.constant 0 : index
    %c0_51 = arith.constant 0 : index
    %79 = vector.load %arg5[%c0_50, %c0_51] : memref<1x32xf32, #tpu.memory_space<vmem>>, vector<1x32xf32>
    %80 = vector.broadcast %79 : vector<1x32xf32> to vector<128x32xf32>
    %81 = arith.addf %78, %80 : vector<128x32xf32>
    %cst_52 = arith.constant 0.000000e+00 : f32
    %82 = vector.broadcast %cst_52 : f32 to vector<128x32xf32>
    %83 = arith.maximumf %81, %82 : vector<128x32xf32>
    %84 = arith.truncf %83 : vector<128x32xf32> to vector<128x32xbf16>
    %c0_53 = arith.constant 0 : index
    %c0_54 = arith.constant 0 : index
    %85 = vector.load %arg6[%c0_53, %c0_54] : memref<128x32xbf16, #tpu.memory_space<vmem>>, vector<128x32xbf16>
    tpu.vector_store %arg6[%c0_53, %c0_54], %84 {strides = array<i32>} : memref<128x32xbf16, #tpu.memory_space<vmem>>, vector<128x32xbf16>,
    return
  }
  func.func @transform_0(%arg0: i32) -> (i32, i32, i32) {
    %c0_i32 = arith.constant 0 : i32
    %c0_i32_0 = arith.constant 0 : i32
    %c0_i32_1 = arith.constant 0 : i32
    %c0_i32_2 = arith.constant 0 : i32
    return %c0_i32, %c0_i32_0, %c0_i32_1 : i32, i32, i32
  }
  func.func @transform_1(%arg0: i32) -> (i32, i32, i32) {
    %c0_i32 = arith.constant 0 : i32
    %c0_i32_0 = arith.constant 0 : i32
    %c0_i32_1 = arith.constant 0 : i32
    %c0_i32_2 = arith.constant 0 : i32
    return %c0_i32, %c0_i32_0, %c0_i32_1 : i32, i32, i32
  }
  func.func @transform_2(%arg0: i32) -> (i32, i32) {
    %c0_i32 = arith.constant 0 : i32
    %c0_i32_0 = arith.constant 0 : i32
    %c0_i32_1 = arith.constant 0 : i32
    return %c0_i32, %c0_i32_0 : i32, i32
  }
  func.func @transform_3(%arg0: i32) -> (i32, i32) {
    %c0_i32 = arith.constant 0 : i32
    %c0_i32_0 = arith.constant 0 : i32
    %c0_i32_1 = arith.constant 0 : i32
    return %c0_i32, %c0_i32_0 : i32, i32
  }
  func.func @transform_4(%arg0: i32) -> (i32, i32) {
    %c0_i32 = arith.constant 0 : i32
    %c0_i32_0 = arith.constant 0 : i32
    %c0_i32_1 = arith.constant 0 : i32
    return %c0_i32, %c0_i32_0 : i32, i32
  }
  func.func @transform_5(%arg0: i32) -> (i32, i32) {
    %c0_i32 = arith.constant 0 : i32
    %c0_i32_0 = arith.constant 0 : i32
    %c0_i32_1 = arith.constant 0 : i32
    return %c0_i32, %c0_i32_0 : i32, i32
  }
}

module attributes {stable_mosaic.version = 11 : i64} {
  func.func @_block_pad_kernel(%arg0: i32, %arg1: memref<2x10x10x32xbf16, #tpu.memory_space<vmem>>, %arg2: memref<9x1x1x1x32xf32, #tpu.memory_space<vmem>>, %arg3: memref<1x1x1x32xf32, #tpu.memory_space<vmem>>, %arg4: memref<32x32xbf16, #tpu.memory_space<vmem>>, %arg5: memref<1x32xf32, #tpu.memory_space<vmem>>, %arg6: memref<128x32xbf16, #tpu.memory_space<vmem>>) attributes {dimension_semantics = [#tpu.dimension_semantics<arbitrary>], iteration_bounds = array<i64: 1>, scalar_prefetch = 0 : i64, scratch_operands = 0 : i64, tpu.core_type = #tpu.core_type<tc>, window_params = [{pipeline_mode = #tpu.pipeline_mode<synchronous>, transform_indices = @transform_0, window_bounds = array<i64: 2, 10, 10, 32>}, {pipeline_mode = #tpu.pipeline_mode<synchronous>, transform_indices = @transform_1, window_bounds = array<i64: 9, 1, 1, 1, 32>}, {pipeline_mode = #tpu.pipeline_mode<synchronous>, transform_indices = @transform_2, window_bounds = array<i64: 1, 1, 1, 32>}, {pipeline_mode = #tpu.pipeline_mode<synchronous>, transform_indices = @transform_3, window_bounds = array<i64: 32, 32>}, {pipeline_mode = #tpu.pipeline_mode<synchronous>, transform_indices = @transform_4, window_bounds = array<i64: 1, 32>}, {pipeline_mode = #tpu.pipeline_mode<synchronous>, transform_indices = @transform_5, window_bounds = array<i64: 128, 32>}]} {
    %c0 = arith.constant 0 : index
    %c0_0 = arith.constant 0 : index
    %c0_1 = arith.constant 0 : index
    %c0_2 = arith.constant 0 : index
    %c0_3 = arith.constant 0 : index
    %0 = vector.load %arg2[%c0, %c0_0, %c0_1, %c0_2, %c0_3] : memref<9x1x1x1x32xf32, #tpu.memory_space<vmem>>, vector<9x1x1x1x32xf32>
    %c0_4 = arith.constant 0 : index
    %c0_5 = arith.constant 0 : index
    %c0_6 = arith.constant 0 : index
    %c0_7 = arith.constant 0 : index
    %1 = vector.load %arg1[%c0_4, %c0_5, %c0_6, %c0_7] : memref<2x10x10x32xbf16, #tpu.memory_space<vmem>>, vector<2x8x8x32xbf16>
    %2 = arith.extf %1 : vector<2x8x8x32xbf16> to vector<2x8x8x32xf32>
    %3 = vector.extract_strided_slice %0 {offsets = [0, 0, 0, 0, 0], sizes = [1, 1, 1, 1, 32], strides = [1, 1, 1, 1, 1]} : vector<9x1x1x1x32xf32> to vector<1x1x1x1x32xf32>
    %4 = vector.shape_cast %3 : vector<1x1x1x1x32xf32> to vector<1x1x1x32xf32>
    %5 = vector.broadcast %4 : vector<1x1x1x32xf32> to vector<2x8x8x32xf32>
    %6 = arith.mulf %2, %5 : vector<2x8x8x32xf32>
    %c0_8 = arith.constant 0 : index
    %c0_9 = arith.constant 0 : index
    %c1 = arith.constant 1 : index
    %c0_10 = arith.constant 0 : index
    %7 = vector.load %arg1[%c0_8, %c0_9, %c1, %c0_10] : memref<2x10x10x32xbf16, #tpu.memory_space<vmem>>, vector<2x8x8x32xbf16>
    %8 = arith.extf %7 : vector<2x8x8x32xbf16> to vector<2x8x8x32xf32>
    %9 = vector.extract_strided_slice %0 {offsets = [1, 0, 0, 0, 0], sizes = [1, 1, 1, 1, 32], strides = [1, 1, 1, 1, 1]} : vector<9x1x1x1x32xf32> to vector<1x1x1x1x32xf32>
    %10 = vector.shape_cast %9 : vector<1x1x1x1x32xf32> to vector<1x1x1x32xf32>
    %11 = vector.broadcast %10 : vector<1x1x1x32xf32> to vector<2x8x8x32xf32>
    %12 = arith.mulf %8, %11 : vector<2x8x8x32xf32>
    %13 = arith.addf %6, %12 : vector<2x8x8x32xf32>
    %c0_11 = arith.constant 0 : index
    %c0_12 = arith.constant 0 : index
    %c2 = arith.constant 2 : index
    %c0_13 = arith.constant 0 : index
    %14 = vector.load %arg1[%c0_11, %c0_12, %c2, %c0_13] : memref<2x10x10x32xbf16, #tpu.memory_space<vmem>>, vector<2x8x8x32xbf16>
    %15 = arith.extf %14 : vector<2x8x8x32xbf16> to vector<2x8x8x32xf32>
    %16 = vector.extract_strided_slice %0 {offsets = [2, 0, 0, 0, 0], sizes = [1, 1, 1, 1, 32], strides = [1, 1, 1, 1, 1]} : vector<9x1x1x1x32xf32> to vector<1x1x1x1x32xf32>
    %17 = vector.shape_cast %16 : vector<1x1x1x1x32xf32> to vector<1x1x1x32xf32>
    %18 = vector.broadcast %17 : vector<1x1x1x32xf32> to vector<2x8x8x32xf32>
    %19 = arith.mulf %15, %18 : vector<2x8x8x32xf32>
    %20 = arith.addf %13, %19 : vector<2x8x8x32xf32>
    %c0_14 = arith.constant 0 : index
    %c1_15 = arith.constant 1 : index
    %c0_16 = arith.constant 0 : index
    %c0_17 = arith.constant 0 : index
    %21 = vector.load %arg1[%c0_14, %c1_15, %c0_16, %c0_17] : memref<2x10x10x32xbf16, #tpu.memory_space<vmem>>, vector<2x8x8x32xbf16>
    %22 = arith.extf %21 : vector<2x8x8x32xbf16> to vector<2x8x8x32xf32>
    %23 = vector.extract_strided_slice %0 {offsets = [3, 0, 0, 0, 0], sizes = [1, 1, 1, 1, 32], strides = [1, 1, 1, 1, 1]} : vector<9x1x1x1x32xf32> to vector<1x1x1x1x32xf32>
    %24 = vector.shape_cast %23 : vector<1x1x1x1x32xf32> to vector<1x1x1x32xf32>
    %25 = vector.broadcast %24 : vector<1x1x1x32xf32> to vector<2x8x8x32xf32>
    %26 = arith.mulf %22, %25 : vector<2x8x8x32xf32>
    %27 = arith.addf %20, %26 : vector<2x8x8x32xf32>
    %c0_18 = arith.constant 0 : index
    %c1_19 = arith.constant 1 : index
    %c1_20 = arith.constant 1 : index
    %c0_21 = arith.constant 0 : index
    %28 = vector.load %arg1[%c0_18, %c1_19, %c1_20, %c0_21] : memref<2x10x10x32xbf16, #tpu.memory_space<vmem>>, vector<2x8x8x32xbf16>
    %29 = arith.extf %28 : vector<2x8x8x32xbf16> to vector<2x8x8x32xf32>
    %30 = vector.extract_strided_slice %0 {offsets = [4, 0, 0, 0, 0], sizes = [1, 1, 1, 1, 32], strides = [1, 1, 1, 1, 1]} : vector<9x1x1x1x32xf32> to vector<1x1x1x1x32xf32>
    %31 = vector.shape_cast %30 : vector<1x1x1x1x32xf32> to vector<1x1x1x32xf32>
    %32 = vector.broadcast %31 : vector<1x1x1x32xf32> to vector<2x8x8x32xf32>
    %33 = arith.mulf %29, %32 : vector<2x8x8x32xf32>
    %34 = arith.addf %27, %33 : vector<2x8x8x32xf32>
    %c0_22 = arith.constant 0 : index
    %c1_23 = arith.constant 1 : index
    %c2_24 = arith.constant 2 : index
    %c0_25 = arith.constant 0 : index
    %35 = vector.load %arg1[%c0_22, %c1_23, %c2_24, %c0_25] : memref<2x10x10x32xbf16, #tpu.memory_space<vmem>>, vector<2x8x8x32xbf16>
    %36 = arith.extf %35 : vector<2x8x8x32xbf16> to vector<2x8x8x32xf32>
    %37 = vector.extract_strided_slice %0 {offsets = [5, 0, 0, 0, 0], sizes = [1, 1, 1, 1, 32], strides = [1, 1, 1, 1, 1]} : vector<9x1x1x1x32xf32> to vector<1x1x1x1x32xf32>
    %38 = vector.shape_cast %37 : vector<1x1x1x1x32xf32> to vector<1x1x1x32xf32>
    %39 = vector.broadcast %38 : vector<1x1x1x32xf32> to vector<2x8x8x32xf32>
    %40 = arith.mulf %36, %39 : vector<2x8x8x32xf32>
    %41 = arith.addf %34, %40 : vector<2x8x8x32xf32>
    %c0_26 = arith.constant 0 : index
    %c2_27 = arith.constant 2 : index
    %c0_28 = arith.constant 0 : index
    %c0_29 = arith.constant 0 : index
    %42 = vector.load %arg1[%c0_26, %c2_27, %c0_28, %c0_29] : memref<2x10x10x32xbf16, #tpu.memory_space<vmem>>, vector<2x8x8x32xbf16>
    %43 = arith.extf %42 : vector<2x8x8x32xbf16> to vector<2x8x8x32xf32>
    %44 = vector.extract_strided_slice %0 {offsets = [6, 0, 0, 0, 0], sizes = [1, 1, 1, 1, 32], strides = [1, 1, 1, 1, 1]} : vector<9x1x1x1x32xf32> to vector<1x1x1x1x32xf32>
    %45 = vector.shape_cast %44 : vector<1x1x1x1x32xf32> to vector<1x1x1x32xf32>
    %46 = vector.broadcast %45 : vector<1x1x1x32xf32> to vector<2x8x8x32xf32>
    %47 = arith.mulf %43, %46 : vector<2x8x8x32xf32>
    %48 = arith.addf %41, %47 : vector<2x8x8x32xf32>
    %c0_30 = arith.constant 0 : index
    %c2_31 = arith.constant 2 : index
    %c1_32 = arith.constant 1 : index
    %c0_33 = arith.constant 0 : index
    %49 = vector.load %arg1[%c0_30, %c2_31, %c1_32, %c0_33] : memref<2x10x10x32xbf16, #tpu.memory_space<vmem>>, vector<2x8x8x32xbf16>
    %50 = arith.extf %49 : vector<2x8x8x32xbf16> to vector<2x8x8x32xf32>
    %51 = vector.extract_strided_slice %0 {offsets = [7, 0, 0, 0, 0], sizes = [1, 1, 1, 1, 32], strides = [1, 1, 1, 1, 1]} : vector<9x1x1x1x32xf32> to vector<1x1x1x1x32xf32>
    %52 = vector.shape_cast %51 : vector<1x1x1x1x32xf32> to vector<1x1x1x32xf32>
    %53 = vector.broadcast %52 : vector<1x1x1x32xf32> to vector<2x8x8x32xf32>
    %54 = arith.mulf %50, %53 : vector<2x8x8x32xf32>
    %55 = arith.addf %48, %54 : vector<2x8x8x32xf32>
    %c0_34 = arith.constant 0 : index
    %c2_35 = arith.constant 2 : index
    %c2_36 = arith.constant 2 : index
    %c0_37 = arith.constant 0 : index
    %56 = vector.load %arg1[%c0_34, %c2_35, %c2_36, %c0_37] : memref<2x10x10x32xbf16, #tpu.memory_space<vmem>>, vector<2x8x8x32xbf16>
    %57 = arith.extf %56 : vector<2x8x8x32xbf16> to vector<2x8x8x32xf32>
    %58 = vector.extract_strided_slice %0 {offsets = [8, 0, 0, 0, 0], sizes = [1, 1, 1, 1, 32], strides = [1, 1, 1, 1, 1]} : vector<9x1x1x1x32xf32> to vector<1x1x1x1x32xf32>
    %59 = vector.shape_cast %58 : vector<1x1x1x1x32xf32> to vector<1x1x1x32xf32>
    %60 = vector.broadcast %59 : vector<1x1x1x32xf32> to vector<2x8x8x32xf32>
    %61 = arith.mulf %57, %60 : vector<2x8x8x32xf32>
    %62 = arith.addf %55, %61 : vector<2x8x8x32xf32>
    %c0_38 = arith.constant 0 : index
    %c0_39 = arith.constant 0 : index
    %c0_40 = arith.constant 0 : index
    %c0_41 = arith.constant 0 : index
    %63 = vector.load %arg3[%c0_38, %c0_39, %c0_40, %c0_41] : memref<1x1x1x32xf32, #tpu.memory_space<vmem>>, vector<1x1x1x32xf32>
    %64 = vector.broadcast %63 : vector<1x1x1x32xf32> to vector<2x8x8x32xf32>
    %65 = arith.addf %62, %64 : vector<2x8x8x32xf32>
    %cst = arith.constant 0.000000e+00 : f32
    %66 = vector.broadcast %cst : f32 to vector<2x8x8x32xf32>
    %67 = arith.maximumf %65, %66 : vector<2x8x8x32xf32>
    %68 = vector.shape_cast %67 : vector<2x8x8x32xf32> to vector<128x32xf32>
    %69 = arith.truncf %68 : vector<128x32xf32> to vector<128x32xbf16>
    %c0_42 = arith.constant 0 : index
    %c0_43 = arith.constant 0 : index
    %70 = vector.load %arg4[%c0_42, %c0_43] : memref<32x32xbf16, #tpu.memory_space<vmem>>, vector<32x32xbf16>
    %cst_44 = arith.constant dense<0.000000e+00> : vector<128x32xf32>
    %71 = tpu.matmul %69, %70, %cst_44 {dimension_numbers = #tpu.dot_dimension_numbers<[1], [0], [0], [1], [0, 0, 1, 1], [], []>} : vector<128x32xbf16>, vector<32x32xbf16>, vector<128x32xf32> -> vector<128x32xf32>
    %c0_45 = arith.constant 0 : index
    %c0_46 = arith.constant 0 : index
    %72 = vector.load %arg5[%c0_45, %c0_46] : memref<1x32xf32, #tpu.memory_space<vmem>>, vector<1x32xf32>
    %73 = vector.broadcast %72 : vector<1x32xf32> to vector<128x32xf32>
    %74 = arith.addf %71, %73 : vector<128x32xf32>
    %cst_47 = arith.constant 0.000000e+00 : f32
    %75 = vector.broadcast %cst_47 : f32 to vector<128x32xf32>
    %76 = arith.maximumf %74, %75 : vector<128x32xf32>
    %77 = arith.truncf %76 : vector<128x32xf32> to vector<128x32xbf16>
    %c0_48 = arith.constant 0 : index
    %c0_49 = arith.constant 0 : index
    %78 = vector.load %arg6[%c0_48, %c0_49] : memref<128x32xbf16, #tpu.memory_space<vmem>>, vector<128x32xbf16>
    tpu.vector_store %arg6[%c0_48, %c0_49], %77 {strides = array<i32>} : memref<128x32xbf16, #tpu.memory_space<vmem>>, vector<128x32xbf16>,
    return
  }
  func.func @transform_0(%arg0: i32) -> (i32, i32, i32, i32) {
    %c0_i32 = arith.constant 0 : i32
    %c0_i32_0 = arith.constant 0 : i32
    %c0_i32_1 = arith.constant 0 : i32
    %c0_i32_2 = arith.constant 0 : i32
    %c0_i32_3 = arith.constant 0 : i32
    return %c0_i32, %c0_i32_0, %c0_i32_1, %c0_i32_2 : i32, i32, i32, i32
  }
  func.func @transform_1(%arg0: i32) -> (i32, i32, i32, i32, i32) {
    %c0_i32 = arith.constant 0 : i32
    %c0_i32_0 = arith.constant 0 : i32
    %c0_i32_1 = arith.constant 0 : i32
    %c0_i32_2 = arith.constant 0 : i32
    %c0_i32_3 = arith.constant 0 : i32
    %c0_i32_4 = arith.constant 0 : i32
    return %c0_i32, %c0_i32_0, %c0_i32_1, %c0_i32_2, %c0_i32_3 : i32, i32, i32, i32, i32
  }
  func.func @transform_2(%arg0: i32) -> (i32, i32, i32, i32) {
    %c0_i32 = arith.constant 0 : i32
    %c0_i32_0 = arith.constant 0 : i32
    %c0_i32_1 = arith.constant 0 : i32
    %c0_i32_2 = arith.constant 0 : i32
    %c0_i32_3 = arith.constant 0 : i32
    return %c0_i32, %c0_i32_0, %c0_i32_1, %c0_i32_2 : i32, i32, i32, i32
  }
  func.func @transform_3(%arg0: i32) -> (i32, i32) {
    %c0_i32 = arith.constant 0 : i32
    %c0_i32_0 = arith.constant 0 : i32
    %c0_i32_1 = arith.constant 0 : i32
    return %c0_i32, %c0_i32_0 : i32, i32
  }
  func.func @transform_4(%arg0: i32) -> (i32, i32) {
    %c0_i32 = arith.constant 0 : i32
    %c0_i32_0 = arith.constant 0 : i32
    %c0_i32_1 = arith.constant 0 : i32
    return %c0_i32, %c0_i32_0 : i32, i32
  }
  func.func @transform_5(%arg0: i32) -> (i32, i32) {
    %c0_i32 = arith.constant 0 : i32
    %c0_i32_0 = arith.constant 0 : i32
    %c0_i32_1 = arith.constant 0 : i32
    return %c0_i32, %c0_i32_0 : i32, i32
  }
}

module attributes {stable_mosaic.version = 11 : i64} {
  func.func @_block_patch_kernel(%arg0: i32, %arg1: memref<9x32x32xbf16, #tpu.memory_space<vmem>>, %arg2: memref<9x1x32xf32, #tpu.memory_space<vmem>>, %arg3: memref<1x32xf32, #tpu.memory_space<vmem>>, %arg4: memref<32x64xbf16, #tpu.memory_space<vmem>>, %arg5: memref<1x64xf32, #tpu.memory_space<vmem>>, %arg6: memref<32x64xbf16, #tpu.memory_space<vmem>>) attributes {dimension_semantics = [#tpu.dimension_semantics<arbitrary>], iteration_bounds = array<i64: 1>, scalar_prefetch = 0 : i64, scratch_operands = 0 : i64, tpu.core_type = #tpu.core_type<tc>, window_params = [{pipeline_mode = #tpu.pipeline_mode<synchronous>, transform_indices = @transform_0, window_bounds = array<i64: 9, 32, 32>}, {pipeline_mode = #tpu.pipeline_mode<synchronous>, transform_indices = @transform_1, window_bounds = array<i64: 9, 1, 32>}, {pipeline_mode = #tpu.pipeline_mode<synchronous>, transform_indices = @transform_2, window_bounds = array<i64: 1, 32>}, {pipeline_mode = #tpu.pipeline_mode<synchronous>, transform_indices = @transform_3, window_bounds = array<i64: 32, 64>}, {pipeline_mode = #tpu.pipeline_mode<synchronous>, transform_indices = @transform_4, window_bounds = array<i64: 1, 64>}, {pipeline_mode = #tpu.pipeline_mode<synchronous>, transform_indices = @transform_5, window_bounds = array<i64: 32, 64>}]} {
    %c0 = arith.constant 0 : index
    %c0_0 = arith.constant 0 : index
    %c0_1 = arith.constant 0 : index
    %0 = vector.load %arg1[%c0, %c0_0, %c0_1] : memref<9x32x32xbf16, #tpu.memory_space<vmem>>, vector<1x32x32xbf16>
    %1 = vector.shape_cast %0 : vector<1x32x32xbf16> to vector<32x32xbf16>
    %2 = arith.extf %1 : vector<32x32xbf16> to vector<32x32xf32>
    %c0_2 = arith.constant 0 : index
    %c0_3 = arith.constant 0 : index
    %c0_4 = arith.constant 0 : index
    %3 = vector.load %arg2[%c0_2, %c0_3, %c0_4] : memref<9x1x32xf32, #tpu.memory_space<vmem>>, vector<1x1x32xf32>
    %4 = vector.shape_cast %3 : vector<1x1x32xf32> to vector<1x32xf32>
    %5 = vector.broadcast %4 : vector<1x32xf32> to vector<32x32xf32>
    %6 = arith.mulf %2, %5 : vector<32x32xf32>
    %c1 = arith.constant 1 : index
    %c0_5 = arith.constant 0 : index
    %c0_6 = arith.constant 0 : index
    %7 = vector.load %arg1[%c1, %c0_5, %c0_6] : memref<9x32x32xbf16, #tpu.memory_space<vmem>>, vector<1x32x32xbf16>
    %8 = vector.shape_cast %7 : vector<1x32x32xbf16> to vector<32x32xbf16>
    %9 = arith.extf %8 : vector<32x32xbf16> to vector<32x32xf32>
    %c1_7 = arith.constant 1 : index
    %c0_8 = arith.constant 0 : index
    %c0_9 = arith.constant 0 : index
    %10 = vector.load %arg2[%c1_7, %c0_8, %c0_9] : memref<9x1x32xf32, #tpu.memory_space<vmem>>, vector<1x1x32xf32>
    %11 = vector.shape_cast %10 : vector<1x1x32xf32> to vector<1x32xf32>
    %12 = vector.broadcast %11 : vector<1x32xf32> to vector<32x32xf32>
    %13 = arith.mulf %9, %12 : vector<32x32xf32>
    %14 = arith.addf %6, %13 : vector<32x32xf32>
    %c2 = arith.constant 2 : index
    %c0_10 = arith.constant 0 : index
    %c0_11 = arith.constant 0 : index
    %15 = vector.load %arg1[%c2, %c0_10, %c0_11] : memref<9x32x32xbf16, #tpu.memory_space<vmem>>, vector<1x32x32xbf16>
    %16 = vector.shape_cast %15 : vector<1x32x32xbf16> to vector<32x32xbf16>
    %17 = arith.extf %16 : vector<32x32xbf16> to vector<32x32xf32>
    %c2_12 = arith.constant 2 : index
    %c0_13 = arith.constant 0 : index
    %c0_14 = arith.constant 0 : index
    %18 = vector.load %arg2[%c2_12, %c0_13, %c0_14] : memref<9x1x32xf32, #tpu.memory_space<vmem>>, vector<1x1x32xf32>
    %19 = vector.shape_cast %18 : vector<1x1x32xf32> to vector<1x32xf32>
    %20 = vector.broadcast %19 : vector<1x32xf32> to vector<32x32xf32>
    %21 = arith.mulf %17, %20 : vector<32x32xf32>
    %22 = arith.addf %14, %21 : vector<32x32xf32>
    %c3 = arith.constant 3 : index
    %c0_15 = arith.constant 0 : index
    %c0_16 = arith.constant 0 : index
    %23 = vector.load %arg1[%c3, %c0_15, %c0_16] : memref<9x32x32xbf16, #tpu.memory_space<vmem>>, vector<1x32x32xbf16>
    %24 = vector.shape_cast %23 : vector<1x32x32xbf16> to vector<32x32xbf16>
    %25 = arith.extf %24 : vector<32x32xbf16> to vector<32x32xf32>
    %c3_17 = arith.constant 3 : index
    %c0_18 = arith.constant 0 : index
    %c0_19 = arith.constant 0 : index
    %26 = vector.load %arg2[%c3_17, %c0_18, %c0_19] : memref<9x1x32xf32, #tpu.memory_space<vmem>>, vector<1x1x32xf32>
    %27 = vector.shape_cast %26 : vector<1x1x32xf32> to vector<1x32xf32>
    %28 = vector.broadcast %27 : vector<1x32xf32> to vector<32x32xf32>
    %29 = arith.mulf %25, %28 : vector<32x32xf32>
    %30 = arith.addf %22, %29 : vector<32x32xf32>
    %c4 = arith.constant 4 : index
    %c0_20 = arith.constant 0 : index
    %c0_21 = arith.constant 0 : index
    %31 = vector.load %arg1[%c4, %c0_20, %c0_21] : memref<9x32x32xbf16, #tpu.memory_space<vmem>>, vector<1x32x32xbf16>
    %32 = vector.shape_cast %31 : vector<1x32x32xbf16> to vector<32x32xbf16>
    %33 = arith.extf %32 : vector<32x32xbf16> to vector<32x32xf32>
    %c4_22 = arith.constant 4 : index
    %c0_23 = arith.constant 0 : index
    %c0_24 = arith.constant 0 : index
    %34 = vector.load %arg2[%c4_22, %c0_23, %c0_24] : memref<9x1x32xf32, #tpu.memory_space<vmem>>, vector<1x1x32xf32>
    %35 = vector.shape_cast %34 : vector<1x1x32xf32> to vector<1x32xf32>
    %36 = vector.broadcast %35 : vector<1x32xf32> to vector<32x32xf32>
    %37 = arith.mulf %33, %36 : vector<32x32xf32>
    %38 = arith.addf %30, %37 : vector<32x32xf32>
    %c5 = arith.constant 5 : index
    %c0_25 = arith.constant 0 : index
    %c0_26 = arith.constant 0 : index
    %39 = vector.load %arg1[%c5, %c0_25, %c0_26] : memref<9x32x32xbf16, #tpu.memory_space<vmem>>, vector<1x32x32xbf16>
    %40 = vector.shape_cast %39 : vector<1x32x32xbf16> to vector<32x32xbf16>
    %41 = arith.extf %40 : vector<32x32xbf16> to vector<32x32xf32>
    %c5_27 = arith.constant 5 : index
    %c0_28 = arith.constant 0 : index
    %c0_29 = arith.constant 0 : index
    %42 = vector.load %arg2[%c5_27, %c0_28, %c0_29] : memref<9x1x32xf32, #tpu.memory_space<vmem>>, vector<1x1x32xf32>
    %43 = vector.shape_cast %42 : vector<1x1x32xf32> to vector<1x32xf32>
    %44 = vector.broadcast %43 : vector<1x32xf32> to vector<32x32xf32>
    %45 = arith.mulf %41, %44 : vector<32x32xf32>
    %46 = arith.addf %38, %45 : vector<32x32xf32>
    %c6 = arith.constant 6 : index
    %c0_30 = arith.constant 0 : index
    %c0_31 = arith.constant 0 : index
    %47 = vector.load %arg1[%c6, %c0_30, %c0_31] : memref<9x32x32xbf16, #tpu.memory_space<vmem>>, vector<1x32x32xbf16>
    %48 = vector.shape_cast %47 : vector<1x32x32xbf16> to vector<32x32xbf16>
    %49 = arith.extf %48 : vector<32x32xbf16> to vector<32x32xf32>
    %c6_32 = arith.constant 6 : index
    %c0_33 = arith.constant 0 : index
    %c0_34 = arith.constant 0 : index
    %50 = vector.load %arg2[%c6_32, %c0_33, %c0_34] : memref<9x1x32xf32, #tpu.memory_space<vmem>>, vector<1x1x32xf32>
    %51 = vector.shape_cast %50 : vector<1x1x32xf32> to vector<1x32xf32>
    %52 = vector.broadcast %51 : vector<1x32xf32> to vector<32x32xf32>
    %53 = arith.mulf %49, %52 : vector<32x32xf32>
    %54 = arith.addf %46, %53 : vector<32x32xf32>
    %c7 = arith.constant 7 : index
    %c0_35 = arith.constant 0 : index
    %c0_36 = arith.constant 0 : index
    %55 = vector.load %arg1[%c7, %c0_35, %c0_36] : memref<9x32x32xbf16, #tpu.memory_space<vmem>>, vector<1x32x32xbf16>
    %56 = vector.shape_cast %55 : vector<1x32x32xbf16> to vector<32x32xbf16>
    %57 = arith.extf %56 : vector<32x32xbf16> to vector<32x32xf32>
    %c7_37 = arith.constant 7 : index
    %c0_38 = arith.constant 0 : index
    %c0_39 = arith.constant 0 : index
    %58 = vector.load %arg2[%c7_37, %c0_38, %c0_39] : memref<9x1x32xf32, #tpu.memory_space<vmem>>, vector<1x1x32xf32>
    %59 = vector.shape_cast %58 : vector<1x1x32xf32> to vector<1x32xf32>
    %60 = vector.broadcast %59 : vector<1x32xf32> to vector<32x32xf32>
    %61 = arith.mulf %57, %60 : vector<32x32xf32>
    %62 = arith.addf %54, %61 : vector<32x32xf32>
    %c8 = arith.constant 8 : index
    %c0_40 = arith.constant 0 : index
    %c0_41 = arith.constant 0 : index
    %63 = vector.load %arg1[%c8, %c0_40, %c0_41] : memref<9x32x32xbf16, #tpu.memory_space<vmem>>, vector<1x32x32xbf16>
    %64 = vector.shape_cast %63 : vector<1x32x32xbf16> to vector<32x32xbf16>
    %65 = arith.extf %64 : vector<32x32xbf16> to vector<32x32xf32>
    %c8_42 = arith.constant 8 : index
    %c0_43 = arith.constant 0 : index
    %c0_44 = arith.constant 0 : index
    %66 = vector.load %arg2[%c8_42, %c0_43, %c0_44] : memref<9x1x32xf32, #tpu.memory_space<vmem>>, vector<1x1x32xf32>
    %67 = vector.shape_cast %66 : vector<1x1x32xf32> to vector<1x32xf32>
    %68 = vector.broadcast %67 : vector<1x32xf32> to vector<32x32xf32>
    %69 = arith.mulf %65, %68 : vector<32x32xf32>
    %70 = arith.addf %62, %69 : vector<32x32xf32>
    %c0_45 = arith.constant 0 : index
    %c0_46 = arith.constant 0 : index
    %71 = vector.load %arg3[%c0_45, %c0_46] : memref<1x32xf32, #tpu.memory_space<vmem>>, vector<1x32xf32>
    %72 = vector.broadcast %71 : vector<1x32xf32> to vector<32x32xf32>
    %73 = arith.addf %70, %72 : vector<32x32xf32>
    %cst = arith.constant 0.000000e+00 : f32
    %74 = vector.broadcast %cst : f32 to vector<32x32xf32>
    %75 = arith.maximumf %73, %74 : vector<32x32xf32>
    %76 = arith.truncf %75 : vector<32x32xf32> to vector<32x32xbf16>
    %c0_47 = arith.constant 0 : index
    %c0_48 = arith.constant 0 : index
    %77 = vector.load %arg4[%c0_47, %c0_48] : memref<32x64xbf16, #tpu.memory_space<vmem>>, vector<32x64xbf16>
    %cst_49 = arith.constant dense<0.000000e+00> : vector<32x64xf32>
    %78 = tpu.matmul %76, %77, %cst_49 {dimension_numbers = #tpu.dot_dimension_numbers<[1], [0], [0], [1], [0, 0, 1, 1], [], []>} : vector<32x32xbf16>, vector<32x64xbf16>, vector<32x64xf32> -> vector<32x64xf32>
    %c0_50 = arith.constant 0 : index
    %c0_51 = arith.constant 0 : index
    %79 = vector.load %arg5[%c0_50, %c0_51] : memref<1x64xf32, #tpu.memory_space<vmem>>, vector<1x64xf32>
    %80 = vector.broadcast %79 : vector<1x64xf32> to vector<32x64xf32>
    %81 = arith.addf %78, %80 : vector<32x64xf32>
    %cst_52 = arith.constant 0.000000e+00 : f32
    %82 = vector.broadcast %cst_52 : f32 to vector<32x64xf32>
    %83 = arith.maximumf %81, %82 : vector<32x64xf32>
    %84 = arith.truncf %83 : vector<32x64xf32> to vector<32x64xbf16>
    %c0_53 = arith.constant 0 : index
    %c0_54 = arith.constant 0 : index
    %85 = vector.load %arg6[%c0_53, %c0_54] : memref<32x64xbf16, #tpu.memory_space<vmem>>, vector<32x64xbf16>
    tpu.vector_store %arg6[%c0_53, %c0_54], %84 {strides = array<i32>} : memref<32x64xbf16, #tpu.memory_space<vmem>>, vector<32x64xbf16>,
    return
  }
  func.func @transform_0(%arg0: i32) -> (i32, i32, i32) {
    %c0_i32 = arith.constant 0 : i32
    %c0_i32_0 = arith.constant 0 : i32
    %c0_i32_1 = arith.constant 0 : i32
    %c0_i32_2 = arith.constant 0 : i32
    return %c0_i32, %c0_i32_0, %c0_i32_1 : i32, i32, i32
  }
  func.func @transform_1(%arg0: i32) -> (i32, i32, i32) {
    %c0_i32 = arith.constant 0 : i32
    %c0_i32_0 = arith.constant 0 : i32
    %c0_i32_1 = arith.constant 0 : i32
    %c0_i32_2 = arith.constant 0 : i32
    return %c0_i32, %c0_i32_0, %c0_i32_1 : i32, i32, i32
  }
  func.func @transform_2(%arg0: i32) -> (i32, i32) {
    %c0_i32 = arith.constant 0 : i32
    %c0_i32_0 = arith.constant 0 : i32
    %c0_i32_1 = arith.constant 0 : i32
    return %c0_i32, %c0_i32_0 : i32, i32
  }
  func.func @transform_3(%arg0: i32) -> (i32, i32) {
    %c0_i32 = arith.constant 0 : i32
    %c0_i32_0 = arith.constant 0 : i32
    %c0_i32_1 = arith.constant 0 : i32
    return %c0_i32, %c0_i32_0 : i32, i32
  }
  func.func @transform_4(%arg0: i32) -> (i32, i32) {
    %c0_i32 = arith.constant 0 : i32
    %c0_i32_0 = arith.constant 0 : i32
    %c0_i32_1 = arith.constant 0 : i32
    return %c0_i32, %c0_i32_0 : i32, i32
  }
  func.func @transform_5(%arg0: i32) -> (i32, i32) {
    %c0_i32 = arith.constant 0 : i32
    %c0_i32_0 = arith.constant 0 : i32
    %c0_i32_1 = arith.constant 0 : i32
    return %c0_i32, %c0_i32_0 : i32, i32
  }
}

module attributes {stable_mosaic.version = 11 : i64} {
  func.func @_block_pad_kernel(%arg0: i32, %arg1: memref<2x6x6x64xbf16, #tpu.memory_space<vmem>>, %arg2: memref<9x1x1x1x64xf32, #tpu.memory_space<vmem>>, %arg3: memref<1x1x1x64xf32, #tpu.memory_space<vmem>>, %arg4: memref<64x64xbf16, #tpu.memory_space<vmem>>, %arg5: memref<1x64xf32, #tpu.memory_space<vmem>>, %arg6: memref<32x64xbf16, #tpu.memory_space<vmem>>) attributes {dimension_semantics = [#tpu.dimension_semantics<arbitrary>], iteration_bounds = array<i64: 1>, scalar_prefetch = 0 : i64, scratch_operands = 0 : i64, tpu.core_type = #tpu.core_type<tc>, window_params = [{pipeline_mode = #tpu.pipeline_mode<synchronous>, transform_indices = @transform_0, window_bounds = array<i64: 2, 6, 6, 64>}, {pipeline_mode = #tpu.pipeline_mode<synchronous>, transform_indices = @transform_1, window_bounds = array<i64: 9, 1, 1, 1, 64>}, {pipeline_mode = #tpu.pipeline_mode<synchronous>, transform_indices = @transform_2, window_bounds = array<i64: 1, 1, 1, 64>}, {pipeline_mode = #tpu.pipeline_mode<synchronous>, transform_indices = @transform_3, window_bounds = array<i64: 64, 64>}, {pipeline_mode = #tpu.pipeline_mode<synchronous>, transform_indices = @transform_4, window_bounds = array<i64: 1, 64>}, {pipeline_mode = #tpu.pipeline_mode<synchronous>, transform_indices = @transform_5, window_bounds = array<i64: 32, 64>}]} {
    %c0 = arith.constant 0 : index
    %c0_0 = arith.constant 0 : index
    %c0_1 = arith.constant 0 : index
    %c0_2 = arith.constant 0 : index
    %c0_3 = arith.constant 0 : index
    %0 = vector.load %arg2[%c0, %c0_0, %c0_1, %c0_2, %c0_3] : memref<9x1x1x1x64xf32, #tpu.memory_space<vmem>>, vector<9x1x1x1x64xf32>
    %c0_4 = arith.constant 0 : index
    %c0_5 = arith.constant 0 : index
    %c0_6 = arith.constant 0 : index
    %c0_7 = arith.constant 0 : index
    %1 = vector.load %arg1[%c0_4, %c0_5, %c0_6, %c0_7] : memref<2x6x6x64xbf16, #tpu.memory_space<vmem>>, vector<2x4x4x64xbf16>
    %2 = arith.extf %1 : vector<2x4x4x64xbf16> to vector<2x4x4x64xf32>
    %3 = vector.extract_strided_slice %0 {offsets = [0, 0, 0, 0, 0], sizes = [1, 1, 1, 1, 64], strides = [1, 1, 1, 1, 1]} : vector<9x1x1x1x64xf32> to vector<1x1x1x1x64xf32>
    %4 = vector.shape_cast %3 : vector<1x1x1x1x64xf32> to vector<1x1x1x64xf32>
    %5 = vector.broadcast %4 : vector<1x1x1x64xf32> to vector<2x4x4x64xf32>
    %6 = arith.mulf %2, %5 : vector<2x4x4x64xf32>
    %c0_8 = arith.constant 0 : index
    %c0_9 = arith.constant 0 : index
    %c1 = arith.constant 1 : index
    %c0_10 = arith.constant 0 : index
    %7 = vector.load %arg1[%c0_8, %c0_9, %c1, %c0_10] : memref<2x6x6x64xbf16, #tpu.memory_space<vmem>>, vector<2x4x4x64xbf16>
    %8 = arith.extf %7 : vector<2x4x4x64xbf16> to vector<2x4x4x64xf32>
    %9 = vector.extract_strided_slice %0 {offsets = [1, 0, 0, 0, 0], sizes = [1, 1, 1, 1, 64], strides = [1, 1, 1, 1, 1]} : vector<9x1x1x1x64xf32> to vector<1x1x1x1x64xf32>
    %10 = vector.shape_cast %9 : vector<1x1x1x1x64xf32> to vector<1x1x1x64xf32>
    %11 = vector.broadcast %10 : vector<1x1x1x64xf32> to vector<2x4x4x64xf32>
    %12 = arith.mulf %8, %11 : vector<2x4x4x64xf32>
    %13 = arith.addf %6, %12 : vector<2x4x4x64xf32>
    %c0_11 = arith.constant 0 : index
    %c0_12 = arith.constant 0 : index
    %c2 = arith.constant 2 : index
    %c0_13 = arith.constant 0 : index
    %14 = vector.load %arg1[%c0_11, %c0_12, %c2, %c0_13] : memref<2x6x6x64xbf16, #tpu.memory_space<vmem>>, vector<2x4x4x64xbf16>
    %15 = arith.extf %14 : vector<2x4x4x64xbf16> to vector<2x4x4x64xf32>
    %16 = vector.extract_strided_slice %0 {offsets = [2, 0, 0, 0, 0], sizes = [1, 1, 1, 1, 64], strides = [1, 1, 1, 1, 1]} : vector<9x1x1x1x64xf32> to vector<1x1x1x1x64xf32>
    %17 = vector.shape_cast %16 : vector<1x1x1x1x64xf32> to vector<1x1x1x64xf32>
    %18 = vector.broadcast %17 : vector<1x1x1x64xf32> to vector<2x4x4x64xf32>
    %19 = arith.mulf %15, %18 : vector<2x4x4x64xf32>
    %20 = arith.addf %13, %19 : vector<2x4x4x64xf32>
    %c0_14 = arith.constant 0 : index
    %c1_15 = arith.constant 1 : index
    %c0_16 = arith.constant 0 : index
    %c0_17 = arith.constant 0 : index
    %21 = vector.load %arg1[%c0_14, %c1_15, %c0_16, %c0_17] : memref<2x6x6x64xbf16, #tpu.memory_space<vmem>>, vector<2x4x4x64xbf16>
    %22 = arith.extf %21 : vector<2x4x4x64xbf16> to vector<2x4x4x64xf32>
    %23 = vector.extract_strided_slice %0 {offsets = [3, 0, 0, 0, 0], sizes = [1, 1, 1, 1, 64], strides = [1, 1, 1, 1, 1]} : vector<9x1x1x1x64xf32> to vector<1x1x1x1x64xf32>
    %24 = vector.shape_cast %23 : vector<1x1x1x1x64xf32> to vector<1x1x1x64xf32>
    %25 = vector.broadcast %24 : vector<1x1x1x64xf32> to vector<2x4x4x64xf32>
    %26 = arith.mulf %22, %25 : vector<2x4x4x64xf32>
    %27 = arith.addf %20, %26 : vector<2x4x4x64xf32>
    %c0_18 = arith.constant 0 : index
    %c1_19 = arith.constant 1 : index
    %c1_20 = arith.constant 1 : index
    %c0_21 = arith.constant 0 : index
    %28 = vector.load %arg1[%c0_18, %c1_19, %c1_20, %c0_21] : memref<2x6x6x64xbf16, #tpu.memory_space<vmem>>, vector<2x4x4x64xbf16>
    %29 = arith.extf %28 : vector<2x4x4x64xbf16> to vector<2x4x4x64xf32>
    %30 = vector.extract_strided_slice %0 {offsets = [4, 0, 0, 0, 0], sizes = [1, 1, 1, 1, 64], strides = [1, 1, 1, 1, 1]} : vector<9x1x1x1x64xf32> to vector<1x1x1x1x64xf32>
    %31 = vector.shape_cast %30 : vector<1x1x1x1x64xf32> to vector<1x1x1x64xf32>
    %32 = vector.broadcast %31 : vector<1x1x1x64xf32> to vector<2x4x4x64xf32>
    %33 = arith.mulf %29, %32 : vector<2x4x4x64xf32>
    %34 = arith.addf %27, %33 : vector<2x4x4x64xf32>
    %c0_22 = arith.constant 0 : index
    %c1_23 = arith.constant 1 : index
    %c2_24 = arith.constant 2 : index
    %c0_25 = arith.constant 0 : index
    %35 = vector.load %arg1[%c0_22, %c1_23, %c2_24, %c0_25] : memref<2x6x6x64xbf16, #tpu.memory_space<vmem>>, vector<2x4x4x64xbf16>
    %36 = arith.extf %35 : vector<2x4x4x64xbf16> to vector<2x4x4x64xf32>
    %37 = vector.extract_strided_slice %0 {offsets = [5, 0, 0, 0, 0], sizes = [1, 1, 1, 1, 64], strides = [1, 1, 1, 1, 1]} : vector<9x1x1x1x64xf32> to vector<1x1x1x1x64xf32>
    %38 = vector.shape_cast %37 : vector<1x1x1x1x64xf32> to vector<1x1x1x64xf32>
    %39 = vector.broadcast %38 : vector<1x1x1x64xf32> to vector<2x4x4x64xf32>
    %40 = arith.mulf %36, %39 : vector<2x4x4x64xf32>
    %41 = arith.addf %34, %40 : vector<2x4x4x64xf32>
    %c0_26 = arith.constant 0 : index
    %c2_27 = arith.constant 2 : index
    %c0_28 = arith.constant 0 : index
    %c0_29 = arith.constant 0 : index
    %42 = vector.load %arg1[%c0_26, %c2_27, %c0_28, %c0_29] : memref<2x6x6x64xbf16, #tpu.memory_space<vmem>>, vector<2x4x4x64xbf16>
    %43 = arith.extf %42 : vector<2x4x4x64xbf16> to vector<2x4x4x64xf32>
    %44 = vector.extract_strided_slice %0 {offsets = [6, 0, 0, 0, 0], sizes = [1, 1, 1, 1, 64], strides = [1, 1, 1, 1, 1]} : vector<9x1x1x1x64xf32> to vector<1x1x1x1x64xf32>
    %45 = vector.shape_cast %44 : vector<1x1x1x1x64xf32> to vector<1x1x1x64xf32>
    %46 = vector.broadcast %45 : vector<1x1x1x64xf32> to vector<2x4x4x64xf32>
    %47 = arith.mulf %43, %46 : vector<2x4x4x64xf32>
    %48 = arith.addf %41, %47 : vector<2x4x4x64xf32>
    %c0_30 = arith.constant 0 : index
    %c2_31 = arith.constant 2 : index
    %c1_32 = arith.constant 1 : index
    %c0_33 = arith.constant 0 : index
    %49 = vector.load %arg1[%c0_30, %c2_31, %c1_32, %c0_33] : memref<2x6x6x64xbf16, #tpu.memory_space<vmem>>, vector<2x4x4x64xbf16>
    %50 = arith.extf %49 : vector<2x4x4x64xbf16> to vector<2x4x4x64xf32>
    %51 = vector.extract_strided_slice %0 {offsets = [7, 0, 0, 0, 0], sizes = [1, 1, 1, 1, 64], strides = [1, 1, 1, 1, 1]} : vector<9x1x1x1x64xf32> to vector<1x1x1x1x64xf32>
    %52 = vector.shape_cast %51 : vector<1x1x1x1x64xf32> to vector<1x1x1x64xf32>
    %53 = vector.broadcast %52 : vector<1x1x1x64xf32> to vector<2x4x4x64xf32>
    %54 = arith.mulf %50, %53 : vector<2x4x4x64xf32>
    %55 = arith.addf %48, %54 : vector<2x4x4x64xf32>
    %c0_34 = arith.constant 0 : index
    %c2_35 = arith.constant 2 : index
    %c2_36 = arith.constant 2 : index
    %c0_37 = arith.constant 0 : index
    %56 = vector.load %arg1[%c0_34, %c2_35, %c2_36, %c0_37] : memref<2x6x6x64xbf16, #tpu.memory_space<vmem>>, vector<2x4x4x64xbf16>
    %57 = arith.extf %56 : vector<2x4x4x64xbf16> to vector<2x4x4x64xf32>
    %58 = vector.extract_strided_slice %0 {offsets = [8, 0, 0, 0, 0], sizes = [1, 1, 1, 1, 64], strides = [1, 1, 1, 1, 1]} : vector<9x1x1x1x64xf32> to vector<1x1x1x1x64xf32>
    %59 = vector.shape_cast %58 : vector<1x1x1x1x64xf32> to vector<1x1x1x64xf32>
    %60 = vector.broadcast %59 : vector<1x1x1x64xf32> to vector<2x4x4x64xf32>
    %61 = arith.mulf %57, %60 : vector<2x4x4x64xf32>
    %62 = arith.addf %55, %61 : vector<2x4x4x64xf32>
    %c0_38 = arith.constant 0 : index
    %c0_39 = arith.constant 0 : index
    %c0_40 = arith.constant 0 : index
    %c0_41 = arith.constant 0 : index
    %63 = vector.load %arg3[%c0_38, %c0_39, %c0_40, %c0_41] : memref<1x1x1x64xf32, #tpu.memory_space<vmem>>, vector<1x1x1x64xf32>
    %64 = vector.broadcast %63 : vector<1x1x1x64xf32> to vector<2x4x4x64xf32>
    %65 = arith.addf %62, %64 : vector<2x4x4x64xf32>
    %cst = arith.constant 0.000000e+00 : f32
    %66 = vector.broadcast %cst : f32 to vector<2x4x4x64xf32>
    %67 = arith.maximumf %65, %66 : vector<2x4x4x64xf32>
    %68 = vector.shape_cast %67 : vector<2x4x4x64xf32> to vector<32x64xf32>
    %69 = arith.truncf %68 : vector<32x64xf32> to vector<32x64xbf16>
    %c0_42 = arith.constant 0 : index
    %c0_43 = arith.constant 0 : index
    %70 = vector.load %arg4[%c0_42, %c0_43] : memref<64x64xbf16, #tpu.memory_space<vmem>>, vector<64x64xbf16>
    %cst_44 = arith.constant dense<0.000000e+00> : vector<32x64xf32>
    %71 = tpu.matmul %69, %70, %cst_44 {dimension_numbers = #tpu.dot_dimension_numbers<[1], [0], [0], [1], [0, 0, 1, 1], [], []>} : vector<32x64xbf16>, vector<64x64xbf16>, vector<32x64xf32> -> vector<32x64xf32>
    %c0_45 = arith.constant 0 : index
    %c0_46 = arith.constant 0 : index
    %72 = vector.load %arg5[%c0_45, %c0_46] : memref<1x64xf32, #tpu.memory_space<vmem>>, vector<1x64xf32>
    %73 = vector.broadcast %72 : vector<1x64xf32> to vector<32x64xf32>
    %74 = arith.addf %71, %73 : vector<32x64xf32>
    %cst_47 = arith.constant 0.000000e+00 : f32
    %75 = vector.broadcast %cst_47 : f32 to vector<32x64xf32>
    %76 = arith.maximumf %74, %75 : vector<32x64xf32>
    %77 = arith.truncf %76 : vector<32x64xf32> to vector<32x64xbf16>
    %c0_48 = arith.constant 0 : index
    %c0_49 = arith.constant 0 : index
    %78 = vector.load %arg6[%c0_48, %c0_49] : memref<32x64xbf16, #tpu.memory_space<vmem>>, vector<32x64xbf16>
    tpu.vector_store %arg6[%c0_48, %c0_49], %77 {strides = array<i32>} : memref<32x64xbf16, #tpu.memory_space<vmem>>, vector<32x64xbf16>,
    return
  }
  func.func @transform_0(%arg0: i32) -> (i32, i32, i32, i32) {
    %c0_i32 = arith.constant 0 : i32
    %c0_i32_0 = arith.constant 0 : i32
    %c0_i32_1 = arith.constant 0 : i32
    %c0_i32_2 = arith.constant 0 : i32
    %c0_i32_3 = arith.constant 0 : i32
    return %c0_i32, %c0_i32_0, %c0_i32_1, %c0_i32_2 : i32, i32, i32, i32
  }
  func.func @transform_1(%arg0: i32) -> (i32, i32, i32, i32, i32) {
    %c0_i32 = arith.constant 0 : i32
    %c0_i32_0 = arith.constant 0 : i32
    %c0_i32_1 = arith.constant 0 : i32
    %c0_i32_2 = arith.constant 0 : i32
    %c0_i32_3 = arith.constant 0 : i32
    %c0_i32_4 = arith.constant 0 : i32
    return %c0_i32, %c0_i32_0, %c0_i32_1, %c0_i32_2, %c0_i32_3 : i32, i32, i32, i32, i32
  }
  func.func @transform_2(%arg0: i32) -> (i32, i32, i32, i32) {
    %c0_i32 = arith.constant 0 : i32
    %c0_i32_0 = arith.constant 0 : i32
    %c0_i32_1 = arith.constant 0 : i32
    %c0_i32_2 = arith.constant 0 : i32
    %c0_i32_3 = arith.constant 0 : i32
    return %c0_i32, %c0_i32_0, %c0_i32_1, %c0_i32_2 : i32, i32, i32, i32
  }
  func.func @transform_3(%arg0: i32) -> (i32, i32) {
    %c0_i32 = arith.constant 0 : i32
    %c0_i32_0 = arith.constant 0 : i32
    %c0_i32_1 = arith.constant 0 : i32
    return %c0_i32, %c0_i32_0 : i32, i32
  }
  func.func @transform_4(%arg0: i32) -> (i32, i32) {
    %c0_i32 = arith.constant 0 : i32
    %c0_i32_0 = arith.constant 0 : i32
    %c0_i32_1 = arith.constant 0 : i32
    return %c0_i32, %c0_i32_0 : i32, i32
  }
  func.func @transform_5(%arg0: i32) -> (i32, i32) {
    %c0_i32 = arith.constant 0 : i32
    %c0_i32_0 = arith.constant 0 : i32
    %c0_i32_1 = arith.constant 0 : i32
    return %c0_i32, %c0_i32_0 : i32, i32
  }
}

module attributes {stable_mosaic.version = 11 : i64} {
  func.func @_block_pad_kernel(%arg0: i32, %arg1: memref<2x4x4x128xbf16, #tpu.memory_space<vmem>>, %arg2: memref<9x1x1x1x128xf32, #tpu.memory_space<vmem>>, %arg3: memref<1x1x1x128xf32, #tpu.memory_space<vmem>>, %arg4: memref<128x128xbf16, #tpu.memory_space<vmem>>, %arg5: memref<1x128xf32, #tpu.memory_space<vmem>>, %arg6: memref<8x128xbf16, #tpu.memory_space<vmem>>) attributes {dimension_semantics = [#tpu.dimension_semantics<arbitrary>], iteration_bounds = array<i64: 1>, scalar_prefetch = 0 : i64, scratch_operands = 0 : i64, tpu.core_type = #tpu.core_type<tc>, window_params = [{pipeline_mode = #tpu.pipeline_mode<synchronous>, transform_indices = @transform_0, window_bounds = array<i64: 2, 4, 4, 128>}, {pipeline_mode = #tpu.pipeline_mode<synchronous>, transform_indices = @transform_1, window_bounds = array<i64: 9, 1, 1, 1, 128>}, {pipeline_mode = #tpu.pipeline_mode<synchronous>, transform_indices = @transform_2, window_bounds = array<i64: 1, 1, 1, 128>}, {pipeline_mode = #tpu.pipeline_mode<synchronous>, transform_indices = @transform_3, window_bounds = array<i64: 128, 128>}, {pipeline_mode = #tpu.pipeline_mode<synchronous>, transform_indices = @transform_4, window_bounds = array<i64: 1, 128>}, {pipeline_mode = #tpu.pipeline_mode<synchronous>, transform_indices = @transform_5, window_bounds = array<i64: 8, 128>}]} {
    %c0 = arith.constant 0 : index
    %c0_0 = arith.constant 0 : index
    %c0_1 = arith.constant 0 : index
    %c0_2 = arith.constant 0 : index
    %c0_3 = arith.constant 0 : index
    %0 = vector.load %arg2[%c0, %c0_0, %c0_1, %c0_2, %c0_3] : memref<9x1x1x1x128xf32, #tpu.memory_space<vmem>>, vector<9x1x1x1x128xf32>
    %c0_4 = arith.constant 0 : index
    %c0_5 = arith.constant 0 : index
    %c0_6 = arith.constant 0 : index
    %c0_7 = arith.constant 0 : index
    %1 = vector.load %arg1[%c0_4, %c0_5, %c0_6, %c0_7] : memref<2x4x4x128xbf16, #tpu.memory_space<vmem>>, vector<2x2x2x128xbf16>
    %2 = arith.extf %1 : vector<2x2x2x128xbf16> to vector<2x2x2x128xf32>
    %3 = vector.extract_strided_slice %0 {offsets = [0, 0, 0, 0, 0], sizes = [1, 1, 1, 1, 128], strides = [1, 1, 1, 1, 1]} : vector<9x1x1x1x128xf32> to vector<1x1x1x1x128xf32>
    %4 = vector.shape_cast %3 : vector<1x1x1x1x128xf32> to vector<1x1x1x128xf32>
    %5 = vector.broadcast %4 : vector<1x1x1x128xf32> to vector<2x2x2x128xf32>
    %6 = arith.mulf %2, %5 : vector<2x2x2x128xf32>
    %c0_8 = arith.constant 0 : index
    %c0_9 = arith.constant 0 : index
    %c1 = arith.constant 1 : index
    %c0_10 = arith.constant 0 : index
    %7 = vector.load %arg1[%c0_8, %c0_9, %c1, %c0_10] : memref<2x4x4x128xbf16, #tpu.memory_space<vmem>>, vector<2x2x2x128xbf16>
    %8 = arith.extf %7 : vector<2x2x2x128xbf16> to vector<2x2x2x128xf32>
    %9 = vector.extract_strided_slice %0 {offsets = [1, 0, 0, 0, 0], sizes = [1, 1, 1, 1, 128], strides = [1, 1, 1, 1, 1]} : vector<9x1x1x1x128xf32> to vector<1x1x1x1x128xf32>
    %10 = vector.shape_cast %9 : vector<1x1x1x1x128xf32> to vector<1x1x1x128xf32>
    %11 = vector.broadcast %10 : vector<1x1x1x128xf32> to vector<2x2x2x128xf32>
    %12 = arith.mulf %8, %11 : vector<2x2x2x128xf32>
    %13 = arith.addf %6, %12 : vector<2x2x2x128xf32>
    %c0_11 = arith.constant 0 : index
    %c0_12 = arith.constant 0 : index
    %c2 = arith.constant 2 : index
    %c0_13 = arith.constant 0 : index
    %14 = vector.load %arg1[%c0_11, %c0_12, %c2, %c0_13] : memref<2x4x4x128xbf16, #tpu.memory_space<vmem>>, vector<2x2x2x128xbf16>
    %15 = arith.extf %14 : vector<2x2x2x128xbf16> to vector<2x2x2x128xf32>
    %16 = vector.extract_strided_slice %0 {offsets = [2, 0, 0, 0, 0], sizes = [1, 1, 1, 1, 128], strides = [1, 1, 1, 1, 1]} : vector<9x1x1x1x128xf32> to vector<1x1x1x1x128xf32>
    %17 = vector.shape_cast %16 : vector<1x1x1x1x128xf32> to vector<1x1x1x128xf32>
    %18 = vector.broadcast %17 : vector<1x1x1x128xf32> to vector<2x2x2x128xf32>
    %19 = arith.mulf %15, %18 : vector<2x2x2x128xf32>
    %20 = arith.addf %13, %19 : vector<2x2x2x128xf32>
    %c0_14 = arith.constant 0 : index
    %c1_15 = arith.constant 1 : index
    %c0_16 = arith.constant 0 : index
    %c0_17 = arith.constant 0 : index
    %21 = vector.load %arg1[%c0_14, %c1_15, %c0_16, %c0_17] : memref<2x4x4x128xbf16, #tpu.memory_space<vmem>>, vector<2x2x2x128xbf16>
    %22 = arith.extf %21 : vector<2x2x2x128xbf16> to vector<2x2x2x128xf32>
    %23 = vector.extract_strided_slice %0 {offsets = [3, 0, 0, 0, 0], sizes = [1, 1, 1, 1, 128], strides = [1, 1, 1, 1, 1]} : vector<9x1x1x1x128xf32> to vector<1x1x1x1x128xf32>
    %24 = vector.shape_cast %23 : vector<1x1x1x1x128xf32> to vector<1x1x1x128xf32>
    %25 = vector.broadcast %24 : vector<1x1x1x128xf32> to vector<2x2x2x128xf32>
    %26 = arith.mulf %22, %25 : vector<2x2x2x128xf32>
    %27 = arith.addf %20, %26 : vector<2x2x2x128xf32>
    %c0_18 = arith.constant 0 : index
    %c1_19 = arith.constant 1 : index
    %c1_20 = arith.constant 1 : index
    %c0_21 = arith.constant 0 : index
    %28 = vector.load %arg1[%c0_18, %c1_19, %c1_20, %c0_21] : memref<2x4x4x128xbf16, #tpu.memory_space<vmem>>, vector<2x2x2x128xbf16>
    %29 = arith.extf %28 : vector<2x2x2x128xbf16> to vector<2x2x2x128xf32>
    %30 = vector.extract_strided_slice %0 {offsets = [4, 0, 0, 0, 0], sizes = [1, 1, 1, 1, 128], strides = [1, 1, 1, 1, 1]} : vector<9x1x1x1x128xf32> to vector<1x1x1x1x128xf32>
    %31 = vector.shape_cast %30 : vector<1x1x1x1x128xf32> to vector<1x1x1x128xf32>
    %32 = vector.broadcast %31 : vector<1x1x1x128xf32> to vector<2x2x2x128xf32>
    %33 = arith.mulf %29, %32 : vector<2x2x2x128xf32>
    %34 = arith.addf %27, %33 : vector<2x2x2x128xf32>
    %c0_22 = arith.constant 0 : index
    %c1_23 = arith.constant 1 : index
    %c2_24 = arith.constant 2 : index
    %c0_25 = arith.constant 0 : index
    %35 = vector.load %arg1[%c0_22, %c1_23, %c2_24, %c0_25] : memref<2x4x4x128xbf16, #tpu.memory_space<vmem>>, vector<2x2x2x128xbf16>
    %36 = arith.extf %35 : vector<2x2x2x128xbf16> to vector<2x2x2x128xf32>
    %37 = vector.extract_strided_slice %0 {offsets = [5, 0, 0, 0, 0], sizes = [1, 1, 1, 1, 128], strides = [1, 1, 1, 1, 1]} : vector<9x1x1x1x128xf32> to vector<1x1x1x1x128xf32>
    %38 = vector.shape_cast %37 : vector<1x1x1x1x128xf32> to vector<1x1x1x128xf32>
    %39 = vector.broadcast %38 : vector<1x1x1x128xf32> to vector<2x2x2x128xf32>
    %40 = arith.mulf %36, %39 : vector<2x2x2x128xf32>
    %41 = arith.addf %34, %40 : vector<2x2x2x128xf32>
    %c0_26 = arith.constant 0 : index
    %c2_27 = arith.constant 2 : index
    %c0_28 = arith.constant 0 : index
    %c0_29 = arith.constant 0 : index
    %42 = vector.load %arg1[%c0_26, %c2_27, %c0_28, %c0_29] : memref<2x4x4x128xbf16, #tpu.memory_space<vmem>>, vector<2x2x2x128xbf16>
    %43 = arith.extf %42 : vector<2x2x2x128xbf16> to vector<2x2x2x128xf32>
    %44 = vector.extract_strided_slice %0 {offsets = [6, 0, 0, 0, 0], sizes = [1, 1, 1, 1, 128], strides = [1, 1, 1, 1, 1]} : vector<9x1x1x1x128xf32> to vector<1x1x1x1x128xf32>
    %45 = vector.shape_cast %44 : vector<1x1x1x1x128xf32> to vector<1x1x1x128xf32>
    %46 = vector.broadcast %45 : vector<1x1x1x128xf32> to vector<2x2x2x128xf32>
    %47 = arith.mulf %43, %46 : vector<2x2x2x128xf32>
    %48 = arith.addf %41, %47 : vector<2x2x2x128xf32>
    %c0_30 = arith.constant 0 : index
    %c2_31 = arith.constant 2 : index
    %c1_32 = arith.constant 1 : index
    %c0_33 = arith.constant 0 : index
    %49 = vector.load %arg1[%c0_30, %c2_31, %c1_32, %c0_33] : memref<2x4x4x128xbf16, #tpu.memory_space<vmem>>, vector<2x2x2x128xbf16>
    %50 = arith.extf %49 : vector<2x2x2x128xbf16> to vector<2x2x2x128xf32>
    %51 = vector.extract_strided_slice %0 {offsets = [7, 0, 0, 0, 0], sizes = [1, 1, 1, 1, 128], strides = [1, 1, 1, 1, 1]} : vector<9x1x1x1x128xf32> to vector<1x1x1x1x128xf32>
    %52 = vector.shape_cast %51 : vector<1x1x1x1x128xf32> to vector<1x1x1x128xf32>
    %53 = vector.broadcast %52 : vector<1x1x1x128xf32> to vector<2x2x2x128xf32>
    %54 = arith.mulf %50, %53 : vector<2x2x2x128xf32>
    %55 = arith.addf %48, %54 : vector<2x2x2x128xf32>
    %c0_34 = arith.constant 0 : index
    %c2_35 = arith.constant 2 : index
    %c2_36 = arith.constant 2 : index
    %c0_37 = arith.constant 0 : index
    %56 = vector.load %arg1[%c0_34, %c2_35, %c2_36, %c0_37] : memref<2x4x4x128xbf16, #tpu.memory_space<vmem>>, vector<2x2x2x128xbf16>
    %57 = arith.extf %56 : vector<2x2x2x128xbf16> to vector<2x2x2x128xf32>
    %58 = vector.extract_strided_slice %0 {offsets = [8, 0, 0, 0, 0], sizes = [1, 1, 1, 1, 128], strides = [1, 1, 1, 1, 1]} : vector<9x1x1x1x128xf32> to vector<1x1x1x1x128xf32>
    %59 = vector.shape_cast %58 : vector<1x1x1x1x128xf32> to vector<1x1x1x128xf32>
    %60 = vector.broadcast %59 : vector<1x1x1x128xf32> to vector<2x2x2x128xf32>
    %61 = arith.mulf %57, %60 : vector<2x2x2x128xf32>
    %62 = arith.addf %55, %61 : vector<2x2x2x128xf32>
    %c0_38 = arith.constant 0 : index
    %c0_39 = arith.constant 0 : index
    %c0_40 = arith.constant 0 : index
    %c0_41 = arith.constant 0 : index
    %63 = vector.load %arg3[%c0_38, %c0_39, %c0_40, %c0_41] : memref<1x1x1x128xf32, #tpu.memory_space<vmem>>, vector<1x1x1x128xf32>
    %64 = vector.broadcast %63 : vector<1x1x1x128xf32> to vector<2x2x2x128xf32>
    %65 = arith.addf %62, %64 : vector<2x2x2x128xf32>
    %cst = arith.constant 0.000000e+00 : f32
    %66 = vector.broadcast %cst : f32 to vector<2x2x2x128xf32>
    %67 = arith.maximumf %65, %66 : vector<2x2x2x128xf32>
    %68 = vector.shape_cast %67 : vector<2x2x2x128xf32> to vector<8x128xf32>
    %69 = arith.truncf %68 : vector<8x128xf32> to vector<8x128xbf16>
    %c0_42 = arith.constant 0 : index
    %c0_43 = arith.constant 0 : index
    %70 = vector.load %arg4[%c0_42, %c0_43] : memref<128x128xbf16, #tpu.memory_space<vmem>>, vector<128x128xbf16>
    %cst_44 = arith.constant dense<0.000000e+00> : vector<8x128xf32>
    %71 = tpu.matmul %69, %70, %cst_44 {dimension_numbers = #tpu.dot_dimension_numbers<[1], [0], [0], [1], [0, 0, 1, 1], [], []>} : vector<8x128xbf16>, vector<128x128xbf16>, vector<8x128xf32> -> vector<8x128xf32>
    %c0_45 = arith.constant 0 : index
    %c0_46 = arith.constant 0 : index
    %72 = vector.load %arg5[%c0_45, %c0_46] : memref<1x128xf32, #tpu.memory_space<vmem>>, vector<1x128xf32>
    %73 = vector.broadcast %72 : vector<1x128xf32> to vector<8x128xf32>
    %74 = arith.addf %71, %73 : vector<8x128xf32>
    %cst_47 = arith.constant 0.000000e+00 : f32
    %75 = vector.broadcast %cst_47 : f32 to vector<8x128xf32>
    %76 = arith.maximumf %74, %75 : vector<8x128xf32>
    %77 = arith.truncf %76 : vector<8x128xf32> to vector<8x128xbf16>
    %c0_48 = arith.constant 0 : index
    %c0_49 = arith.constant 0 : index
    %78 = vector.load %arg6[%c0_48, %c0_49] : memref<8x128xbf16, #tpu.memory_space<vmem>>, vector<8x128xbf16>
    tpu.vector_store %arg6[%c0_48, %c0_49], %77 {strides = array<i32>} : memref<8x128xbf16, #tpu.memory_space<vmem>>, vector<8x128xbf16>,
    return
  }
  func.func @transform_0(%arg0: i32) -> (i32, i32, i32, i32) {
    %c0_i32 = arith.constant 0 : i32
    %c0_i32_0 = arith.constant 0 : i32
    %c0_i32_1 = arith.constant 0 : i32
    %c0_i32_2 = arith.constant 0 : i32
    %c0_i32_3 = arith.constant 0 : i32
    return %c0_i32, %c0_i32_0, %c0_i32_1, %c0_i32_2 : i32, i32, i32, i32
  }
  func.func @transform_1(%arg0: i32) -> (i32, i32, i32, i32, i32) {
    %c0_i32 = arith.constant 0 : i32
    %c0_i32_0 = arith.constant 0 : i32
    %c0_i32_1 = arith.constant 0 : i32
    %c0_i32_2 = arith.constant 0 : i32
    %c0_i32_3 = arith.constant 0 : i32
    %c0_i32_4 = arith.constant 0 : i32
    return %c0_i32, %c0_i32_0, %c0_i32_1, %c0_i32_2, %c0_i32_3 : i32, i32, i32, i32, i32
  }
  func.func @transform_2(%arg0: i32) -> (i32, i32, i32, i32) {
    %c0_i32 = arith.constant 0 : i32
    %c0_i32_0 = arith.constant 0 : i32
    %c0_i32_1 = arith.constant 0 : i32
    %c0_i32_2 = arith.constant 0 : i32
    %c0_i32_3 = arith.constant 0 : i32
    return %c0_i32, %c0_i32_0, %c0_i32_1, %c0_i32_2 : i32, i32, i32, i32
  }
  func.func @transform_3(%arg0: i32) -> (i32, i32) {
    %c0_i32 = arith.constant 0 : i32
    %c0_i32_0 = arith.constant 0 : i32
    %c0_i32_1 = arith.constant 0 : i32
    return %c0_i32, %c0_i32_0 : i32, i32
  }
  func.func @transform_4(%arg0: i32) -> (i32, i32) {
    %c0_i32 = arith.constant 0 : i32
    %c0_i32_0 = arith.constant 0 : i32
    %c0_i32_1 = arith.constant 0 : i32
    return %c0_i32, %c0_i32_0 : i32, i32
  }
  func.func @transform_5(%arg0: i32) -> (i32, i32) {
    %c0_i32 = arith.constant 0 : i32
    %c0_i32_0 = arith.constant 0 : i32
    %c0_i32_1 = arith.constant 0 : i32
    return %c0_i32, %c0_i32_0 : i32, i32
  }
}

module attributes {stable_mosaic.version = 11 : i64} {
  func.func @_block_patch_kernel(%arg0: i32, %arg1: memref<9x8x64xbf16, #tpu.memory_space<vmem>>, %arg2: memref<9x1x64xf32, #tpu.memory_space<vmem>>, %arg3: memref<1x64xf32, #tpu.memory_space<vmem>>, %arg4: memref<64x128xbf16, #tpu.memory_space<vmem>>, %arg5: memref<1x128xf32, #tpu.memory_space<vmem>>, %arg6: memref<8x128xbf16, #tpu.memory_space<vmem>>) attributes {dimension_semantics = [#tpu.dimension_semantics<arbitrary>], iteration_bounds = array<i64: 1>, scalar_prefetch = 0 : i64, scratch_operands = 0 : i64, tpu.core_type = #tpu.core_type<tc>, window_params = [{pipeline_mode = #tpu.pipeline_mode<synchronous>, transform_indices = @transform_0, window_bounds = array<i64: 9, 8, 64>}, {pipeline_mode = #tpu.pipeline_mode<synchronous>, transform_indices = @transform_1, window_bounds = array<i64: 9, 1, 64>}, {pipeline_mode = #tpu.pipeline_mode<synchronous>, transform_indices = @transform_2, window_bounds = array<i64: 1, 64>}, {pipeline_mode = #tpu.pipeline_mode<synchronous>, transform_indices = @transform_3, window_bounds = array<i64: 64, 128>}, {pipeline_mode = #tpu.pipeline_mode<synchronous>, transform_indices = @transform_4, window_bounds = array<i64: 1, 128>}, {pipeline_mode = #tpu.pipeline_mode<synchronous>, transform_indices = @transform_5, window_bounds = array<i64: 8, 128>}]} {
    %c0 = arith.constant 0 : index
    %c0_0 = arith.constant 0 : index
    %c0_1 = arith.constant 0 : index
    %0 = vector.load %arg1[%c0, %c0_0, %c0_1] : memref<9x8x64xbf16, #tpu.memory_space<vmem>>, vector<1x8x64xbf16>
    %1 = vector.shape_cast %0 : vector<1x8x64xbf16> to vector<8x64xbf16>
    %2 = arith.extf %1 : vector<8x64xbf16> to vector<8x64xf32>
    %c0_2 = arith.constant 0 : index
    %c0_3 = arith.constant 0 : index
    %c0_4 = arith.constant 0 : index
    %3 = vector.load %arg2[%c0_2, %c0_3, %c0_4] : memref<9x1x64xf32, #tpu.memory_space<vmem>>, vector<1x1x64xf32>
    %4 = vector.shape_cast %3 : vector<1x1x64xf32> to vector<1x64xf32>
    %5 = vector.broadcast %4 : vector<1x64xf32> to vector<8x64xf32>
    %6 = arith.mulf %2, %5 : vector<8x64xf32>
    %c1 = arith.constant 1 : index
    %c0_5 = arith.constant 0 : index
    %c0_6 = arith.constant 0 : index
    %7 = vector.load %arg1[%c1, %c0_5, %c0_6] : memref<9x8x64xbf16, #tpu.memory_space<vmem>>, vector<1x8x64xbf16>
    %8 = vector.shape_cast %7 : vector<1x8x64xbf16> to vector<8x64xbf16>
    %9 = arith.extf %8 : vector<8x64xbf16> to vector<8x64xf32>
    %c1_7 = arith.constant 1 : index
    %c0_8 = arith.constant 0 : index
    %c0_9 = arith.constant 0 : index
    %10 = vector.load %arg2[%c1_7, %c0_8, %c0_9] : memref<9x1x64xf32, #tpu.memory_space<vmem>>, vector<1x1x64xf32>
    %11 = vector.shape_cast %10 : vector<1x1x64xf32> to vector<1x64xf32>
    %12 = vector.broadcast %11 : vector<1x64xf32> to vector<8x64xf32>
    %13 = arith.mulf %9, %12 : vector<8x64xf32>
    %14 = arith.addf %6, %13 : vector<8x64xf32>
    %c2 = arith.constant 2 : index
    %c0_10 = arith.constant 0 : index
    %c0_11 = arith.constant 0 : index
    %15 = vector.load %arg1[%c2, %c0_10, %c0_11] : memref<9x8x64xbf16, #tpu.memory_space<vmem>>, vector<1x8x64xbf16>
    %16 = vector.shape_cast %15 : vector<1x8x64xbf16> to vector<8x64xbf16>
    %17 = arith.extf %16 : vector<8x64xbf16> to vector<8x64xf32>
    %c2_12 = arith.constant 2 : index
    %c0_13 = arith.constant 0 : index
    %c0_14 = arith.constant 0 : index
    %18 = vector.load %arg2[%c2_12, %c0_13, %c0_14] : memref<9x1x64xf32, #tpu.memory_space<vmem>>, vector<1x1x64xf32>
    %19 = vector.shape_cast %18 : vector<1x1x64xf32> to vector<1x64xf32>
    %20 = vector.broadcast %19 : vector<1x64xf32> to vector<8x64xf32>
    %21 = arith.mulf %17, %20 : vector<8x64xf32>
    %22 = arith.addf %14, %21 : vector<8x64xf32>
    %c3 = arith.constant 3 : index
    %c0_15 = arith.constant 0 : index
    %c0_16 = arith.constant 0 : index
    %23 = vector.load %arg1[%c3, %c0_15, %c0_16] : memref<9x8x64xbf16, #tpu.memory_space<vmem>>, vector<1x8x64xbf16>
    %24 = vector.shape_cast %23 : vector<1x8x64xbf16> to vector<8x64xbf16>
    %25 = arith.extf %24 : vector<8x64xbf16> to vector<8x64xf32>
    %c3_17 = arith.constant 3 : index
    %c0_18 = arith.constant 0 : index
    %c0_19 = arith.constant 0 : index
    %26 = vector.load %arg2[%c3_17, %c0_18, %c0_19] : memref<9x1x64xf32, #tpu.memory_space<vmem>>, vector<1x1x64xf32>
    %27 = vector.shape_cast %26 : vector<1x1x64xf32> to vector<1x64xf32>
    %28 = vector.broadcast %27 : vector<1x64xf32> to vector<8x64xf32>
    %29 = arith.mulf %25, %28 : vector<8x64xf32>
    %30 = arith.addf %22, %29 : vector<8x64xf32>
    %c4 = arith.constant 4 : index
    %c0_20 = arith.constant 0 : index
    %c0_21 = arith.constant 0 : index
    %31 = vector.load %arg1[%c4, %c0_20, %c0_21] : memref<9x8x64xbf16, #tpu.memory_space<vmem>>, vector<1x8x64xbf16>
    %32 = vector.shape_cast %31 : vector<1x8x64xbf16> to vector<8x64xbf16>
    %33 = arith.extf %32 : vector<8x64xbf16> to vector<8x64xf32>
    %c4_22 = arith.constant 4 : index
    %c0_23 = arith.constant 0 : index
    %c0_24 = arith.constant 0 : index
    %34 = vector.load %arg2[%c4_22, %c0_23, %c0_24] : memref<9x1x64xf32, #tpu.memory_space<vmem>>, vector<1x1x64xf32>
    %35 = vector.shape_cast %34 : vector<1x1x64xf32> to vector<1x64xf32>
    %36 = vector.broadcast %35 : vector<1x64xf32> to vector<8x64xf32>
    %37 = arith.mulf %33, %36 : vector<8x64xf32>
    %38 = arith.addf %30, %37 : vector<8x64xf32>
    %c5 = arith.constant 5 : index
    %c0_25 = arith.constant 0 : index
    %c0_26 = arith.constant 0 : index
    %39 = vector.load %arg1[%c5, %c0_25, %c0_26] : memref<9x8x64xbf16, #tpu.memory_space<vmem>>, vector<1x8x64xbf16>
    %40 = vector.shape_cast %39 : vector<1x8x64xbf16> to vector<8x64xbf16>
    %41 = arith.extf %40 : vector<8x64xbf16> to vector<8x64xf32>
    %c5_27 = arith.constant 5 : index
    %c0_28 = arith.constant 0 : index
    %c0_29 = arith.constant 0 : index
    %42 = vector.load %arg2[%c5_27, %c0_28, %c0_29] : memref<9x1x64xf32, #tpu.memory_space<vmem>>, vector<1x1x64xf32>
    %43 = vector.shape_cast %42 : vector<1x1x64xf32> to vector<1x64xf32>
    %44 = vector.broadcast %43 : vector<1x64xf32> to vector<8x64xf32>
    %45 = arith.mulf %41, %44 : vector<8x64xf32>
    %46 = arith.addf %38, %45 : vector<8x64xf32>
    %c6 = arith.constant 6 : index
    %c0_30 = arith.constant 0 : index
    %c0_31 = arith.constant 0 : index
    %47 = vector.load %arg1[%c6, %c0_30, %c0_31] : memref<9x8x64xbf16, #tpu.memory_space<vmem>>, vector<1x8x64xbf16>
    %48 = vector.shape_cast %47 : vector<1x8x64xbf16> to vector<8x64xbf16>
    %49 = arith.extf %48 : vector<8x64xbf16> to vector<8x64xf32>
    %c6_32 = arith.constant 6 : index
    %c0_33 = arith.constant 0 : index
    %c0_34 = arith.constant 0 : index
    %50 = vector.load %arg2[%c6_32, %c0_33, %c0_34] : memref<9x1x64xf32, #tpu.memory_space<vmem>>, vector<1x1x64xf32>
    %51 = vector.shape_cast %50 : vector<1x1x64xf32> to vector<1x64xf32>
    %52 = vector.broadcast %51 : vector<1x64xf32> to vector<8x64xf32>
    %53 = arith.mulf %49, %52 : vector<8x64xf32>
    %54 = arith.addf %46, %53 : vector<8x64xf32>
    %c7 = arith.constant 7 : index
    %c0_35 = arith.constant 0 : index
    %c0_36 = arith.constant 0 : index
    %55 = vector.load %arg1[%c7, %c0_35, %c0_36] : memref<9x8x64xbf16, #tpu.memory_space<vmem>>, vector<1x8x64xbf16>
    %56 = vector.shape_cast %55 : vector<1x8x64xbf16> to vector<8x64xbf16>
    %57 = arith.extf %56 : vector<8x64xbf16> to vector<8x64xf32>
    %c7_37 = arith.constant 7 : index
    %c0_38 = arith.constant 0 : index
    %c0_39 = arith.constant 0 : index
    %58 = vector.load %arg2[%c7_37, %c0_38, %c0_39] : memref<9x1x64xf32, #tpu.memory_space<vmem>>, vector<1x1x64xf32>
    %59 = vector.shape_cast %58 : vector<1x1x64xf32> to vector<1x64xf32>
    %60 = vector.broadcast %59 : vector<1x64xf32> to vector<8x64xf32>
    %61 = arith.mulf %57, %60 : vector<8x64xf32>
    %62 = arith.addf %54, %61 : vector<8x64xf32>
    %c8 = arith.constant 8 : index
    %c0_40 = arith.constant 0 : index
    %c0_41 = arith.constant 0 : index
    %63 = vector.load %arg1[%c8, %c0_40, %c0_41] : memref<9x8x64xbf16, #tpu.memory_space<vmem>>, vector<1x8x64xbf16>
    %64 = vector.shape_cast %63 : vector<1x8x64xbf16> to vector<8x64xbf16>
    %65 = arith.extf %64 : vector<8x64xbf16> to vector<8x64xf32>
    %c8_42 = arith.constant 8 : index
    %c0_43 = arith.constant 0 : index
    %c0_44 = arith.constant 0 : index
    %66 = vector.load %arg2[%c8_42, %c0_43, %c0_44] : memref<9x1x64xf32, #tpu.memory_space<vmem>>, vector<1x1x64xf32>
    %67 = vector.shape_cast %66 : vector<1x1x64xf32> to vector<1x64xf32>
    %68 = vector.broadcast %67 : vector<1x64xf32> to vector<8x64xf32>
    %69 = arith.mulf %65, %68 : vector<8x64xf32>
    %70 = arith.addf %62, %69 : vector<8x64xf32>
    %c0_45 = arith.constant 0 : index
    %c0_46 = arith.constant 0 : index
    %71 = vector.load %arg3[%c0_45, %c0_46] : memref<1x64xf32, #tpu.memory_space<vmem>>, vector<1x64xf32>
    %72 = vector.broadcast %71 : vector<1x64xf32> to vector<8x64xf32>
    %73 = arith.addf %70, %72 : vector<8x64xf32>
    %cst = arith.constant 0.000000e+00 : f32
    %74 = vector.broadcast %cst : f32 to vector<8x64xf32>
    %75 = arith.maximumf %73, %74 : vector<8x64xf32>
    %76 = arith.truncf %75 : vector<8x64xf32> to vector<8x64xbf16>
    %c0_47 = arith.constant 0 : index
    %c0_48 = arith.constant 0 : index
    %77 = vector.load %arg4[%c0_47, %c0_48] : memref<64x128xbf16, #tpu.memory_space<vmem>>, vector<64x128xbf16>
    %cst_49 = arith.constant dense<0.000000e+00> : vector<8x128xf32>
    %78 = tpu.matmul %76, %77, %cst_49 {dimension_numbers = #tpu.dot_dimension_numbers<[1], [0], [0], [1], [0, 0, 1, 1], [], []>} : vector<8x64xbf16>, vector<64x128xbf16>, vector<8x128xf32> -> vector<8x128xf32>
    %c0_50 = arith.constant 0 : index
    %c0_51 = arith.constant 0 : index
    %79 = vector.load %arg5[%c0_50, %c0_51] : memref<1x128xf32, #tpu.memory_space<vmem>>, vector<1x128xf32>
    %80 = vector.broadcast %79 : vector<1x128xf32> to vector<8x128xf32>
    %81 = arith.addf %78, %80 : vector<8x128xf32>
    %cst_52 = arith.constant 0.000000e+00 : f32
    %82 = vector.broadcast %cst_52 : f32 to vector<8x128xf32>
    %83 = arith.maximumf %81, %82 : vector<8x128xf32>
    %84 = arith.truncf %83 : vector<8x128xf32> to vector<8x128xbf16>
    %c0_53 = arith.constant 0 : index
    %c0_54 = arith.constant 0 : index
    %85 = vector.load %arg6[%c0_53, %c0_54] : memref<8x128xbf16, #tpu.memory_space<vmem>>, vector<8x128xbf16>
    tpu.vector_store %arg6[%c0_53, %c0_54], %84 {strides = array<i32>} : memref<8x128xbf16, #tpu.memory_space<vmem>>, vector<8x128xbf16>,
    return
  }
  func.func @transform_0(%arg0: i32) -> (i32, i32, i32) {
    %c0_i32 = arith.constant 0 : i32
    %c0_i32_0 = arith.constant 0 : i32
    %c0_i32_1 = arith.constant 0 : i32
    %c0_i32_2 = arith.constant 0 : i32
    return %c0_i32, %c0_i32_0, %c0_i32_1 : i32, i32, i32
  }
  func.func @transform_1(%arg0: i32) -> (i32, i32, i32) {
    %c0_i32 = arith.constant 0 : i32
    %c0_i32_0 = arith.constant 0 : i32
    %c0_i32_1 = arith.constant 0 : i32
    %c0_i32_2 = arith.constant 0 : i32
    return %c0_i32, %c0_i32_0, %c0_i32_1 : i32, i32, i32
  }
  func.func @transform_2(%arg0: i32) -> (i32, i32) {
    %c0_i32 = arith.constant 0 : i32
    %c0_i32_0 = arith.constant 0 : i32
    %c0_i32_1 = arith.constant 0 : i32
    return %c0_i32, %c0_i32_0 : i32, i32
  }
  func.func @transform_3(%arg0: i32) -> (i32, i32) {
    %c0_i32 = arith.constant 0 : i32
    %c0_i32_0 = arith.constant 0 : i32
    %c0_i32_1 = arith.constant 0 : i32
    return %c0_i32, %c0_i32_0 : i32, i32
  }
  func.func @transform_4(%arg0: i32) -> (i32, i32) {
    %c0_i32 = arith.constant 0 : i32
    %c0_i32_0 = arith.constant 0 : i32
    %c0_i32_1 = arith.constant 0 : i32
    return %c0_i32, %c0_i32_0 : i32, i32
  }
  func.func @transform_5(%arg0: i32) -> (i32, i32) {
    %c0_i32 = arith.constant 0 : i32
    %c0_i32_0 = arith.constant 0 : i32
    %c0_i32_1 = arith.constant 0 : i32
    return %c0_i32, %c0_i32_0 : i32, i32
  }
}

module attributes {stable_mosaic.version = 11 : i64} {
  func.func @_block_patch_kernel(%arg0: i32, %arg1: memref<9x2x128xbf16, #tpu.memory_space<vmem>>, %arg2: memref<9x1x128xf32, #tpu.memory_space<vmem>>, %arg3: memref<1x128xf32, #tpu.memory_space<vmem>>, %arg4: memref<128x256xbf16, #tpu.memory_space<vmem>>, %arg5: memref<1x256xf32, #tpu.memory_space<vmem>>, %arg6: memref<2x256xbf16, #tpu.memory_space<vmem>>) attributes {dimension_semantics = [#tpu.dimension_semantics<arbitrary>], iteration_bounds = array<i64: 1>, scalar_prefetch = 0 : i64, scratch_operands = 0 : i64, tpu.core_type = #tpu.core_type<tc>, window_params = [{pipeline_mode = #tpu.pipeline_mode<synchronous>, transform_indices = @transform_0, window_bounds = array<i64: 9, 2, 128>}, {pipeline_mode = #tpu.pipeline_mode<synchronous>, transform_indices = @transform_1, window_bounds = array<i64: 9, 1, 128>}, {pipeline_mode = #tpu.pipeline_mode<synchronous>, transform_indices = @transform_2, window_bounds = array<i64: 1, 128>}, {pipeline_mode = #tpu.pipeline_mode<synchronous>, transform_indices = @transform_3, window_bounds = array<i64: 128, 256>}, {pipeline_mode = #tpu.pipeline_mode<synchronous>, transform_indices = @transform_4, window_bounds = array<i64: 1, 256>}, {pipeline_mode = #tpu.pipeline_mode<synchronous>, transform_indices = @transform_5, window_bounds = array<i64: 2, 256>}]} {
    %c0 = arith.constant 0 : index
    %c0_0 = arith.constant 0 : index
    %c0_1 = arith.constant 0 : index
    %0 = vector.load %arg1[%c0, %c0_0, %c0_1] : memref<9x2x128xbf16, #tpu.memory_space<vmem>>, vector<1x2x128xbf16>
    %1 = vector.shape_cast %0 : vector<1x2x128xbf16> to vector<2x128xbf16>
    %2 = arith.extf %1 : vector<2x128xbf16> to vector<2x128xf32>
    %c0_2 = arith.constant 0 : index
    %c0_3 = arith.constant 0 : index
    %c0_4 = arith.constant 0 : index
    %3 = vector.load %arg2[%c0_2, %c0_3, %c0_4] : memref<9x1x128xf32, #tpu.memory_space<vmem>>, vector<1x1x128xf32>
    %4 = vector.shape_cast %3 : vector<1x1x128xf32> to vector<1x128xf32>
    %5 = vector.broadcast %4 : vector<1x128xf32> to vector<2x128xf32>
    %6 = arith.mulf %2, %5 : vector<2x128xf32>
    %c1 = arith.constant 1 : index
    %c0_5 = arith.constant 0 : index
    %c0_6 = arith.constant 0 : index
    %7 = vector.load %arg1[%c1, %c0_5, %c0_6] : memref<9x2x128xbf16, #tpu.memory_space<vmem>>, vector<1x2x128xbf16>
    %8 = vector.shape_cast %7 : vector<1x2x128xbf16> to vector<2x128xbf16>
    %9 = arith.extf %8 : vector<2x128xbf16> to vector<2x128xf32>
    %c1_7 = arith.constant 1 : index
    %c0_8 = arith.constant 0 : index
    %c0_9 = arith.constant 0 : index
    %10 = vector.load %arg2[%c1_7, %c0_8, %c0_9] : memref<9x1x128xf32, #tpu.memory_space<vmem>>, vector<1x1x128xf32>
    %11 = vector.shape_cast %10 : vector<1x1x128xf32> to vector<1x128xf32>
    %12 = vector.broadcast %11 : vector<1x128xf32> to vector<2x128xf32>
    %13 = arith.mulf %9, %12 : vector<2x128xf32>
    %14 = arith.addf %6, %13 : vector<2x128xf32>
    %c2 = arith.constant 2 : index
    %c0_10 = arith.constant 0 : index
    %c0_11 = arith.constant 0 : index
    %15 = vector.load %arg1[%c2, %c0_10, %c0_11] : memref<9x2x128xbf16, #tpu.memory_space<vmem>>, vector<1x2x128xbf16>
    %16 = vector.shape_cast %15 : vector<1x2x128xbf16> to vector<2x128xbf16>
    %17 = arith.extf %16 : vector<2x128xbf16> to vector<2x128xf32>
    %c2_12 = arith.constant 2 : index
    %c0_13 = arith.constant 0 : index
    %c0_14 = arith.constant 0 : index
    %18 = vector.load %arg2[%c2_12, %c0_13, %c0_14] : memref<9x1x128xf32, #tpu.memory_space<vmem>>, vector<1x1x128xf32>
    %19 = vector.shape_cast %18 : vector<1x1x128xf32> to vector<1x128xf32>
    %20 = vector.broadcast %19 : vector<1x128xf32> to vector<2x128xf32>
    %21 = arith.mulf %17, %20 : vector<2x128xf32>
    %22 = arith.addf %14, %21 : vector<2x128xf32>
    %c3 = arith.constant 3 : index
    %c0_15 = arith.constant 0 : index
    %c0_16 = arith.constant 0 : index
    %23 = vector.load %arg1[%c3, %c0_15, %c0_16] : memref<9x2x128xbf16, #tpu.memory_space<vmem>>, vector<1x2x128xbf16>
    %24 = vector.shape_cast %23 : vector<1x2x128xbf16> to vector<2x128xbf16>
    %25 = arith.extf %24 : vector<2x128xbf16> to vector<2x128xf32>
    %c3_17 = arith.constant 3 : index
    %c0_18 = arith.constant 0 : index
    %c0_19 = arith.constant 0 : index
    %26 = vector.load %arg2[%c3_17, %c0_18, %c0_19] : memref<9x1x128xf32, #tpu.memory_space<vmem>>, vector<1x1x128xf32>
    %27 = vector.shape_cast %26 : vector<1x1x128xf32> to vector<1x128xf32>
    %28 = vector.broadcast %27 : vector<1x128xf32> to vector<2x128xf32>
    %29 = arith.mulf %25, %28 : vector<2x128xf32>
    %30 = arith.addf %22, %29 : vector<2x128xf32>
    %c4 = arith.constant 4 : index
    %c0_20 = arith.constant 0 : index
    %c0_21 = arith.constant 0 : index
    %31 = vector.load %arg1[%c4, %c0_20, %c0_21] : memref<9x2x128xbf16, #tpu.memory_space<vmem>>, vector<1x2x128xbf16>
    %32 = vector.shape_cast %31 : vector<1x2x128xbf16> to vector<2x128xbf16>
    %33 = arith.extf %32 : vector<2x128xbf16> to vector<2x128xf32>
    %c4_22 = arith.constant 4 : index
    %c0_23 = arith.constant 0 : index
    %c0_24 = arith.constant 0 : index
    %34 = vector.load %arg2[%c4_22, %c0_23, %c0_24] : memref<9x1x128xf32, #tpu.memory_space<vmem>>, vector<1x1x128xf32>
    %35 = vector.shape_cast %34 : vector<1x1x128xf32> to vector<1x128xf32>
    %36 = vector.broadcast %35 : vector<1x128xf32> to vector<2x128xf32>
    %37 = arith.mulf %33, %36 : vector<2x128xf32>
    %38 = arith.addf %30, %37 : vector<2x128xf32>
    %c5 = arith.constant 5 : index
    %c0_25 = arith.constant 0 : index
    %c0_26 = arith.constant 0 : index
    %39 = vector.load %arg1[%c5, %c0_25, %c0_26] : memref<9x2x128xbf16, #tpu.memory_space<vmem>>, vector<1x2x128xbf16>
    %40 = vector.shape_cast %39 : vector<1x2x128xbf16> to vector<2x128xbf16>
    %41 = arith.extf %40 : vector<2x128xbf16> to vector<2x128xf32>
    %c5_27 = arith.constant 5 : index
    %c0_28 = arith.constant 0 : index
    %c0_29 = arith.constant 0 : index
    %42 = vector.load %arg2[%c5_27, %c0_28, %c0_29] : memref<9x1x128xf32, #tpu.memory_space<vmem>>, vector<1x1x128xf32>
    %43 = vector.shape_cast %42 : vector<1x1x128xf32> to vector<1x128xf32>
    %44 = vector.broadcast %43 : vector<1x128xf32> to vector<2x128xf32>
    %45 = arith.mulf %41, %44 : vector<2x128xf32>
    %46 = arith.addf %38, %45 : vector<2x128xf32>
    %c6 = arith.constant 6 : index
    %c0_30 = arith.constant 0 : index
    %c0_31 = arith.constant 0 : index
    %47 = vector.load %arg1[%c6, %c0_30, %c0_31] : memref<9x2x128xbf16, #tpu.memory_space<vmem>>, vector<1x2x128xbf16>
    %48 = vector.shape_cast %47 : vector<1x2x128xbf16> to vector<2x128xbf16>
    %49 = arith.extf %48 : vector<2x128xbf16> to vector<2x128xf32>
    %c6_32 = arith.constant 6 : index
    %c0_33 = arith.constant 0 : index
    %c0_34 = arith.constant 0 : index
    %50 = vector.load %arg2[%c6_32, %c0_33, %c0_34] : memref<9x1x128xf32, #tpu.memory_space<vmem>>, vector<1x1x128xf32>
    %51 = vector.shape_cast %50 : vector<1x1x128xf32> to vector<1x128xf32>
    %52 = vector.broadcast %51 : vector<1x128xf32> to vector<2x128xf32>
    %53 = arith.mulf %49, %52 : vector<2x128xf32>
    %54 = arith.addf %46, %53 : vector<2x128xf32>
    %c7 = arith.constant 7 : index
    %c0_35 = arith.constant 0 : index
    %c0_36 = arith.constant 0 : index
    %55 = vector.load %arg1[%c7, %c0_35, %c0_36] : memref<9x2x128xbf16, #tpu.memory_space<vmem>>, vector<1x2x128xbf16>
    %56 = vector.shape_cast %55 : vector<1x2x128xbf16> to vector<2x128xbf16>
    %57 = arith.extf %56 : vector<2x128xbf16> to vector<2x128xf32>
    %c7_37 = arith.constant 7 : index
    %c0_38 = arith.constant 0 : index
    %c0_39 = arith.constant 0 : index
    %58 = vector.load %arg2[%c7_37, %c0_38, %c0_39] : memref<9x1x128xf32, #tpu.memory_space<vmem>>, vector<1x1x128xf32>
    %59 = vector.shape_cast %58 : vector<1x1x128xf32> to vector<1x128xf32>
    %60 = vector.broadcast %59 : vector<1x128xf32> to vector<2x128xf32>
    %61 = arith.mulf %57, %60 : vector<2x128xf32>
    %62 = arith.addf %54, %61 : vector<2x128xf32>
    %c8 = arith.constant 8 : index
    %c0_40 = arith.constant 0 : index
    %c0_41 = arith.constant 0 : index
    %63 = vector.load %arg1[%c8, %c0_40, %c0_41] : memref<9x2x128xbf16, #tpu.memory_space<vmem>>, vector<1x2x128xbf16>
    %64 = vector.shape_cast %63 : vector<1x2x128xbf16> to vector<2x128xbf16>
    %65 = arith.extf %64 : vector<2x128xbf16> to vector<2x128xf32>
    %c8_42 = arith.constant 8 : index
    %c0_43 = arith.constant 0 : index
    %c0_44 = arith.constant 0 : index
    %66 = vector.load %arg2[%c8_42, %c0_43, %c0_44] : memref<9x1x128xf32, #tpu.memory_space<vmem>>, vector<1x1x128xf32>
    %67 = vector.shape_cast %66 : vector<1x1x128xf32> to vector<1x128xf32>
    %68 = vector.broadcast %67 : vector<1x128xf32> to vector<2x128xf32>
    %69 = arith.mulf %65, %68 : vector<2x128xf32>
    %70 = arith.addf %62, %69 : vector<2x128xf32>
    %c0_45 = arith.constant 0 : index
    %c0_46 = arith.constant 0 : index
    %71 = vector.load %arg3[%c0_45, %c0_46] : memref<1x128xf32, #tpu.memory_space<vmem>>, vector<1x128xf32>
    %72 = vector.broadcast %71 : vector<1x128xf32> to vector<2x128xf32>
    %73 = arith.addf %70, %72 : vector<2x128xf32>
    %cst = arith.constant 0.000000e+00 : f32
    %74 = vector.broadcast %cst : f32 to vector<2x128xf32>
    %75 = arith.maximumf %73, %74 : vector<2x128xf32>
    %76 = arith.truncf %75 : vector<2x128xf32> to vector<2x128xbf16>
    %c0_47 = arith.constant 0 : index
    %c0_48 = arith.constant 0 : index
    %77 = vector.load %arg4[%c0_47, %c0_48] : memref<128x256xbf16, #tpu.memory_space<vmem>>, vector<128x256xbf16>
    %cst_49 = arith.constant dense<0.000000e+00> : vector<2x256xf32>
    %78 = tpu.matmul %76, %77, %cst_49 {dimension_numbers = #tpu.dot_dimension_numbers<[1], [0], [0], [1], [0, 0, 1, 1], [], []>} : vector<2x128xbf16>, vector<128x256xbf16>, vector<2x256xf32> -> vector<2x256xf32>
    %c0_50 = arith.constant 0 : index
    %c0_51 = arith.constant 0 : index
    %79 = vector.load %arg5[%c0_50, %c0_51] : memref<1x256xf32, #tpu.memory_space<vmem>>, vector<1x256xf32>
    %80 = vector.broadcast %79 : vector<1x256xf32> to vector<2x256xf32>
    %81 = arith.addf %78, %80 : vector<2x256xf32>
    %cst_52 = arith.constant 0.000000e+00 : f32
    %82 = vector.broadcast %cst_52 : f32 to vector<2x256xf32>
    %83 = arith.maximumf %81, %82 : vector<2x256xf32>
    %84 = arith.truncf %83 : vector<2x256xf32> to vector<2x256xbf16>
    %c0_53 = arith.constant 0 : index
    %c0_54 = arith.constant 0 : index
    %85 = vector.load %arg6[%c0_53, %c0_54] : memref<2x256xbf16, #tpu.memory_space<vmem>>, vector<2x256xbf16>
    tpu.vector_store %arg6[%c0_53, %c0_54], %84 {strides = array<i32>} : memref<2x256xbf16, #tpu.memory_space<vmem>>, vector<2x256xbf16>,
    return
  }
  func.func @transform_0(%arg0: i32) -> (i32, i32, i32) {
    %c0_i32 = arith.constant 0 : i32
    %c0_i32_0 = arith.constant 0 : i32
    %c0_i32_1 = arith.constant 0 : i32
    %c0_i32_2 = arith.constant 0 : i32
    return %c0_i32, %c0_i32_0, %c0_i32_1 : i32, i32, i32
  }
  func.func @transform_1(%arg0: i32) -> (i32, i32, i32) {
    %c0_i32 = arith.constant 0 : i32
    %c0_i32_0 = arith.constant 0 : i32
    %c0_i32_1 = arith.constant 0 : i32
    %c0_i32_2 = arith.constant 0 : i32
    return %c0_i32, %c0_i32_0, %c0_i32_1 : i32, i32, i32
  }
  func.func @transform_2(%arg0: i32) -> (i32, i32) {
    %c0_i32 = arith.constant 0 : i32
    %c0_i32_0 = arith.constant 0 : i32
    %c0_i32_1 = arith.constant 0 : i32
    return %c0_i32, %c0_i32_0 : i32, i32
  }
  func.func @transform_3(%arg0: i32) -> (i32, i32) {
    %c0_i32 = arith.constant 0 : i32
    %c0_i32_0 = arith.constant 0 : i32
    %c0_i32_1 = arith.constant 0 : i32
    return %c0_i32, %c0_i32_0 : i32, i32
  }
  func.func @transform_4(%arg0: i32) -> (i32, i32) {
    %c0_i32 = arith.constant 0 : i32
    %c0_i32_0 = arith.constant 0 : i32
    %c0_i32_1 = arith.constant 0 : i32
    return %c0_i32, %c0_i32_0 : i32, i32
  }
  func.func @transform_5(%arg0: i32) -> (i32, i32) {
    %c0_i32 = arith.constant 0 : i32
    %c0_i32_0 = arith.constant 0 : i32
    %c0_i32_1 = arith.constant 0 : i32
    return %c0_i32, %c0_i32_0 : i32, i32
  }
}

module attributes {stable_mosaic.version = 11 : i64} {
  func.func @_block_pad_head_kernel(%arg0: i32, %arg1: memref<2x3x3x256xbf16, #tpu.memory_space<vmem>>, %arg2: memref<9x1x1x1x256xf32, #tpu.memory_space<vmem>>, %arg3: memref<1x1x1x256xf32, #tpu.memory_space<vmem>>, %arg4: memref<256x256xbf16, #tpu.memory_space<vmem>>, %arg5: memref<1x256xf32, #tpu.memory_space<vmem>>, %arg6: memref<256x2xf32, #tpu.memory_space<vmem>>, %arg7: memref<1x2xf32, #tpu.memory_space<vmem>>, %arg8: memref<2x2xf32, #tpu.memory_space<vmem>>) attributes {dimension_semantics = [#tpu.dimension_semantics<arbitrary>], iteration_bounds = array<i64: 1>, scalar_prefetch = 0 : i64, scratch_operands = 0 : i64, tpu.core_type = #tpu.core_type<tc>, window_params = [{pipeline_mode = #tpu.pipeline_mode<synchronous>, transform_indices = @transform_0, window_bounds = array<i64: 2, 3, 3, 256>}, {pipeline_mode = #tpu.pipeline_mode<synchronous>, transform_indices = @transform_1, window_bounds = array<i64: 9, 1, 1, 1, 256>}, {pipeline_mode = #tpu.pipeline_mode<synchronous>, transform_indices = @transform_2, window_bounds = array<i64: 1, 1, 1, 256>}, {pipeline_mode = #tpu.pipeline_mode<synchronous>, transform_indices = @transform_3, window_bounds = array<i64: 256, 256>}, {pipeline_mode = #tpu.pipeline_mode<synchronous>, transform_indices = @transform_4, window_bounds = array<i64: 1, 256>}, {pipeline_mode = #tpu.pipeline_mode<synchronous>, transform_indices = @transform_5, window_bounds = array<i64: 256, 2>}, {pipeline_mode = #tpu.pipeline_mode<synchronous>, transform_indices = @transform_6, window_bounds = array<i64: 1, 2>}, {pipeline_mode = #tpu.pipeline_mode<synchronous>, transform_indices = @transform_7, window_bounds = array<i64: 2, 2>}]} {
    %c0 = arith.constant 0 : index
    %c0_0 = arith.constant 0 : index
    %c0_1 = arith.constant 0 : index
    %c0_2 = arith.constant 0 : index
    %c0_3 = arith.constant 0 : index
    %0 = vector.load %arg2[%c0, %c0_0, %c0_1, %c0_2, %c0_3] : memref<9x1x1x1x256xf32, #tpu.memory_space<vmem>>, vector<9x1x1x1x256xf32>
    %c0_4 = arith.constant 0 : index
    %c0_5 = arith.constant 0 : index
    %c0_6 = arith.constant 0 : index
    %c0_7 = arith.constant 0 : index
    %1 = vector.load %arg1[%c0_4, %c0_5, %c0_6, %c0_7] : memref<2x3x3x256xbf16, #tpu.memory_space<vmem>>, vector<2x1x1x256xbf16>
    %2 = arith.extf %1 : vector<2x1x1x256xbf16> to vector<2x1x1x256xf32>
    %3 = vector.extract_strided_slice %0 {offsets = [0, 0, 0, 0, 0], sizes = [1, 1, 1, 1, 256], strides = [1, 1, 1, 1, 1]} : vector<9x1x1x1x256xf32> to vector<1x1x1x1x256xf32>
    %4 = vector.shape_cast %3 : vector<1x1x1x1x256xf32> to vector<1x1x1x256xf32>
    %5 = vector.broadcast %4 : vector<1x1x1x256xf32> to vector<2x1x1x256xf32>
    %6 = arith.mulf %2, %5 : vector<2x1x1x256xf32>
    %c0_8 = arith.constant 0 : index
    %c0_9 = arith.constant 0 : index
    %c1 = arith.constant 1 : index
    %c0_10 = arith.constant 0 : index
    %7 = vector.load %arg1[%c0_8, %c0_9, %c1, %c0_10] : memref<2x3x3x256xbf16, #tpu.memory_space<vmem>>, vector<2x1x1x256xbf16>
    %8 = arith.extf %7 : vector<2x1x1x256xbf16> to vector<2x1x1x256xf32>
    %9 = vector.extract_strided_slice %0 {offsets = [1, 0, 0, 0, 0], sizes = [1, 1, 1, 1, 256], strides = [1, 1, 1, 1, 1]} : vector<9x1x1x1x256xf32> to vector<1x1x1x1x256xf32>
    %10 = vector.shape_cast %9 : vector<1x1x1x1x256xf32> to vector<1x1x1x256xf32>
    %11 = vector.broadcast %10 : vector<1x1x1x256xf32> to vector<2x1x1x256xf32>
    %12 = arith.mulf %8, %11 : vector<2x1x1x256xf32>
    %13 = arith.addf %6, %12 : vector<2x1x1x256xf32>
    %c0_11 = arith.constant 0 : index
    %c0_12 = arith.constant 0 : index
    %c2 = arith.constant 2 : index
    %c0_13 = arith.constant 0 : index
    %14 = vector.load %arg1[%c0_11, %c0_12, %c2, %c0_13] : memref<2x3x3x256xbf16, #tpu.memory_space<vmem>>, vector<2x1x1x256xbf16>
    %15 = arith.extf %14 : vector<2x1x1x256xbf16> to vector<2x1x1x256xf32>
    %16 = vector.extract_strided_slice %0 {offsets = [2, 0, 0, 0, 0], sizes = [1, 1, 1, 1, 256], strides = [1, 1, 1, 1, 1]} : vector<9x1x1x1x256xf32> to vector<1x1x1x1x256xf32>
    %17 = vector.shape_cast %16 : vector<1x1x1x1x256xf32> to vector<1x1x1x256xf32>
    %18 = vector.broadcast %17 : vector<1x1x1x256xf32> to vector<2x1x1x256xf32>
    %19 = arith.mulf %15, %18 : vector<2x1x1x256xf32>
    %20 = arith.addf %13, %19 : vector<2x1x1x256xf32>
    %c0_14 = arith.constant 0 : index
    %c1_15 = arith.constant 1 : index
    %c0_16 = arith.constant 0 : index
    %c0_17 = arith.constant 0 : index
    %21 = vector.load %arg1[%c0_14, %c1_15, %c0_16, %c0_17] : memref<2x3x3x256xbf16, #tpu.memory_space<vmem>>, vector<2x1x1x256xbf16>
    %22 = arith.extf %21 : vector<2x1x1x256xbf16> to vector<2x1x1x256xf32>
    %23 = vector.extract_strided_slice %0 {offsets = [3, 0, 0, 0, 0], sizes = [1, 1, 1, 1, 256], strides = [1, 1, 1, 1, 1]} : vector<9x1x1x1x256xf32> to vector<1x1x1x1x256xf32>
    %24 = vector.shape_cast %23 : vector<1x1x1x1x256xf32> to vector<1x1x1x256xf32>
    %25 = vector.broadcast %24 : vector<1x1x1x256xf32> to vector<2x1x1x256xf32>
    %26 = arith.mulf %22, %25 : vector<2x1x1x256xf32>
    %27 = arith.addf %20, %26 : vector<2x1x1x256xf32>
    %c0_18 = arith.constant 0 : index
    %c1_19 = arith.constant 1 : index
    %c1_20 = arith.constant 1 : index
    %c0_21 = arith.constant 0 : index
    %28 = vector.load %arg1[%c0_18, %c1_19, %c1_20, %c0_21] : memref<2x3x3x256xbf16, #tpu.memory_space<vmem>>, vector<2x1x1x256xbf16>
    %29 = arith.extf %28 : vector<2x1x1x256xbf16> to vector<2x1x1x256xf32>
    %30 = vector.extract_strided_slice %0 {offsets = [4, 0, 0, 0, 0], sizes = [1, 1, 1, 1, 256], strides = [1, 1, 1, 1, 1]} : vector<9x1x1x1x256xf32> to vector<1x1x1x1x256xf32>
    %31 = vector.shape_cast %30 : vector<1x1x1x1x256xf32> to vector<1x1x1x256xf32>
    %32 = vector.broadcast %31 : vector<1x1x1x256xf32> to vector<2x1x1x256xf32>
    %33 = arith.mulf %29, %32 : vector<2x1x1x256xf32>
    %34 = arith.addf %27, %33 : vector<2x1x1x256xf32>
    %c0_22 = arith.constant 0 : index
    %c1_23 = arith.constant 1 : index
    %c2_24 = arith.constant 2 : index
    %c0_25 = arith.constant 0 : index
    %35 = vector.load %arg1[%c0_22, %c1_23, %c2_24, %c0_25] : memref<2x3x3x256xbf16, #tpu.memory_space<vmem>>, vector<2x1x1x256xbf16>
    %36 = arith.extf %35 : vector<2x1x1x256xbf16> to vector<2x1x1x256xf32>
    %37 = vector.extract_strided_slice %0 {offsets = [5, 0, 0, 0, 0], sizes = [1, 1, 1, 1, 256], strides = [1, 1, 1, 1, 1]} : vector<9x1x1x1x256xf32> to vector<1x1x1x1x256xf32>
    %38 = vector.shape_cast %37 : vector<1x1x1x1x256xf32> to vector<1x1x1x256xf32>
    %39 = vector.broadcast %38 : vector<1x1x1x256xf32> to vector<2x1x1x256xf32>
    %40 = arith.mulf %36, %39 : vector<2x1x1x256xf32>
    %41 = arith.addf %34, %40 : vector<2x1x1x256xf32>
    %c0_26 = arith.constant 0 : index
    %c2_27 = arith.constant 2 : index
    %c0_28 = arith.constant 0 : index
    %c0_29 = arith.constant 0 : index
    %42 = vector.load %arg1[%c0_26, %c2_27, %c0_28, %c0_29] : memref<2x3x3x256xbf16, #tpu.memory_space<vmem>>, vector<2x1x1x256xbf16>
    %43 = arith.extf %42 : vector<2x1x1x256xbf16> to vector<2x1x1x256xf32>
    %44 = vector.extract_strided_slice %0 {offsets = [6, 0, 0, 0, 0], sizes = [1, 1, 1, 1, 256], strides = [1, 1, 1, 1, 1]} : vector<9x1x1x1x256xf32> to vector<1x1x1x1x256xf32>
    %45 = vector.shape_cast %44 : vector<1x1x1x1x256xf32> to vector<1x1x1x256xf32>
    %46 = vector.broadcast %45 : vector<1x1x1x256xf32> to vector<2x1x1x256xf32>
    %47 = arith.mulf %43, %46 : vector<2x1x1x256xf32>
    %48 = arith.addf %41, %47 : vector<2x1x1x256xf32>
    %c0_30 = arith.constant 0 : index
    %c2_31 = arith.constant 2 : index
    %c1_32 = arith.constant 1 : index
    %c0_33 = arith.constant 0 : index
    %49 = vector.load %arg1[%c0_30, %c2_31, %c1_32, %c0_33] : memref<2x3x3x256xbf16, #tpu.memory_space<vmem>>, vector<2x1x1x256xbf16>
    %50 = arith.extf %49 : vector<2x1x1x256xbf16> to vector<2x1x1x256xf32>
    %51 = vector.extract_strided_slice %0 {offsets = [7, 0, 0, 0, 0], sizes = [1, 1, 1, 1, 256], strides = [1, 1, 1, 1, 1]} : vector<9x1x1x1x256xf32> to vector<1x1x1x1x256xf32>
    %52 = vector.shape_cast %51 : vector<1x1x1x1x256xf32> to vector<1x1x1x256xf32>
    %53 = vector.broadcast %52 : vector<1x1x1x256xf32> to vector<2x1x1x256xf32>
    %54 = arith.mulf %50, %53 : vector<2x1x1x256xf32>
    %55 = arith.addf %48, %54 : vector<2x1x1x256xf32>
    %c0_34 = arith.constant 0 : index
    %c2_35 = arith.constant 2 : index
    %c2_36 = arith.constant 2 : index
    %c0_37 = arith.constant 0 : index
    %56 = vector.load %arg1[%c0_34, %c2_35, %c2_36, %c0_37] : memref<2x3x3x256xbf16, #tpu.memory_space<vmem>>, vector<2x1x1x256xbf16>
    %57 = arith.extf %56 : vector<2x1x1x256xbf16> to vector<2x1x1x256xf32>
    %58 = vector.extract_strided_slice %0 {offsets = [8, 0, 0, 0, 0], sizes = [1, 1, 1, 1, 256], strides = [1, 1, 1, 1, 1]} : vector<9x1x1x1x256xf32> to vector<1x1x1x1x256xf32>
    %59 = vector.shape_cast %58 : vector<1x1x1x1x256xf32> to vector<1x1x1x256xf32>
    %60 = vector.broadcast %59 : vector<1x1x1x256xf32> to vector<2x1x1x256xf32>
    %61 = arith.mulf %57, %60 : vector<2x1x1x256xf32>
    %62 = arith.addf %55, %61 : vector<2x1x1x256xf32>
    %c0_38 = arith.constant 0 : index
    %c0_39 = arith.constant 0 : index
    %c0_40 = arith.constant 0 : index
    %c0_41 = arith.constant 0 : index
    %63 = vector.load %arg3[%c0_38, %c0_39, %c0_40, %c0_41] : memref<1x1x1x256xf32, #tpu.memory_space<vmem>>, vector<1x1x1x256xf32>
    %64 = vector.broadcast %63 : vector<1x1x1x256xf32> to vector<2x1x1x256xf32>
    %65 = arith.addf %62, %64 : vector<2x1x1x256xf32>
    %cst = arith.constant 0.000000e+00 : f32
    %66 = vector.broadcast %cst : f32 to vector<2x1x1x256xf32>
    %67 = arith.maximumf %65, %66 : vector<2x1x1x256xf32>
    %68 = vector.shape_cast %67 : vector<2x1x1x256xf32> to vector<2x256xf32>
    %69 = arith.truncf %68 : vector<2x256xf32> to vector<2x256xbf16>
    %c0_42 = arith.constant 0 : index
    %c0_43 = arith.constant 0 : index
    %70 = vector.load %arg4[%c0_42, %c0_43] : memref<256x256xbf16, #tpu.memory_space<vmem>>, vector<256x256xbf16>
    %cst_44 = arith.constant dense<0.000000e+00> : vector<2x256xf32>
    %71 = tpu.matmul %69, %70, %cst_44 {dimension_numbers = #tpu.dot_dimension_numbers<[1], [0], [0], [1], [0, 0, 1, 1], [], []>} : vector<2x256xbf16>, vector<256x256xbf16>, vector<2x256xf32> -> vector<2x256xf32>
    %c0_45 = arith.constant 0 : index
    %c0_46 = arith.constant 0 : index
    %72 = vector.load %arg5[%c0_45, %c0_46] : memref<1x256xf32, #tpu.memory_space<vmem>>, vector<1x256xf32>
    %73 = vector.broadcast %72 : vector<1x256xf32> to vector<2x256xf32>
    %74 = arith.addf %71, %73 : vector<2x256xf32>
    %cst_47 = arith.constant 0.000000e+00 : f32
    %75 = vector.broadcast %cst_47 : f32 to vector<2x256xf32>
    %76 = arith.maximumf %74, %75 : vector<2x256xf32>
    %c0_48 = arith.constant 0 : index
    %c0_49 = arith.constant 0 : index
    %77 = vector.load %arg6[%c0_48, %c0_49] : memref<256x2xf32, #tpu.memory_space<vmem>>, vector<256x2xf32>
    %cst_50 = arith.constant dense<0.000000e+00> : vector<2x2xf32>
    %78 = tpu.matmul %76, %77, %cst_50 {dimension_numbers = #tpu.dot_dimension_numbers<[1], [0], [0], [1], [0, 0, 1, 1], [], []>} : vector<2x256xf32>, vector<256x2xf32>, vector<2x2xf32> -> vector<2x2xf32>
    %c0_51 = arith.constant 0 : index
    %c0_52 = arith.constant 0 : index
    %79 = vector.load %arg7[%c0_51, %c0_52] : memref<1x2xf32, #tpu.memory_space<vmem>>, vector<1x2xf32>
    %80 = vector.broadcast %79 : vector<1x2xf32> to vector<2x2xf32>
    %81 = arith.addf %78, %80 : vector<2x2xf32>
    %cst_53 = arith.constant dense<0xFF800000> : vector<2xf32>
    %82 = vector.multi_reduction <maximumf>, %81, %cst_53 [1] : vector<2x2xf32> to vector<2xf32>
    %83 = vector.shape_cast %82 : vector<2xf32> to vector<2x1xf32>
    %84 = vector.broadcast %83 : vector<2x1xf32> to vector<2x2xf32>
    %85 = arith.subf %81, %84 : vector<2x2xf32>
    %86 = math.exp %85 : vector<2x2xf32>
    %cst_54 = arith.constant dense<0.000000e+00> : vector<2xf32>
    %87 = vector.multi_reduction <add>, %86, %cst_54 [1] : vector<2x2xf32> to vector<2xf32>
    %88 = vector.shape_cast %87 : vector<2xf32> to vector<2x1xf32>
    %89 = vector.broadcast %88 : vector<2x1xf32> to vector<2x2xf32>
    %90 = arith.divf %86, %89 : vector<2x2xf32>
    %c0_55 = arith.constant 0 : index
    %c0_56 = arith.constant 0 : index
    %91 = vector.load %arg8[%c0_55, %c0_56] : memref<2x2xf32, #tpu.memory_space<vmem>>, vector<2x2xf32>
    tpu.vector_store %arg8[%c0_55, %c0_56], %90 {strides = array<i32>} : memref<2x2xf32, #tpu.memory_space<vmem>>, vector<2x2xf32>,
    return
  }
  func.func @transform_0(%arg0: i32) -> (i32, i32, i32, i32) {
    %c0_i32 = arith.constant 0 : i32
    %c0_i32_0 = arith.constant 0 : i32
    %c0_i32_1 = arith.constant 0 : i32
    %c0_i32_2 = arith.constant 0 : i32
    %c0_i32_3 = arith.constant 0 : i32
    return %c0_i32, %c0_i32_0, %c0_i32_1, %c0_i32_2 : i32, i32, i32, i32
  }
  func.func @transform_1(%arg0: i32) -> (i32, i32, i32, i32, i32) {
    %c0_i32 = arith.constant 0 : i32
    %c0_i32_0 = arith.constant 0 : i32
    %c0_i32_1 = arith.constant 0 : i32
    %c0_i32_2 = arith.constant 0 : i32
    %c0_i32_3 = arith.constant 0 : i32
    %c0_i32_4 = arith.constant 0 : i32
    return %c0_i32, %c0_i32_0, %c0_i32_1, %c0_i32_2, %c0_i32_3 : i32, i32, i32, i32, i32
  }
  func.func @transform_2(%arg0: i32) -> (i32, i32, i32, i32) {
    %c0_i32 = arith.constant 0 : i32
    %c0_i32_0 = arith.constant 0 : i32
    %c0_i32_1 = arith.constant 0 : i32
    %c0_i32_2 = arith.constant 0 : i32
    %c0_i32_3 = arith.constant 0 : i32
    return %c0_i32, %c0_i32_0, %c0_i32_1, %c0_i32_2 : i32, i32, i32, i32
  }
  func.func @transform_3(%arg0: i32) -> (i32, i32) {
    %c0_i32 = arith.constant 0 : i32
    %c0_i32_0 = arith.constant 0 : i32
    %c0_i32_1 = arith.constant 0 : i32
    return %c0_i32, %c0_i32_0 : i32, i32
  }
  func.func @transform_4(%arg0: i32) -> (i32, i32) {
    %c0_i32 = arith.constant 0 : i32
    %c0_i32_0 = arith.constant 0 : i32
    %c0_i32_1 = arith.constant 0 : i32
    return %c0_i32, %c0_i32_0 : i32, i32
  }
  func.func @transform_5(%arg0: i32) -> (i32, i32) {
    %c0_i32 = arith.constant 0 : i32
    %c0_i32_0 = arith.constant 0 : i32
    %c0_i32_1 = arith.constant 0 : i32
    return %c0_i32, %c0_i32_0 : i32, i32
  }
  func.func @transform_6(%arg0: i32) -> (i32, i32) {
    %c0_i32 = arith.constant 0 : i32
    %c0_i32_0 = arith.constant 0 : i32
    %c0_i32_1 = arith.constant 0 : i32
    return %c0_i32, %c0_i32_0 : i32, i32
  }
  func.func @transform_7(%arg0: i32) -> (i32, i32) {
    %c0_i32 = arith.constant 0 : i32
    %c0_i32_0 = arith.constant 0 : i32
    %c0_i32_1 = arith.constant 0 : i32
    return %c0_i32, %c0_i32_0 : i32, i32
  }
}

</mosaic_0001>

<llo_original>
// kernel: _lambda_.14
$region0: #{_lambda_.14}
  #allocation0 [shape = 'u32[]', space=smem, size = 0x4, offset = 0x4, fixed_abs, tag = 'smem constant byte address 0x4 - core index']
  #allocation1 [shape = 'u32[144,128]{1,0:T(1,128)}', space=vmem, size = 0x12000, scoped, tag = 'internal scratch']
  %s0 = inlined_call_operand.vmem [shape: bf16[512,27], index: 0, kind: input, shape index: {}]
  %s1 = inlined_call_operand.vmem [shape: bf16[27,8], index: 1, kind: input, shape index: {}]
  %s2 = inlined_call_operand.vmem [shape: f32[1,8], index: 2, kind: input, shape index: {}]
  %s3 = inlined_call_operand.vmem [shape: bf16[512,8], index: 3, kind: output, shape index: {}]
  %s4 = sld [smem:[#allocation0]]
  $region22: #{_lambda_.14} parent=0
    _
  %s6 = ssub.s32 1, %s4
  %s7 = scalar_select 0, %s6, %s4
  // Predicated region
  $region2: #{_lambda_.14} parent=0 // pred_check
    _
  $region3: #{_lambda_.14} parent=0 // pred_check_branch
    %9 = sbr.rel (0) target = $region5
  $region4: #{_lambda_.14} parent=0 // pred_region
    _
  $region5: #{_lambda_.14} parent=0 // pred_fallthru
    _
  // Predicated region
  $region6: #{_lambda_.14} parent=0 // pred_check
    _
  $region7: #{_lambda_.14} parent=0 // pred_check_branch
    %11 = sbr.rel (0) target = $region9
  $region8: #{_lambda_.14} parent=0 // pred_region
    _
  $region9: #{_lambda_.14} parent=0 // pred_fallthru
    _
  // Predicated region
  $region10: #{_lambda_.14} parent=0 // pred_check
    _
  $region11: #{_lambda_.14} parent=0 // pred_check_branch
    %13 = sbr.rel (0) target = $region13
  $region12: #{_lambda_.14} parent=0 // pred_region
    _
  $region13: #{_lambda_.14} parent=0 // pred_fallthru
    _
  %v15 = vld [vmem:[%s0] sm:$0xf]
  %v16 = vld [vmem:[%s0 + $0x4] sm:$0xf]
  %v17 = vld [vmem:[%s0 + $0x8] sm:$0xf]
  %v18 = vld [vmem:[%s0 + $0xc] sm:$0xf]
  %v19 = vld [vmem:[%s0 + $0x10] sm:$0xf]
  %v20 = vld [vmem:[%s0 + $0x14] sm:$0xf]
  %v21 = vld [vmem:[%s0 + $0x18] sm:$0xf]
  %v22 = vld [vmem:[%s0 + $0x1c] sm:$0xf]
  %v23 = vld [vmem:[%s0 + $0x20] sm:$0xf]
  %v24 = vld [vmem:[%s0 + $0x24] sm:$0xf]
  %v25 = vld [vmem:[%s0 + $0x28] sm:$0xf]
  %v26 = vld [vmem:[%s0 + $0x2c] sm:$0xf]
  %v27 = vld [vmem:[%s0 + $0x30] sm:$0xf]
  %v28 = vld [vmem:[%s0 + $0x34] sm:$0xf]
  %v29 = vld [vmem:[%s0 + $0x38] sm:$0xf]
  %v30 = vld [vmem:[%s0 + $0x3c] sm:$0xf]
  %v31 = vld [vmem:[%s0 + $0x40] sm:$0xf]
  %v32 = vld [vmem:[%s0 + $0x44] sm:$0xf]
  %v33 = vld [vmem:[%s0 + $0x48] sm:$0xf]
  %v34 = vld [vmem:[%s0 + $0x4c] sm:$0xf]
  %v35 = vld [vmem:[%s0 + $0x50] sm:$0xf]
  %v36 = vld [vmem:[%s0 + $0x54] sm:$0xf]
  %v37 = vld [vmem:[%s0 + $0x58] sm:$0xf]
  %v38 = vld [vmem:[%s0 + $0x5c] sm:$0xf]
  %v39 = vld [vmem:[%s0 + $0x60] sm:$0xf]
  %v40 = vld [vmem:[%s0 + $0x64] sm:$0xf]
  %v41 = vld [vmem:[%s0 + $0x68] sm:$0xf]
  %v42 = vld [vmem:[%s0 + $0x6c] sm:$0xf]
  %v43 = vld [vmem:[%s0 + $0x70] sm:$0xf]
  %v44 = vld [vmem:[%s0 + $0x74] sm:$0xf]
  %v45 = vld [vmem:[%s0 + $0x78] sm:$0xf]
  %v46 = vld [vmem:[%s0 + $0x7c] sm:$0xf]
  %v47 = vld [vmem:[%s0 + $0x80] sm:$0xf]
  %v48 = vld [vmem:[%s0 + $0x84] sm:$0xf]
  %v49 = vld [vmem:[%s0 + $0x88] sm:$0xf]
  %v50 = vld [vmem:[%s0 + $0x8c] sm:$0xf]
  %v51 = vld [vmem:[%s0 + $0x90] sm:$0xf]
  %v52 = vld [vmem:[%s0 + $0x94] sm:$0xf]
  %v53 = vld [vmem:[%s0 + $0x98] sm:$0xf]
  %v54 = vld [vmem:[%s0 + $0x9c] sm:$0xf]
  %v55 = vld [vmem:[%s0 + $0xa0] sm:$0xf]
  %v56 = vld [vmem:[%s0 + $0xa4] sm:$0xf]
  %v57 = vld [vmem:[%s0 + $0xa8] sm:$0xf]
  %v58 = vld [vmem:[%s0 + $0xac] sm:$0xf]
  %v59 = vld [vmem:[%s0 + $0xb0] sm:$0xf]
  %v60 = vld [vmem:[%s0 + $0xb4] sm:$0xf]
  %v61 = vld [vmem:[%s0 + $0xb8] sm:$0xf]
  %v62 = vld [vmem:[%s0 + $0xbc] sm:$0xf]
  %v63 = vld [vmem:[%s0 + $0xc0] sm:$0xf]
  %v64 = vld [vmem:[%s0 + $0xc4] sm:$0xf]
  %v65 = vld [vmem:[%s0 + $0xc8] sm:$0xf]
  %v66 = vld [vmem:[%s0 + $0xcc] sm:$0xf]
  %v67 = vld [vmem:[%s0 + $0xd0] sm:$0xf]
  %v68 = vld [vmem:[%s0 + $0xd4] sm:$0xf]
  %v69 = vld [vmem:[%s0 + $0xd8] sm:$0xf]
  %v70 = vld [vmem:[%s0 + $0xdc] sm:$0xf]
  %v71 = vld [vmem:[%s0 + $0xe0] sm:$0xf]
  %v72 = vld [vmem:[%s0 + $0xe4] sm:$0xf]
  %v73 = vld [vmem:[%s0 + $0xe8] sm:$0xf]
  %v74 = vld [vmem:[%s0 + $0xec] sm:$0xf]
  %v75 = vld [vmem:[%s0 + $0xf0] sm:$0xf]
  %v76 = vld [vmem:[%s0 + $0xf4] sm:$0xf]
  %v77 = vld [vmem:[%s0 + $0xf8] sm:$0xf]
  %v78 = vld [vmem:[%s0 + $0xfc] sm:$0xf]
  %v79 = vld [vmem:[%s1] sm:$0xf]
  %v80 = vld [vmem:[%s1 + $0x4] sm:$0xf]
  %v81 = vld [vmem:[%s1 + $0x8] sm:$0xf]
  %v82 = vld [vmem:[%s1 + $0xc] sm:$0x3]
  %v83 = vld [vmem:[%s2] sm:$0x1]
  %v85 = vlaneseq
  %v86 = vshrl.u32 %v85, 7
  %v87 = vsub.s32 0, %v86
  %v88 = vrot.slane %v83, %v87
  %v154 = vunpack.c.l.b16 %v15
  %v155 = vunpack.c.l.b16 %v16
  %v156 = vunpack.c.l.b16 %v17
  %v157 = vunpack.c.l.b16 %v18
  %v158 = vunpack.c.l.b16 %v19
  %v159 = vunpack.c.l.b16 %v20
  %v160 = vunpack.c.l.b16 %v21
  %v161 = vunpack.c.l.b16 %v22
  %v162 = vunpack.c.l.b16 %v23
  %v163 = vunpack.c.l.b16 %v24
  %v164 = vunpack.c.l.b16 %v25
  %v165 = vunpack.c.l.b16 %v26
  %v166 = vunpack.c.l.b16 %v27
  %v167 = vunpack.c.l.b16 %v28
  %v168 = vunpack.c.l.b16 %v29
  %v169 = vunpack.c.l.b16 %v30
  %v170 = vunpack.c.l.b16 %v31
  %v171 = vunpack.c.l.b16 %v32
  %v172 = vunpack.c.l.b16 %v33
  %v173 = vunpack.c.l.b16 %v34
  %v174 = vunpack.c.l.b16 %v35
  %v175 = vunpack.c.l.b16 %v36
  %v176 = vunpack.c.l.b16 %v37
  %v177 = vunpack.c.l.b16 %v38
  %v178 = vunpack.c.l.b16 %v39
  %v179 = vunpack.c.l.b16 %v40
  %v180 = vunpack.c.l.b16 %v41
  %v181 = vunpack.c.l.b16 %v42
  %v182 = vunpack.c.l.b16 %v43
  %v183 = vunpack.c.l.b16 %v44
  %v184 = vunpack.c.l.b16 %v45
  %v185 = vunpack.c.l.b16 %v46
  %v186 = vunpack.c.l.b16 %v47
  %v187 = vunpack.c.l.b16 %v48
  %v188 = vunpack.c.l.b16 %v49
  %v189 = vunpack.c.l.b16 %v50
  %v190 = vunpack.c.l.b16 %v51
  %v191 = vunpack.c.l.b16 %v52
  %v192 = vunpack.c.l.b16 %v53
  %v193 = vunpack.c.l.b16 %v54
  %v194 = vunpack.c.l.b16 %v55
  %v195 = vunpack.c.l.b16 %v56
  %v196 = vunpack.c.l.b16 %v57
  %v197 = vunpack.c.l.b16 %v58
  %v198 = vunpack.c.l.b16 %v59
  %v199 = vunpack.c.l.b16 %v60
  %v200 = vunpack.c.l.b16 %v61
  %v201 = vunpack.c.l.b16 %v62
  %v202 = vunpack.c.l.b16 %v63
  %v203 = vunpack.c.l.b16 %v64
  %v204 = vunpack.c.l.b16 %v65
  %v205 = vunpack.c.l.b16 %v66
  %v206 = vunpack.c.l.b16 %v67
  %v207 = vunpack.c.l.b16 %v68
  %v208 = vunpack.c.l.b16 %v69
  %v209 = vunpack.c.l.b16 %v70
  %v210 = vunpack.c.l.b16 %v71
  %v211 = vunpack.c.l.b16 %v72
  %v212 = vunpack.c.l.b16 %v73
  %v213 = vunpack.c.l.b16 %v74
  %v214 = vunpack.c.l.b16 %v75
  %v215 = vunpack.c.l.b16 %v76
  %v216 = vunpack.c.l.b16 %v77
  %v217 = vunpack.c.l.b16 %v78
  %v218 = vpack.c.b16 %v155, %v154
  %v219 = vpack.c.b16 %v157, %v156
  %v220 = vpack.c.b16 %v159, %v158
  %v221 = vpack.c.b16 %v161, %v160
  %v222 = vpack.c.b16 %v163, %v162
  %v223 = vpack.c.b16 %v165, %v164
  %v224 = vpack.c.b16 %v167, %v166
  %v225 = vpack.c.b16 %v169, %v168
  %v226 = vpack.c.b16 %v171, %v170
  %v227 = vpack.c.b16 %v173, %v172
  %v228 = vpack.c.b16 %v175, %v174
  %v229 = vpack.c.b16 %v177, %v176
  %v230 = vpack.c.b16 %v179, %v178
  %v231 = vpack.c.b16 %v181, %v180
  %v232 = vpack.c.b16 %v183, %v182
  %v233 = vpack.c.b16 %v185, %v184
  %v234 = vpack.c.b16 %v187, %v186
  %v235 = vpack.c.b16 %v189, %v188
  %v236 = vpack.c.b16 %v191, %v190
  %v237 = vpack.c.b16 %v193, %v192
  %v238 = vpack.c.b16 %v195, %v194
  %v239 = vpack.c.b16 %v197, %v196
  %v240 = vpack.c.b16 %v199, %v198
  %v241 = vpack.c.b16 %v201, %v200
  %v242 = vpack.c.b16 %v203, %v202
  %v243 = vpack.c.b16 %v205, %v204
  %v244 = vpack.c.b16 %v207, %v206
  %v245 = vpack.c.b16 %v209, %v208
  %v246 = vpack.c.b16 %v211, %v210
  %v247 = vpack.c.b16 %v213, %v212
  %v248 = vpack.c.b16 %v215, %v214
  %v249 = vpack.c.b16 %v217, %v216
  %v254 = vunpack.c.l.b16 %v79
  %v255 = vunpack.c.l.b16 %v80
  %v256 = vunpack.c.l.b16 %v81
  %v257 = vunpack.c.l.b16 %v82
  %v258 = vpack.c.b16 %v255, %v254
  %v259 = vpack.c.b16 %v257, %v256
  %vm261 = vcmask 220160
  %v263 = vsel %vm261, %v218, 0
  %v266 = vsel %vm261, %v219, 0
  %v269 = vsel %vm261, %v220, 0
  %v272 = vsel %vm261, %v221, 0
  %v275 = vsel %vm261, %v222, 0
  %v278 = vsel %vm261, %v223, 0
  %v281 = vsel %vm261, %v224, 0
  %v284 = vsel %vm261, %v225, 0
  %v287 = vsel %vm261, %v226, 0
  %v290 = vsel %vm261, %v227, 0
  %v293 = vsel %vm261, %v228, 0
  %v296 = vsel %vm261, %v229, 0
  %v299 = vsel %vm261, %v230, 0
  %v302 = vsel %vm261, %v231, 0
  %v305 = vsel %vm261, %v232, 0
  %v308 = vsel %vm261, %v233, 0
  %v311 = vsel %vm261, %v234, 0
  %v314 = vsel %vm261, %v235, 0
  %v317 = vsel %vm261, %v236, 0
  %v320 = vsel %vm261, %v237, 0
  %v323 = vsel %vm261, %v238, 0
  %v326 = vsel %vm261, %v239, 0
  %v329 = vsel %vm261, %v240, 0
  %v332 = vsel %vm261, %v241, 0
  %v335 = vsel %vm261, %v242, 0
  %v338 = vsel %vm261, %v243, 0
  %v341 = vsel %vm261, %v244, 0
  %v344 = vsel %vm261, %v245, 0
  %v347 = vsel %vm261, %v246, 0
  %v350 = vsel %vm261, %v247, 0
  %v353 = vsel %vm261, %v248, 0
  %v356 = vsel %vm261, %v249, 0
  %vm358 = vcmask 1044480
  %vm359 = vcmask 1045504
  %v360 = vsel %vm358, 4294967295, 65535
  %v361 = vsel %vm359, %v360, 0
  %v363 = vand.u32 %v259, %v361
  %365 = vmatprep.subr.bf16.mxu0 0
  %366 = vmatpush1.bf16.msra.mxu0 0
  %367 = vmatprep.subr.bf16.mxu0 0
  %368 = vmatpush1.bf16.msra.mxu0 0
  %369 = vmatprep.subr.bf16.mxu0 0
  %370 = vmatpush1.bf16.msra.mxu0 0
  %371 = vmatprep.subr.bf16.mxu0 0
  %372 = vmatpush1.bf16.msra.mxu0 0
  %373 = vmatprep.subr.bf16.mxu0 0
  %374 = vmatpush1.bf16.msra.mxu0 0
  %375 = vmatprep.subr.bf16.mxu0 0
  %376 = vmatpush1.bf16.msra.mxu0 0
  %377 = vmatprep.subr.bf16.mxu0 0
  %378 = vmatpush1.bf16.msra.mxu0 %v363
  %379 = vmatprep.subr.bf16.mxu0 0
  %380 = vmatpush1.bf16.msra.mxu0 %v258
  %381 = vmatprep.subr.bf16.mxu0 0
  %382 = vmatpush2.bf16.msra.mxu0 0
  %383 = vmatprep.subr.bf16.mxu0 0
  %384 = vmatpush2.bf16.msra.mxu0 0
  %385 = vmatprep.subr.bf16.mxu0 0
  %386 = vmatpush2.bf16.msra.mxu0 0
  %387 = vmatprep.subr.bf16.mxu0 0
  %388 = vmatpush2.bf16.msra.mxu0 0
  %389 = vmatprep.subr.bf16.mxu0 0
  %390 = vmatpush2.bf16.msra.mxu0 0
  %391 = vmatprep.subr.bf16.mxu0 0
  %392 = vmatpush2.bf16.msra.mxu0 0
  %393 = vmatprep.subr.bf16.mxu0 0
  %394 = vmatpush2.bf16.msra.mxu0 0
  %395 = vmatprep.subr.bf16.mxu0 0
  %396 = vmatpush2.bf16.msra.mxu0 0
  %397 = vmatprep.mubr.bf16.mxu0 0
  %398 = vmatmul.mubr.bf16.gmra.mxu0 %v263
  %v399 = vpop.f32.mrf.mxu0
  %v400 = vadd.f32 %v88, %v399
  %v401 = vpop.f32.mrf.mxu0
  %v402 = vpop.f32.mrf.mxu0
  %v403 = vadd.f32 %v88, %v402
  %v404 = vpop.f32.mrf.mxu0
  %405 = vmatprep.mubr.bf16.mxu0 0
  %406 = vmatmul.mubr.bf16.gmra.mxu0 %v266
  %v407 = vpop.f32.mrf.mxu0
  %v408 = vadd.f32 %v88, %v407
  %v409 = vpop.f32.mrf.mxu0
  %v410 = vpop.f32.mrf.mxu0
  %v411 = vadd.f32 %v88, %v410
  %v412 = vpop.f32.mrf.mxu0
  %413 = vmatprep.mubr.bf16.mxu0 0
  %414 = vmatmul.mubr.bf16.gmra.mxu0 %v269
  %v415 = vpop.f32.mrf.mxu0
  %v416 = vadd.f32 %v88, %v415
  %v417 = vpop.f32.mrf.mxu0
  %v418 = vpop.f32.mrf.mxu0
  %v419 = vadd.f32 %v88, %v418
  %v420 = vpop.f32.mrf.mxu0
  %421 = vmatprep.mubr.bf16.mxu0 0
  %422 = vmatmul.mubr.bf16.gmra.mxu0 %v272
  %v423 = vpop.f32.mrf.mxu0
  %v424 = vadd.f32 %v88, %v423
  %v425 = vpop.f32.mrf.mxu0
  %v426 = vpop.f32.mrf.mxu0
  %v427 = vadd.f32 %v88, %v426
  %v428 = vpop.f32.mrf.mxu0
  %429 = vmatprep.mubr.bf16.mxu0 0
  %430 = vmatmul.mubr.bf16.gmra.mxu0 %v275
  %v431 = vpop.f32.mrf.mxu0
  %v432 = vadd.f32 %v88, %v431
  %v433 = vpop.f32.mrf.mxu0
  %v434 = vpop.f32.mrf.mxu0
  %v435 = vadd.f32 %v88, %v434
  %v436 = vpop.f32.mrf.mxu0
  %437 = vmatprep.mubr.bf16.mxu0 0
  %438 = vmatmul.mubr.bf16.gmra.mxu0 %v278
  %v439 = vpop.f32.mrf.mxu0
  %v440 = vadd.f32 %v88, %v439
  %v441 = vpop.f32.mrf.mxu0
  %v442 = vpop.f32.mrf.mxu0
  %v443 = vadd.f32 %v88, %v442
  %v444 = vpop.f32.mrf.mxu0
  %445 = vmatprep.mubr.bf16.mxu0 0
  %446 = vmatmul.mubr.bf16.gmra.mxu0 %v281
  %v447 = vpop.f32.mrf.mxu0
  %v448 = vadd.f32 %v88, %v447
  %v449 = vpop.f32.mrf.mxu0
  %v450 = vpop.f32.mrf.mxu0
  %v451 = vadd.f32 %v88, %v450
  %v452 = vpop.f32.mrf.mxu0
  %453 = vmatprep.mubr.bf16.mxu0 0
  %454 = vmatmul.mubr.bf16.gmra.mxu0 %v284
  %v455 = vpop.f32.mrf.mxu0
  %v456 = vadd.f32 %v88, %v455
  %v457 = vpop.f32.mrf.mxu0
  %v458 = vpop.f32.mrf.mxu0
  %v459 = vadd.f32 %v88, %v458
  %v460 = vpop.f32.mrf.mxu0
  %461 = vmatprep.mubr.bf16.mxu0 0
  %462 = vmatmul.mubr.bf16.gmra.mxu0 %v287
  %v463 = vpop.f32.mrf.mxu0
  %v464 = vadd.f32 %v88, %v463
  %v465 = vpop.f32.mrf.mxu0
  %v466 = vpop.f32.mrf.mxu0
  %v467 = vadd.f32 %v88, %v466
  %v468 = vpop.f32.mrf.mxu0
  %469 = vmatprep.mubr.bf16.mxu0 0
  %470 = vmatmul.mubr.bf16.gmra.mxu0 %v290
  %v471 = vpop.f32.mrf.mxu0
  %v472 = vadd.f32 %v88, %v471
  %v473 = vpop.f32.mrf.mxu0
  %v474 = vpop.f32.mrf.mxu0
  %v475 = vadd.f32 %v88, %v474
  %v476 = vpop.f32.mrf.mxu0
  %477 = vmatprep.mubr.bf16.mxu0 0
  %478 = vmatmul.mubr.bf16.gmra.mxu0 %v293
  %v479 = vpop.f32.mrf.mxu0
  %v480 = vadd.f32 %v88, %v479
  %v481 = vpop.f32.mrf.mxu0
  %v482 = vpop.f32.mrf.mxu0
  %v483 = vadd.f32 %v88, %v482
  %v484 = vpop.f32.mrf.mxu0
  %485 = vmatprep.mubr.bf16.mxu0 0
  %486 = vmatmul.mubr.bf16.gmra.mxu0 %v296
  %v487 = vpop.f32.mrf.mxu0
  %v488 = vadd.f32 %v88, %v487
  %v489 = vpop.f32.mrf.mxu0
  %v490 = vpop.f32.mrf.mxu0
  %v491 = vadd.f32 %v88, %v490
  %v492 = vpop.f32.mrf.mxu0
  %493 = vmatprep.mubr.bf16.mxu0 0
  %494 = vmatmul.mubr.bf16.gmra.mxu0 %v299
  %v495 = vpop.f32.mrf.mxu0
  %v496 = vadd.f32 %v88, %v495
  %v497 = vpop.f32.mrf.mxu0
  %v498 = vpop.f32.mrf.mxu0
  %v499 = vadd.f32 %v88, %v498
  %v500 = vpop.f32.mrf.mxu0
  %501 = vmatprep.mubr.bf16.mxu0 0
  %502 = vmatmul.mubr.bf16.gmra.mxu0 %v302
  %v503 = vpop.f32.mrf.mxu0
  %v504 = vadd.f32 %v88, %v503
  %v505 = vpop.f32.mrf.mxu0
  %v506 = vpop.f32.mrf.mxu0
  %v507 = vadd.f32 %v88, %v506
  %v508 = vpop.f32.mrf.mxu0
  %509 = vmatprep.mubr.bf16.mxu0 0
  %510 = vmatmul.mubr.bf16.gmra.mxu0 %v305
  %v511 = vpop.f32.mrf.mxu0
  %v512 = vadd.f32 %v88, %v511
  %v513 = vpop.f32.mrf.mxu0
  %v514 = vpop.f32.mrf.mxu0
  %v515 = vadd.f32 %v88, %v514
  %v516 = vpop.f32.mrf.mxu0
  %517 = vmatprep.mubr.bf16.mxu0 0
  %518 = vmatmul.mubr.bf16.gmra.mxu0 %v308
  %v519 = vpop.f32.mrf.mxu0
  %v520 = vadd.f32 %v88, %v519
  %v521 = vpop.f32.mrf.mxu0
  %v522 = vpop.f32.mrf.mxu0
  %v523 = vadd.f32 %v88, %v522
  %v524 = vpop.f32.mrf.mxu0
  %525 = vmatprep.mubr.bf16.mxu0 0
  %526 = vmatmul.mubr.bf16.gmra.mxu0 %v311
  %v527 = vpop.f32.mrf.mxu0
  %v528 = vadd.f32 %v88, %v527
  %v529 = vpop.f32.mrf.mxu0
  %v530 = vpop.f32.mrf.mxu0
  %v531 = vadd.f32 %v88, %v530
  %v532 = vpop.f32.mrf.mxu0
  %533 = vmatprep.mubr.bf16.mxu0 0
  %534 = vmatmul.mubr.bf16.gmra.mxu0 %v314
  %v535 = vpop.f32.mrf.mxu0
  %v536 = vadd.f32 %v88, %v535
  %v537 = vpop.f32.mrf.mxu0
  %v538 = vpop.f32.mrf.mxu0
  %v539 = vadd.f32 %v88, %v538
  %v540 = vpop.f32.mrf.mxu0
  %541 = vmatprep.mubr.bf16.mxu0 0
  %542 = vmatmul.mubr.bf16.gmra.mxu0 %v317
  %v543 = vpop.f32.mrf.mxu0
  %v544 = vadd.f32 %v88, %v543
  %v545 = vpop.f32.mrf.mxu0
  %v546 = vpop.f32.mrf.mxu0
  %v547 = vadd.f32 %v88, %v546
  %v548 = vpop.f32.mrf.mxu0
  %549 = vmatprep.mubr.bf16.mxu0 0
  %550 = vmatmul.mubr.bf16.gmra.mxu0 %v320
  %v551 = vpop.f32.mrf.mxu0
  %v552 = vadd.f32 %v88, %v551
  %v553 = vpop.f32.mrf.mxu0
  %v554 = vpop.f32.mrf.mxu0
  %v555 = vadd.f32 %v88, %v554
  %v556 = vpop.f32.mrf.mxu0
  %557 = vmatprep.mubr.bf16.mxu0 0
  %558 = vmatmul.mubr.bf16.gmra.mxu0 %v323
  %v559 = vpop.f32.mrf.mxu0
  %v560 = vadd.f32 %v88, %v559
  %v561 = vpop.f32.mrf.mxu0
  %v562 = vpop.f32.mrf.mxu0
  %v563 = vadd.f32 %v88, %v562
  %v564 = vpop.f32.mrf.mxu0
  %565 = vmatprep.mubr.bf16.mxu0 0
  %566 = vmatmul.mubr.bf16.gmra.mxu0 %v326
  %v567 = vpop.f32.mrf.mxu0
  %v568 = vadd.f32 %v88, %v567
  %v569 = vpop.f32.mrf.mxu0
  %v570 = vpop.f32.mrf.mxu0
  %v571 = vadd.f32 %v88, %v570
  %v572 = vpop.f32.mrf.mxu0
  %573 = vmatprep.mubr.bf16.mxu0 0
  %574 = vmatmul.mubr.bf16.gmra.mxu0 %v329
  %v575 = vpop.f32.mrf.mxu0
  %v576 = vadd.f32 %v88, %v575
  %v577 = vpop.f32.mrf.mxu0
  %v578 = vpop.f32.mrf.mxu0
  %v579 = vadd.f32 %v88, %v578
  %v580 = vpop.f32.mrf.mxu0
  %581 = vmatprep.mubr.bf16.mxu0 0
  %582 = vmatmul.mubr.bf16.gmra.mxu0 %v332
  %v583 = vpop.f32.mrf.mxu0
  %v584 = vadd.f32 %v88, %v583
  %v585 = vpop.f32.mrf.mxu0
  %v586 = vpop.f32.mrf.mxu0
  %v587 = vadd.f32 %v88, %v586
  %v588 = vpop.f32.mrf.mxu0
  %589 = vmatprep.mubr.bf16.mxu0 0
  %590 = vmatmul.mubr.bf16.gmra.mxu0 %v335
  %v591 = vpop.f32.mrf.mxu0
  %v592 = vadd.f32 %v88, %v591
  %v593 = vpop.f32.mrf.mxu0
  %v594 = vpop.f32.mrf.mxu0
  %v595 = vadd.f32 %v88, %v594
  %v596 = vpop.f32.mrf.mxu0
  %597 = vmatprep.mubr.bf16.mxu0 0
  %598 = vmatmul.mubr.bf16.gmra.mxu0 %v338
  %v599 = vpop.f32.mrf.mxu0
  %v600 = vadd.f32 %v88, %v599
  %v601 = vpop.f32.mrf.mxu0
  %v602 = vpop.f32.mrf.mxu0
  %v603 = vadd.f32 %v88, %v602
  %v604 = vpop.f32.mrf.mxu0
  %605 = vmatprep.mubr.bf16.mxu0 0
  %606 = vmatmul.mubr.bf16.gmra.mxu0 %v341
  %v607 = vpop.f32.mrf.mxu0
  %v608 = vadd.f32 %v88, %v607
  %v609 = vpop.f32.mrf.mxu0
  %v610 = vpop.f32.mrf.mxu0
  %v611 = vadd.f32 %v88, %v610
  %v612 = vpop.f32.mrf.mxu0
  %613 = vmatprep.mubr.bf16.mxu0 0
  %614 = vmatmul.mubr.bf16.gmra.mxu0 %v344
  %v615 = vpop.f32.mrf.mxu0
  %v616 = vadd.f32 %v88, %v615
  %v617 = vpop.f32.mrf.mxu0
  %v618 = vpop.f32.mrf.mxu0
  %v619 = vadd.f32 %v88, %v618
  %v620 = vpop.f32.mrf.mxu0
  %621 = vmatprep.mubr.bf16.mxu0 0
  %622 = vmatmul.mubr.bf16.gmra.mxu0 %v347
  %v623 = vpop.f32.mrf.mxu0
  %v624 = vadd.f32 %v88, %v623
  %v625 = vpop.f32.mrf.mxu0
  %v626 = vpop.f32.mrf.mxu0
  %v627 = vadd.f32 %v88, %v626
  %v628 = vpop.f32.mrf.mxu0
  %629 = vmatprep.mubr.bf16.mxu0 0
  %630 = vmatmul.mubr.bf16.gmra.mxu0 %v350
  %v631 = vpop.f32.mrf.mxu0
  %v632 = vadd.f32 %v88, %v631
  %v633 = vpop.f32.mrf.mxu0
  %v634 = vpop.f32.mrf.mxu0
  %v635 = vadd.f32 %v88, %v634
  %v636 = vpop.f32.mrf.mxu0
  %637 = vmatprep.mubr.bf16.mxu0 0
  %638 = vmatmul.mubr.bf16.gmra.mxu0 %v353
  %v639 = vpop.f32.mrf.mxu0
  %v640 = vadd.f32 %v88, %v639
  %v641 = vpop.f32.mrf.mxu0
  %v642 = vpop.f32.mrf.mxu0
  %v643 = vadd.f32 %v88, %v642
  %v644 = vpop.f32.mrf.mxu0
  %645 = vmatprep.mubr.bf16.mxu0 0
  %646 = vmatmul.mubr.bf16.gmra.mxu0 %v356
  %v647 = vpop.f32.mrf.mxu0
  %v648 = vadd.f32 %v88, %v647
  %v649 = vpop.f32.mrf.mxu0
  %v650 = vpop.f32.mrf.mxu0
  %v651 = vadd.f32 %v88, %v650
  %v652 = vpop.f32.mrf.mxu0
  %653 = vdwg.mxu0
  %v654 = vmax.f32 %v400, 0.0
  %v655 = vmax.f32 %v403, 0.0
  %v656 = vmax.f32 %v408, 0.0
  %v657 = vmax.f32 %v411, 0.0
  %v658 = vmax.f32 %v416, 0.0
  %v659 = vmax.f32 %v419, 0.0
  %v660 = vmax.f32 %v424, 0.0
  %v661 = vmax.f32 %v427, 0.0
  %v662 = vmax.f32 %v432, 0.0
  %v663 = vmax.f32 %v435, 0.0
  %v664 = vmax.f32 %v440, 0.0
  %v665 = vmax.f32 %v443, 0.0
  %v666 = vmax.f32 %v448, 0.0
  %v667 = vmax.f32 %v451, 0.0
  %v668 = vmax.f32 %v456, 0.0
  %v669 = vmax.f32 %v459, 0.0
  %v670 = vmax.f32 %v464, 0.0
  %v671 = vmax.f32 %v467, 0.0
  %v672 = vmax.f32 %v472, 0.0
  %v673 = vmax.f32 %v475, 0.0
  %v674 = vmax.f32 %v480, 0.0
  %v675 = vmax.f32 %v483, 0.0
  %v676 = vmax.f32 %v488, 0.0
  %v677 = vmax.f32 %v491, 0.0
  %v678 = vmax.f32 %v496, 0.0
  %v679 = vmax.f32 %v499, 0.0
  %v680 = vmax.f32 %v504, 0.0
  %v681 = vmax.f32 %v507, 0.0
  %v682 = vmax.f32 %v512, 0.0
  %v683 = vmax.f32 %v515, 0.0
  %v684 = vmax.f32 %v520, 0.0
  %v685 = vmax.f32 %v523, 0.0
  %v686 = vmax.f32 %v528, 0.0
  %v687 = vmax.f32 %v531, 0.0
  %v688 = vmax.f32 %v536, 0.0
  %v689 = vmax.f32 %v539, 0.0
  %v690 = vmax.f32 %v544, 0.0
  %v691 = vmax.f32 %v547, 0.0
  %v692 = vmax.f32 %v552, 0.0
  %v693 = vmax.f32 %v555, 0.0
  %v694 = vmax.f32 %v560, 0.0
  %v695 = vmax.f32 %v563, 0.0
  %v696 = vmax.f32 %v568, 0.0
  %v697 = vmax.f32 %v571, 0.0
  %v698 = vmax.f32 %v576, 0.0
  %v699 = vmax.f32 %v579, 0.0
  %v700 = vmax.f32 %v584, 0.0
  %v701 = vmax.f32 %v587, 0.0
  %v702 = vmax.f32 %v592, 0.0
  %v703 = vmax.f32 %v595, 0.0
  %v704 = vmax.f32 %v600, 0.0
  %v705 = vmax.f32 %v603, 0.0
  %v706 = vmax.f32 %v608, 0.0
  %v707 = vmax.f32 %v611, 0.0
  %v708 = vmax.f32 %v616, 0.0
  %v709 = vmax.f32 %v619, 0.0
  %v710 = vmax.f32 %v624, 0.0
  %v711 = vmax.f32 %v627, 0.0
  %v712 = vmax.f32 %v632, 0.0
  %v713 = vmax.f32 %v635, 0.0
  %v714 = vmax.f32 %v640, 0.0
  %v715 = vmax.f32 %v643, 0.0
  %v716 = vmax.f32 %v648, 0.0
  %v717 = vmax.f32 %v651, 0.0
  %v718 = vpack.c.bf16 %v655, %v654
  %v719 = vpack.c.bf16 %v657, %v656
  %v720 = vpack.c.bf16 %v659, %v658
  %v721 = vpack.c.bf16 %v661, %v660
  %v722 = vpack.c.bf16 %v663, %v662
  %v723 = vpack.c.bf16 %v665, %v664
  %v724 = vpack.c.bf16 %v667, %v666
  %v725 = vpack.c.bf16 %v669, %v668
  %v726 = vpack.c.bf16 %v671, %v670
  %v727 = vpack.c.bf16 %v673, %v672
  %v728 = vpack.c.bf16 %v675, %v674
  %v729 = vpack.c.bf16 %v677, %v676
  %v730 = vpack.c.bf16 %v679, %v678
  %v731 = vpack.c.bf16 %v681, %v680
  %v732 = vpack.c.bf16 %v683, %v682
  %v733 = vpack.c.bf16 %v685, %v684
  %v734 = vpack.c.bf16 %v687, %v686
  %v735 = vpack.c.bf16 %v689, %v688
  %v736 = vpack.c.bf16 %v691, %v690
  %v737 = vpack.c.bf16 %v693, %v692
  %v738 = vpack.c.bf16 %v695, %v694
  %v739 = vpack.c.bf16 %v697, %v696
  %v740 = vpack.c.bf16 %v699, %v698
  %v741 = vpack.c.bf16 %v701, %v700
  %v742 = vpack.c.bf16 %v703, %v702
  %v743 = vpack.c.bf16 %v705, %v704
  %v744 = vpack.c.bf16 %v707, %v706
  %v745 = vpack.c.bf16 %v709, %v708
  %v746 = vpack.c.bf16 %v711, %v710
  %v747 = vpack.c.bf16 %v713, %v712
  %v748 = vpack.c.bf16 %v715, %v714
  %v749 = vpack.c.bf16 %v717, %v716
  %v782 = vunpack.c.l.b16 %v718
  %v783 = vunpack.c.h.b16 %v718
  %v784 = vunpack.c.l.b16 %v719
  %v785 = vunpack.c.h.b16 %v719
  %v786 = vunpack.c.l.b16 %v720
  %v787 = vunpack.c.h.b16 %v720
  %v788 = vunpack.c.l.b16 %v721
  %v789 = vunpack.c.h.b16 %v721
  %v790 = vunpack.c.l.b16 %v722
  %v791 = vunpack.c.h.b16 %v722
  %v792 = vunpack.c.l.b16 %v723
  %v793 = vunpack.c.h.b16 %v723
  %v794 = vunpack.c.l.b16 %v724
  %v795 = vunpack.c.h.b16 %v724
  %v796 = vunpack.c.l.b16 %v725
  %v797 = vunpack.c.h.b16 %v725
  %v798 = vunpack.c.l.b16 %v726
  %v799 = vunpack.c.h.b16 %v726
  %v800 = vunpack.c.l.b16 %v727
  %v801 = vunpack.c.h.b16 %v727
  %v802 = vunpack.c.l.b16 %v728
  %v803 = vunpack.c.h.b16 %v728
  %v804 = vunpack.c.l.b16 %v729
  %v805 = vunpack.c.h.b16 %v729
  %v806 = vunpack.c.l.b16 %v730
  %v807 = vunpack.c.h.b16 %v730
  %v808 = vunpack.c.l.b16 %v731
  %v809 = vunpack.c.h.b16 %v731
  %v810 = vunpack.c.l.b16 %v732
  %v811 = vunpack.c.h.b16 %v732
  %v812 = vunpack.c.l.b16 %v733
  %v813 = vunpack.c.h.b16 %v733
  %v814 = vunpack.c.l.b16 %v734
  %v815 = vunpack.c.h.b16 %v734
  %v816 = vunpack.c.l.b16 %v735
  %v817 = vunpack.c.h.b16 %v735
  %v818 = vunpack.c.l.b16 %v736
  %v819 = vunpack.c.h.b16 %v736
  %v820 = vunpack.c.l.b16 %v737
  %v821 = vunpack.c.h.b16 %v737
  %v822 = vunpack.c.l.b16 %v738
  %v823 = vunpack.c.h.b16 %v738
  %v824 = vunpack.c.l.b16 %v739
  %v825 = vunpack.c.h.b16 %v739
  %v826 = vunpack.c.l.b16 %v740
  %v827 = vunpack.c.h.b16 %v740
  %v828 = vunpack.c.l.b16 %v741
  %v829 = vunpack.c.h.b16 %v741
  %v830 = vunpack.c.l.b16 %v742
  %v831 = vunpack.c.h.b16 %v742
  %v832 = vunpack.c.l.b16 %v743
  %v833 = vunpack.c.h.b16 %v743
  %v834 = vunpack.c.l.b16 %v744
  %v835 = vunpack.c.h.b16 %v744
  %v836 = vunpack.c.l.b16 %v745
  %v837 = vunpack.c.h.b16 %v745
  %v838 = vunpack.c.l.b16 %v746
  %v839 = vunpack.c.h.b16 %v746
  %v840 = vunpack.c.l.b16 %v747
  %v841 = vunpack.c.h.b16 %v747
  %v842 = vunpack.c.l.b16 %v748
  %v843 = vunpack.c.h.b16 %v748
  %v844 = vunpack.c.l.b16 %v749
  %v845 = vunpack.c.h.b16 %v749
  %v846 = vpack.c.b16 %v782, %v782
  %v847 = vpack.c.b16 %v783, %v783
  %v848 = vpack.c.b16 %v784, %v784
  %v849 = vpack.c.b16 %v785, %v785
  %v850 = vpack.c.b16 %v786, %v786
  %v851 = vpack.c.b16 %v787, %v787
  %v852 = vpack.c.b16 %v788, %v788
  %v853 = vpack.c.b16 %v789, %v789
  %v854 = vpack.c.b16 %v790, %v790
  %v855 = vpack.c.b16 %v791, %v791
  %v856 = vpack.c.b16 %v792, %v792
  %v857 = vpack.c.b16 %v793, %v793
  %v858 = vpack.c.b16 %v794, %v794
  %v859 = vpack.c.b16 %v795, %v795
  %v860 = vpack.c.b16 %v796, %v796
  %v861 = vpack.c.b16 %v797, %v797
  %v862 = vpack.c.b16 %v798, %v798
  %v863 = vpack.c.b16 %v799, %v799
  %v864 = vpack.c.b16 %v800, %v800
  %v865 = vpack.c.b16 %v801, %v801
  %v866 = vpack.c.b16 %v802, %v802
  %v867 = vpack.c.b16 %v803, %v803
  %v868 = vpack.c.b16 %v804, %v804
  %v869 = vpack.c.b16 %v805, %v805
  %v870 = vpack.c.b16 %v806, %v806
  %v871 = vpack.c.b16 %v807, %v807
  %v872 = vpack.c.b16 %v808, %v808
  %v873 = vpack.c.b16 %v809, %v809
  %v874 = vpack.c.b16 %v810, %v810
  %v875 = vpack.c.b16 %v811, %v811
  %v876 = vpack.c.b16 %v812, %v812
  %v877 = vpack.c.b16 %v813, %v813
  %v878 = vpack.c.b16 %v814, %v814
  %v879 = vpack.c.b16 %v815, %v815
  %v880 = vpack.c.b16 %v816, %v816
  %v881 = vpack.c.b16 %v817, %v817
  %v882 = vpack.c.b16 %v818, %v818
  %v883 = vpack.c.b16 %v819, %v819
  %v884 = vpack.c.b16 %v820, %v820
  %v885 = vpack.c.b16 %v821, %v821
  %v886 = vpack.c.b16 %v822, %v822
  %v887 = vpack.c.b16 %v823, %v823
  %v888 = vpack.c.b16 %v824, %v824
  %v889 = vpack.c.b16 %v825, %v825
  %v890 = vpack.c.b16 %v826, %v826
  %v891 = vpack.c.b16 %v827, %v827
  %v892 = vpack.c.b16 %v828, %v828
  %v893 = vpack.c.b16 %v829, %v829
  %v894 = vpack.c.b16 %v830, %v830
  %v895 = vpack.c.b16 %v831, %v831
  %v896 = vpack.c.b16 %v832, %v832
  %v897 = vpack.c.b16 %v833, %v833
  %v898 = vpack.c.b16 %v834, %v834
  %v899 = vpack.c.b16 %v835, %v835
  %v900 = vpack.c.b16 %v836, %v836
  %v901 = vpack.c.b16 %v837, %v837
  %v902 = vpack.c.b16 %v838, %v838
  %v903 = vpack.c.b16 %v839, %v839
  %v904 = vpack.c.b16 %v840, %v840
  %v905 = vpack.c.b16 %v841, %v841
  %v906 = vpack.c.b16 %v842, %v842
  %v907 = vpack.c.b16 %v843, %v843
  %v908 = vpack.c.b16 %v844, %v844
  %v909 = vpack.c.b16 %v845, %v845
  %vm974 = vcmask 60416
  %975 = vst.msk [vmem:[%s3] sm:$0xf] %vm974, %v846
  %976 = vst.msk [vmem:[%s3 + $0x4] sm:$0xf] %vm974, %v847
  %977 = vst.msk [vmem:[%s3 + $0x8] sm:$0xf] %vm974, %v848
  %978 = vst.msk [vmem:[%s3 + $0xc] sm:$0xf] %vm974, %v849
  %979 = vst.msk [vmem:[%s3 + $0x10] sm:$0xf] %vm974, %v850
  %980 = vst.msk [vmem:[%s3 + $0x14] sm:$0xf] %vm974, %v851
  %981 = vst.msk [vmem:[%s3 + $0x18] sm:$0xf] %vm974, %v852
  %982 = vst.msk [vmem:[%s3 + $0x1c] sm:$0xf] %vm974, %v853
  %983 = vst.msk [vmem:[%s3 + $0x20] sm:$0xf] %vm974, %v854
  %984 = vst.msk [vmem:[%s3 + $0x24] sm:$0xf] %vm974, %v855
  %985 = vst.msk [vmem:[%s3 + $0x28] sm:$0xf] %vm974, %v856
  %986 = vst.msk [vmem:[%s3 + $0x2c] sm:$0xf] %vm974, %v857
  %987 = vst.msk [vmem:[%s3 + $0x30] sm:$0xf] %vm974, %v858
  %988 = vst.msk [vmem:[%s3 + $0x34] sm:$0xf] %vm974, %v859
  %989 = vst.msk [vmem:[%s3 + $0x38] sm:$0xf] %vm974, %v860
  %990 = vst.msk [vmem:[%s3 + $0x3c] sm:$0xf] %vm974, %v861
  %991 = vst.msk [vmem:[%s3 + $0x40] sm:$0xf] %vm974, %v862
  %992 = vst.msk [vmem:[%s3 + $0x44] sm:$0xf] %vm974, %v863
  %993 = vst.msk [vmem:[%s3 + $0x48] sm:$0xf] %vm974, %v864
  %994 = vst.msk [vmem:[%s3 + $0x4c] sm:$0xf] %vm974, %v865
  %995 = vst.msk [vmem:[%s3 + $0x50] sm:$0xf] %vm974, %v866
  %996 = vst.msk [vmem:[%s3 + $0x54] sm:$0xf] %vm974, %v867
  %997 = vst.msk [vmem:[%s3 + $0x58] sm:$0xf] %vm974, %v868
  %998 = vst.msk [vmem:[%s3 + $0x5c] sm:$0xf] %vm974, %v869
  %999 = vst.msk [vmem:[%s3 + $0x60] sm:$0xf] %vm974, %v870
  %1000 = vst.msk [vmem:[%s3 + $0x64] sm:$0xf] %vm974, %v871
  %1001 = vst.msk [vmem:[%s3 + $0x68] sm:$0xf] %vm974, %v872
  %1002 = vst.msk [vmem:[%s3 + $0x6c] sm:$0xf] %vm974, %v873
  %1003 = vst.msk [vmem:[%s3 + $0x70] sm:$0xf] %vm974, %v874
  %1004 = vst.msk [vmem:[%s3 + $0x74] sm:$0xf] %vm974, %v875
  %1005 = vst.msk [vmem:[%s3 + $0x78] sm:$0xf] %vm974, %v876
  %1006 = vst.msk [vmem:[%s3 + $0x7c] sm:$0xf] %vm974, %v877
  %1007 = vst.msk [vmem:[%s3 + $0x80] sm:$0xf] %vm974, %v878
  %1008 = vst.msk [vmem:[%s3 + $0x84] sm:$0xf] %vm974, %v879
  %1009 = vst.msk [vmem:[%s3 + $0x88] sm:$0xf] %vm974, %v880
  %1010 = vst.msk [vmem:[%s3 + $0x8c] sm:$0xf] %vm974, %v881
  %1011 = vst.msk [vmem:[%s3 + $0x90] sm:$0xf] %vm974, %v882
  %1012 = vst.msk [vmem:[%s3 + $0x94] sm:$0xf] %vm974, %v883
  %1013 = vst.msk [vmem:[%s3 + $0x98] sm:$0xf] %vm974, %v884
  %1014 = vst.msk [vmem:[%s3 + $0x9c] sm:$0xf] %vm974, %v885
  %1015 = vst.msk [vmem:[%s3 + $0xa0] sm:$0xf] %vm974, %v886
  %1016 = vst.msk [vmem:[%s3 + $0xa4] sm:$0xf] %vm974, %v887
  %1017 = vst.msk [vmem:[%s3 + $0xa8] sm:$0xf] %vm974, %v888
  %1018 = vst.msk [vmem:[%s3 + $0xac] sm:$0xf] %vm974, %v889
  %1019 = vst.msk [vmem:[%s3 + $0xb0] sm:$0xf] %vm974, %v890
  %1020 = vst.msk [vmem:[%s3 + $0xb4] sm:$0xf] %vm974, %v891
  %1021 = vst.msk [vmem:[%s3 + $0xb8] sm:$0xf] %vm974, %v892
  %1022 = vst.msk [vmem:[%s3 + $0xbc] sm:$0xf] %vm974, %v893
  %1023 = vst.msk [vmem:[%s3 + $0xc0] sm:$0xf] %vm974, %v894
  %1024 = vst.msk [vmem:[%s3 + $0xc4] sm:$0xf] %vm974, %v895
  %1025 = vst.msk [vmem:[%s3 + $0xc8] sm:$0xf] %vm974, %v896
  %1026 = vst.msk [vmem:[%s3 + $0xcc] sm:$0xf] %vm974, %v897
  %1027 = vst.msk [vmem:[%s3 + $0xd0] sm:$0xf] %vm974, %v898
  %1028 = vst.msk [vmem:[%s3 + $0xd4] sm:$0xf] %vm974, %v899
  %1029 = vst.msk [vmem:[%s3 + $0xd8] sm:$0xf] %vm974, %v900
  %1030 = vst.msk [vmem:[%s3 + $0xdc] sm:$0xf] %vm974, %v901
  %1031 = vst.msk [vmem:[%s3 + $0xe0] sm:$0xf] %vm974, %v902
  %1032 = vst.msk [vmem:[%s3 + $0xe4] sm:$0xf] %vm974, %v903
  %1033 = vst.msk [vmem:[%s3 + $0xe8] sm:$0xf] %vm974, %v904
  %1034 = vst.msk [vmem:[%s3 + $0xec] sm:$0xf] %vm974, %v905
  %1035 = vst.msk [vmem:[%s3 + $0xf0] sm:$0xf] %vm974, %v906
  %1036 = vst.msk [vmem:[%s3 + $0xf4] sm:$0xf] %vm974, %v907
  %1037 = vst.msk [vmem:[%s3 + $0xf8] sm:$0xf] %vm974, %v908
  %1038 = vst.msk [vmem:[%s3 + $0xfc] sm:$0xf] %vm974, %v909
  // Predicated region
  $region14: #{_lambda_.14} parent=0 // pred_check
    _
  $region15: #{_lambda_.14} parent=0 // pred_check_branch
    %1040 = sbr.rel (0) target = $region17
  $region16: #{_lambda_.14} parent=0 // pred_region
    _
  $region17: #{_lambda_.14} parent=0 // pred_fallthru
    _
  // Predicated region
  $region18: #{_lambda_.14} parent=0 // pred_check
    _
  $region19: #{_lambda_.14} parent=0 // pred_check_branch
    %1042 = sbr.rel (0) target = $region21
  $region20: #{_lambda_.14} parent=0 // pred_region
    _
  $region21: #{_lambda_.14} parent=0 // pred_fallthru
    _

// kernel: _lambda_.16
$region0: #{_lambda_.16}
  #allocation0 [shape = 'u32[]', space=smem, size = 0x4, offset = 0x4, fixed_abs, tag = 'smem constant byte address 0x4 - core index']
  #allocation1 [shape = 'u32[144,128]{1,0:T(1,128)}', space=vmem, size = 0x12000, scoped, tag = 'internal scratch']
  %s0 = inlined_call_operand.vmem [shape: bf16[9,128,16], index: 0, kind: input, shape index: {}]
  %s1 = inlined_call_operand.vmem [shape: f32[9,1,16], index: 1, kind: input, shape index: {}]
  %s2 = inlined_call_operand.vmem [shape: f32[1,16], index: 2, kind: input, shape index: {}]
  %s3 = inlined_call_operand.vmem [shape: bf16[16,32], index: 3, kind: input, shape index: {}]
  %s4 = inlined_call_operand.vmem [shape: f32[1,32], index: 4, kind: input, shape index: {}]
  %s5 = inlined_call_operand.vmem [shape: bf16[128,32], index: 5, kind: output, shape index: {}]
  %s6 = sld [smem:[#allocation0]]
  $region30: #{_lambda_.16} parent=0
    _
  %s8 = ssub.s32 1, %s6
  %s9 = scalar_select 0, %s8, %s6
  // Predicated region
  $region2: #{_lambda_.16} parent=0 // pred_check
    _
  $region3: #{_lambda_.16} parent=0 // pred_check_branch
    %11 = sbr.rel (0) target = $region5
  $region4: #{_lambda_.16} parent=0 // pred_region
    _
  $region5: #{_lambda_.16} parent=0 // pred_fallthru
    _
  // Predicated region
  $region6: #{_lambda_.16} parent=0 // pred_check
    _
  $region7: #{_lambda_.16} parent=0 // pred_check_branch
    %13 = sbr.rel (0) target = $region9
  $region8: #{_lambda_.16} parent=0 // pred_region
    _
  $region9: #{_lambda_.16} parent=0 // pred_fallthru
    _
  // Predicated region
  $region10: #{_lambda_.16} parent=0 // pred_check
    _
  $region11: #{_lambda_.16} parent=0 // pred_check_branch
    %15 = sbr.rel (0) target = $region13
  $region12: #{_lambda_.16} parent=0 // pred_region
    _
  $region13: #{_lambda_.16} parent=0 // pred_fallthru
    _
  // Predicated region
  $region14: #{_lambda_.16} parent=0 // pred_check
    _
  $region15: #{_lambda_.16} parent=0 // pred_check_branch
    %17 = sbr.rel (0) target = $region17
  $region16: #{_lambda_.16} parent=0 // pred_region
    _
  $region17: #{_lambda_.16} parent=0 // pred_fallthru
    _
  // Predicated region
  $region18: #{_lambda_.16} parent=0 // pred_check
    _
  $region19: #{_lambda_.16} parent=0 // pred_check_branch
    %19 = sbr.rel (0) target = $region21
  $region20: #{_lambda_.16} parent=0 // pred_region
    _
  $region21: #{_lambda_.16} parent=0 // pred_fallthru
    _
  %v21 = vld [vmem:[%s0] sm:$0xf]
  %v22 = vld [vmem:[%s0 + $0x4] sm:$0xf]
  %v23 = vld [vmem:[%s0 + $0x8] sm:$0xf]
  %v24 = vld [vmem:[%s0 + $0xc] sm:$0xf]
  %v25 = vld [vmem:[%s0 + $0x10] sm:$0xf]
  %v26 = vld [vmem:[%s0 + $0x14] sm:$0xf]
  %v27 = vld [vmem:[%s0 + $0x18] sm:$0xf]
  %v28 = vld [vmem:[%s0 + $0x1c] sm:$0xf]
  %v29 = vld [vmem:[%s0 + $0x20] sm:$0xf]
  %v30 = vld [vmem:[%s0 + $0x24] sm:$0xf]
  %v31 = vld [vmem:[%s0 + $0x28] sm:$0xf]
  %v32 = vld [vmem:[%s0 + $0x2c] sm:$0xf]
  %v33 = vld [vmem:[%s0 + $0x30] sm:$0xf]
  %v34 = vld [vmem:[%s0 + $0x34] sm:$0xf]
  %v35 = vld [vmem:[%s0 + $0x38] sm:$0xf]
  %v36 = vld [vmem:[%s0 + $0x3c] sm:$0xf]
  %v37 = vunpack.c.l.bf16 %v21
  %v38 = vunpack.c.l.bf16 %v22
  %v39 = vunpack.c.l.bf16 %v23
  %v40 = vunpack.c.l.bf16 %v24
  %v41 = vunpack.c.l.bf16 %v25
  %v42 = vunpack.c.l.bf16 %v26
  %v43 = vunpack.c.l.bf16 %v27
  %v44 = vunpack.c.l.bf16 %v28
  %v45 = vunpack.c.l.bf16 %v29
  %v46 = vunpack.c.l.bf16 %v30
  %v47 = vunpack.c.l.bf16 %v31
  %v48 = vunpack.c.l.bf16 %v32
  %v49 = vunpack.c.l.bf16 %v33
  %v50 = vunpack.c.l.bf16 %v34
  %v51 = vunpack.c.l.bf16 %v35
  %v52 = vunpack.c.l.bf16 %v36
  %v53 = vld [vmem:[%s1] sm:$0x1]
  %v55 = vlaneseq
  %v56 = vshrl.u32 %v55, 7
  %v57 = vsub.s32 0, %v56
  %v58 = vrot.slane %v53, %v57
  %v60 = vmul.f32 %v37, %v58
  %v61 = vmul.f32 %v38, %v58
  %v62 = vmul.f32 %v39, %v58
  %v63 = vmul.f32 %v40, %v58
  %v64 = vmul.f32 %v41, %v58
  %v65 = vmul.f32 %v42, %v58
  %v66 = vmul.f32 %v43, %v58
  %v67 = vmul.f32 %v44, %v58
  %v68 = vmul.f32 %v45, %v58
  %v69 = vmul.f32 %v46, %v58
  %v70 = vmul.f32 %v47, %v58
  %v71 = vmul.f32 %v48, %v58
  %v72 = vmul.f32 %v49, %v58
  %v73 = vmul.f32 %v50, %v58
  %v74 = vmul.f32 %v51, %v58
  %v75 = vmul.f32 %v52, %v58
  %s76 = scalar_lea.vmem %s0, 64
  %v77 = vld [vmem:[%s76] sm:$0xf]
  %v78 = vld [vmem:[%s76 + $0x4] sm:$0xf]
  %v79 = vld [vmem:[%s76 + $0x8] sm:$0xf]
  %v80 = vld [vmem:[%s76 + $0xc] sm:$0xf]
  %v81 = vld [vmem:[%s76 + $0x10] sm:$0xf]
  %v82 = vld [vmem:[%s76 + $0x14] sm:$0xf]
  %v83 = vld [vmem:[%s76 + $0x18] sm:$0xf]
  %v84 = vld [vmem:[%s76 + $0x1c] sm:$0xf]
  %v85 = vld [vmem:[%s76 + $0x20] sm:$0xf]
  %v86 = vld [vmem:[%s76 + $0x24] sm:$0xf]
  %v87 = vld [vmem:[%s76 + $0x28] sm:$0xf]
  %v88 = vld [vmem:[%s76 + $0x2c] sm:$0xf]
  %v89 = vld [vmem:[%s76 + $0x30] sm:$0xf]
  %v90 = vld [vmem:[%s76 + $0x34] sm:$0xf]
  %v91 = vld [vmem:[%s76 + $0x38] sm:$0xf]
  %v92 = vld [vmem:[%s76 + $0x3c] sm:$0xf]
  %v93 = vunpack.c.l.bf16 %v77
  %v94 = vunpack.c.l.bf16 %v78
  %v95 = vunpack.c.l.bf16 %v79
  %v96 = vunpack.c.l.bf16 %v80
  %v97 = vunpack.c.l.bf16 %v81
  %v98 = vunpack.c.l.bf16 %v82
  %v99 = vunpack.c.l.bf16 %v83
  %v100 = vunpack.c.l.bf16 %v84
  %v101 = vunpack.c.l.bf16 %v85
  %v102 = vunpack.c.l.bf16 %v86
  %v103 = vunpack.c.l.bf16 %v87
  %v104 = vunpack.c.l.bf16 %v88
  %v105 = vunpack.c.l.bf16 %v89
  %v106 = vunpack.c.l.bf16 %v90
  %v107 = vunpack.c.l.bf16 %v91
  %v108 = vunpack.c.l.bf16 %v92
  %s109 = scalar_lea.vmem %s1, 1
  %v110 = vld [vmem:[%s109] sm:$0x1]
  %v112 = vlaneseq
  %v113 = vshrl.u32 %v112, 7
  %v114 = vsub.s32 0, %v113
  %v115 = vrot.slane %v110, %v114
  %v117 = vmul.f32 %v93, %v115
  %v118 = vmul.f32 %v94, %v115
  %v119 = vmul.f32 %v95, %v115
  %v120 = vmul.f32 %v96, %v115
  %v121 = vmul.f32 %v97, %v115
  %v122 = vmul.f32 %v98, %v115
  %v123 = vmul.f32 %v99, %v115
  %v124 = vmul.f32 %v100, %v115
  %v125 = vmul.f32 %v101, %v115
  %v126 = vmul.f32 %v102, %v115
  %v127 = vmul.f32 %v103, %v115
  %v128 = vmul.f32 %v104, %v115
  %v129 = vmul.f32 %v105, %v115
  %v130 = vmul.f32 %v106, %v115
  %v131 = vmul.f32 %v107, %v115
  %v132 = vmul.f32 %v108, %v115
  %v133 = vadd.f32 %v60, %v117
  %v134 = vadd.f32 %v61, %v118
  %v135 = vadd.f32 %v62, %v119
  %v136 = vadd.f32 %v63, %v120
  %v137 = vadd.f32 %v64, %v121
  %v138 = vadd.f32 %v65, %v122
  %v139 = vadd.f32 %v66, %v123
  %v140 = vadd.f32 %v67, %v124
  %v141 = vadd.f32 %v68, %v125
  %v142 = vadd.f32 %v69, %v126
  %v143 = vadd.f32 %v70, %v127
  %v144 = vadd.f32 %v71, %v128
  %v145 = vadd.f32 %v72, %v129
  %v146 = vadd.f32 %v73, %v130
  %v147 = vadd.f32 %v74, %v131
  %v148 = vadd.f32 %v75, %v132
  %s149 = scalar_lea.vmem %s0, 128
  %v150 = vld [vmem:[%s149] sm:$0xf]
  %v151 = vld [vmem:[%s149 + $0x4] sm:$0xf]
  %v152 = vld [vmem:[%s149 + $0x8] sm:$0xf]
  %v153 = vld [vmem:[%s149 + $0xc] sm:$0xf]
  %v154 = vld [vmem:[%s149 + $0x10] sm:$0xf]
  %v155 = vld [vmem:[%s149 + $0x14] sm:$0xf]
  %v156 = vld [vmem:[%s149 + $0x18] sm:$0xf]
  %v157 = vld [vmem:[%s149 + $0x1c] sm:$0xf]
  %v158 = vld [vmem:[%s149 + $0x20] sm:$0xf]
  %v159 = vld [vmem:[%s149 + $0x24] sm:$0xf]
  %v160 = vld [vmem:[%s149 + $0x28] sm:$0xf]
  %v161 = vld [vmem:[%s149 + $0x2c] sm:$0xf]
  %v162 = vld [vmem:[%s149 + $0x30] sm:$0xf]
  %v163 = vld [vmem:[%s149 + $0x34] sm:$0xf]
  %v164 = vld [vmem:[%s149 + $0x38] sm:$0xf]
  %v165 = vld [vmem:[%s149 + $0x3c] sm:$0xf]
  %v166 = vunpack.c.l.bf16 %v150
  %v167 = vunpack.c.l.bf16 %v151
  %v168 = vunpack.c.l.bf16 %v152
  %v169 = vunpack.c.l.bf16 %v153
  %v170 = vunpack.c.l.bf16 %v154
  %v171 = vunpack.c.l.bf16 %v155
  %v172 = vunpack.c.l.bf16 %v156
  %v173 = vunpack.c.l.bf16 %v157
  %v174 = vunpack.c.l.bf16 %v158
  %v175 = vunpack.c.l.bf16 %v159
  %v176 = vunpack.c.l.bf16 %v160
  %v177 = vunpack.c.l.bf16 %v161
  %v178 = vunpack.c.l.bf16 %v162
  %v179 = vunpack.c.l.bf16 %v163
  %v180 = vunpack.c.l.bf16 %v164
  %v181 = vunpack.c.l.bf16 %v165
  %s182 = scalar_lea.vmem %s1, 2
  %v183 = vld [vmem:[%s182] sm:$0x1]
  %v185 = vlaneseq
  %v186 = vshrl.u32 %v185, 7
  %v187 = vsub.s32 0, %v186
  %v188 = vrot.slane %v183, %v187
  %v190 = vmul.f32 %v166, %v188
  %v191 = vmul.f32 %v167, %v188
  %v192 = vmul.f32 %v168, %v188
  %v193 = vmul.f32 %v169, %v188
  %v194 = vmul.f32 %v170, %v188
  %v195 = vmul.f32 %v171, %v188
  %v196 = vmul.f32 %v172, %v188
  %v197 = vmul.f32 %v173, %v188
  %v198 = vmul.f32 %v174, %v188
  %v199 = vmul.f32 %v175, %v188
  %v200 = vmul.f32 %v176, %v188
  %v201 = vmul.f32 %v177, %v188
  %v202 = vmul.f32 %v178, %v188
  %v203 = vmul.f32 %v179, %v188
  %v204 = vmul.f32 %v180, %v188
  %v205 = vmul.f32 %v181, %v188
  %v206 = vadd.f32 %v133, %v190
  %v207 = vadd.f32 %v134, %v191
  %v208 = vadd.f32 %v135, %v192
  %v209 = vadd.f32 %v136, %v193
  %v210 = vadd.f32 %v137, %v194
  %v211 = vadd.f32 %v138, %v195
  %v212 = vadd.f32 %v139, %v196
  %v213 = vadd.f32 %v140, %v197
  %v214 = vadd.f32 %v141, %v198
  %v215 = vadd.f32 %v142, %v199
  %v216 = vadd.f32 %v143, %v200
  %v217 = vadd.f32 %v144, %v201
  %v218 = vadd.f32 %v145, %v202
  %v219 = vadd.f32 %v146, %v203
  %v220 = vadd.f32 %v147, %v204
  %v221 = vadd.f32 %v148, %v205
  %s222 = scalar_lea.vmem %s0, 192
  %v223 = vld [vmem:[%s222] sm:$0xf]
  %v224 = vld [vmem:[%s222 + $0x4] sm:$0xf]
  %v225 = vld [vmem:[%s222 + $0x8] sm:$0xf]
  %v226 = vld [vmem:[%s222 + $0xc] sm:$0xf]
  %v227 = vld [vmem:[%s222 + $0x10] sm:$0xf]
  %v228 = vld [vmem:[%s222 + $0x14] sm:$0xf]
  %v229 = vld [vmem:[%s222 + $0x18] sm:$0xf]
  %v230 = vld [vmem:[%s222 + $0x1c] sm:$0xf]
  %v231 = vld [vmem:[%s222 + $0x20] sm:$0xf]
  %v232 = vld [vmem:[%s222 + $0x24] sm:$0xf]
  %v233 = vld [vmem:[%s222 + $0x28] sm:$0xf]
  %v234 = vld [vmem:[%s222 + $0x2c] sm:$0xf]
  %v235 = vld [vmem:[%s222 + $0x30] sm:$0xf]
  %v236 = vld [vmem:[%s222 + $0x34] sm:$0xf]
  %v237 = vld [vmem:[%s222 + $0x38] sm:$0xf]
  %v238 = vld [vmem:[%s222 + $0x3c] sm:$0xf]
  %v239 = vunpack.c.l.bf16 %v223
  %v240 = vunpack.c.l.bf16 %v224
  %v241 = vunpack.c.l.bf16 %v225
  %v242 = vunpack.c.l.bf16 %v226
  %v243 = vunpack.c.l.bf16 %v227
  %v244 = vunpack.c.l.bf16 %v228
  %v245 = vunpack.c.l.bf16 %v229
  %v246 = vunpack.c.l.bf16 %v230
  %v247 = vunpack.c.l.bf16 %v231
  %v248 = vunpack.c.l.bf16 %v232
  %v249 = vunpack.c.l.bf16 %v233
  %v250 = vunpack.c.l.bf16 %v234
  %v251 = vunpack.c.l.bf16 %v235
  %v252 = vunpack.c.l.bf16 %v236
  %v253 = vunpack.c.l.bf16 %v237
  %v254 = vunpack.c.l.bf16 %v238
  %s255 = scalar_lea.vmem %s1, 3
  %v256 = vld [vmem:[%s255] sm:$0x1]
  %v258 = vlaneseq
  %v259 = vshrl.u32 %v258, 7
  %v260 = vsub.s32 0, %v259
  %v261 = vrot.slane %v256, %v260
  %v263 = vmul.f32 %v239, %v261
  %v264 = vmul.f32 %v240, %v261
  %v265 = vmul.f32 %v241, %v261
  %v266 = vmul.f32 %v242, %v261
  %v267 = vmul.f32 %v243, %v261
  %v268 = vmul.f32 %v244, %v261
  %v269 = vmul.f32 %v245, %v261
  %v270 = vmul.f32 %v246, %v261
  %v271 = vmul.f32 %v247, %v261
  %v272 = vmul.f32 %v248, %v261
  %v273 = vmul.f32 %v249, %v261
  %v274 = vmul.f32 %v250, %v261
  %v275 = vmul.f32 %v251, %v261
  %v276 = vmul.f32 %v252, %v261
  %v277 = vmul.f32 %v253, %v261
  %v278 = vmul.f32 %v254, %v261
  %v279 = vadd.f32 %v206, %v263
  %v280 = vadd.f32 %v207, %v264
  %v281 = vadd.f32 %v208, %v265
  %v282 = vadd.f32 %v209, %v266
  %v283 = vadd.f32 %v210, %v267
  %v284 = vadd.f32 %v211, %v268
  %v285 = vadd.f32 %v212, %v269
  %v286 = vadd.f32 %v213, %v270
  %v287 = vadd.f32 %v214, %v271
  %v288 = vadd.f32 %v215, %v272
  %v289 = vadd.f32 %v216, %v273
  %v290 = vadd.f32 %v217, %v274
  %v291 = vadd.f32 %v218, %v275
  %v292 = vadd.f32 %v219, %v276
  %v293 = vadd.f32 %v220, %v277
  %v294 = vadd.f32 %v221, %v278
  %s295 = scalar_lea.vmem %s0, 256
  %v296 = vld [vmem:[%s295] sm:$0xf]
  %v297 = vld [vmem:[%s295 + $0x4] sm:$0xf]
  %v298 = vld [vmem:[%s295 + $0x8] sm:$0xf]
  %v299 = vld [vmem:[%s295 + $0xc] sm:$0xf]
  %v300 = vld [vmem:[%s295 + $0x10] sm:$0xf]
  %v301 = vld [vmem:[%s295 + $0x14] sm:$0xf]
  %v302 = vld [vmem:[%s295 + $0x18] sm:$0xf]
  %v303 = vld [vmem:[%s295 + $0x1c] sm:$0xf]
  %v304 = vld [vmem:[%s295 + $0x20] sm:$0xf]
  %v305 = vld [vmem:[%s295 + $0x24] sm:$0xf]
  %v306 = vld [vmem:[%s295 + $0x28] sm:$0xf]
  %v307 = vld [vmem:[%s295 + $0x2c] sm:$0xf]
  %v308 = vld [vmem:[%s295 + $0x30] sm:$0xf]
  %v309 = vld [vmem:[%s295 + $0x34] sm:$0xf]
  %v310 = vld [vmem:[%s295 + $0x38] sm:$0xf]
  %v311 = vld [vmem:[%s295 + $0x3c] sm:$0xf]
  %v312 = vunpack.c.l.bf16 %v296
  %v313 = vunpack.c.l.bf16 %v297
  %v314 = vunpack.c.l.bf16 %v298
  %v315 = vunpack.c.l.bf16 %v299
  %v316 = vunpack.c.l.bf16 %v300
  %v317 = vunpack.c.l.bf16 %v301
  %v318 = vunpack.c.l.bf16 %v302
  %v319 = vunpack.c.l.bf16 %v303
  %v320 = vunpack.c.l.bf16 %v304
  %v321 = vunpack.c.l.bf16 %v305
  %v322 = vunpack.c.l.bf16 %v306
  %v323 = vunpack.c.l.bf16 %v307
  %v324 = vunpack.c.l.bf16 %v308
  %v325 = vunpack.c.l.bf16 %v309
  %v326 = vunpack.c.l.bf16 %v310
  %v327 = vunpack.c.l.bf16 %v311
  %s328 = scalar_lea.vmem %s1, 4
  %v329 = vld [vmem:[%s328] sm:$0x1]
  %v331 = vlaneseq
  %v332 = vshrl.u32 %v331, 7
  %v333 = vsub.s32 0, %v332
  %v334 = vrot.slane %v329, %v333
  %v336 = vmul.f32 %v312, %v334
  %v337 = vmul.f32 %v313, %v334
  %v338 = vmul.f32 %v314, %v334
  %v339 = vmul.f32 %v315, %v334
  %v340 = vmul.f32 %v316, %v334
  %v341 = vmul.f32 %v317, %v334
  %v342 = vmul.f32 %v318, %v334
  %v343 = vmul.f32 %v319, %v334
  %v344 = vmul.f32 %v320, %v334
  %v345 = vmul.f32 %v321, %v334
  %v346 = vmul.f32 %v322, %v334
  %v347 = vmul.f32 %v323, %v334
  %v348 = vmul.f32 %v324, %v334
  %v349 = vmul.f32 %v325, %v334
  %v350 = vmul.f32 %v326, %v334
  %v351 = vmul.f32 %v327, %v334
  %v352 = vadd.f32 %v279, %v336
  %v353 = vadd.f32 %v280, %v337
  %v354 = vadd.f32 %v281, %v338
  %v355 = vadd.f32 %v282, %v339
  %v356 = vadd.f32 %v283, %v340
  %v357 = vadd.f32 %v284, %v341
  %v358 = vadd.f32 %v285, %v342
  %v359 = vadd.f32 %v286, %v343
  %v360 = vadd.f32 %v287, %v344
  %v361 = vadd.f32 %v288, %v345
  %v362 = vadd.f32 %v289, %v346
  %v363 = vadd.f32 %v290, %v347
  %v364 = vadd.f32 %v291, %v348
  %v365 = vadd.f32 %v292, %v349
  %v366 = vadd.f32 %v293, %v350
  %v367 = vadd.f32 %v294, %v351
  %s368 = scalar_lea.vmem %s0, 320
  %v369 = vld [vmem:[%s368] sm:$0xf]
  %v370 = vld [vmem:[%s368 + $0x4] sm:$0xf]
  %v371 = vld [vmem:[%s368 + $0x8] sm:$0xf]
  %v372 = vld [vmem:[%s368 + $0xc] sm:$0xf]
  %v373 = vld [vmem:[%s368 + $0x10] sm:$0xf]
  %v374 = vld [vmem:[%s368 + $0x14] sm:$0xf]
  %v375 = vld [vmem:[%s368 + $0x18] sm:$0xf]
  %v376 = vld [vmem:[%s368 + $0x1c] sm:$0xf]
  %v377 = vld [vmem:[%s368 + $0x20] sm:$0xf]
  %v378 = vld [vmem:[%s368 + $0x24] sm:$0xf]
  %v379 = vld [vmem:[%s368 + $0x28] sm:$0xf]
  %v380 = vld [vmem:[%s368 + $0x2c] sm:$0xf]
  %v381 = vld [vmem:[%s368 + $0x30] sm:$0xf]
  %v382 = vld [vmem:[%s368 + $0x34] sm:$0xf]
  %v383 = vld [vmem:[%s368 + $0x38] sm:$0xf]
  %v384 = vld [vmem:[%s368 + $0x3c] sm:$0xf]
  %v385 = vunpack.c.l.bf16 %v369
  %v386 = vunpack.c.l.bf16 %v370
  %v387 = vunpack.c.l.bf16 %v371
  %v388 = vunpack.c.l.bf16 %v372
  %v389 = vunpack.c.l.bf16 %v373
  %v390 = vunpack.c.l.bf16 %v374
  %v391 = vunpack.c.l.bf16 %v375
  %v392 = vunpack.c.l.bf16 %v376
  %v393 = vunpack.c.l.bf16 %v377
  %v394 = vunpack.c.l.bf16 %v378
  %v395 = vunpack.c.l.bf16 %v379
  %v396 = vunpack.c.l.bf16 %v380
  %v397 = vunpack.c.l.bf16 %v381
  %v398 = vunpack.c.l.bf16 %v382
  %v399 = vunpack.c.l.bf16 %v383
  %v400 = vunpack.c.l.bf16 %v384
  %s401 = scalar_lea.vmem %s1, 5
  %v402 = vld [vmem:[%s401] sm:$0x1]
  %v404 = vlaneseq
  %v405 = vshrl.u32 %v404, 7
  %v406 = vsub.s32 0, %v405
  %v407 = vrot.slane %v402, %v406
  %v409 = vmul.f32 %v385, %v407
  %v410 = vmul.f32 %v386, %v407
  %v411 = vmul.f32 %v387, %v407
  %v412 = vmul.f32 %v388, %v407
  %v413 = vmul.f32 %v389, %v407
  %v414 = vmul.f32 %v390, %v407
  %v415 = vmul.f32 %v391, %v407
  %v416 = vmul.f32 %v392, %v407
  %v417 = vmul.f32 %v393, %v407
  %v418 = vmul.f32 %v394, %v407
  %v419 = vmul.f32 %v395, %v407
  %v420 = vmul.f32 %v396, %v407
  %v421 = vmul.f32 %v397, %v407
  %v422 = vmul.f32 %v398, %v407
  %v423 = vmul.f32 %v399, %v407
  %v424 = vmul.f32 %v400, %v407
  %v425 = vadd.f32 %v352, %v409
  %v426 = vadd.f32 %v353, %v410
  %v427 = vadd.f32 %v354, %v411
  %v428 = vadd.f32 %v355, %v412
  %v429 = vadd.f32 %v356, %v413
  %v430 = vadd.f32 %v357, %v414
  %v431 = vadd.f32 %v358, %v415
  %v432 = vadd.f32 %v359, %v416
  %v433 = vadd.f32 %v360, %v417
  %v434 = vadd.f32 %v361, %v418
  %v435 = vadd.f32 %v362, %v419
  %v436 = vadd.f32 %v363, %v420
  %v437 = vadd.f32 %v364, %v421
  %v438 = vadd.f32 %v365, %v422
  %v439 = vadd.f32 %v366, %v423
  %v440 = vadd.f32 %v367, %v424
  %s441 = scalar_lea.vmem %s0, 384
  %v442 = vld [vmem:[%s441] sm:$0xf]
  %v443 = vld [vmem:[%s441 + $0x4] sm:$0xf]
  %v444 = vld [vmem:[%s441 + $0x8] sm:$0xf]
  %v445 = vld [vmem:[%s441 + $0xc] sm:$0xf]
  %v446 = vld [vmem:[%s441 + $0x10] sm:$0xf]
  %v447 = vld [vmem:[%s441 + $0x14] sm:$0xf]
  %v448 = vld [vmem:[%s441 + $0x18] sm:$0xf]
  %v449 = vld [vmem:[%s441 + $0x1c] sm:$0xf]
  %v450 = vld [vmem:[%s441 + $0x20] sm:$0xf]
  %v451 = vld [vmem:[%s441 + $0x24] sm:$0xf]
  %v452 = vld [vmem:[%s441 + $0x28] sm:$0xf]
  %v453 = vld [vmem:[%s441 + $0x2c] sm:$0xf]
  %v454 = vld [vmem:[%s441 + $0x30] sm:$0xf]
  %v455 = vld [vmem:[%s441 + $0x34] sm:$0xf]
  %v456 = vld [vmem:[%s441 + $0x38] sm:$0xf]
  %v457 = vld [vmem:[%s441 + $0x3c] sm:$0xf]
  %v458 = vunpack.c.l.bf16 %v442
  %v459 = vunpack.c.l.bf16 %v443
  %v460 = vunpack.c.l.bf16 %v444
  %v461 = vunpack.c.l.bf16 %v445
  %v462 = vunpack.c.l.bf16 %v446
  %v463 = vunpack.c.l.bf16 %v447
  %v464 = vunpack.c.l.bf16 %v448
  %v465 = vunpack.c.l.bf16 %v449
  %v466 = vunpack.c.l.bf16 %v450
  %v467 = vunpack.c.l.bf16 %v451
  %v468 = vunpack.c.l.bf16 %v452
  %v469 = vunpack.c.l.bf16 %v453
  %v470 = vunpack.c.l.bf16 %v454
  %v471 = vunpack.c.l.bf16 %v455
  %v472 = vunpack.c.l.bf16 %v456
  %v473 = vunpack.c.l.bf16 %v457
  %s474 = scalar_lea.vmem %s1, 6
  %v475 = vld [vmem:[%s474] sm:$0x1]
  %v477 = vlaneseq
  %v478 = vshrl.u32 %v477, 7
  %v479 = vsub.s32 0, %v478
  %v480 = vrot.slane %v475, %v479
  %v482 = vmul.f32 %v458, %v480
  %v483 = vmul.f32 %v459, %v480
  %v484 = vmul.f32 %v460, %v480
  %v485 = vmul.f32 %v461, %v480
  %v486 = vmul.f32 %v462, %v480
  %v487 = vmul.f32 %v463, %v480
  %v488 = vmul.f32 %v464, %v480
  %v489 = vmul.f32 %v465, %v480
  %v490 = vmul.f32 %v466, %v480
  %v491 = vmul.f32 %v467, %v480
  %v492 = vmul.f32 %v468, %v480
  %v493 = vmul.f32 %v469, %v480
  %v494 = vmul.f32 %v470, %v480
  %v495 = vmul.f32 %v471, %v480
  %v496 = vmul.f32 %v472, %v480
  %v497 = vmul.f32 %v473, %v480
  %v498 = vadd.f32 %v425, %v482
  %v499 = vadd.f32 %v426, %v483
  %v500 = vadd.f32 %v427, %v484
  %v501 = vadd.f32 %v428, %v485
  %v502 = vadd.f32 %v429, %v486
  %v503 = vadd.f32 %v430, %v487
  %v504 = vadd.f32 %v431, %v488
  %v505 = vadd.f32 %v432, %v489
  %v506 = vadd.f32 %v433, %v490
  %v507 = vadd.f32 %v434, %v491
  %v508 = vadd.f32 %v435, %v492
  %v509 = vadd.f32 %v436, %v493
  %v510 = vadd.f32 %v437, %v494
  %v511 = vadd.f32 %v438, %v495
  %v512 = vadd.f32 %v439, %v496
  %v513 = vadd.f32 %v440, %v497
  %s514 = scalar_lea.vmem %s0, 448
  %v515 = vld [vmem:[%s514] sm:$0xf]
  %v516 = vld [vmem:[%s514 + $0x4] sm:$0xf]
  %v517 = vld [vmem:[%s514 + $0x8] sm:$0xf]
  %v518 = vld [vmem:[%s514 + $0xc] sm:$0xf]
  %v519 = vld [vmem:[%s514 + $0x10] sm:$0xf]
  %v520 = vld [vmem:[%s514 + $0x14] sm:$0xf]
  %v521 = vld [vmem:[%s514 + $0x18] sm:$0xf]
  %v522 = vld [vmem:[%s514 + $0x1c] sm:$0xf]
  %v523 = vld [vmem:[%s514 + $0x20] sm:$0xf]
  %v524 = vld [vmem:[%s514 + $0x24] sm:$0xf]
  %v525 = vld [vmem:[%s514 + $0x28] sm:$0xf]
  %v526 = vld [vmem:[%s514 + $0x2c] sm:$0xf]
  %v527 = vld [vmem:[%s514 + $0x30] sm:$0xf]
  %v528 = vld [vmem:[%s514 + $0x34] sm:$0xf]
  %v529 = vld [vmem:[%s514 + $0x38] sm:$0xf]
  %v530 = vld [vmem:[%s514 + $0x3c] sm:$0xf]
  %v531 = vunpack.c.l.bf16 %v515
  %v532 = vunpack.c.l.bf16 %v516
  %v533 = vunpack.c.l.bf16 %v517
  %v534 = vunpack.c.l.bf16 %v518
  %v535 = vunpack.c.l.bf16 %v519
  %v536 = vunpack.c.l.bf16 %v520
  %v537 = vunpack.c.l.bf16 %v521
  %v538 = vunpack.c.l.bf16 %v522
  %v539 = vunpack.c.l.bf16 %v523
  %v540 = vunpack.c.l.bf16 %v524
  %v541 = vunpack.c.l.bf16 %v525
  %v542 = vunpack.c.l.bf16 %v526
  %v543 = vunpack.c.l.bf16 %v527
  %v544 = vunpack.c.l.bf16 %v528
  %v545 = vunpack.c.l.bf16 %v529
  %v546 = vunpack.c.l.bf16 %v530
  %s547 = scalar_lea.vmem %s1, 7
  %v548 = vld [vmem:[%s547] sm:$0x1]
  %v550 = vlaneseq
  %v551 = vshrl.u32 %v550, 7
  %v552 = vsub.s32 0, %v551
  %v553 = vrot.slane %v548, %v552
  %v555 = vmul.f32 %v531, %v553
  %v556 = vmul.f32 %v532, %v553
  %v557 = vmul.f32 %v533, %v553
  %v558 = vmul.f32 %v534, %v553
  %v559 = vmul.f32 %v535, %v553
  %v560 = vmul.f32 %v536, %v553
  %v561 = vmul.f32 %v537, %v553
  %v562 = vmul.f32 %v538, %v553
  %v563 = vmul.f32 %v539, %v553
  %v564 = vmul.f32 %v540, %v553
  %v565 = vmul.f32 %v541, %v553
  %v566 = vmul.f32 %v542, %v553
  %v567 = vmul.f32 %v543, %v553
  %v568 = vmul.f32 %v544, %v553
  %v569 = vmul.f32 %v545, %v553
  %v570 = vmul.f32 %v546, %v553
  %v571 = vadd.f32 %v498, %v555
  %v572 = vadd.f32 %v499, %v556
  %v573 = vadd.f32 %v500, %v557
  %v574 = vadd.f32 %v501, %v558
  %v575 = vadd.f32 %v502, %v559
  %v576 = vadd.f32 %v503, %v560
  %v577 = vadd.f32 %v504, %v561
  %v578 = vadd.f32 %v505, %v562
  %v579 = vadd.f32 %v506, %v563
  %v580 = vadd.f32 %v507, %v564
  %v581 = vadd.f32 %v508, %v565
  %v582 = vadd.f32 %v509, %v566
  %v583 = vadd.f32 %v510, %v567
  %v584 = vadd.f32 %v511, %v568
  %v585 = vadd.f32 %v512, %v569
  %v586 = vadd.f32 %v513, %v570
  %s587 = scalar_lea.vmem %s0, 512
  %v588 = vld [vmem:[%s587] sm:$0xf]
  %v589 = vld [vmem:[%s587 + $0x4] sm:$0xf]
  %v590 = vld [vmem:[%s587 + $0x8] sm:$0xf]
  %v591 = vld [vmem:[%s587 + $0xc] sm:$0xf]
  %v592 = vld [vmem:[%s587 + $0x10] sm:$0xf]
  %v593 = vld [vmem:[%s587 + $0x14] sm:$0xf]
  %v594 = vld [vmem:[%s587 + $0x18] sm:$0xf]
  %v595 = vld [vmem:[%s587 + $0x1c] sm:$0xf]
  %v596 = vld [vmem:[%s587 + $0x20] sm:$0xf]
  %v597 = vld [vmem:[%s587 + $0x24] sm:$0xf]
  %v598 = vld [vmem:[%s587 + $0x28] sm:$0xf]
  %v599 = vld [vmem:[%s587 + $0x2c] sm:$0xf]
  %v600 = vld [vmem:[%s587 + $0x30] sm:$0xf]
  %v601 = vld [vmem:[%s587 + $0x34] sm:$0xf]
  %v602 = vld [vmem:[%s587 + $0x38] sm:$0xf]
  %v603 = vld [vmem:[%s587 + $0x3c] sm:$0xf]
  %v604 = vunpack.c.l.bf16 %v588
  %v605 = vunpack.c.l.bf16 %v589
  %v606 = vunpack.c.l.bf16 %v590
  %v607 = vunpack.c.l.bf16 %v591
  %v608 = vunpack.c.l.bf16 %v592
  %v609 = vunpack.c.l.bf16 %v593
  %v610 = vunpack.c.l.bf16 %v594
  %v611 = vunpack.c.l.bf16 %v595
  %v612 = vunpack.c.l.bf16 %v596
  %v613 = vunpack.c.l.bf16 %v597
  %v614 = vunpack.c.l.bf16 %v598
  %v615 = vunpack.c.l.bf16 %v599
  %v616 = vunpack.c.l.bf16 %v600
  %v617 = vunpack.c.l.bf16 %v601
  %v618 = vunpack.c.l.bf16 %v602
  %v619 = vunpack.c.l.bf16 %v603
  %s620 = scalar_lea.vmem %s1, 8
  %v621 = vld [vmem:[%s620] sm:$0x1]
  %v623 = vlaneseq
  %v624 = vshrl.u32 %v623, 7
  %v625 = vsub.s32 0, %v624
  %v626 = vrot.slane %v621, %v625
  %v628 = vmul.f32 %v604, %v626
  %v629 = vmul.f32 %v605, %v626
  %v630 = vmul.f32 %v606, %v626
  %v631 = vmul.f32 %v607, %v626
  %v632 = vmul.f32 %v608, %v626
  %v633 = vmul.f32 %v609, %v626
  %v634 = vmul.f32 %v610, %v626
  %v635 = vmul.f32 %v611, %v626
  %v636 = vmul.f32 %v612, %v626
  %v637 = vmul.f32 %v613, %v626
  %v638 = vmul.f32 %v614, %v626
  %v639 = vmul.f32 %v615, %v626
  %v640 = vmul.f32 %v616, %v626
  %v641 = vmul.f32 %v617, %v626
  %v642 = vmul.f32 %v618, %v626
  %v643 = vmul.f32 %v619, %v626
  %v644 = vadd.f32 %v571, %v628
  %v645 = vadd.f32 %v572, %v629
  %v646 = vadd.f32 %v573, %v630
  %v647 = vadd.f32 %v574, %v631
  %v648 = vadd.f32 %v575, %v632
  %v649 = vadd.f32 %v576, %v633
  %v650 = vadd.f32 %v577, %v634
  %v651 = vadd.f32 %v578, %v635
  %v652 = vadd.f32 %v579, %v636
  %v653 = vadd.f32 %v580, %v637
  %v654 = vadd.f32 %v581, %v638
  %v655 = vadd.f32 %v582, %v639
  %v656 = vadd.f32 %v583, %v640
  %v657 = vadd.f32 %v584, %v641
  %v658 = vadd.f32 %v585, %v642
  %v659 = vadd.f32 %v586, %v643
  %v660 = vld [vmem:[%s2] sm:$0x1]
  %v662 = vlaneseq
  %v663 = vshrl.u32 %v662, 7
  %v664 = vsub.s32 0, %v663
  %v665 = vrot.slane %v660, %v664
  %v667 = vadd.f32 %v644, %v665
  %v668 = vadd.f32 %v645, %v665
  %v669 = vadd.f32 %v646, %v665
  %v670 = vadd.f32 %v647, %v665
  %v671 = vadd.f32 %v648, %v665
  %v672 = vadd.f32 %v649, %v665
  %v673 = vadd.f32 %v650, %v665
  %v674 = vadd.f32 %v651, %v665
  %v675 = vadd.f32 %v652, %v665
  %v676 = vadd.f32 %v653, %v665
  %v677 = vadd.f32 %v654, %v665
  %v678 = vadd.f32 %v655, %v665
  %v679 = vadd.f32 %v656, %v665
  %v680 = vadd.f32 %v657, %v665
  %v681 = vadd.f32 %v658, %v665
  %v682 = vadd.f32 %v659, %v665
  %v683 = vmax.f32 %v667, 0.0
  %v684 = vmax.f32 %v668, 0.0
  %v685 = vmax.f32 %v669, 0.0
  %v686 = vmax.f32 %v670, 0.0
  %v687 = vmax.f32 %v671, 0.0
  %v688 = vmax.f32 %v672, 0.0
  %v689 = vmax.f32 %v673, 0.0
  %v690 = vmax.f32 %v674, 0.0
  %v691 = vmax.f32 %v675, 0.0
  %v692 = vmax.f32 %v676, 0.0
  %v693 = vmax.f32 %v677, 0.0
  %v694 = vmax.f32 %v678, 0.0
  %v695 = vmax.f32 %v679, 0.0
  %v696 = vmax.f32 %v680, 0.0
  %v697 = vmax.f32 %v681, 0.0
  %v698 = vmax.f32 %v682, 0.0
  %v699 = vpack.c.bf16 %v684, %v683
  %v700 = vpack.c.bf16 %v686, %v685
  %v701 = vpack.c.bf16 %v688, %v687
  %v702 = vpack.c.bf16 %v690, %v689
  %v703 = vpack.c.bf16 %v692, %v691
  %v704 = vpack.c.bf16 %v694, %v693
  %v705 = vpack.c.bf16 %v696, %v695
  %v706 = vpack.c.bf16 %v698, %v697
  %v707 = vld [vmem:[%s3] sm:$0xf]
  %v708 = vld [vmem:[%s3 + $0x4] sm:$0xf]
  %v709 = vld [vmem:[%s4] sm:$0x1]
  %v711 = vlaneseq
  %v712 = vshrl.u32 %v711, 7
  %v713 = vsub.s32 0, %v712
  %v714 = vrot.slane %v709, %v713
  %v718 = vunpack.c.l.b16 %v707
  %v719 = vunpack.c.l.b16 %v708
  %v720 = vpack.c.b16 %v719, %v718
  %vm722 = vcmask 130048
  %v724 = vsel %vm722, %v699, 0
  %v727 = vsel %vm722, %v700, 0
  %v730 = vsel %vm722, %v701, 0
  %v733 = vsel %vm722, %v702, 0
  %v736 = vsel %vm722, %v703, 0
  %v739 = vsel %vm722, %v704, 0
  %v742 = vsel %vm722, %v705, 0
  %v745 = vsel %vm722, %v706, 0
  %747 = vmatprep.subr.bf16.mxu0 0
  %748 = vmatpush1.bf16.msra.mxu0 0
  %749 = vmatprep.subr.bf16.mxu0 0
  %750 = vmatpush1.bf16.msra.mxu0 0
  %751 = vmatprep.subr.bf16.mxu0 0
  %752 = vmatpush1.bf16.msra.mxu0 0
  %753 = vmatprep.subr.bf16.mxu0 0
  %754 = vmatpush1.bf16.msra.mxu0 0
  %755 = vmatprep.subr.bf16.mxu0 0
  %756 = vmatpush1.bf16.msra.mxu0 0
  %757 = vmatprep.subr.bf16.mxu0 0
  %758 = vmatpush1.bf16.msra.mxu0 0
  %759 = vmatprep.subr.bf16.mxu0 0
  %760 = vmatpush1.bf16.msra.mxu0 0
  %761 = vmatprep.subr.bf16.mxu0 0
  %762 = vmatpush1.bf16.msra.mxu0 %v720
  %763 = vmatprep.subr.bf16.mxu0 0
  %764 = vmatpush2.bf16.msra.mxu0 0
  %765 = vmatprep.subr.bf16.mxu0 0
  %766 = vmatpush2.bf16.msra.mxu0 0
  %767 = vmatprep.subr.bf16.mxu0 0
  %768 = vmatpush2.bf16.msra.mxu0 0
  %769 = vmatprep.subr.bf16.mxu0 0
  %770 = vmatpush2.bf16.msra.mxu0 0
  %771 = vmatprep.subr.bf16.mxu0 0
  %772 = vmatpush2.bf16.msra.mxu0 0
  %773 = vmatprep.subr.bf16.mxu0 0
  %774 = vmatpush2.bf16.msra.mxu0 0
  %775 = vmatprep.subr.bf16.mxu0 0
  %776 = vmatpush2.bf16.msra.mxu0 0
  %777 = vmatprep.subr.bf16.mxu0 0
  %778 = vmatpush2.bf16.msra.mxu0 0
  %779 = vmatprep.mubr.bf16.mxu0 0
  %780 = vmatmul.mubr.bf16.gmra.mxu0 %v724
  %v781 = vpop.f32.mrf.mxu0
  %v782 = vadd.f32 %v714, %v781
  %v783 = vpop.f32.mrf.mxu0
  %v784 = vpop.f32.mrf.mxu0
  %v785 = vadd.f32 %v714, %v784
  %v786 = vpop.f32.mrf.mxu0
  %787 = vmatprep.mubr.bf16.mxu0 0
  %788 = vmatmul.mubr.bf16.gmra.mxu0 %v727
  %v789 = vpop.f32.mrf.mxu0
  %v790 = vadd.f32 %v714, %v789
  %v791 = vpop.f32.mrf.mxu0
  %v792 = vpop.f32.mrf.mxu0
  %v793 = vadd.f32 %v714, %v792
  %v794 = vpop.f32.mrf.mxu0
  %795 = vmatprep.mubr.bf16.mxu0 0
  %796 = vmatmul.mubr.bf16.gmra.mxu0 %v730
  %v797 = vpop.f32.mrf.mxu0
  %v798 = vadd.f32 %v714, %v797
  %v799 = vpop.f32.mrf.mxu0
  %v800 = vpop.f32.mrf.mxu0
  %v801 = vadd.f32 %v714, %v800
  %v802 = vpop.f32.mrf.mxu0
  %803 = vmatprep.mubr.bf16.mxu0 0
  %804 = vmatmul.mubr.bf16.gmra.mxu0 %v733
  %v805 = vpop.f32.mrf.mxu0
  %v806 = vadd.f32 %v714, %v805
  %v807 = vpop.f32.mrf.mxu0
  %v808 = vpop.f32.mrf.mxu0
  %v809 = vadd.f32 %v714, %v808
  %v810 = vpop.f32.mrf.mxu0
  %811 = vmatprep.mubr.bf16.mxu0 0
  %812 = vmatmul.mubr.bf16.gmra.mxu0 %v736
  %v813 = vpop.f32.mrf.mxu0
  %v814 = vadd.f32 %v714, %v813
  %v815 = vpop.f32.mrf.mxu0
  %v816 = vpop.f32.mrf.mxu0
  %v817 = vadd.f32 %v714, %v816
  %v818 = vpop.f32.mrf.mxu0
  %819 = vmatprep.mubr.bf16.mxu0 0
  %820 = vmatmul.mubr.bf16.gmra.mxu0 %v739
  %v821 = vpop.f32.mrf.mxu0
  %v822 = vadd.f32 %v714, %v821
  %v823 = vpop.f32.mrf.mxu0
  %v824 = vpop.f32.mrf.mxu0
  %v825 = vadd.f32 %v714, %v824
  %v826 = vpop.f32.mrf.mxu0
  %827 = vmatprep.mubr.bf16.mxu0 0
  %828 = vmatmul.mubr.bf16.gmra.mxu0 %v742
  %v829 = vpop.f32.mrf.mxu0
  %v830 = vadd.f32 %v714, %v829
  %v831 = vpop.f32.mrf.mxu0
  %v832 = vpop.f32.mrf.mxu0
  %v833 = vadd.f32 %v714, %v832
  %v834 = vpop.f32.mrf.mxu0
  %835 = vmatprep.mubr.bf16.mxu0 0
  %836 = vmatmul.mubr.bf16.gmra.mxu0 %v745
  %v837 = vpop.f32.mrf.mxu0
  %v838 = vadd.f32 %v714, %v837
  %v839 = vpop.f32.mrf.mxu0
  %v840 = vpop.f32.mrf.mxu0
  %v841 = vadd.f32 %v714, %v840
  %v842 = vpop.f32.mrf.mxu0
  %843 = vdwg.mxu0
  %v844 = vmax.f32 %v782, 0.0
  %v845 = vmax.f32 %v785, 0.0
  %v846 = vmax.f32 %v790, 0.0
  %v847 = vmax.f32 %v793, 0.0
  %v848 = vmax.f32 %v798, 0.0
  %v849 = vmax.f32 %v801, 0.0
  %v850 = vmax.f32 %v806, 0.0
  %v851 = vmax.f32 %v809, 0.0
  %v852 = vmax.f32 %v814, 0.0
  %v853 = vmax.f32 %v817, 0.0
  %v854 = vmax.f32 %v822, 0.0
  %v855 = vmax.f32 %v825, 0.0
  %v856 = vmax.f32 %v830, 0.0
  %v857 = vmax.f32 %v833, 0.0
  %v858 = vmax.f32 %v838, 0.0
  %v859 = vmax.f32 %v841, 0.0
  %v860 = vpack.c.bf16 %v845, %v844
  %v861 = vpack.c.bf16 %v847, %v846
  %v862 = vpack.c.bf16 %v849, %v848
  %v863 = vpack.c.bf16 %v851, %v850
  %v864 = vpack.c.bf16 %v853, %v852
  %v865 = vpack.c.bf16 %v855, %v854
  %v866 = vpack.c.bf16 %v857, %v856
  %v867 = vpack.c.bf16 %v859, %v858
  %v876 = vunpack.c.l.b16 %v860
  %v877 = vunpack.c.h.b16 %v860
  %v878 = vunpack.c.l.b16 %v861
  %v879 = vunpack.c.h.b16 %v861
  %v880 = vunpack.c.l.b16 %v862
  %v881 = vunpack.c.h.b16 %v862
  %v882 = vunpack.c.l.b16 %v863
  %v883 = vunpack.c.h.b16 %v863
  %v884 = vunpack.c.l.b16 %v864
  %v885 = vunpack.c.h.b16 %v864
  %v886 = vunpack.c.l.b16 %v865
  %v887 = vunpack.c.h.b16 %v865
  %v888 = vunpack.c.l.b16 %v866
  %v889 = vunpack.c.h.b16 %v866
  %v890 = vunpack.c.l.b16 %v867
  %v891 = vunpack.c.h.b16 %v867
  %v892 = vpack.c.b16 %v876, %v876
  %v893 = vpack.c.b16 %v877, %v877
  %v894 = vpack.c.b16 %v878, %v878
  %v895 = vpack.c.b16 %v879, %v879
  %v896 = vpack.c.b16 %v880, %v880
  %v897 = vpack.c.b16 %v881, %v881
  %v898 = vpack.c.b16 %v882, %v882
  %v899 = vpack.c.b16 %v883, %v883
  %v900 = vpack.c.b16 %v884, %v884
  %v901 = vpack.c.b16 %v885, %v885
  %v902 = vpack.c.b16 %v886, %v886
  %v903 = vpack.c.b16 %v887, %v887
  %v904 = vpack.c.b16 %v888, %v888
  %v905 = vpack.c.b16 %v889, %v889
  %v906 = vpack.c.b16 %v890, %v890
  %v907 = vpack.c.b16 %v891, %v891
  %vm924 = vcmask 257024
  %925 = vst.msk [vmem:[%s5] sm:$0xf] %vm924, %v892
  %926 = vst.msk [vmem:[%s5 + $0x4] sm:$0xf] %vm924, %v893
  %927 = vst.msk [vmem:[%s5 + $0x8] sm:$0xf] %vm924, %v894
  %928 = vst.msk [vmem:[%s5 + $0xc] sm:$0xf] %vm924, %v895
  %929 = vst.msk [vmem:[%s5 + $0x10] sm:$0xf] %vm924, %v896
  %930 = vst.msk [vmem:[%s5 + $0x14] sm:$0xf] %vm924, %v897
  %931 = vst.msk [vmem:[%s5 + $0x18] sm:$0xf] %vm924, %v898
  %932 = vst.msk [vmem:[%s5 + $0x1c] sm:$0xf] %vm924, %v899
  %933 = vst.msk [vmem:[%s5 + $0x20] sm:$0xf] %vm924, %v900
  %934 = vst.msk [vmem:[%s5 + $0x24] sm:$0xf] %vm924, %v901
  %935 = vst.msk [vmem:[%s5 + $0x28] sm:$0xf] %vm924, %v902
  %936 = vst.msk [vmem:[%s5 + $0x2c] sm:$0xf] %vm924, %v903
  %937 = vst.msk [vmem:[%s5 + $0x30] sm:$0xf] %vm924, %v904
  %938 = vst.msk [vmem:[%s5 + $0x34] sm:$0xf] %vm924, %v905
  %939 = vst.msk [vmem:[%s5 + $0x38] sm:$0xf] %vm924, %v906
  %940 = vst.msk [vmem:[%s5 + $0x3c] sm:$0xf] %vm924, %v907
  // Predicated region
  $region22: #{_lambda_.16} parent=0 // pred_check
    _
  $region23: #{_lambda_.16} parent=0 // pred_check_branch
    %942 = sbr.rel (0) target = $region25
  $region24: #{_lambda_.16} parent=0 // pred_region
    _
  $region25: #{_lambda_.16} parent=0 // pred_fallthru
    _
  // Predicated region
  $region26: #{_lambda_.16} parent=0 // pred_check
    _
  $region27: #{_lambda_.16} parent=0 // pred_check_branch
    %944 = sbr.rel (0) target = $region29
  $region28: #{_lambda_.16} parent=0 // pred_region
    _
  $region29: #{_lambda_.16} parent=0 // pred_fallthru
    _

// kernel: _lambda_.17
$region0: #{_lambda_.17}
  #allocation0 [shape = 'u32[]', space=smem, size = 0x4, offset = 0x4, fixed_abs, tag = 'smem constant byte address 0x4 - core index']
  #allocation1 [shape = 'u32[144,128]{1,0:T(1,128)}', space=vmem, size = 0x12000, scoped, tag = 'internal scratch']
  %s0 = inlined_call_operand.vmem [shape: bf16[2,10,10,32], index: 0, kind: input, shape index: {}]
  %s1 = inlined_call_operand.vmem [shape: f32[9,1,1,1,32], index: 1, kind: input, shape index: {}]
  %s2 = inlined_call_operand.vmem [shape: f32[1,1,1,32], index: 2, kind: input, shape index: {}]
  %s3 = inlined_call_operand.vmem [shape: bf16[32,32], index: 3, kind: input, shape index: {}]
  %s4 = inlined_call_operand.vmem [shape: f32[1,32], index: 4, kind: input, shape index: {}]
  %s5 = inlined_call_operand.vmem [shape: bf16[128,32], index: 5, kind: output, shape index: {}]
  %s6 = sld [smem:[#allocation0]]
  $region30: #{_lambda_.17} parent=0
    _
  %s8 = ssub.s32 1, %s6
  %s9 = scalar_select 0, %s8, %s6
  // Predicated region
  $region2: #{_lambda_.17} parent=0 // pred_check
    _
  $region3: #{_lambda_.17} parent=0 // pred_check_branch
    %11 = sbr.rel (0) target = $region5
  $region4: #{_lambda_.17} parent=0 // pred_region
    _
  $region5: #{_lambda_.17} parent=0 // pred_fallthru
    _
  // Predicated region
  $region6: #{_lambda_.17} parent=0 // pred_check
    _
  $region7: #{_lambda_.17} parent=0 // pred_check_branch
    %13 = sbr.rel (0) target = $region9
  $region8: #{_lambda_.17} parent=0 // pred_region
    _
  $region9: #{_lambda_.17} parent=0 // pred_fallthru
    _
  // Predicated region
  $region10: #{_lambda_.17} parent=0 // pred_check
    _
  $region11: #{_lambda_.17} parent=0 // pred_check_branch
    %15 = sbr.rel (0) target = $region13
  $region12: #{_lambda_.17} parent=0 // pred_region
    _
  $region13: #{_lambda_.17} parent=0 // pred_fallthru
    _
  // Predicated region
  $region14: #{_lambda_.17} parent=0 // pred_check
    _
  $region15: #{_lambda_.17} parent=0 // pred_check_branch
    %17 = sbr.rel (0) target = $region17
  $region16: #{_lambda_.17} parent=0 // pred_region
    _
  $region17: #{_lambda_.17} parent=0 // pred_fallthru
    _
  // Predicated region
  $region18: #{_lambda_.17} parent=0 // pred_check
    _
  $region19: #{_lambda_.17} parent=0 // pred_check_branch
    %19 = sbr.rel (0) target = $region21
  $region20: #{_lambda_.17} parent=0 // pred_region
    _
  $region21: #{_lambda_.17} parent=0 // pred_fallthru
    _
  %v21 = vld [vmem:[%s1] sm:$0x1]
  %v22 = vld [vmem:[%s1 + $0x1] sm:$0x1]
  %v23 = vld [vmem:[%s1 + $0x2] sm:$0x1]
  %v24 = vld [vmem:[%s1 + $0x3] sm:$0x1]
  %v25 = vld [vmem:[%s1 + $0x4] sm:$0x1]
  %v26 = vld [vmem:[%s1 + $0x5] sm:$0x1]
  %v27 = vld [vmem:[%s1 + $0x6] sm:$0x1]
  %v28 = vld [vmem:[%s1 + $0x7] sm:$0x1]
  %v29 = vld [vmem:[%s1 + $0x8] sm:$0x1]
  %v30 = vld [vmem:[%s0] sm:$0xf]
  %v31 = vld [vmem:[%s0 + $0x8] sm:$0xf]
  %v32 = vld [vmem:[%s0 + $0x10] sm:$0xf]
  %v33 = vld [vmem:[%s0 + $0x18] sm:$0xf]
  %v34 = vld [vmem:[%s0 + $0x20] sm:$0xf]
  %v35 = vld [vmem:[%s0 + $0x28] sm:$0xf]
  %v36 = vld [vmem:[%s0 + $0x30] sm:$0xf]
  %v37 = vld [vmem:[%s0 + $0x38] sm:$0xf]
  %v38 = vld [vmem:[%s0 + $0x50] sm:$0xf]
  %v39 = vld [vmem:[%s0 + $0x58] sm:$0xf]
  %v40 = vld [vmem:[%s0 + $0x60] sm:$0xf]
  %v41 = vld [vmem:[%s0 + $0x68] sm:$0xf]
  %v42 = vld [vmem:[%s0 + $0x70] sm:$0xf]
  %v43 = vld [vmem:[%s0 + $0x78] sm:$0xf]
  %v44 = vld [vmem:[%s0 + $0x80] sm:$0xf]
  %v45 = vld [vmem:[%s0 + $0x88] sm:$0xf]
  %v46 = vunpack.c.l.bf16 %v30
  %v47 = vunpack.c.l.bf16 %v31
  %v48 = vunpack.c.l.bf16 %v32
  %v49 = vunpack.c.l.bf16 %v33
  %v50 = vunpack.c.l.bf16 %v34
  %v51 = vunpack.c.l.bf16 %v35
  %v52 = vunpack.c.l.bf16 %v36
  %v53 = vunpack.c.l.bf16 %v37
  %v54 = vunpack.c.l.bf16 %v38
  %v55 = vunpack.c.l.bf16 %v39
  %v56 = vunpack.c.l.bf16 %v40
  %v57 = vunpack.c.l.bf16 %v41
  %v58 = vunpack.c.l.bf16 %v42
  %v59 = vunpack.c.l.bf16 %v43
  %v60 = vunpack.c.l.bf16 %v44
  %v61 = vunpack.c.l.bf16 %v45
  %v63 = vlaneseq
  %v64 = vshrl.u32 %v63, 7
  %v65 = vsub.s32 0, %v64
  %v66 = vrot.slane %v21, %v65
  %v68 = vmul.f32 %v46, %v66
  %v69 = vmul.f32 %v47, %v66
  %v70 = vmul.f32 %v48, %v66
  %v71 = vmul.f32 %v49, %v66
  %v72 = vmul.f32 %v50, %v66
  %v73 = vmul.f32 %v51, %v66
  %v74 = vmul.f32 %v52, %v66
  %v75 = vmul.f32 %v53, %v66
  %v76 = vmul.f32 %v54, %v66
  %v77 = vmul.f32 %v55, %v66
  %v78 = vmul.f32 %v56, %v66
  %v79 = vmul.f32 %v57, %v66
  %v80 = vmul.f32 %v58, %v66
  %v81 = vmul.f32 %v59, %v66
  %v82 = vmul.f32 %v60, %v66
  %v83 = vmul.f32 %v61, %v66
  %v84 = vld [vmem:[%s0 + $0x4] sm:$0x1]
  %v85 = vld [vmem:[%s0 + $0xc] sm:$0x1]
  %v86 = vld [vmem:[%s0 + $0x14] sm:$0x1]
  %v87 = vld [vmem:[%s0 + $0x1c] sm:$0x1]
  %v88 = vld [vmem:[%s0 + $0x24] sm:$0x1]
  %v89 = vld [vmem:[%s0 + $0x2c] sm:$0x1]
  %v90 = vld [vmem:[%s0 + $0x34] sm:$0x1]
  %v91 = vld [vmem:[%s0 + $0x3c] sm:$0x1]
  %v92 = vld [vmem:[%s0 + $0x54] sm:$0x1]
  %v93 = vld [vmem:[%s0 + $0x5c] sm:$0x1]
  %v94 = vld [vmem:[%s0 + $0x64] sm:$0x1]
  %v95 = vld [vmem:[%s0 + $0x6c] sm:$0x1]
  %v96 = vld [vmem:[%s0 + $0x74] sm:$0x1]
  %v97 = vld [vmem:[%s0 + $0x7c] sm:$0x1]
  %v98 = vld [vmem:[%s0 + $0x84] sm:$0x1]
  %v99 = vld [vmem:[%s0 + $0x8c] sm:$0x1]
  %v100 = vunpack.c.l.bf16 %v84
  %v101 = vunpack.c.l.bf16 %v85
  %v102 = vunpack.c.l.bf16 %v86
  %v103 = vunpack.c.l.bf16 %v87
  %v104 = vunpack.c.l.bf16 %v88
  %v105 = vunpack.c.l.bf16 %v89
  %v106 = vunpack.c.l.bf16 %v90
  %v107 = vunpack.c.l.bf16 %v91
  %v108 = vunpack.c.l.bf16 %v92
  %v109 = vunpack.c.l.bf16 %v93
  %v110 = vunpack.c.l.bf16 %v94
  %v111 = vunpack.c.l.bf16 %v95
  %v112 = vunpack.c.l.bf16 %v96
  %v113 = vunpack.c.l.bf16 %v97
  %v114 = vunpack.c.l.bf16 %v98
  %v115 = vunpack.c.l.bf16 %v99
  %v117 = vlaneseq
  %v118 = vshrl.u32 %v117, 7
  %v119 = vsub.s32 0, %v118
  %v120 = vrot.slane %v22, %v119
  %v122 = vmul.f32 %v46, %v120
  %v123 = vmul.f32 %v100, %v120
  %v124 = vmul.f32 %v47, %v120
  %v125 = vmul.f32 %v101, %v120
  %v126 = vmul.f32 %v48, %v120
  %v127 = vmul.f32 %v102, %v120
  %v128 = vmul.f32 %v49, %v120
  %v129 = vmul.f32 %v103, %v120
  %v130 = vmul.f32 %v50, %v120
  %v131 = vmul.f32 %v104, %v120
  %v132 = vmul.f32 %v51, %v120
  %v133 = vmul.f32 %v105, %v120
  %v134 = vmul.f32 %v52, %v120
  %v135 = vmul.f32 %v106, %v120
  %v136 = vmul.f32 %v53, %v120
  %v137 = vmul.f32 %v107, %v120
  %v138 = vmul.f32 %v54, %v120
  %v139 = vmul.f32 %v108, %v120
  %v140 = vmul.f32 %v55, %v120
  %v141 = vmul.f32 %v109, %v120
  %v142 = vmul.f32 %v56, %v120
  %v143 = vmul.f32 %v110, %v120
  %v144 = vmul.f32 %v57, %v120
  %v145 = vmul.f32 %v111, %v120
  %v146 = vmul.f32 %v58, %v120
  %v147 = vmul.f32 %v112, %v120
  %v148 = vmul.f32 %v59, %v120
  %v149 = vmul.f32 %v113, %v120
  %v150 = vmul.f32 %v60, %v120
  %v151 = vmul.f32 %v114, %v120
  %v152 = vmul.f32 %v61, %v120
  %v153 = vmul.f32 %v115, %v120
  %vm186 = vcmask 1046528
  %v187 = vrot.slane %v122, 1
  %v188 = vrot.slane %v123, 1
  %v189 = vsel %vm186, %v187, %v188
  %v190 = vrot.slane %v124, 1
  %v191 = vrot.slane %v125, 1
  %v192 = vsel %vm186, %v190, %v191
  %v193 = vrot.slane %v126, 1
  %v194 = vrot.slane %v127, 1
  %v195 = vsel %vm186, %v193, %v194
  %v196 = vrot.slane %v128, 1
  %v197 = vrot.slane %v129, 1
  %v198 = vsel %vm186, %v196, %v197
  %v199 = vrot.slane %v130, 1
  %v200 = vrot.slane %v131, 1
  %v201 = vsel %vm186, %v199, %v200
  %v202 = vrot.slane %v132, 1
  %v203 = vrot.slane %v133, 1
  %v204 = vsel %vm186, %v202, %v203
  %v205 = vrot.slane %v134, 1
  %v206 = vrot.slane %v135, 1
  %v207 = vsel %vm186, %v205, %v206
  %v208 = vrot.slane %v136, 1
  %v209 = vrot.slane %v137, 1
  %v210 = vsel %vm186, %v208, %v209
  %v211 = vrot.slane %v138, 1
  %v212 = vrot.slane %v139, 1
  %v213 = vsel %vm186, %v211, %v212
  %v214 = vrot.slane %v140, 1
  %v215 = vrot.slane %v141, 1
  %v216 = vsel %vm186, %v214, %v215
  %v217 = vrot.slane %v142, 1
  %v218 = vrot.slane %v143, 1
  %v219 = vsel %vm186, %v217, %v218
  %v220 = vrot.slane %v144, 1
  %v221 = vrot.slane %v145, 1
  %v222 = vsel %vm186, %v220, %v221
  %v223 = vrot.slane %v146, 1
  %v224 = vrot.slane %v147, 1
  %v225 = vsel %vm186, %v223, %v224
  %v226 = vrot.slane %v148, 1
  %v227 = vrot.slane %v149, 1
  %v228 = vsel %vm186, %v226, %v227
  %v229 = vrot.slane %v150, 1
  %v230 = vrot.slane %v151, 1
  %v231 = vsel %vm186, %v229, %v230
  %v232 = vrot.slane %v152, 1
  %v233 = vrot.slane %v153, 1
  %v234 = vsel %vm186, %v232, %v233
  %v251 = vadd.f32 %v68, %v189
  %v252 = vadd.f32 %v69, %v192
  %v253 = vadd.f32 %v70, %v195
  %v254 = vadd.f32 %v71, %v198
  %v255 = vadd.f32 %v72, %v201
  %v256 = vadd.f32 %v73, %v204
  %v257 = vadd.f32 %v74, %v207
  %v258 = vadd.f32 %v75, %v210
  %v259 = vadd.f32 %v76, %v213
  %v260 = vadd.f32 %v77, %v216
  %v261 = vadd.f32 %v78, %v219
  %v262 = vadd.f32 %v79, %v222
  %v263 = vadd.f32 %v80, %v225
  %v264 = vadd.f32 %v81, %v228
  %v265 = vadd.f32 %v82, %v231
  %v266 = vadd.f32 %v83, %v234
  %v267 = vld [vmem:[%s0] sm:$0xe]
  %v268 = vld [vmem:[%s0 + $0x8] sm:$0xe]
  %v269 = vld [vmem:[%s0 + $0x10] sm:$0xe]
  %v270 = vld [vmem:[%s0 + $0x18] sm:$0xe]
  %v271 = vld [vmem:[%s0 + $0x20] sm:$0xe]
  %v272 = vld [vmem:[%s0 + $0x28] sm:$0xe]
  %v273 = vld [vmem:[%s0 + $0x30] sm:$0xe]
  %v274 = vld [vmem:[%s0 + $0x38] sm:$0xe]
  %v275 = vld [vmem:[%s0 + $0x50] sm:$0xe]
  %v276 = vld [vmem:[%s0 + $0x58] sm:$0xe]
  %v277 = vld [vmem:[%s0 + $0x60] sm:$0xe]
  %v278 = vld [vmem:[%s0 + $0x68] sm:$0xe]
  %v279 = vld [vmem:[%s0 + $0x70] sm:$0xe]
  %v280 = vld [vmem:[%s0 + $0x78] sm:$0xe]
  %v281 = vld [vmem:[%s0 + $0x80] sm:$0xe]
  %v282 = vld [vmem:[%s0 + $0x88] sm:$0xe]
  %v283 = vunpack.c.l.bf16 %v267
  %v284 = vunpack.c.l.bf16 %v268
  %v285 = vunpack.c.l.bf16 %v269
  %v286 = vunpack.c.l.bf16 %v270
  %v287 = vunpack.c.l.bf16 %v271
  %v288 = vunpack.c.l.bf16 %v272
  %v289 = vunpack.c.l.bf16 %v273
  %v290 = vunpack.c.l.bf16 %v274
  %v291 = vunpack.c.l.bf16 %v275
  %v292 = vunpack.c.l.bf16 %v276
  %v293 = vunpack.c.l.bf16 %v277
  %v294 = vunpack.c.l.bf16 %v278
  %v295 = vunpack.c.l.bf16 %v279
  %v296 = vunpack.c.l.bf16 %v280
  %v297 = vunpack.c.l.bf16 %v281
  %v298 = vunpack.c.l.bf16 %v282
  %v300 = vlaneseq
  %v301 = vshrl.u32 %v300, 7
  %v302 = vsub.s32 0, %v301
  %v303 = vrot.slane %v23, %v302
  %v305 = vmul.f32 %v283, %v303
  %v306 = vmul.f32 %v100, %v303
  %v307 = vmul.f32 %v284, %v303
  %v308 = vmul.f32 %v101, %v303
  %v309 = vmul.f32 %v285, %v303
  %v310 = vmul.f32 %v102, %v303
  %v311 = vmul.f32 %v286, %v303
  %v312 = vmul.f32 %v103, %v303
  %v313 = vmul.f32 %v287, %v303
  %v314 = vmul.f32 %v104, %v303
  %v315 = vmul.f32 %v288, %v303
  %v316 = vmul.f32 %v105, %v303
  %v317 = vmul.f32 %v289, %v303
  %v318 = vmul.f32 %v106, %v303
  %v319 = vmul.f32 %v290, %v303
  %v320 = vmul.f32 %v107, %v303
  %v321 = vmul.f32 %v291, %v303
  %v322 = vmul.f32 %v108, %v303
  %v323 = vmul.f32 %v292, %v303
  %v324 = vmul.f32 %v109, %v303
  %v325 = vmul.f32 %v293, %v303
  %v326 = vmul.f32 %v110, %v303
  %v327 = vmul.f32 %v294, %v303
  %v328 = vmul.f32 %v111, %v303
  %v329 = vmul.f32 %v295, %v303
  %v330 = vmul.f32 %v112, %v303
  %v331 = vmul.f32 %v296, %v303
  %v332 = vmul.f32 %v113, %v303
  %v333 = vmul.f32 %v297, %v303
  %v334 = vmul.f32 %v114, %v303
  %v335 = vmul.f32 %v298, %v303
  %v336 = vmul.f32 %v115, %v303
  %vm369 = vcmask 1045504
  %v370 = vrot.slane %v305, 2
  %v371 = vrot.slane %v306, 2
  %v372 = vsel %vm369, %v370, %v371
  %v373 = vrot.slane %v307, 2
  %v374 = vrot.slane %v308, 2
  %v375 = vsel %vm369, %v373, %v374
  %v376 = vrot.slane %v309, 2
  %v377 = vrot.slane %v310, 2
  %v378 = vsel %vm369, %v376, %v377
  %v379 = vrot.slane %v311, 2
  %v380 = vrot.slane %v312, 2
  %v381 = vsel %vm369, %v379, %v380
  %v382 = vrot.slane %v313, 2
  %v383 = vrot.slane %v314, 2
  %v384 = vsel %vm369, %v382, %v383
  %v385 = vrot.slane %v315, 2
  %v386 = vrot.slane %v316, 2
  %v387 = vsel %vm369, %v385, %v386
  %v388 = vrot.slane %v317, 2
  %v389 = vrot.slane %v318, 2
  %v390 = vsel %vm369, %v388, %v389
  %v391 = vrot.slane %v319, 2
  %v392 = vrot.slane %v320, 2
  %v393 = vsel %vm369, %v391, %v392
  %v394 = vrot.slane %v321, 2
  %v395 = vrot.slane %v322, 2
  %v396 = vsel %vm369, %v394, %v395
  %v397 = vrot.slane %v323, 2
  %v398 = vrot.slane %v324, 2
  %v399 = vsel %vm369, %v397, %v398
  %v400 = vrot.slane %v325, 2
  %v401 = vrot.slane %v326, 2
  %v402 = vsel %vm369, %v400, %v401
  %v403 = vrot.slane %v327, 2
  %v404 = vrot.slane %v328, 2
  %v405 = vsel %vm369, %v403, %v404
  %v406 = vrot.slane %v329, 2
  %v407 = vrot.slane %v330, 2
  %v408 = vsel %vm369, %v406, %v407
  %v409 = vrot.slane %v331, 2
  %v410 = vrot.slane %v332, 2
  %v411 = vsel %vm369, %v409, %v410
  %v412 = vrot.slane %v333, 2
  %v413 = vrot.slane %v334, 2
  %v414 = vsel %vm369, %v412, %v413
  %v415 = vrot.slane %v335, 2
  %v416 = vrot.slane %v336, 2
  %v417 = vsel %vm369, %v415, %v416
  %v434 = vadd.f32 %v251, %v372
  %v435 = vadd.f32 %v252, %v375
  %v436 = vadd.f32 %v253, %v378
  %v437 = vadd.f32 %v254, %v381
  %v438 = vadd.f32 %v255, %v384
  %v439 = vadd.f32 %v256, %v387
  %v440 = vadd.f32 %v257, %v390
  %v441 = vadd.f32 %v258, %v393
  %v442 = vadd.f32 %v259, %v396
  %v443 = vadd.f32 %v260, %v399
  %v444 = vadd.f32 %v261, %v402
  %v445 = vadd.f32 %v262, %v405
  %v446 = vadd.f32 %v263, %v408
  %v447 = vadd.f32 %v264, %v411
  %v448 = vadd.f32 %v265, %v414
  %v449 = vadd.f32 %v266, %v417
  %s450 = scalar_lea.vmem %s0, 8
  %v451 = vld [vmem:[%s450] sm:$0xf]
  %v452 = vld [vmem:[%s450 + $0x8] sm:$0xf]
  %v453 = vld [vmem:[%s450 + $0x10] sm:$0xf]
  %v454 = vld [vmem:[%s450 + $0x18] sm:$0xf]
  %v455 = vld [vmem:[%s450 + $0x20] sm:$0xf]
  %v456 = vld [vmem:[%s450 + $0x28] sm:$0xf]
  %v457 = vld [vmem:[%s450 + $0x30] sm:$0xf]
  %v458 = vld [vmem:[%s450 + $0x38] sm:$0xf]
  %v459 = vld [vmem:[%s450 + $0x50] sm:$0xf]
  %v460 = vld [vmem:[%s450 + $0x58] sm:$0xf]
  %v461 = vld [vmem:[%s450 + $0x60] sm:$0xf]
  %v462 = vld [vmem:[%s450 + $0x68] sm:$0xf]
  %v463 = vld [vmem:[%s450 + $0x70] sm:$0xf]
  %v464 = vld [vmem:[%s450 + $0x78] sm:$0xf]
  %v465 = vld [vmem:[%s450 + $0x80] sm:$0xf]
  %v466 = vld [vmem:[%s450 + $0x88] sm:$0xf]
  %v467 = vunpack.c.l.bf16 %v451
  %v468 = vunpack.c.l.bf16 %v452
  %v469 = vunpack.c.l.bf16 %v453
  %v470 = vunpack.c.l.bf16 %v454
  %v471 = vunpack.c.l.bf16 %v455
  %v472 = vunpack.c.l.bf16 %v456
  %v473 = vunpack.c.l.bf16 %v457
  %v474 = vunpack.c.l.bf16 %v458
  %v475 = vunpack.c.l.bf16 %v459
  %v476 = vunpack.c.l.bf16 %v460
  %v477 = vunpack.c.l.bf16 %v461
  %v478 = vunpack.c.l.bf16 %v462
  %v479 = vunpack.c.l.bf16 %v463
  %v480 = vunpack.c.l.bf16 %v464
  %v481 = vunpack.c.l.bf16 %v465
  %v482 = vunpack.c.l.bf16 %v466
  %v484 = vlaneseq
  %v485 = vshrl.u32 %v484, 7
  %v486 = vsub.s32 0, %v485
  %v487 = vrot.slane %v24, %v486
  %v489 = vmul.f32 %v467, %v487
  %v490 = vmul.f32 %v468, %v487
  %v491 = vmul.f32 %v469, %v487
  %v492 = vmul.f32 %v470, %v487
  %v493 = vmul.f32 %v471, %v487
  %v494 = vmul.f32 %v472, %v487
  %v495 = vmul.f32 %v473, %v487
  %v496 = vmul.f32 %v474, %v487
  %v497 = vmul.f32 %v475, %v487
  %v498 = vmul.f32 %v476, %v487
  %v499 = vmul.f32 %v477, %v487
  %v500 = vmul.f32 %v478, %v487
  %v501 = vmul.f32 %v479, %v487
  %v502 = vmul.f32 %v480, %v487
  %v503 = vmul.f32 %v481, %v487
  %v504 = vmul.f32 %v482, %v487
  %v505 = vadd.f32 %v434, %v489
  %v506 = vadd.f32 %v435, %v490
  %v507 = vadd.f32 %v436, %v491
  %v508 = vadd.f32 %v437, %v492
  %v509 = vadd.f32 %v438, %v493
  %v510 = vadd.f32 %v439, %v494
  %v511 = vadd.f32 %v440, %v495
  %v512 = vadd.f32 %v441, %v496
  %v513 = vadd.f32 %v442, %v497
  %v514 = vadd.f32 %v443, %v498
  %v515 = vadd.f32 %v444, %v499
  %v516 = vadd.f32 %v445, %v500
  %v517 = vadd.f32 %v446, %v501
  %v518 = vadd.f32 %v447, %v502
  %v519 = vadd.f32 %v448, %v503
  %v520 = vadd.f32 %v449, %v504
  %v521 = vld [vmem:[%s450 + $0x4] sm:$0x1]
  %v522 = vld [vmem:[%s450 + $0xc] sm:$0x1]
  %v523 = vld [vmem:[%s450 + $0x14] sm:$0x1]
  %v524 = vld [vmem:[%s450 + $0x1c] sm:$0x1]
  %v525 = vld [vmem:[%s450 + $0x24] sm:$0x1]
  %v526 = vld [vmem:[%s450 + $0x2c] sm:$0x1]
  %v527 = vld [vmem:[%s450 + $0x34] sm:$0x1]
  %v528 = vld [vmem:[%s450 + $0x3c] sm:$0x1]
  %v529 = vld [vmem:[%s450 + $0x54] sm:$0x1]
  %v530 = vld [vmem:[%s450 + $0x5c] sm:$0x1]
  %v531 = vld [vmem:[%s450 + $0x64] sm:$0x1]
  %v532 = vld [vmem:[%s450 + $0x6c] sm:$0x1]
  %v533 = vld [vmem:[%s450 + $0x74] sm:$0x1]
  %v534 = vld [vmem:[%s450 + $0x7c] sm:$0x1]
  %v535 = vld [vmem:[%s450 + $0x84] sm:$0x1]
  %v536 = vld [vmem:[%s450 + $0x8c] sm:$0x1]
  %v537 = vunpack.c.l.bf16 %v521
  %v538 = vunpack.c.l.bf16 %v522
  %v539 = vunpack.c.l.bf16 %v523
  %v540 = vunpack.c.l.bf16 %v524
  %v541 = vunpack.c.l.bf16 %v525
  %v542 = vunpack.c.l.bf16 %v526
  %v543 = vunpack.c.l.bf16 %v527
  %v544 = vunpack.c.l.bf16 %v528
  %v545 = vunpack.c.l.bf16 %v529
  %v546 = vunpack.c.l.bf16 %v530
  %v547 = vunpack.c.l.bf16 %v531
  %v548 = vunpack.c.l.bf16 %v532
  %v549 = vunpack.c.l.bf16 %v533
  %v550 = vunpack.c.l.bf16 %v534
  %v551 = vunpack.c.l.bf16 %v535
  %v552 = vunpack.c.l.bf16 %v536
  %v554 = vlaneseq
  %v555 = vshrl.u32 %v554, 7
  %v556 = vsub.s32 0, %v555
  %v557 = vrot.slane %v25, %v556
  %v559 = vmul.f32 %v467, %v557
  %v560 = vmul.f32 %v537, %v557
  %v561 = vmul.f32 %v468, %v557
  %v562 = vmul.f32 %v538, %v557
  %v563 = vmul.f32 %v469, %v557
  %v564 = vmul.f32 %v539, %v557
  %v565 = vmul.f32 %v470, %v557
  %v566 = vmul.f32 %v540, %v557
  %v567 = vmul.f32 %v471, %v557
  %v568 = vmul.f32 %v541, %v557
  %v569 = vmul.f32 %v472, %v557
  %v570 = vmul.f32 %v542, %v557
  %v571 = vmul.f32 %v473, %v557
  %v572 = vmul.f32 %v543, %v557
  %v573 = vmul.f32 %v474, %v557
  %v574 = vmul.f32 %v544, %v557
  %v575 = vmul.f32 %v475, %v557
  %v576 = vmul.f32 %v545, %v557
  %v577 = vmul.f32 %v476, %v557
  %v578 = vmul.f32 %v546, %v557
  %v579 = vmul.f32 %v477, %v557
  %v580 = vmul.f32 %v547, %v557
  %v581 = vmul.f32 %v478, %v557
  %v582 = vmul.f32 %v548, %v557
  %v583 = vmul.f32 %v479, %v557
  %v584 = vmul.f32 %v549, %v557
  %v585 = vmul.f32 %v480, %v557
  %v586 = vmul.f32 %v550, %v557
  %v587 = vmul.f32 %v481, %v557
  %v588 = vmul.f32 %v551, %v557
  %v589 = vmul.f32 %v482, %v557
  %v590 = vmul.f32 %v552, %v557
  %v623 = vrot.slane %v559, 1
  %v624 = vrot.slane %v560, 1
  %v625 = vsel %vm186, %v623, %v624
  %v626 = vrot.slane %v561, 1
  %v627 = vrot.slane %v562, 1
  %v628 = vsel %vm186, %v626, %v627
  %v629 = vrot.slane %v563, 1
  %v630 = vrot.slane %v564, 1
  %v631 = vsel %vm186, %v629, %v630
  %v632 = vrot.slane %v565, 1
  %v633 = vrot.slane %v566, 1
  %v634 = vsel %vm186, %v632, %v633
  %v635 = vrot.slane %v567, 1
  %v636 = vrot.slane %v568, 1
  %v637 = vsel %vm186, %v635, %v636
  %v638 = vrot.slane %v569, 1
  %v639 = vrot.slane %v570, 1
  %v640 = vsel %vm186, %v638, %v639
  %v641 = vrot.slane %v571, 1
  %v642 = vrot.slane %v572, 1
  %v643 = vsel %vm186, %v641, %v642
  %v644 = vrot.slane %v573, 1
  %v645 = vrot.slane %v574, 1
  %v646 = vsel %vm186, %v644, %v645
  %v647 = vrot.slane %v575, 1
  %v648 = vrot.slane %v576, 1
  %v649 = vsel %vm186, %v647, %v648
  %v650 = vrot.slane %v577, 1
  %v651 = vrot.slane %v578, 1
  %v652 = vsel %vm186, %v650, %v651
  %v653 = vrot.slane %v579, 1
  %v654 = vrot.slane %v580, 1
  %v655 = vsel %vm186, %v653, %v654
  %v656 = vrot.slane %v581, 1
  %v657 = vrot.slane %v582, 1
  %v658 = vsel %vm186, %v656, %v657
  %v659 = vrot.slane %v583, 1
  %v660 = vrot.slane %v584, 1
  %v661 = vsel %vm186, %v659, %v660
  %v662 = vrot.slane %v585, 1
  %v663 = vrot.slane %v586, 1
  %v664 = vsel %vm186, %v662, %v663
  %v665 = vrot.slane %v587, 1
  %v666 = vrot.slane %v588, 1
  %v667 = vsel %vm186, %v665, %v666
  %v668 = vrot.slane %v589, 1
  %v669 = vrot.slane %v590, 1
  %v670 = vsel %vm186, %v668, %v669
  %v687 = vadd.f32 %v505, %v625
  %v688 = vadd.f32 %v506, %v628
  %v689 = vadd.f32 %v507, %v631
  %v690 = vadd.f32 %v508, %v634
  %v691 = vadd.f32 %v509, %v637
  %v692 = vadd.f32 %v510, %v640
  %v693 = vadd.f32 %v511, %v643
  %v694 = vadd.f32 %v512, %v646
  %v695 = vadd.f32 %v513, %v649
  %v696 = vadd.f32 %v514, %v652
  %v697 = vadd.f32 %v515, %v655
  %v698 = vadd.f32 %v516, %v658
  %v699 = vadd.f32 %v517, %v661
  %v700 = vadd.f32 %v518, %v664
  %v701 = vadd.f32 %v519, %v667
  %v702 = vadd.f32 %v520, %v670
  %v703 = vld [vmem:[%s450] sm:$0xe]
  %v704 = vld [vmem:[%s450 + $0x8] sm:$0xe]
  %v705 = vld [vmem:[%s450 + $0x10] sm:$0xe]
  %v706 = vld [vmem:[%s450 + $0x18] sm:$0xe]
  %v707 = vld [vmem:[%s450 + $0x20] sm:$0xe]
  %v708 = vld [vmem:[%s450 + $0x28] sm:$0xe]
  %v709 = vld [vmem:[%s450 + $0x30] sm:$0xe]
  %v710 = vld [vmem:[%s450 + $0x38] sm:$0xe]
  %v711 = vld [vmem:[%s450 + $0x50] sm:$0xe]
  %v712 = vld [vmem:[%s450 + $0x58] sm:$0xe]
  %v713 = vld [vmem:[%s450 + $0x60] sm:$0xe]
  %v714 = vld [vmem:[%s450 + $0x68] sm:$0xe]
  %v715 = vld [vmem:[%s450 + $0x70] sm:$0xe]
  %v716 = vld [vmem:[%s450 + $0x78] sm:$0xe]
  %v717 = vld [vmem:[%s450 + $0x80] sm:$0xe]
  %v718 = vld [vmem:[%s450 + $0x88] sm:$0xe]
  %v719 = vunpack.c.l.bf16 %v703
  %v720 = vunpack.c.l.bf16 %v704
  %v721 = vunpack.c.l.bf16 %v705
  %v722 = vunpack.c.l.bf16 %v706
  %v723 = vunpack.c.l.bf16 %v707
  %v724 = vunpack.c.l.bf16 %v708
  %v725 = vunpack.c.l.bf16 %v709
  %v726 = vunpack.c.l.bf16 %v710
  %v727 = vunpack.c.l.bf16 %v711
  %v728 = vunpack.c.l.bf16 %v712
  %v729 = vunpack.c.l.bf16 %v713
  %v730 = vunpack.c.l.bf16 %v714
  %v731 = vunpack.c.l.bf16 %v715
  %v732 = vunpack.c.l.bf16 %v716
  %v733 = vunpack.c.l.bf16 %v717
  %v734 = vunpack.c.l.bf16 %v718
  %v736 = vlaneseq
  %v737 = vshrl.u32 %v736, 7
  %v738 = vsub.s32 0, %v737
  %v739 = vrot.slane %v26, %v738
  %v741 = vmul.f32 %v719, %v739
  %v742 = vmul.f32 %v537, %v739
  %v743 = vmul.f32 %v720, %v739
  %v744 = vmul.f32 %v538, %v739
  %v745 = vmul.f32 %v721, %v739
  %v746 = vmul.f32 %v539, %v739
  %v747 = vmul.f32 %v722, %v739
  %v748 = vmul.f32 %v540, %v739
  %v749 = vmul.f32 %v723, %v739
  %v750 = vmul.f32 %v541, %v739
  %v751 = vmul.f32 %v724, %v739
  %v752 = vmul.f32 %v542, %v739
  %v753 = vmul.f32 %v725, %v739
  %v754 = vmul.f32 %v543, %v739
  %v755 = vmul.f32 %v726, %v739
  %v756 = vmul.f32 %v544, %v739
  %v757 = vmul.f32 %v727, %v739
  %v758 = vmul.f32 %v545, %v739
  %v759 = vmul.f32 %v728, %v739
  %v760 = vmul.f32 %v546, %v739
  %v761 = vmul.f32 %v729, %v739
  %v762 = vmul.f32 %v547, %v739
  %v763 = vmul.f32 %v730, %v739
  %v764 = vmul.f32 %v548, %v739
  %v765 = vmul.f32 %v731, %v739
  %v766 = vmul.f32 %v549, %v739
  %v767 = vmul.f32 %v732, %v739
  %v768 = vmul.f32 %v550, %v739
  %v769 = vmul.f32 %v733, %v739
  %v770 = vmul.f32 %v551, %v739
  %v771 = vmul.f32 %v734, %v739
  %v772 = vmul.f32 %v552, %v739
  %v805 = vrot.slane %v741, 2
  %v806 = vrot.slane %v742, 2
  %v807 = vsel %vm369, %v805, %v806
  %v808 = vrot.slane %v743, 2
  %v809 = vrot.slane %v744, 2
  %v810 = vsel %vm369, %v808, %v809
  %v811 = vrot.slane %v745, 2
  %v812 = vrot.slane %v746, 2
  %v813 = vsel %vm369, %v811, %v812
  %v814 = vrot.slane %v747, 2
  %v815 = vrot.slane %v748, 2
  %v816 = vsel %vm369, %v814, %v815
  %v817 = vrot.slane %v749, 2
  %v818 = vrot.slane %v750, 2
  %v819 = vsel %vm369, %v817, %v818
  %v820 = vrot.slane %v751, 2
  %v821 = vrot.slane %v752, 2
  %v822 = vsel %vm369, %v820, %v821
  %v823 = vrot.slane %v753, 2
  %v824 = vrot.slane %v754, 2
  %v825 = vsel %vm369, %v823, %v824
  %v826 = vrot.slane %v755, 2
  %v827 = vrot.slane %v756, 2
  %v828 = vsel %vm369, %v826, %v827
  %v829 = vrot.slane %v757, 2
  %v830 = vrot.slane %v758, 2
  %v831 = vsel %vm369, %v829, %v830
  %v832 = vrot.slane %v759, 2
  %v833 = vrot.slane %v760, 2
  %v834 = vsel %vm369, %v832, %v833
  %v835 = vrot.slane %v761, 2
  %v836 = vrot.slane %v762, 2
  %v837 = vsel %vm369, %v835, %v836
  %v838 = vrot.slane %v763, 2
  %v839 = vrot.slane %v764, 2
  %v840 = vsel %vm369, %v838, %v839
  %v841 = vrot.slane %v765, 2
  %v842 = vrot.slane %v766, 2
  %v843 = vsel %vm369, %v841, %v842
  %v844 = vrot.slane %v767, 2
  %v845 = vrot.slane %v768, 2
  %v846 = vsel %vm369, %v844, %v845
  %v847 = vrot.slane %v769, 2
  %v848 = vrot.slane %v770, 2
  %v849 = vsel %vm369, %v847, %v848
  %v850 = vrot.slane %v771, 2
  %v851 = vrot.slane %v772, 2
  %v852 = vsel %vm369, %v850, %v851
  %v869 = vadd.f32 %v687, %v807
  %v870 = vadd.f32 %v688, %v810
  %v871 = vadd.f32 %v689, %v813
  %v872 = vadd.f32 %v690, %v816
  %v873 = vadd.f32 %v691, %v819
  %v874 = vadd.f32 %v692, %v822
  %v875 = vadd.f32 %v693, %v825
  %v876 = vadd.f32 %v694, %v828
  %v877 = vadd.f32 %v695, %v831
  %v878 = vadd.f32 %v696, %v834
  %v879 = vadd.f32 %v697, %v837
  %v880 = vadd.f32 %v698, %v840
  %v881 = vadd.f32 %v699, %v843
  %v882 = vadd.f32 %v700, %v846
  %v883 = vadd.f32 %v701, %v849
  %v884 = vadd.f32 %v702, %v852
  %s885 = scalar_lea.vmem %s0, 16
  %v886 = vld [vmem:[%s885] sm:$0xf]
  %v887 = vld [vmem:[%s885 + $0x8] sm:$0xf]
  %v888 = vld [vmem:[%s885 + $0x10] sm:$0xf]
  %v889 = vld [vmem:[%s885 + $0x18] sm:$0xf]
  %v890 = vld [vmem:[%s885 + $0x20] sm:$0xf]
  %v891 = vld [vmem:[%s885 + $0x28] sm:$0xf]
  %v892 = vld [vmem:[%s885 + $0x30] sm:$0xf]
  %v893 = vld [vmem:[%s885 + $0x38] sm:$0xf]
  %v894 = vld [vmem:[%s885 + $0x50] sm:$0xf]
  %v895 = vld [vmem:[%s885 + $0x58] sm:$0xf]
  %v896 = vld [vmem:[%s885 + $0x60] sm:$0xf]
  %v897 = vld [vmem:[%s885 + $0x68] sm:$0xf]
  %v898 = vld [vmem:[%s885 + $0x70] sm:$0xf]
  %v899 = vld [vmem:[%s885 + $0x78] sm:$0xf]
  %v900 = vld [vmem:[%s885 + $0x80] sm:$0xf]
  %v901 = vld [vmem:[%s885 + $0x88] sm:$0xf]
  %v902 = vunpack.c.l.bf16 %v886
  %v903 = vunpack.c.l.bf16 %v887
  %v904 = vunpack.c.l.bf16 %v888
  %v905 = vunpack.c.l.bf16 %v889
  %v906 = vunpack.c.l.bf16 %v890
  %v907 = vunpack.c.l.bf16 %v891
  %v908 = vunpack.c.l.bf16 %v892
  %v909 = vunpack.c.l.bf16 %v893
  %v910 = vunpack.c.l.bf16 %v894
  %v911 = vunpack.c.l.bf16 %v895
  %v912 = vunpack.c.l.bf16 %v896
  %v913 = vunpack.c.l.bf16 %v897
  %v914 = vunpack.c.l.bf16 %v898
  %v915 = vunpack.c.l.bf16 %v899
  %v916 = vunpack.c.l.bf16 %v900
  %v917 = vunpack.c.l.bf16 %v901
  %v919 = vlaneseq
  %v920 = vshrl.u32 %v919, 7
  %v921 = vsub.s32 0, %v920
  %v922 = vrot.slane %v27, %v921
  %v924 = vmul.f32 %v902, %v922
  %v925 = vmul.f32 %v903, %v922
  %v926 = vmul.f32 %v904, %v922
  %v927 = vmul.f32 %v905, %v922
  %v928 = vmul.f32 %v906, %v922
  %v929 = vmul.f32 %v907, %v922
  %v930 = vmul.f32 %v908, %v922
  %v931 = vmul.f32 %v909, %v922
  %v932 = vmul.f32 %v910, %v922
  %v933 = vmul.f32 %v911, %v922
  %v934 = vmul.f32 %v912, %v922
  %v935 = vmul.f32 %v913, %v922
  %v936 = vmul.f32 %v914, %v922
  %v937 = vmul.f32 %v915, %v922
  %v938 = vmul.f32 %v916, %v922
  %v939 = vmul.f32 %v917, %v922
  %v940 = vadd.f32 %v869, %v924
  %v941 = vadd.f32 %v870, %v925
  %v942 = vadd.f32 %v871, %v926
  %v943 = vadd.f32 %v872, %v927
  %v944 = vadd.f32 %v873, %v928
  %v945 = vadd.f32 %v874, %v929
  %v946 = vadd.f32 %v875, %v930
  %v947 = vadd.f32 %v876, %v931
  %v948 = vadd.f32 %v877, %v932
  %v949 = vadd.f32 %v878, %v933
  %v950 = vadd.f32 %v879, %v934
  %v951 = vadd.f32 %v880, %v935
  %v952 = vadd.f32 %v881, %v936
  %v953 = vadd.f32 %v882, %v937
  %v954 = vadd.f32 %v883, %v938
  %v955 = vadd.f32 %v884, %v939
  %v956 = vld [vmem:[%s885 + $0x4] sm:$0x1]
  %v957 = vld [vmem:[%s885 + $0xc] sm:$0x1]
  %v958 = vld [vmem:[%s885 + $0x14] sm:$0x1]
  %v959 = vld [vmem:[%s885 + $0x1c] sm:$0x1]
  %v960 = vld [vmem:[%s885 + $0x24] sm:$0x1]
  %v961 = vld [vmem:[%s885 + $0x2c] sm:$0x1]
  %v962 = vld [vmem:[%s885 + $0x34] sm:$0x1]
  %v963 = vld [vmem:[%s885 + $0x3c] sm:$0x1]
  %v964 = vld [vmem:[%s885 + $0x54] sm:$0x1]
  %v965 = vld [vmem:[%s885 + $0x5c] sm:$0x1]
  %v966 = vld [vmem:[%s885 + $0x64] sm:$0x1]
  %v967 = vld [vmem:[%s885 + $0x6c] sm:$0x1]
  %v968 = vld [vmem:[%s885 + $0x74] sm:$0x1]
  %v969 = vld [vmem:[%s885 + $0x7c] sm:$0x1]
  %v970 = vld [vmem:[%s885 + $0x84] sm:$0x1]
  %v971 = vld [vmem:[%s885 + $0x8c] sm:$0x1]
  %v972 = vunpack.c.l.bf16 %v956
  %v973 = vunpack.c.l.bf16 %v957
  %v974 = vunpack.c.l.bf16 %v958
  %v975 = vunpack.c.l.bf16 %v959
  %v976 = vunpack.c.l.bf16 %v960
  %v977 = vunpack.c.l.bf16 %v961
  %v978 = vunpack.c.l.bf16 %v962
  %v979 = vunpack.c.l.bf16 %v963
  %v980 = vunpack.c.l.bf16 %v964
  %v981 = vunpack.c.l.bf16 %v965
  %v982 = vunpack.c.l.bf16 %v966
  %v983 = vunpack.c.l.bf16 %v967
  %v984 = vunpack.c.l.bf16 %v968
  %v985 = vunpack.c.l.bf16 %v969
  %v986 = vunpack.c.l.bf16 %v970
  %v987 = vunpack.c.l.bf16 %v971
  %v989 = vlaneseq
  %v990 = vshrl.u32 %v989, 7
  %v991 = vsub.s32 0, %v990
  %v992 = vrot.slane %v28, %v991
  %v994 = vmul.f32 %v902, %v992
  %v995 = vmul.f32 %v972, %v992
  %v996 = vmul.f32 %v903, %v992
  %v997 = vmul.f32 %v973, %v992
  %v998 = vmul.f32 %v904, %v992
  %v999 = vmul.f32 %v974, %v992
  %v1000 = vmul.f32 %v905, %v992
  %v1001 = vmul.f32 %v975, %v992
  %v1002 = vmul.f32 %v906, %v992
  %v1003 = vmul.f32 %v976, %v992
  %v1004 = vmul.f32 %v907, %v992
  %v1005 = vmul.f32 %v977, %v992
  %v1006 = vmul.f32 %v908, %v992
  %v1007 = vmul.f32 %v978, %v992
  %v1008 = vmul.f32 %v909, %v992
  %v1009 = vmul.f32 %v979, %v992
  %v1010 = vmul.f32 %v910, %v992
  %v1011 = vmul.f32 %v980, %v992
  %v1012 = vmul.f32 %v911, %v992
  %v1013 = vmul.f32 %v981, %v992
  %v1014 = vmul.f32 %v912, %v992
  %v1015 = vmul.f32 %v982, %v992
  %v1016 = vmul.f32 %v913, %v992
  %v1017 = vmul.f32 %v983, %v992
  %v1018 = vmul.f32 %v914, %v992
  %v1019 = vmul.f32 %v984, %v992
  %v1020 = vmul.f32 %v915, %v992
  %v1021 = vmul.f32 %v985, %v992
  %v1022 = vmul.f32 %v916, %v992
  %v1023 = vmul.f32 %v986, %v992
  %v1024 = vmul.f32 %v917, %v992
  %v1025 = vmul.f32 %v987, %v992
  %v1058 = vrot.slane %v994, 1
  %v1059 = vrot.slane %v995, 1
  %v1060 = vsel %vm186, %v1058, %v1059
  %v1061 = vrot.slane %v996, 1
  %v1062 = vrot.slane %v997, 1
  %v1063 = vsel %vm186, %v1061, %v1062
  %v1064 = vrot.slane %v998, 1
  %v1065 = vrot.slane %v999, 1
  %v1066 = vsel %vm186, %v1064, %v1065
  %v1067 = vrot.slane %v1000, 1
  %v1068 = vrot.slane %v1001, 1
  %v1069 = vsel %vm186, %v1067, %v1068
  %v1070 = vrot.slane %v1002, 1
  %v1071 = vrot.slane %v1003, 1
  %v1072 = vsel %vm186, %v1070, %v1071
  %v1073 = vrot.slane %v1004, 1
  %v1074 = vrot.slane %v1005, 1
  %v1075 = vsel %vm186, %v1073, %v1074
  %v1076 = vrot.slane %v1006, 1
  %v1077 = vrot.slane %v1007, 1
  %v1078 = vsel %vm186, %v1076, %v1077
  %v1079 = vrot.slane %v1008, 1
  %v1080 = vrot.slane %v1009, 1
  %v1081 = vsel %vm186, %v1079, %v1080
  %v1082 = vrot.slane %v1010, 1
  %v1083 = vrot.slane %v1011, 1
  %v1084 = vsel %vm186, %v1082, %v1083
  %v1085 = vrot.slane %v1012, 1
  %v1086 = vrot.slane %v1013, 1
  %v1087 = vsel %vm186, %v1085, %v1086
  %v1088 = vrot.slane %v1014, 1
  %v1089 = vrot.slane %v1015, 1
  %v1090 = vsel %vm186, %v1088, %v1089
  %v1091 = vrot.slane %v1016, 1
  %v1092 = vrot.slane %v1017, 1
  %v1093 = vsel %vm186, %v1091, %v1092
  %v1094 = vrot.slane %v1018, 1
  %v1095 = vrot.slane %v1019, 1
  %v1096 = vsel %vm186, %v1094, %v1095
  %v1097 = vrot.slane %v1020, 1
  %v1098 = vrot.slane %v1021, 1
  %v1099 = vsel %vm186, %v1097, %v1098
  %v1100 = vrot.slane %v1022, 1
  %v1101 = vrot.slane %v1023, 1
  %v1102 = vsel %vm186, %v1100, %v1101
  %v1103 = vrot.slane %v1024, 1
  %v1104 = vrot.slane %v1025, 1
  %v1105 = vsel %vm186, %v1103, %v1104
  %v1122 = vadd.f32 %v940, %v1060
  %v1123 = vadd.f32 %v941, %v1063
  %v1124 = vadd.f32 %v942, %v1066
  %v1125 = vadd.f32 %v943, %v1069
  %v1126 = vadd.f32 %v944, %v1072
  %v1127 = vadd.f32 %v945, %v1075
  %v1128 = vadd.f32 %v946, %v1078
  %v1129 = vadd.f32 %v947, %v1081
  %v1130 = vadd.f32 %v948, %v1084
  %v1131 = vadd.f32 %v949, %v1087
  %v1132 = vadd.f32 %v950, %v1090
  %v1133 = vadd.f32 %v951, %v1093
  %v1134 = vadd.f32 %v952, %v1096
  %v1135 = vadd.f32 %v953, %v1099
  %v1136 = vadd.f32 %v954, %v1102
  %v1137 = vadd.f32 %v955, %v1105
  %v1138 = vld [vmem:[%s885] sm:$0xe]
  %v1139 = vld [vmem:[%s885 + $0x8] sm:$0xe]
  %v1140 = vld [vmem:[%s885 + $0x10] sm:$0xe]
  %v1141 = vld [vmem:[%s885 + $0x18] sm:$0xe]
  %v1142 = vld [vmem:[%s885 + $0x20] sm:$0xe]
  %v1143 = vld [vmem:[%s885 + $0x28] sm:$0xe]
  %v1144 = vld [vmem:[%s885 + $0x30] sm:$0xe]
  %v1145 = vld [vmem:[%s885 + $0x38] sm:$0xe]
  %v1146 = vld [vmem:[%s885 + $0x50] sm:$0xe]
  %v1147 = vld [vmem:[%s885 + $0x58] sm:$0xe]
  %v1148 = vld [vmem:[%s885 + $0x60] sm:$0xe]
  %v1149 = vld [vmem:[%s885 + $0x68] sm:$0xe]
  %v1150 = vld [vmem:[%s885 + $0x70] sm:$0xe]
  %v1151 = vld [vmem:[%s885 + $0x78] sm:$0xe]
  %v1152 = vld [vmem:[%s885 + $0x80] sm:$0xe]
  %v1153 = vld [vmem:[%s885 + $0x88] sm:$0xe]
  %v1154 = vunpack.c.l.bf16 %v1138
  %v1155 = vunpack.c.l.bf16 %v1139
  %v1156 = vunpack.c.l.bf16 %v1140
  %v1157 = vunpack.c.l.bf16 %v1141
  %v1158 = vunpack.c.l.bf16 %v1142
  %v1159 = vunpack.c.l.bf16 %v1143
  %v1160 = vunpack.c.l.bf16 %v1144
  %v1161 = vunpack.c.l.bf16 %v1145
  %v1162 = vunpack.c.l.bf16 %v1146
  %v1163 = vunpack.c.l.bf16 %v1147
  %v1164 = vunpack.c.l.bf16 %v1148
  %v1165 = vunpack.c.l.bf16 %v1149
  %v1166 = vunpack.c.l.bf16 %v1150
  %v1167 = vunpack.c.l.bf16 %v1151
  %v1168 = vunpack.c.l.bf16 %v1152
  %v1169 = vunpack.c.l.bf16 %v1153
  %v1171 = vlaneseq
  %v1172 = vshrl.u32 %v1171, 7
  %v1173 = vsub.s32 0, %v1172
  %v1174 = vrot.slane %v29, %v1173
  %v1176 = vmul.f32 %v1154, %v1174
  %v1177 = vmul.f32 %v972, %v1174
  %v1178 = vmul.f32 %v1155, %v1174
  %v1179 = vmul.f32 %v973, %v1174
  %v1180 = vmul.f32 %v1156, %v1174
  %v1181 = vmul.f32 %v974, %v1174
  %v1182 = vmul.f32 %v1157, %v1174
  %v1183 = vmul.f32 %v975, %v1174
  %v1184 = vmul.f32 %v1158, %v1174
  %v1185 = vmul.f32 %v976, %v1174
  %v1186 = vmul.f32 %v1159, %v1174
  %v1187 = vmul.f32 %v977, %v1174
  %v1188 = vmul.f32 %v1160, %v1174
  %v1189 = vmul.f32 %v978, %v1174
  %v1190 = vmul.f32 %v1161, %v1174
  %v1191 = vmul.f32 %v979, %v1174
  %v1192 = vmul.f32 %v1162, %v1174
  %v1193 = vmul.f32 %v980, %v1174
  %v1194 = vmul.f32 %v1163, %v1174
  %v1195 = vmul.f32 %v981, %v1174
  %v1196 = vmul.f32 %v1164, %v1174
  %v1197 = vmul.f32 %v982, %v1174
  %v1198 = vmul.f32 %v1165, %v1174
  %v1199 = vmul.f32 %v983, %v1174
  %v1200 = vmul.f32 %v1166, %v1174
  %v1201 = vmul.f32 %v984, %v1174
  %v1202 = vmul.f32 %v1167, %v1174
  %v1203 = vmul.f32 %v985, %v1174
  %v1204 = vmul.f32 %v1168, %v1174
  %v1205 = vmul.f32 %v986, %v1174
  %v1206 = vmul.f32 %v1169, %v1174
  %v1207 = vmul.f32 %v987, %v1174
  %v1240 = vrot.slane %v1176, 2
  %v1241 = vrot.slane %v1177, 2
  %v1242 = vsel %vm369, %v1240, %v1241
  %v1243 = vrot.slane %v1178, 2
  %v1244 = vrot.slane %v1179, 2
  %v1245 = vsel %vm369, %v1243, %v1244
  %v1246 = vrot.slane %v1180, 2
  %v1247 = vrot.slane %v1181, 2
  %v1248 = vsel %vm369, %v1246, %v1247
  %v1249 = vrot.slane %v1182, 2
  %v1250 = vrot.slane %v1183, 2
  %v1251 = vsel %vm369, %v1249, %v1250
  %v1252 = vrot.slane %v1184, 2
  %v1253 = vrot.slane %v1185, 2
  %v1254 = vsel %vm369, %v1252, %v1253
  %v1255 = vrot.slane %v1186, 2
  %v1256 = vrot.slane %v1187, 2
  %v1257 = vsel %vm369, %v1255, %v1256
  %v1258 = vrot.slane %v1188, 2
  %v1259 = vrot.slane %v1189, 2
  %v1260 = vsel %vm369, %v1258, %v1259
  %v1261 = vrot.slane %v1190, 2
  %v1262 = vrot.slane %v1191, 2
  %v1263 = vsel %vm369, %v1261, %v1262
  %v1264 = vrot.slane %v1192, 2
  %v1265 = vrot.slane %v1193, 2
  %v1266 = vsel %vm369, %v1264, %v1265
  %v1267 = vrot.slane %v1194, 2
  %v1268 = vrot.slane %v1195, 2
  %v1269 = vsel %vm369, %v1267, %v1268
  %v1270 = vrot.slane %v1196, 2
  %v1271 = vrot.slane %v1197, 2
  %v1272 = vsel %vm369, %v1270, %v1271
  %v1273 = vrot.slane %v1198, 2
  %v1274 = vrot.slane %v1199, 2
  %v1275 = vsel %vm369, %v1273, %v1274
  %v1276 = vrot.slane %v1200, 2
  %v1277 = vrot.slane %v1201, 2
  %v1278 = vsel %vm369, %v1276, %v1277
  %v1279 = vrot.slane %v1202, 2
  %v1280 = vrot.slane %v1203, 2
  %v1281 = vsel %vm369, %v1279, %v1280
  %v1282 = vrot.slane %v1204, 2
  %v1283 = vrot.slane %v1205, 2
  %v1284 = vsel %vm369, %v1282, %v1283
  %v1285 = vrot.slane %v1206, 2
  %v1286 = vrot.slane %v1207, 2
  %v1287 = vsel %vm369, %v1285, %v1286
  %v1304 = vadd.f32 %v1122, %v1242
  %v1305 = vadd.f32 %v1123, %v1245
  %v1306 = vadd.f32 %v1124, %v1248
  %v1307 = vadd.f32 %v1125, %v1251
  %v1308 = vadd.f32 %v1126, %v1254
  %v1309 = vadd.f32 %v1127, %v1257
  %v1310 = vadd.f32 %v1128, %v1260
  %v1311 = vadd.f32 %v1129, %v1263
  %v1312 = vadd.f32 %v1130, %v1266
  %v1313 = vadd.f32 %v1131, %v1269
  %v1314 = vadd.f32 %v1132, %v1272
  %v1315 = vadd.f32 %v1133, %v1275
  %v1316 = vadd.f32 %v1134, %v1278
  %v1317 = vadd.f32 %v1135, %v1281
  %v1318 = vadd.f32 %v1136, %v1284
  %v1319 = vadd.f32 %v1137, %v1287
  %v1320 = vld [vmem:[%s2] sm:$0x1]
  %v1322 = vlaneseq
  %v1323 = vshrl.u32 %v1322, 7
  %v1324 = vsub.s32 0, %v1323
  %v1325 = vrot.slane %v1320, %v1324
  %v1327 = vadd.f32 %v1304, %v1325
  %v1328 = vadd.f32 %v1305, %v1325
  %v1329 = vadd.f32 %v1306, %v1325
  %v1330 = vadd.f32 %v1307, %v1325
  %v1331 = vadd.f32 %v1308, %v1325
  %v1332 = vadd.f32 %v1309, %v1325
  %v1333 = vadd.f32 %v1310, %v1325
  %v1334 = vadd.f32 %v1311, %v1325
  %v1335 = vadd.f32 %v1312, %v1325
  %v1336 = vadd.f32 %v1313, %v1325
  %v1337 = vadd.f32 %v1314, %v1325
  %v1338 = vadd.f32 %v1315, %v1325
  %v1339 = vadd.f32 %v1316, %v1325
  %v1340 = vadd.f32 %v1317, %v1325
  %v1341 = vadd.f32 %v1318, %v1325
  %v1342 = vadd.f32 %v1319, %v1325
  %v1343 = vmax.f32 %v1327, 0.0
  %v1344 = vmax.f32 %v1328, 0.0
  %v1345 = vmax.f32 %v1329, 0.0
  %v1346 = vmax.f32 %v1330, 0.0
  %v1347 = vmax.f32 %v1331, 0.0
  %v1348 = vmax.f32 %v1332, 0.0
  %v1349 = vmax.f32 %v1333, 0.0
  %v1350 = vmax.f32 %v1334, 0.0
  %v1351 = vmax.f32 %v1335, 0.0
  %v1352 = vmax.f32 %v1336, 0.0
  %v1353 = vmax.f32 %v1337, 0.0
  %v1354 = vmax.f32 %v1338, 0.0
  %v1355 = vmax.f32 %v1339, 0.0
  %v1356 = vmax.f32 %v1340, 0.0
  %v1357 = vmax.f32 %v1341, 0.0
  %v1358 = vmax.f32 %v1342, 0.0
  %v1359 = vpack.c.bf16 %v1344, %v1343
  %v1360 = vpack.c.bf16 %v1346, %v1345
  %v1361 = vpack.c.bf16 %v1348, %v1347
  %v1362 = vpack.c.bf16 %v1350, %v1349
  %v1363 = vpack.c.bf16 %v1352, %v1351
  %v1364 = vpack.c.bf16 %v1354, %v1353
  %v1365 = vpack.c.bf16 %v1356, %v1355
  %v1366 = vpack.c.bf16 %v1358, %v1357
  %v1367 = vld [vmem:[%s3] sm:$0xf]
  %v1368 = vld [vmem:[%s3 + $0x4] sm:$0xf]
  %v1369 = vld [vmem:[%s3 + $0x8] sm:$0xf]
  %v1370 = vld [vmem:[%s3 + $0xc] sm:$0xf]
  %v1371 = vld [vmem:[%s4] sm:$0x1]
  %v1373 = vlaneseq
  %v1374 = vshrl.u32 %v1373, 7
  %v1375 = vsub.s32 0, %v1374
  %v1376 = vrot.slane %v1371, %v1375
  %v1382 = vunpack.c.l.b16 %v1367
  %v1383 = vunpack.c.l.b16 %v1368
  %v1384 = vunpack.c.l.b16 %v1369
  %v1385 = vunpack.c.l.b16 %v1370
  %v1386 = vpack.c.b16 %v1383, %v1382
  %v1387 = vpack.c.b16 %v1385, %v1384
  %vm1390 = vcmask 261120
  %v1392 = vsel %vm1390, %v1359, 0
  %v1395 = vsel %vm1390, %v1360, 0
  %v1398 = vsel %vm1390, %v1361, 0
  %v1401 = vsel %vm1390, %v1362, 0
  %v1404 = vsel %vm1390, %v1363, 0
  %v1407 = vsel %vm1390, %v1364, 0
  %v1410 = vsel %vm1390, %v1365, 0
  %v1413 = vsel %vm1390, %v1366, 0
  %1415 = vmatprep.subr.bf16.mxu0 0
  %1416 = vmatpush1.bf16.msra.mxu0 0
  %1417 = vmatprep.subr.bf16.mxu0 0
  %1418 = vmatpush1.bf16.msra.mxu0 0
  %1419 = vmatprep.subr.bf16.mxu0 0
  %1420 = vmatpush1.bf16.msra.mxu0 0
  %1421 = vmatprep.subr.bf16.mxu0 0
  %1422 = vmatpush1.bf16.msra.mxu0 0
  %1423 = vmatprep.subr.bf16.mxu0 0
  %1424 = vmatpush1.bf16.msra.mxu0 0
  %1425 = vmatprep.subr.bf16.mxu0 0
  %1426 = vmatpush1.bf16.msra.mxu0 0
  %1427 = vmatprep.subr.bf16.mxu0 0
  %1428 = vmatpush1.bf16.msra.mxu0 %v1387
  %1429 = vmatprep.subr.bf16.mxu0 0
  %1430 = vmatpush1.bf16.msra.mxu0 %v1386
  %1431 = vmatprep.subr.bf16.mxu0 0
  %1432 = vmatpush2.bf16.msra.mxu0 0
  %1433 = vmatprep.subr.bf16.mxu0 0
  %1434 = vmatpush2.bf16.msra.mxu0 0
  %1435 = vmatprep.subr.bf16.mxu0 0
  %1436 = vmatpush2.bf16.msra.mxu0 0
  %1437 = vmatprep.subr.bf16.mxu0 0
  %1438 = vmatpush2.bf16.msra.mxu0 0
  %1439 = vmatprep.subr.bf16.mxu0 0
  %1440 = vmatpush2.bf16.msra.mxu0 0
  %1441 = vmatprep.subr.bf16.mxu0 0
  %1442 = vmatpush2.bf16.msra.mxu0 0
  %1443 = vmatprep.subr.bf16.mxu0 0
  %1444 = vmatpush2.bf16.msra.mxu0 0
  %1445 = vmatprep.subr.bf16.mxu0 0
  %1446 = vmatpush2.bf16.msra.mxu0 0
  %1447 = vmatprep.mubr.bf16.mxu0 0
  %1448 = vmatmul.mubr.bf16.gmra.mxu0 %v1392
  %v1449 = vpop.f32.mrf.mxu0
  %v1450 = vadd.f32 %v1376, %v1449
  %v1451 = vpop.f32.mrf.mxu0
  %v1452 = vpop.f32.mrf.mxu0
  %v1453 = vadd.f32 %v1376, %v1452
  %v1454 = vpop.f32.mrf.mxu0
  %1455 = vmatprep.mubr.bf16.mxu0 0
  %1456 = vmatmul.mubr.bf16.gmra.mxu0 %v1395
  %v1457 = vpop.f32.mrf.mxu0
  %v1458 = vadd.f32 %v1376, %v1457
  %v1459 = vpop.f32.mrf.mxu0
  %v1460 = vpop.f32.mrf.mxu0
  %v1461 = vadd.f32 %v1376, %v1460
  %v1462 = vpop.f32.mrf.mxu0
  %1463 = vmatprep.mubr.bf16.mxu0 0
  %1464 = vmatmul.mubr.bf16.gmra.mxu0 %v1398
  %v1465 = vpop.f32.mrf.mxu0
  %v1466 = vadd.f32 %v1376, %v1465
  %v1467 = vpop.f32.mrf.mxu0
  %v1468 = vpop.f32.mrf.mxu0
  %v1469 = vadd.f32 %v1376, %v1468
  %v1470 = vpop.f32.mrf.mxu0
  %1471 = vmatprep.mubr.bf16.mxu0 0
  %1472 = vmatmul.mubr.bf16.gmra.mxu0 %v1401
  %v1473 = vpop.f32.mrf.mxu0
  %v1474 = vadd.f32 %v1376, %v1473
  %v1475 = vpop.f32.mrf.mxu0
  %v1476 = vpop.f32.mrf.mxu0
  %v1477 = vadd.f32 %v1376, %v1476
  %v1478 = vpop.f32.mrf.mxu0
  %1479 = vmatprep.mubr.bf16.mxu0 0
  %1480 = vmatmul.mubr.bf16.gmra.mxu0 %v1404
  %v1481 = vpop.f32.mrf.mxu0
  %v1482 = vadd.f32 %v1376, %v1481
  %v1483 = vpop.f32.mrf.mxu0
  %v1484 = vpop.f32.mrf.mxu0
  %v1485 = vadd.f32 %v1376, %v1484
  %v1486 = vpop.f32.mrf.mxu0
  %1487 = vmatprep.mubr.bf16.mxu0 0
  %1488 = vmatmul.mubr.bf16.gmra.mxu0 %v1407
  %v1489 = vpop.f32.mrf.mxu0
  %v1490 = vadd.f32 %v1376, %v1489
  %v1491 = vpop.f32.mrf.mxu0
  %v1492 = vpop.f32.mrf.mxu0
  %v1493 = vadd.f32 %v1376, %v1492
  %v1494 = vpop.f32.mrf.mxu0
  %1495 = vmatprep.mubr.bf16.mxu0 0
  %1496 = vmatmul.mubr.bf16.gmra.mxu0 %v1410
  %v1497 = vpop.f32.mrf.mxu0
  %v1498 = vadd.f32 %v1376, %v1497
  %v1499 = vpop.f32.mrf.mxu0
  %v1500 = vpop.f32.mrf.mxu0
  %v1501 = vadd.f32 %v1376, %v1500
  %v1502 = vpop.f32.mrf.mxu0
  %1503 = vmatprep.mubr.bf16.mxu0 0
  %1504 = vmatmul.mubr.bf16.gmra.mxu0 %v1413
  %v1505 = vpop.f32.mrf.mxu0
  %v1506 = vadd.f32 %v1376, %v1505
  %v1507 = vpop.f32.mrf.mxu0
  %v1508 = vpop.f32.mrf.mxu0
  %v1509 = vadd.f32 %v1376, %v1508
  %v1510 = vpop.f32.mrf.mxu0
  %1511 = vdwg.mxu0
  %v1512 = vmax.f32 %v1450, 0.0
  %v1513 = vmax.f32 %v1453, 0.0
  %v1514 = vmax.f32 %v1458, 0.0
  %v1515 = vmax.f32 %v1461, 0.0
  %v1516 = vmax.f32 %v1466, 0.0
  %v1517 = vmax.f32 %v1469, 0.0
  %v1518 = vmax.f32 %v1474, 0.0
  %v1519 = vmax.f32 %v1477, 0.0
  %v1520 = vmax.f32 %v1482, 0.0
  %v1521 = vmax.f32 %v1485, 0.0
  %v1522 = vmax.f32 %v1490, 0.0
  %v1523 = vmax.f32 %v1493, 0.0
  %v1524 = vmax.f32 %v1498, 0.0
  %v1525 = vmax.f32 %v1501, 0.0
  %v1526 = vmax.f32 %v1506, 0.0
  %v1527 = vmax.f32 %v1509, 0.0
  %v1528 = vpack.c.bf16 %v1513, %v1512
  %v1529 = vpack.c.bf16 %v1515, %v1514
  %v1530 = vpack.c.bf16 %v1517, %v1516
  %v1531 = vpack.c.bf16 %v1519, %v1518
  %v1532 = vpack.c.bf16 %v1521, %v1520
  %v1533 = vpack.c.bf16 %v1523, %v1522
  %v1534 = vpack.c.bf16 %v1525, %v1524
  %v1535 = vpack.c.bf16 %v1527, %v1526
  %v1544 = vunpack.c.l.b16 %v1528
  %v1545 = vunpack.c.h.b16 %v1528
  %v1546 = vunpack.c.l.b16 %v1529
  %v1547 = vunpack.c.h.b16 %v1529
  %v1548 = vunpack.c.l.b16 %v1530
  %v1549 = vunpack.c.h.b16 %v1530
  %v1550 = vunpack.c.l.b16 %v1531
  %v1551 = vunpack.c.h.b16 %v1531
  %v1552 = vunpack.c.l.b16 %v1532
  %v1553 = vunpack.c.h.b16 %v1532
  %v1554 = vunpack.c.l.b16 %v1533
  %v1555 = vunpack.c.h.b16 %v1533
  %v1556 = vunpack.c.l.b16 %v1534
  %v1557 = vunpack.c.h.b16 %v1534
  %v1558 = vunpack.c.l.b16 %v1535
  %v1559 = vunpack.c.h.b16 %v1535
  %v1560 = vpack.c.b16 %v1544, %v1544
  %v1561 = vpack.c.b16 %v1545, %v1545
  %v1562 = vpack.c.b16 %v1546, %v1546
  %v1563 = vpack.c.b16 %v1547, %v1547
  %v1564 = vpack.c.b16 %v1548, %v1548
  %v1565 = vpack.c.b16 %v1549, %v1549
  %v1566 = vpack.c.b16 %v1550, %v1550
  %v1567 = vpack.c.b16 %v1551, %v1551
  %v1568 = vpack.c.b16 %v1552, %v1552
  %v1569 = vpack.c.b16 %v1553, %v1553
  %v1570 = vpack.c.b16 %v1554, %v1554
  %v1571 = vpack.c.b16 %v1555, %v1555
  %v1572 = vpack.c.b16 %v1556, %v1556
  %v1573 = vpack.c.b16 %v1557, %v1557
  %v1574 = vpack.c.b16 %v1558, %v1558
  %v1575 = vpack.c.b16 %v1559, %v1559
  %vm1592 = vcmask 257024
  %1593 = vst.msk [vmem:[%s5] sm:$0xf] %vm1592, %v1560
  %1594 = vst.msk [vmem:[%s5 + $0x4] sm:$0xf] %vm1592, %v1561
  %1595 = vst.msk [vmem:[%s5 + $0x8] sm:$0xf] %vm1592, %v1562
  %1596 = vst.msk [vmem:[%s5 + $0xc] sm:$0xf] %vm1592, %v1563
  %1597 = vst.msk [vmem:[%s5 + $0x10] sm:$0xf] %vm1592, %v1564
  %1598 = vst.msk [vmem:[%s5 + $0x14] sm:$0xf] %vm1592, %v1565
  %1599 = vst.msk [vmem:[%s5 + $0x18] sm:$0xf] %vm1592, %v1566
  %1600 = vst.msk [vmem:[%s5 + $0x1c] sm:$0xf] %vm1592, %v1567
  %1601 = vst.msk [vmem:[%s5 + $0x20] sm:$0xf] %vm1592, %v1568
  %1602 = vst.msk [vmem:[%s5 + $0x24] sm:$0xf] %vm1592, %v1569
  %1603 = vst.msk [vmem:[%s5 + $0x28] sm:$0xf] %vm1592, %v1570
  %1604 = vst.msk [vmem:[%s5 + $0x2c] sm:$0xf] %vm1592, %v1571
  %1605 = vst.msk [vmem:[%s5 + $0x30] sm:$0xf] %vm1592, %v1572
  %1606 = vst.msk [vmem:[%s5 + $0x34] sm:$0xf] %vm1592, %v1573
  %1607 = vst.msk [vmem:[%s5 + $0x38] sm:$0xf] %vm1592, %v1574
  %1608 = vst.msk [vmem:[%s5 + $0x3c] sm:$0xf] %vm1592, %v1575
  // Predicated region
  $region22: #{_lambda_.17} parent=0 // pred_check
    _
  $region23: #{_lambda_.17} parent=0 // pred_check_branch
    %1610 = sbr.rel (0) target = $region25
  $region24: #{_lambda_.17} parent=0 // pred_region
    _
  $region25: #{_lambda_.17} parent=0 // pred_fallthru
    _
  // Predicated region
  $region26: #{_lambda_.17} parent=0 // pred_check
    _
  $region27: #{_lambda_.17} parent=0 // pred_check_branch
    %1612 = sbr.rel (0) target = $region29
  $region28: #{_lambda_.17} parent=0 // pred_region
    _
  $region29: #{_lambda_.17} parent=0 // pred_fallthru
    _

// kernel: _lambda_.18
$region0: #{_lambda_.18}
  #allocation0 [shape = 'u32[]', space=smem, size = 0x4, offset = 0x4, fixed_abs, tag = 'smem constant byte address 0x4 - core index']
  #allocation1 [shape = 'u32[144,128]{1,0:T(1,128)}', space=vmem, size = 0x12000, scoped, tag = 'internal scratch']
  %s0 = inlined_call_operand.vmem [shape: bf16[9,32,32], index: 0, kind: input, shape index: {}]
  %s1 = inlined_call_operand.vmem [shape: f32[9,1,32], index: 1, kind: input, shape index: {}]
  %s2 = inlined_call_operand.vmem [shape: f32[1,32], index: 2, kind: input, shape index: {}]
  %s3 = inlined_call_operand.vmem [shape: bf16[32,64], index: 3, kind: input, shape index: {}]
  %s4 = inlined_call_operand.vmem [shape: f32[1,64], index: 4, kind: input, shape index: {}]
  %s5 = inlined_call_operand.vmem [shape: bf16[32,64], index: 5, kind: output, shape index: {}]
  %s6 = sld [smem:[#allocation0]]
  $region30: #{_lambda_.18} parent=0
    _
  %s8 = ssub.s32 1, %s6
  %s9 = scalar_select 0, %s8, %s6
  // Predicated region
  $region2: #{_lambda_.18} parent=0 // pred_check
    _
  $region3: #{_lambda_.18} parent=0 // pred_check_branch
    %11 = sbr.rel (0) target = $region5
  $region4: #{_lambda_.18} parent=0 // pred_region
    _
  $region5: #{_lambda_.18} parent=0 // pred_fallthru
    _
  // Predicated region
  $region6: #{_lambda_.18} parent=0 // pred_check
    _
  $region7: #{_lambda_.18} parent=0 // pred_check_branch
    %13 = sbr.rel (0) target = $region9
  $region8: #{_lambda_.18} parent=0 // pred_region
    _
  $region9: #{_lambda_.18} parent=0 // pred_fallthru
    _
  // Predicated region
  $region10: #{_lambda_.18} parent=0 // pred_check
    _
  $region11: #{_lambda_.18} parent=0 // pred_check_branch
    %15 = sbr.rel (0) target = $region13
  $region12: #{_lambda_.18} parent=0 // pred_region
    _
  $region13: #{_lambda_.18} parent=0 // pred_fallthru
    _
  // Predicated region
  $region14: #{_lambda_.18} parent=0 // pred_check
    _
  $region15: #{_lambda_.18} parent=0 // pred_check_branch
    %17 = sbr.rel (0) target = $region17
  $region16: #{_lambda_.18} parent=0 // pred_region
    _
  $region17: #{_lambda_.18} parent=0 // pred_fallthru
    _
  // Predicated region
  $region18: #{_lambda_.18} parent=0 // pred_check
    _
  $region19: #{_lambda_.18} parent=0 // pred_check_branch
    %19 = sbr.rel (0) target = $region21
  $region20: #{_lambda_.18} parent=0 // pred_region
    _
  $region21: #{_lambda_.18} parent=0 // pred_fallthru
    _
  %v21 = vld [vmem:[%s0] sm:$0xf]
  %v22 = vld [vmem:[%s0 + $0x4] sm:$0xf]
  %v23 = vld [vmem:[%s0 + $0x8] sm:$0xf]
  %v24 = vld [vmem:[%s0 + $0xc] sm:$0xf]
  %v25 = vunpack.c.l.bf16 %v21
  %v26 = vunpack.c.l.bf16 %v22
  %v27 = vunpack.c.l.bf16 %v23
  %v28 = vunpack.c.l.bf16 %v24
  %v29 = vld [vmem:[%s1] sm:$0x1]
  %v31 = vlaneseq
  %v32 = vshrl.u32 %v31, 7
  %v33 = vsub.s32 0, %v32
  %v34 = vrot.slane %v29, %v33
  %v36 = vmul.f32 %v25, %v34
  %v37 = vmul.f32 %v26, %v34
  %v38 = vmul.f32 %v27, %v34
  %v39 = vmul.f32 %v28, %v34
  %s40 = scalar_lea.vmem %s0, 16
  %v41 = vld [vmem:[%s40] sm:$0xf]
  %v42 = vld [vmem:[%s40 + $0x4] sm:$0xf]
  %v43 = vld [vmem:[%s40 + $0x8] sm:$0xf]
  %v44 = vld [vmem:[%s40 + $0xc] sm:$0xf]
  %v45 = vunpack.c.l.bf16 %v41
  %v46 = vunpack.c.l.bf16 %v42
  %v47 = vunpack.c.l.bf16 %v43
  %v48 = vunpack.c.l.bf16 %v44
  %s49 = scalar_lea.vmem %s1, 1
  %v50 = vld [vmem:[%s49] sm:$0x1]
  %v52 = vlaneseq
  %v53 = vshrl.u32 %v52, 7
  %v54 = vsub.s32 0, %v53
  %v55 = vrot.slane %v50, %v54
  %v57 = vmul.f32 %v45, %v55
  %v58 = vmul.f32 %v46, %v55
  %v59 = vmul.f32 %v47, %v55
  %v60 = vmul.f32 %v48, %v55
  %v61 = vadd.f32 %v36, %v57
  %v62 = vadd.f32 %v37, %v58
  %v63 = vadd.f32 %v38, %v59
  %v64 = vadd.f32 %v39, %v60
  %s65 = scalar_lea.vmem %s0, 32
  %v66 = vld [vmem:[%s65] sm:$0xf]
  %v67 = vld [vmem:[%s65 + $0x4] sm:$0xf]
  %v68 = vld [vmem:[%s65 + $0x8] sm:$0xf]
  %v69 = vld [vmem:[%s65 + $0xc] sm:$0xf]
  %v70 = vunpack.c.l.bf16 %v66
  %v71 = vunpack.c.l.bf16 %v67
  %v72 = vunpack.c.l.bf16 %v68
  %v73 = vunpack.c.l.bf16 %v69
  %s74 = scalar_lea.vmem %s1, 2
  %v75 = vld [vmem:[%s74] sm:$0x1]
  %v77 = vlaneseq
  %v78 = vshrl.u32 %v77, 7
  %v79 = vsub.s32 0, %v78
  %v80 = vrot.slane %v75, %v79
  %v82 = vmul.f32 %v70, %v80
  %v83 = vmul.f32 %v71, %v80
  %v84 = vmul.f32 %v72, %v80
  %v85 = vmul.f32 %v73, %v80
  %v86 = vadd.f32 %v61, %v82
  %v87 = vadd.f32 %v62, %v83
  %v88 = vadd.f32 %v63, %v84
  %v89 = vadd.f32 %v64, %v85
  %s90 = scalar_lea.vmem %s0, 48
  %v91 = vld [vmem:[%s90] sm:$0xf]
  %v92 = vld [vmem:[%s90 + $0x4] sm:$0xf]
  %v93 = vld [vmem:[%s90 + $0x8] sm:$0xf]
  %v94 = vld [vmem:[%s90 + $0xc] sm:$0xf]
  %v95 = vunpack.c.l.bf16 %v91
  %v96 = vunpack.c.l.bf16 %v92
  %v97 = vunpack.c.l.bf16 %v93
  %v98 = vunpack.c.l.bf16 %v94
  %s99 = scalar_lea.vmem %s1, 3
  %v100 = vld [vmem:[%s99] sm:$0x1]
  %v102 = vlaneseq
  %v103 = vshrl.u32 %v102, 7
  %v104 = vsub.s32 0, %v103
  %v105 = vrot.slane %v100, %v104
  %v107 = vmul.f32 %v95, %v105
  %v108 = vmul.f32 %v96, %v105
  %v109 = vmul.f32 %v97, %v105
  %v110 = vmul.f32 %v98, %v105
  %v111 = vadd.f32 %v86, %v107
  %v112 = vadd.f32 %v87, %v108
  %v113 = vadd.f32 %v88, %v109
  %v114 = vadd.f32 %v89, %v110
  %s115 = scalar_lea.vmem %s0, 64
  %v116 = vld [vmem:[%s115] sm:$0xf]
  %v117 = vld [vmem:[%s115 + $0x4] sm:$0xf]
  %v118 = vld [vmem:[%s115 + $0x8] sm:$0xf]
  %v119 = vld [vmem:[%s115 + $0xc] sm:$0xf]
  %v120 = vunpack.c.l.bf16 %v116
  %v121 = vunpack.c.l.bf16 %v117
  %v122 = vunpack.c.l.bf16 %v118
  %v123 = vunpack.c.l.bf16 %v119
  %s124 = scalar_lea.vmem %s1, 4
  %v125 = vld [vmem:[%s124] sm:$0x1]
  %v127 = vlaneseq
  %v128 = vshrl.u32 %v127, 7
  %v129 = vsub.s32 0, %v128
  %v130 = vrot.slane %v125, %v129
  %v132 = vmul.f32 %v120, %v130
  %v133 = vmul.f32 %v121, %v130
  %v134 = vmul.f32 %v122, %v130
  %v135 = vmul.f32 %v123, %v130
  %v136 = vadd.f32 %v111, %v132
  %v137 = vadd.f32 %v112, %v133
  %v138 = vadd.f32 %v113, %v134
  %v139 = vadd.f32 %v114, %v135
  %s140 = scalar_lea.vmem %s0, 80
  %v141 = vld [vmem:[%s140] sm:$0xf]
  %v142 = vld [vmem:[%s140 + $0x4] sm:$0xf]
  %v143 = vld [vmem:[%s140 + $0x8] sm:$0xf]
  %v144 = vld [vmem:[%s140 + $0xc] sm:$0xf]
  %v145 = vunpack.c.l.bf16 %v141
  %v146 = vunpack.c.l.bf16 %v142
  %v147 = vunpack.c.l.bf16 %v143
  %v148 = vunpack.c.l.bf16 %v144
  %s149 = scalar_lea.vmem %s1, 5
  %v150 = vld [vmem:[%s149] sm:$0x1]
  %v152 = vlaneseq
  %v153 = vshrl.u32 %v152, 7
  %v154 = vsub.s32 0, %v153
  %v155 = vrot.slane %v150, %v154
  %v157 = vmul.f32 %v145, %v155
  %v158 = vmul.f32 %v146, %v155
  %v159 = vmul.f32 %v147, %v155
  %v160 = vmul.f32 %v148, %v155
  %v161 = vadd.f32 %v136, %v157
  %v162 = vadd.f32 %v137, %v158
  %v163 = vadd.f32 %v138, %v159
  %v164 = vadd.f32 %v139, %v160
  %s165 = scalar_lea.vmem %s0, 96
  %v166 = vld [vmem:[%s165] sm:$0xf]
  %v167 = vld [vmem:[%s165 + $0x4] sm:$0xf]
  %v168 = vld [vmem:[%s165 + $0x8] sm:$0xf]
  %v169 = vld [vmem:[%s165 + $0xc] sm:$0xf]
  %v170 = vunpack.c.l.bf16 %v166
  %v171 = vunpack.c.l.bf16 %v167
  %v172 = vunpack.c.l.bf16 %v168
  %v173 = vunpack.c.l.bf16 %v169
  %s174 = scalar_lea.vmem %s1, 6
  %v175 = vld [vmem:[%s174] sm:$0x1]
  %v177 = vlaneseq
  %v178 = vshrl.u32 %v177, 7
  %v179 = vsub.s32 0, %v178
  %v180 = vrot.slane %v175, %v179
  %v182 = vmul.f32 %v170, %v180
  %v183 = vmul.f32 %v171, %v180
  %v184 = vmul.f32 %v172, %v180
  %v185 = vmul.f32 %v173, %v180
  %v186 = vadd.f32 %v161, %v182
  %v187 = vadd.f32 %v162, %v183
  %v188 = vadd.f32 %v163, %v184
  %v189 = vadd.f32 %v164, %v185
  %s190 = scalar_lea.vmem %s0, 112
  %v191 = vld [vmem:[%s190] sm:$0xf]
  %v192 = vld [vmem:[%s190 + $0x4] sm:$0xf]
  %v193 = vld [vmem:[%s190 + $0x8] sm:$0xf]
  %v194 = vld [vmem:[%s190 + $0xc] sm:$0xf]
  %v195 = vunpack.c.l.bf16 %v191
  %v196 = vunpack.c.l.bf16 %v192
  %v197 = vunpack.c.l.bf16 %v193
  %v198 = vunpack.c.l.bf16 %v194
  %s199 = scalar_lea.vmem %s1, 7
  %v200 = vld [vmem:[%s199] sm:$0x1]
  %v202 = vlaneseq
  %v203 = vshrl.u32 %v202, 7
  %v204 = vsub.s32 0, %v203
  %v205 = vrot.slane %v200, %v204
  %v207 = vmul.f32 %v195, %v205
  %v208 = vmul.f32 %v196, %v205
  %v209 = vmul.f32 %v197, %v205
  %v210 = vmul.f32 %v198, %v205
  %v211 = vadd.f32 %v186, %v207
  %v212 = vadd.f32 %v187, %v208
  %v213 = vadd.f32 %v188, %v209
  %v214 = vadd.f32 %v189, %v210
  %s215 = scalar_lea.vmem %s0, 128
  %v216 = vld [vmem:[%s215] sm:$0xf]
  %v217 = vld [vmem:[%s215 + $0x4] sm:$0xf]
  %v218 = vld [vmem:[%s215 + $0x8] sm:$0xf]
  %v219 = vld [vmem:[%s215 + $0xc] sm:$0xf]
  %v220 = vunpack.c.l.bf16 %v216
  %v221 = vunpack.c.l.bf16 %v217
  %v222 = vunpack.c.l.bf16 %v218
  %v223 = vunpack.c.l.bf16 %v219
  %s224 = scalar_lea.vmem %s1, 8
  %v225 = vld [vmem:[%s224] sm:$0x1]
  %v227 = vlaneseq
  %v228 = vshrl.u32 %v227, 7
  %v229 = vsub.s32 0, %v228
  %v230 = vrot.slane %v225, %v229
  %v232 = vmul.f32 %v220, %v230
  %v233 = vmul.f32 %v221, %v230
  %v234 = vmul.f32 %v222, %v230
  %v235 = vmul.f32 %v223, %v230
  %v236 = vadd.f32 %v211, %v232
  %v237 = vadd.f32 %v212, %v233
  %v238 = vadd.f32 %v213, %v234
  %v239 = vadd.f32 %v214, %v235
  %v240 = vld [vmem:[%s2] sm:$0x1]
  %v242 = vlaneseq
  %v243 = vshrl.u32 %v242, 7
  %v244 = vsub.s32 0, %v243
  %v245 = vrot.slane %v240, %v244
  %v247 = vadd.f32 %v236, %v245
  %v248 = vadd.f32 %v237, %v245
  %v249 = vadd.f32 %v238, %v245
  %v250 = vadd.f32 %v239, %v245
  %v251 = vmax.f32 %v247, 0.0
  %v252 = vmax.f32 %v248, 0.0
  %v253 = vmax.f32 %v249, 0.0
  %v254 = vmax.f32 %v250, 0.0
  %v255 = vpack.c.bf16 %v252, %v251
  %v256 = vpack.c.bf16 %v254, %v253
  %v257 = vld [vmem:[%s3] sm:$0xf]
  %v258 = vld [vmem:[%s3 + $0x4] sm:$0xf]
  %v259 = vld [vmem:[%s3 + $0x8] sm:$0xf]
  %v260 = vld [vmem:[%s3 + $0xc] sm:$0xf]
  %v261 = vld [vmem:[%s4] sm:$0x1]
  %v263 = vlaneseq
  %v264 = vshrl.u32 %v263, 7
  %v265 = vsub.s32 0, %v264
  %v266 = vrot.slane %v261, %v265
  %v272 = vunpack.c.l.b16 %v257
  %v273 = vunpack.c.l.b16 %v258
  %v274 = vunpack.c.l.b16 %v259
  %v275 = vunpack.c.l.b16 %v260
  %v276 = vpack.c.b16 %v273, %v272
  %v277 = vpack.c.b16 %v275, %v274
  %vm280 = vcmask 261120
  %v282 = vsel %vm280, %v255, 0
  %v285 = vsel %vm280, %v256, 0
  %287 = vmatprep.subr.bf16.mxu0 0
  %288 = vmatpush1.bf16.msra.mxu0 0
  %289 = vmatprep.subr.bf16.mxu0 0
  %290 = vmatpush1.bf16.msra.mxu0 0
  %291 = vmatprep.subr.bf16.mxu0 0
  %292 = vmatpush1.bf16.msra.mxu0 0
  %293 = vmatprep.subr.bf16.mxu0 0
  %294 = vmatpush1.bf16.msra.mxu0 0
  %295 = vmatprep.subr.bf16.mxu0 0
  %296 = vmatpush1.bf16.msra.mxu0 0
  %297 = vmatprep.subr.bf16.mxu0 0
  %298 = vmatpush1.bf16.msra.mxu0 0
  %299 = vmatprep.subr.bf16.mxu0 0
  %300 = vmatpush1.bf16.msra.mxu0 %v277
  %301 = vmatprep.subr.bf16.mxu0 0
  %302 = vmatpush1.bf16.msra.mxu0 %v276
  %303 = vmatprep.subr.bf16.mxu0 0
  %304 = vmatpush2.bf16.msra.mxu0 0
  %305 = vmatprep.subr.bf16.mxu0 0
  %306 = vmatpush2.bf16.msra.mxu0 0
  %307 = vmatprep.subr.bf16.mxu0 0
  %308 = vmatpush2.bf16.msra.mxu0 0
  %309 = vmatprep.subr.bf16.mxu0 0
  %310 = vmatpush2.bf16.msra.mxu0 0
  %311 = vmatprep.subr.bf16.mxu0 0
  %312 = vmatpush2.bf16.msra.mxu0 0
  %313 = vmatprep.subr.bf16.mxu0 0
  %314 = vmatpush2.bf16.msra.mxu0 0
  %315 = vmatprep.subr.bf16.mxu0 0
  %316 = vmatpush2.bf16.msra.mxu0 0
  %317 = vmatprep.subr.bf16.mxu0 0
  %318 = vmatpush2.bf16.msra.mxu0 0
  %319 = vmatprep.mubr.bf16.mxu0 0
  %320 = vmatmul.mubr.bf16.gmra.mxu0 %v282
  %v321 = vpop.f32.mrf.mxu0
  %v322 = vadd.f32 %v266, %v321
  %v323 = vpop.f32.mrf.mxu0
  %v324 = vpop.f32.mrf.mxu0
  %v325 = vadd.f32 %v266, %v324
  %v326 = vpop.f32.mrf.mxu0
  %327 = vmatprep.mubr.bf16.mxu0 0
  %328 = vmatmul.mubr.bf16.gmra.mxu0 %v285
  %v329 = vpop.f32.mrf.mxu0
  %v330 = vadd.f32 %v266, %v329
  %v331 = vpop.f32.mrf.mxu0
  %v332 = vpop.f32.mrf.mxu0
  %v333 = vadd.f32 %v266, %v332
  %v334 = vpop.f32.mrf.mxu0
  %335 = vdwg.mxu0
  %v336 = vmax.f32 %v322, 0.0
  %v337 = vmax.f32 %v325, 0.0
  %v338 = vmax.f32 %v330, 0.0
  %v339 = vmax.f32 %v333, 0.0
  %v340 = vpack.c.bf16 %v337, %v336
  %v341 = vpack.c.bf16 %v339, %v338
  %v344 = vunpack.c.l.b16 %v340
  %v345 = vunpack.c.h.b16 %v340
  %v346 = vunpack.c.l.b16 %v341
  %v347 = vunpack.c.h.b16 %v341
  %v348 = vpack.c.b16 %v344, %v344
  %v349 = vpack.c.b16 %v345, %v345
  %v350 = vpack.c.b16 %v346, %v346
  %v351 = vpack.c.b16 %v347, %v347
  %vm356 = vcmask 519168
  %357 = vst.msk [vmem:[%s5] sm:$0xf] %vm356, %v348
  %358 = vst.msk [vmem:[%s5 + $0x4] sm:$0xf] %vm356, %v349
  %359 = vst.msk [vmem:[%s5 + $0x8] sm:$0xf] %vm356, %v350
  %360 = vst.msk [vmem:[%s5 + $0xc] sm:$0xf] %vm356, %v351
  // Predicated region
  $region22: #{_lambda_.18} parent=0 // pred_check
    _
  $region23: #{_lambda_.18} parent=0 // pred_check_branch
    %362 = sbr.rel (0) target = $region25
  $region24: #{_lambda_.18} parent=0 // pred_region
    _
  $region25: #{_lambda_.18} parent=0 // pred_fallthru
    _
  // Predicated region
  $region26: #{_lambda_.18} parent=0 // pred_check
    _
  $region27: #{_lambda_.18} parent=0 // pred_check_branch
    %364 = sbr.rel (0) target = $region29
  $region28: #{_lambda_.18} parent=0 // pred_region
    _
  $region29: #{_lambda_.18} parent=0 // pred_fallthru
    _

// kernel: _lambda_.19
$region0: #{_lambda_.19}
  #allocation0 [shape = 'u32[]', space=smem, size = 0x4, offset = 0x4, fixed_abs, tag = 'smem constant byte address 0x4 - core index']
  #allocation1 [shape = 'u32[144,128]{1,0:T(1,128)}', space=vmem, size = 0x12000, scoped, tag = 'internal scratch']
  %s0 = inlined_call_operand.vmem [shape: bf16[2,6,6,64], index: 0, kind: input, shape index: {}]
  %s1 = inlined_call_operand.vmem [shape: f32[9,1,1,1,64], index: 1, kind: input, shape index: {}]
  %s2 = inlined_call_operand.vmem [shape: f32[1,1,1,64], index: 2, kind: input, shape index: {}]
  %s3 = inlined_call_operand.vmem [shape: bf16[64,64], index: 3, kind: input, shape index: {}]
  %s4 = inlined_call_operand.vmem [shape: f32[1,64], index: 4, kind: input, shape index: {}]
  %s5 = inlined_call_operand.vmem [shape: bf16[32,64], index: 5, kind: output, shape index: {}]
  %s6 = sld [smem:[#allocation0]]
  $region30: #{_lambda_.19} parent=0
    _
  %s8 = ssub.s32 1, %s6
  %s9 = scalar_select 0, %s8, %s6
  // Predicated region
  $region2: #{_lambda_.19} parent=0 // pred_check
    _
  $region3: #{_lambda_.19} parent=0 // pred_check_branch
    %11 = sbr.rel (0) target = $region5
  $region4: #{_lambda_.19} parent=0 // pred_region
    _
  $region5: #{_lambda_.19} parent=0 // pred_fallthru
    _
  // Predicated region
  $region6: #{_lambda_.19} parent=0 // pred_check
    _
  $region7: #{_lambda_.19} parent=0 // pred_check_branch
    %13 = sbr.rel (0) target = $region9
  $region8: #{_lambda_.19} parent=0 // pred_region
    _
  $region9: #{_lambda_.19} parent=0 // pred_fallthru
    _
  // Predicated region
  $region10: #{_lambda_.19} parent=0 // pred_check
    _
  $region11: #{_lambda_.19} parent=0 // pred_check_branch
    %15 = sbr.rel (0) target = $region13
  $region12: #{_lambda_.19} parent=0 // pred_region
    _
  $region13: #{_lambda_.19} parent=0 // pred_fallthru
    _
  // Predicated region
  $region14: #{_lambda_.19} parent=0 // pred_check
    _
  $region15: #{_lambda_.19} parent=0 // pred_check_branch
    %17 = sbr.rel (0) target = $region17
  $region16: #{_lambda_.19} parent=0 // pred_region
    _
  $region17: #{_lambda_.19} parent=0 // pred_fallthru
    _
  // Predicated region
  $region18: #{_lambda_.19} parent=0 // pred_check
    _
  $region19: #{_lambda_.19} parent=0 // pred_check_branch
    %19 = sbr.rel (0) target = $region21
  $region20: #{_lambda_.19} parent=0 // pred_region
    _
  $region21: #{_lambda_.19} parent=0 // pred_fallthru
    _
  %v21 = vld [vmem:[%s1] sm:$0x1]
  %v22 = vld [vmem:[%s1 + $0x1] sm:$0x1]
  %v23 = vld [vmem:[%s1 + $0x2] sm:$0x1]
  %v24 = vld [vmem:[%s1 + $0x3] sm:$0x1]
  %v25 = vld [vmem:[%s1 + $0x4] sm:$0x1]
  %v26 = vld [vmem:[%s1 + $0x5] sm:$0x1]
  %v27 = vld [vmem:[%s1 + $0x6] sm:$0x1]
  %v28 = vld [vmem:[%s1 + $0x7] sm:$0x1]
  %v29 = vld [vmem:[%s1 + $0x8] sm:$0x1]
  %v30 = vld [vmem:[%s0] sm:$0x3]
  %v31 = vld [vmem:[%s0 + $0x4] sm:$0x3]
  %v32 = vld [vmem:[%s0 + $0x8] sm:$0x3]
  %v33 = vld [vmem:[%s0 + $0xc] sm:$0x3]
  %v34 = vld [vmem:[%s0 + $0x18] sm:$0x3]
  %v35 = vld [vmem:[%s0 + $0x1c] sm:$0x3]
  %v36 = vld [vmem:[%s0 + $0x20] sm:$0x3]
  %v37 = vld [vmem:[%s0 + $0x24] sm:$0x3]
  %v38 = vunpack.c.l.bf16 %v30
  %v39 = vunpack.c.l.bf16 %v31
  %v40 = vunpack.c.l.bf16 %v32
  %v41 = vunpack.c.l.bf16 %v33
  %v42 = vunpack.c.l.bf16 %v34
  %v43 = vunpack.c.l.bf16 %v35
  %v44 = vunpack.c.l.bf16 %v36
  %v45 = vunpack.c.l.bf16 %v37
  %v47 = vlaneseq
  %v48 = vshrl.u32 %v47, 7
  %v49 = vsub.s32 0, %v48
  %v50 = vrot.slane %v21, %v49
  %v52 = vmul.f32 %v38, %v50
  %v53 = vmul.f32 %v39, %v50
  %v54 = vmul.f32 %v40, %v50
  %v55 = vmul.f32 %v41, %v50
  %v56 = vmul.f32 %v42, %v50
  %v57 = vmul.f32 %v43, %v50
  %v58 = vmul.f32 %v44, %v50
  %v59 = vmul.f32 %v45, %v50
  %v60 = vld [vmem:[%s0] sm:$0x7]
  %v61 = vld [vmem:[%s0 + $0x4] sm:$0x7]
  %v62 = vld [vmem:[%s0 + $0x8] sm:$0x7]
  %v63 = vld [vmem:[%s0 + $0xc] sm:$0x7]
  %v64 = vld [vmem:[%s0 + $0x18] sm:$0x7]
  %v65 = vld [vmem:[%s0 + $0x1c] sm:$0x7]
  %v66 = vld [vmem:[%s0 + $0x20] sm:$0x7]
  %v67 = vld [vmem:[%s0 + $0x24] sm:$0x7]
  %v68 = vunpack.c.l.bf16 %v60
  %v69 = vunpack.c.l.bf16 %v61
  %v70 = vunpack.c.l.bf16 %v62
  %v71 = vunpack.c.l.bf16 %v63
  %v72 = vunpack.c.l.bf16 %v64
  %v73 = vunpack.c.l.bf16 %v65
  %v74 = vunpack.c.l.bf16 %v66
  %v75 = vunpack.c.l.bf16 %v67
  %v77 = vlaneseq
  %v78 = vshrl.u32 %v77, 7
  %v79 = vsub.s32 0, %v78
  %v80 = vrot.slane %v22, %v79
  %v82 = vmul.f32 %v68, %v80
  %v83 = vmul.f32 %v69, %v80
  %v84 = vmul.f32 %v70, %v80
  %v85 = vmul.f32 %v71, %v80
  %v86 = vmul.f32 %v72, %v80
  %v87 = vmul.f32 %v73, %v80
  %v88 = vmul.f32 %v74, %v80
  %v89 = vmul.f32 %v75, %v80
  %v98 = vrot.slane %v82, 1
  %v99 = vrot.slane %v83, 1
  %v100 = vrot.slane %v84, 1
  %v101 = vrot.slane %v85, 1
  %v102 = vrot.slane %v86, 1
  %v103 = vrot.slane %v87, 1
  %v104 = vrot.slane %v88, 1
  %v105 = vrot.slane %v89, 1
  %v114 = vadd.f32 %v52, %v98
  %v115 = vadd.f32 %v53, %v99
  %v116 = vadd.f32 %v54, %v100
  %v117 = vadd.f32 %v55, %v101
  %v118 = vadd.f32 %v56, %v102
  %v119 = vadd.f32 %v57, %v103
  %v120 = vadd.f32 %v58, %v104
  %v121 = vadd.f32 %v59, %v105
  %v122 = vld [vmem:[%s0] sm:$0x6]
  %v123 = vld [vmem:[%s0 + $0x4] sm:$0x6]
  %v124 = vld [vmem:[%s0 + $0x8] sm:$0x6]
  %v125 = vld [vmem:[%s0 + $0xc] sm:$0x6]
  %v126 = vld [vmem:[%s0 + $0x18] sm:$0x6]
  %v127 = vld [vmem:[%s0 + $0x1c] sm:$0x6]
  %v128 = vld [vmem:[%s0 + $0x20] sm:$0x6]
  %v129 = vld [vmem:[%s0 + $0x24] sm:$0x6]
  %v130 = vunpack.c.l.bf16 %v122
  %v131 = vunpack.c.l.bf16 %v123
  %v132 = vunpack.c.l.bf16 %v124
  %v133 = vunpack.c.l.bf16 %v125
  %v134 = vunpack.c.l.bf16 %v126
  %v135 = vunpack.c.l.bf16 %v127
  %v136 = vunpack.c.l.bf16 %v128
  %v137 = vunpack.c.l.bf16 %v129
  %v139 = vlaneseq
  %v140 = vshrl.u32 %v139, 7
  %v141 = vsub.s32 0, %v140
  %v142 = vrot.slane %v23, %v141
  %v144 = vmul.f32 %v130, %v142
  %v145 = vmul.f32 %v131, %v142
  %v146 = vmul.f32 %v132, %v142
  %v147 = vmul.f32 %v133, %v142
  %v148 = vmul.f32 %v134, %v142
  %v149 = vmul.f32 %v135, %v142
  %v150 = vmul.f32 %v136, %v142
  %v151 = vmul.f32 %v137, %v142
  %v160 = vrot.slane %v144, 2
  %v161 = vrot.slane %v145, 2
  %v162 = vrot.slane %v146, 2
  %v163 = vrot.slane %v147, 2
  %v164 = vrot.slane %v148, 2
  %v165 = vrot.slane %v149, 2
  %v166 = vrot.slane %v150, 2
  %v167 = vrot.slane %v151, 2
  %v176 = vadd.f32 %v114, %v160
  %v177 = vadd.f32 %v115, %v161
  %v178 = vadd.f32 %v116, %v162
  %v179 = vadd.f32 %v117, %v163
  %v180 = vadd.f32 %v118, %v164
  %v181 = vadd.f32 %v119, %v165
  %v182 = vadd.f32 %v120, %v166
  %v183 = vadd.f32 %v121, %v167
  %s184 = scalar_lea.vmem %s0, 4
  %v185 = vld [vmem:[%s184] sm:$0x3]
  %v186 = vld [vmem:[%s184 + $0x4] sm:$0x3]
  %v187 = vld [vmem:[%s184 + $0x8] sm:$0x3]
  %v188 = vld [vmem:[%s184 + $0xc] sm:$0x3]
  %v189 = vld [vmem:[%s184 + $0x18] sm:$0x3]
  %v190 = vld [vmem:[%s184 + $0x1c] sm:$0x3]
  %v191 = vld [vmem:[%s184 + $0x20] sm:$0x3]
  %v192 = vld [vmem:[%s184 + $0x24] sm:$0x3]
  %v193 = vunpack.c.l.bf16 %v185
  %v194 = vunpack.c.l.bf16 %v186
  %v195 = vunpack.c.l.bf16 %v187
  %v196 = vunpack.c.l.bf16 %v188
  %v197 = vunpack.c.l.bf16 %v189
  %v198 = vunpack.c.l.bf16 %v190
  %v199 = vunpack.c.l.bf16 %v191
  %v200 = vunpack.c.l.bf16 %v192
  %v202 = vlaneseq
  %v203 = vshrl.u32 %v202, 7
  %v204 = vsub.s32 0, %v203
  %v205 = vrot.slane %v24, %v204
  %v207 = vmul.f32 %v193, %v205
  %v208 = vmul.f32 %v194, %v205
  %v209 = vmul.f32 %v195, %v205
  %v210 = vmul.f32 %v196, %v205
  %v211 = vmul.f32 %v197, %v205
  %v212 = vmul.f32 %v198, %v205
  %v213 = vmul.f32 %v199, %v205
  %v214 = vmul.f32 %v200, %v205
  %v215 = vadd.f32 %v176, %v207
  %v216 = vadd.f32 %v177, %v208
  %v217 = vadd.f32 %v178, %v209
  %v218 = vadd.f32 %v179, %v210
  %v219 = vadd.f32 %v180, %v211
  %v220 = vadd.f32 %v181, %v212
  %v221 = vadd.f32 %v182, %v213
  %v222 = vadd.f32 %v183, %v214
  %v223 = vld [vmem:[%s184] sm:$0x7]
  %v224 = vld [vmem:[%s184 + $0x4] sm:$0x7]
  %v225 = vld [vmem:[%s184 + $0x8] sm:$0x7]
  %v226 = vld [vmem:[%s184 + $0xc] sm:$0x7]
  %v227 = vld [vmem:[%s184 + $0x18] sm:$0x7]
  %v228 = vld [vmem:[%s184 + $0x1c] sm:$0x7]
  %v229 = vld [vmem:[%s184 + $0x20] sm:$0x7]
  %v230 = vld [vmem:[%s184 + $0x24] sm:$0x7]
  %v231 = vunpack.c.l.bf16 %v223
  %v232 = vunpack.c.l.bf16 %v224
  %v233 = vunpack.c.l.bf16 %v225
  %v234 = vunpack.c.l.bf16 %v226
  %v235 = vunpack.c.l.bf16 %v227
  %v236 = vunpack.c.l.bf16 %v228
  %v237 = vunpack.c.l.bf16 %v229
  %v238 = vunpack.c.l.bf16 %v230
  %v240 = vlaneseq
  %v241 = vshrl.u32 %v240, 7
  %v242 = vsub.s32 0, %v241
  %v243 = vrot.slane %v25, %v242
  %v245 = vmul.f32 %v231, %v243
  %v246 = vmul.f32 %v232, %v243
  %v247 = vmul.f32 %v233, %v243
  %v248 = vmul.f32 %v234, %v243
  %v249 = vmul.f32 %v235, %v243
  %v250 = vmul.f32 %v236, %v243
  %v251 = vmul.f32 %v237, %v243
  %v252 = vmul.f32 %v238, %v243
  %v261 = vrot.slane %v245, 1
  %v262 = vrot.slane %v246, 1
  %v263 = vrot.slane %v247, 1
  %v264 = vrot.slane %v248, 1
  %v265 = vrot.slane %v249, 1
  %v266 = vrot.slane %v250, 1
  %v267 = vrot.slane %v251, 1
  %v268 = vrot.slane %v252, 1
  %v277 = vadd.f32 %v215, %v261
  %v278 = vadd.f32 %v216, %v262
  %v279 = vadd.f32 %v217, %v263
  %v280 = vadd.f32 %v218, %v264
  %v281 = vadd.f32 %v219, %v265
  %v282 = vadd.f32 %v220, %v266
  %v283 = vadd.f32 %v221, %v267
  %v284 = vadd.f32 %v222, %v268
  %v285 = vld [vmem:[%s184] sm:$0x6]
  %v286 = vld [vmem:[%s184 + $0x4] sm:$0x6]
  %v287 = vld [vmem:[%s184 + $0x8] sm:$0x6]
  %v288 = vld [vmem:[%s184 + $0xc] sm:$0x6]
  %v289 = vld [vmem:[%s184 + $0x18] sm:$0x6]
  %v290 = vld [vmem:[%s184 + $0x1c] sm:$0x6]
  %v291 = vld [vmem:[%s184 + $0x20] sm:$0x6]
  %v292 = vld [vmem:[%s184 + $0x24] sm:$0x6]
  %v293 = vunpack.c.l.bf16 %v285
  %v294 = vunpack.c.l.bf16 %v286
  %v295 = vunpack.c.l.bf16 %v287
  %v296 = vunpack.c.l.bf16 %v288
  %v297 = vunpack.c.l.bf16 %v289
  %v298 = vunpack.c.l.bf16 %v290
  %v299 = vunpack.c.l.bf16 %v291
  %v300 = vunpack.c.l.bf16 %v292
  %v302 = vlaneseq
  %v303 = vshrl.u32 %v302, 7
  %v304 = vsub.s32 0, %v303
  %v305 = vrot.slane %v26, %v304
  %v307 = vmul.f32 %v293, %v305
  %v308 = vmul.f32 %v294, %v305
  %v309 = vmul.f32 %v295, %v305
  %v310 = vmul.f32 %v296, %v305
  %v311 = vmul.f32 %v297, %v305
  %v312 = vmul.f32 %v298, %v305
  %v313 = vmul.f32 %v299, %v305
  %v314 = vmul.f32 %v300, %v305
  %v323 = vrot.slane %v307, 2
  %v324 = vrot.slane %v308, 2
  %v325 = vrot.slane %v309, 2
  %v326 = vrot.slane %v310, 2
  %v327 = vrot.slane %v311, 2
  %v328 = vrot.slane %v312, 2
  %v329 = vrot.slane %v313, 2
  %v330 = vrot.slane %v314, 2
  %v339 = vadd.f32 %v277, %v323
  %v340 = vadd.f32 %v278, %v324
  %v341 = vadd.f32 %v279, %v325
  %v342 = vadd.f32 %v280, %v326
  %v343 = vadd.f32 %v281, %v327
  %v344 = vadd.f32 %v282, %v328
  %v345 = vadd.f32 %v283, %v329
  %v346 = vadd.f32 %v284, %v330
  %s347 = scalar_lea.vmem %s0, 8
  %v348 = vld [vmem:[%s347] sm:$0x3]
  %v349 = vld [vmem:[%s347 + $0x4] sm:$0x3]
  %v350 = vld [vmem:[%s347 + $0x8] sm:$0x3]
  %v351 = vld [vmem:[%s347 + $0xc] sm:$0x3]
  %v352 = vld [vmem:[%s347 + $0x18] sm:$0x3]
  %v353 = vld [vmem:[%s347 + $0x1c] sm:$0x3]
  %v354 = vld [vmem:[%s347 + $0x20] sm:$0x3]
  %v355 = vld [vmem:[%s347 + $0x24] sm:$0x3]
  %v356 = vunpack.c.l.bf16 %v348
  %v357 = vunpack.c.l.bf16 %v349
  %v358 = vunpack.c.l.bf16 %v350
  %v359 = vunpack.c.l.bf16 %v351
  %v360 = vunpack.c.l.bf16 %v352
  %v361 = vunpack.c.l.bf16 %v353
  %v362 = vunpack.c.l.bf16 %v354
  %v363 = vunpack.c.l.bf16 %v355
  %v365 = vlaneseq
  %v366 = vshrl.u32 %v365, 7
  %v367 = vsub.s32 0, %v366
  %v368 = vrot.slane %v27, %v367
  %v370 = vmul.f32 %v356, %v368
  %v371 = vmul.f32 %v357, %v368
  %v372 = vmul.f32 %v358, %v368
  %v373 = vmul.f32 %v359, %v368
  %v374 = vmul.f32 %v360, %v368
  %v375 = vmul.f32 %v361, %v368
  %v376 = vmul.f32 %v362, %v368
  %v377 = vmul.f32 %v363, %v368
  %v378 = vadd.f32 %v339, %v370
  %v379 = vadd.f32 %v340, %v371
  %v380 = vadd.f32 %v341, %v372
  %v381 = vadd.f32 %v342, %v373
  %v382 = vadd.f32 %v343, %v374
  %v383 = vadd.f32 %v344, %v375
  %v384 = vadd.f32 %v345, %v376
  %v385 = vadd.f32 %v346, %v377
  %v386 = vld [vmem:[%s347] sm:$0x7]
  %v387 = vld [vmem:[%s347 + $0x4] sm:$0x7]
  %v388 = vld [vmem:[%s347 + $0x8] sm:$0x7]
  %v389 = vld [vmem:[%s347 + $0xc] sm:$0x7]
  %v390 = vld [vmem:[%s347 + $0x18] sm:$0x7]
  %v391 = vld [vmem:[%s347 + $0x1c] sm:$0x7]
  %v392 = vld [vmem:[%s347 + $0x20] sm:$0x7]
  %v393 = vld [vmem:[%s347 + $0x24] sm:$0x7]
  %v394 = vunpack.c.l.bf16 %v386
  %v395 = vunpack.c.l.bf16 %v387
  %v396 = vunpack.c.l.bf16 %v388
  %v397 = vunpack.c.l.bf16 %v389
  %v398 = vunpack.c.l.bf16 %v390
  %v399 = vunpack.c.l.bf16 %v391
  %v400 = vunpack.c.l.bf16 %v392
  %v401 = vunpack.c.l.bf16 %v393
  %v403 = vlaneseq
  %v404 = vshrl.u32 %v403, 7
  %v405 = vsub.s32 0, %v404
  %v406 = vrot.slane %v28, %v405
  %v408 = vmul.f32 %v394, %v406
  %v409 = vmul.f32 %v395, %v406
  %v410 = vmul.f32 %v396, %v406
  %v411 = vmul.f32 %v397, %v406
  %v412 = vmul.f32 %v398, %v406
  %v413 = vmul.f32 %v399, %v406
  %v414 = vmul.f32 %v400, %v406
  %v415 = vmul.f32 %v401, %v406
  %v424 = vrot.slane %v408, 1
  %v425 = vrot.slane %v409, 1
  %v426 = vrot.slane %v410, 1
  %v427 = vrot.slane %v411, 1
  %v428 = vrot.slane %v412, 1
  %v429 = vrot.slane %v413, 1
  %v430 = vrot.slane %v414, 1
  %v431 = vrot.slane %v415, 1
  %v440 = vadd.f32 %v378, %v424
  %v441 = vadd.f32 %v379, %v425
  %v442 = vadd.f32 %v380, %v426
  %v443 = vadd.f32 %v381, %v427
  %v444 = vadd.f32 %v382, %v428
  %v445 = vadd.f32 %v383, %v429
  %v446 = vadd.f32 %v384, %v430
  %v447 = vadd.f32 %v385, %v431
  %v448 = vld [vmem:[%s347] sm:$0x6]
  %v449 = vld [vmem:[%s347 + $0x4] sm:$0x6]
  %v450 = vld [vmem:[%s347 + $0x8] sm:$0x6]
  %v451 = vld [vmem:[%s347 + $0xc] sm:$0x6]
  %v452 = vld [vmem:[%s347 + $0x18] sm:$0x6]
  %v453 = vld [vmem:[%s347 + $0x1c] sm:$0x6]
  %v454 = vld [vmem:[%s347 + $0x20] sm:$0x6]
  %v455 = vld [vmem:[%s347 + $0x24] sm:$0x6]
  %v456 = vunpack.c.l.bf16 %v448
  %v457 = vunpack.c.l.bf16 %v449
  %v458 = vunpack.c.l.bf16 %v450
  %v459 = vunpack.c.l.bf16 %v451
  %v460 = vunpack.c.l.bf16 %v452
  %v461 = vunpack.c.l.bf16 %v453
  %v462 = vunpack.c.l.bf16 %v454
  %v463 = vunpack.c.l.bf16 %v455
  %v465 = vlaneseq
  %v466 = vshrl.u32 %v465, 7
  %v467 = vsub.s32 0, %v466
  %v468 = vrot.slane %v29, %v467
  %v470 = vmul.f32 %v456, %v468
  %v471 = vmul.f32 %v457, %v468
  %v472 = vmul.f32 %v458, %v468
  %v473 = vmul.f32 %v459, %v468
  %v474 = vmul.f32 %v460, %v468
  %v475 = vmul.f32 %v461, %v468
  %v476 = vmul.f32 %v462, %v468
  %v477 = vmul.f32 %v463, %v468
  %v486 = vrot.slane %v470, 2
  %v487 = vrot.slane %v471, 2
  %v488 = vrot.slane %v472, 2
  %v489 = vrot.slane %v473, 2
  %v490 = vrot.slane %v474, 2
  %v491 = vrot.slane %v475, 2
  %v492 = vrot.slane %v476, 2
  %v493 = vrot.slane %v477, 2
  %v502 = vadd.f32 %v440, %v486
  %v503 = vadd.f32 %v441, %v487
  %v504 = vadd.f32 %v442, %v488
  %v505 = vadd.f32 %v443, %v489
  %v506 = vadd.f32 %v444, %v490
  %v507 = vadd.f32 %v445, %v491
  %v508 = vadd.f32 %v446, %v492
  %v509 = vadd.f32 %v447, %v493
  %v510 = vld [vmem:[%s2] sm:$0x1]
  %v512 = vlaneseq
  %v513 = vshrl.u32 %v512, 7
  %v514 = vsub.s32 0, %v513
  %v515 = vrot.slane %v510, %v514
  %v517 = vadd.f32 %v502, %v515
  %v518 = vadd.f32 %v503, %v515
  %v519 = vadd.f32 %v504, %v515
  %v520 = vadd.f32 %v505, %v515
  %v521 = vadd.f32 %v506, %v515
  %v522 = vadd.f32 %v507, %v515
  %v523 = vadd.f32 %v508, %v515
  %v524 = vadd.f32 %v509, %v515
  %v525 = vmax.f32 %v517, 0.0
  %v526 = vmax.f32 %v518, 0.0
  %v527 = vmax.f32 %v519, 0.0
  %v528 = vmax.f32 %v520, 0.0
  %v529 = vmax.f32 %v521, 0.0
  %v530 = vmax.f32 %v522, 0.0
  %v531 = vmax.f32 %v523, 0.0
  %v532 = vmax.f32 %v524, 0.0
  %v541 = vcombine.low %v525, %v526
  %v542 = vcombine.low %v527, %v528
  %v543 = vcombine.low %v529, %v530
  %v544 = vcombine.low %v531, %v532
  %v549 = vpack.c.bf16 %v542, %v541
  %v550 = vpack.c.bf16 %v544, %v543
  %v551 = vld [vmem:[%s3] sm:$0xf]
  %v552 = vld [vmem:[%s3 + $0x4] sm:$0xf]
  %v553 = vld [vmem:[%s3 + $0x8] sm:$0xf]
  %v554 = vld [vmem:[%s3 + $0xc] sm:$0xf]
  %v555 = vld [vmem:[%s3 + $0x10] sm:$0xf]
  %v556 = vld [vmem:[%s3 + $0x14] sm:$0xf]
  %v557 = vld [vmem:[%s3 + $0x18] sm:$0xf]
  %v558 = vld [vmem:[%s3 + $0x1c] sm:$0xf]
  %v559 = vld [vmem:[%s4] sm:$0x1]
  %v561 = vlaneseq
  %v562 = vshrl.u32 %v561, 7
  %v563 = vsub.s32 0, %v562
  %v564 = vrot.slane %v559, %v563
  %v574 = vunpack.c.l.b16 %v551
  %v575 = vunpack.c.l.b16 %v552
  %v576 = vunpack.c.l.b16 %v553
  %v577 = vunpack.c.l.b16 %v554
  %v578 = vunpack.c.l.b16 %v555
  %v579 = vunpack.c.l.b16 %v556
  %v580 = vunpack.c.l.b16 %v557
  %v581 = vunpack.c.l.b16 %v558
  %v582 = vpack.c.b16 %v575, %v574
  %v583 = vpack.c.b16 %v577, %v576
  %v584 = vpack.c.b16 %v579, %v578
  %v585 = vpack.c.b16 %v581, %v580
  %vm590 = vcmask 523264
  %v592 = vsel %vm590, %v549, 0
  %v595 = vsel %vm590, %v550, 0
  %597 = vmatprep.subr.bf16.mxu0 0
  %598 = vmatpush1.bf16.msra.mxu0 0
  %599 = vmatprep.subr.bf16.mxu0 0
  %600 = vmatpush1.bf16.msra.mxu0 0
  %601 = vmatprep.subr.bf16.mxu0 0
  %602 = vmatpush1.bf16.msra.mxu0 0
  %603 = vmatprep.subr.bf16.mxu0 0
  %604 = vmatpush1.bf16.msra.mxu0 0
  %605 = vmatprep.subr.bf16.mxu0 0
  %606 = vmatpush1.bf16.msra.mxu0 %v585
  %607 = vmatprep.subr.bf16.mxu0 0
  %608 = vmatpush1.bf16.msra.mxu0 %v584
  %609 = vmatprep.subr.bf16.mxu0 0
  %610 = vmatpush1.bf16.msra.mxu0 %v583
  %611 = vmatprep.subr.bf16.mxu0 0
  %612 = vmatpush1.bf16.msra.mxu0 %v582
  %613 = vmatprep.subr.bf16.mxu0 0
  %614 = vmatpush2.bf16.msra.mxu0 0
  %615 = vmatprep.subr.bf16.mxu0 0
  %616 = vmatpush2.bf16.msra.mxu0 0
  %617 = vmatprep.subr.bf16.mxu0 0
  %618 = vmatpush2.bf16.msra.mxu0 0
  %619 = vmatprep.subr.bf16.mxu0 0
  %620 = vmatpush2.bf16.msra.mxu0 0
  %621 = vmatprep.subr.bf16.mxu0 0
  %622 = vmatpush2.bf16.msra.mxu0 0
  %623 = vmatprep.subr.bf16.mxu0 0
  %624 = vmatpush2.bf16.msra.mxu0 0
  %625 = vmatprep.subr.bf16.mxu0 0
  %626 = vmatpush2.bf16.msra.mxu0 0
  %627 = vmatprep.subr.bf16.mxu0 0
  %628 = vmatpush2.bf16.msra.mxu0 0
  %629 = vmatprep.mubr.bf16.mxu0 0
  %630 = vmatmul.mubr.bf16.gmra.mxu0 %v592
  %v631 = vpop.f32.mrf.mxu0
  %v632 = vadd.f32 %v564, %v631
  %v633 = vpop.f32.mrf.mxu0
  %v634 = vpop.f32.mrf.mxu0
  %v635 = vadd.f32 %v564, %v634
  %v636 = vpop.f32.mrf.mxu0
  %637 = vmatprep.mubr.bf16.mxu0 0
  %638 = vmatmul.mubr.bf16.gmra.mxu0 %v595
  %v639 = vpop.f32.mrf.mxu0
  %v640 = vadd.f32 %v564, %v639
  %v641 = vpop.f32.mrf.mxu0
  %v642 = vpop.f32.mrf.mxu0
  %v643 = vadd.f32 %v564, %v642
  %v644 = vpop.f32.mrf.mxu0
  %645 = vdwg.mxu0
  %v646 = vmax.f32 %v632, 0.0
  %v647 = vmax.f32 %v635, 0.0
  %v648 = vmax.f32 %v640, 0.0
  %v649 = vmax.f32 %v643, 0.0
  %v650 = vpack.c.bf16 %v647, %v646
  %v651 = vpack.c.bf16 %v649, %v648
  %v654 = vunpack.c.l.b16 %v650
  %v655 = vunpack.c.h.b16 %v650
  %v656 = vunpack.c.l.b16 %v651
  %v657 = vunpack.c.h.b16 %v651
  %v658 = vpack.c.b16 %v654, %v654
  %v659 = vpack.c.b16 %v655, %v655
  %v660 = vpack.c.b16 %v656, %v656
  %v661 = vpack.c.b16 %v657, %v657
  %vm666 = vcmask 519168
  %667 = vst.msk [vmem:[%s5] sm:$0xf] %vm666, %v658
  %668 = vst.msk [vmem:[%s5 + $0x4] sm:$0xf] %vm666, %v659
  %669 = vst.msk [vmem:[%s5 + $0x8] sm:$0xf] %vm666, %v660
  %670 = vst.msk [vmem:[%s5 + $0xc] sm:$0xf] %vm666, %v661
  // Predicated region
  $region22: #{_lambda_.19} parent=0 // pred_check
    _
  $region23: #{_lambda_.19} parent=0 // pred_check_branch
    %672 = sbr.rel (0) target = $region25
  $region24: #{_lambda_.19} parent=0 // pred_region
    _
  $region25: #{_lambda_.19} parent=0 // pred_fallthru
    _
  // Predicated region
  $region26: #{_lambda_.19} parent=0 // pred_check
    _
  $region27: #{_lambda_.19} parent=0 // pred_check_branch
    %674 = sbr.rel (0) target = $region29
  $region28: #{_lambda_.19} parent=0 // pred_region
    _
  $region29: #{_lambda_.19} parent=0 // pred_fallthru
    _

// kernel: _lambda_.15
$region0: #{_lambda_.15}
  #allocation0 [shape = 'u32[]', space=smem, size = 0x4, offset = 0x4, fixed_abs, tag = 'smem constant byte address 0x4 - core index']
  #allocation1 [shape = 'u32[144,128]{1,0:T(1,128)}', space=vmem, size = 0x12000, scoped, tag = 'internal scratch']
  %s0 = inlined_call_operand.vmem [shape: bf16[2,18,18,8], index: 0, kind: input, shape index: {}]
  %s1 = inlined_call_operand.vmem [shape: f32[9,1,1,1,8], index: 1, kind: input, shape index: {}]
  %s2 = inlined_call_operand.vmem [shape: f32[1,1,1,8], index: 2, kind: input, shape index: {}]
  %s3 = inlined_call_operand.vmem [shape: bf16[8,16], index: 3, kind: input, shape index: {}]
  %s4 = inlined_call_operand.vmem [shape: f32[1,16], index: 4, kind: input, shape index: {}]
  %s5 = inlined_call_operand.vmem [shape: bf16[512,16], index: 5, kind: output, shape index: {}]
  %s6 = sld [smem:[#allocation0]]
  $region30: #{_lambda_.15} parent=0
    _
  %s8 = ssub.s32 1, %s6
  %s9 = scalar_select 0, %s8, %s6
  // Predicated region
  $region2: #{_lambda_.15} parent=0 // pred_check
    _
  $region3: #{_lambda_.15} parent=0 // pred_check_branch
    %11 = sbr.rel (0) target = $region5
  $region4: #{_lambda_.15} parent=0 // pred_region
    _
  $region5: #{_lambda_.15} parent=0 // pred_fallthru
    _
  // Predicated region
  $region6: #{_lambda_.15} parent=0 // pred_check
    _
  $region7: #{_lambda_.15} parent=0 // pred_check_branch
    %13 = sbr.rel (0) target = $region9
  $region8: #{_lambda_.15} parent=0 // pred_region
    _
  $region9: #{_lambda_.15} parent=0 // pred_fallthru
    _
  // Predicated region
  $region10: #{_lambda_.15} parent=0 // pred_check
    _
  $region11: #{_lambda_.15} parent=0 // pred_check_branch
    %15 = sbr.rel (0) target = $region13
  $region12: #{_lambda_.15} parent=0 // pred_region
    _
  $region13: #{_lambda_.15} parent=0 // pred_fallthru
    _
  // Predicated region
  $region14: #{_lambda_.15} parent=0 // pred_check
    _
  $region15: #{_lambda_.15} parent=0 // pred_check_branch
    %17 = sbr.rel (0) target = $region17
  $region16: #{_lambda_.15} parent=0 // pred_region
    _
  $region17: #{_lambda_.15} parent=0 // pred_fallthru
    _
  // Predicated region
  $region18: #{_lambda_.15} parent=0 // pred_check
    _
  $region19: #{_lambda_.15} parent=0 // pred_check_branch
    %19 = sbr.rel (0) target = $region21
  $region20: #{_lambda_.15} parent=0 // pred_region
    _
  $region21: #{_lambda_.15} parent=0 // pred_fallthru
    _
  %v21 = vld [vmem:[%s1] sm:$0x1]
  %v22 = vld [vmem:[%s1 + $0x1] sm:$0x1]
  %v23 = vld [vmem:[%s1 + $0x2] sm:$0x1]
  %v24 = vld [vmem:[%s1 + $0x3] sm:$0x1]
  %v25 = vld [vmem:[%s1 + $0x4] sm:$0x1]
  %v26 = vld [vmem:[%s1 + $0x5] sm:$0x1]
  %v27 = vld [vmem:[%s1 + $0x6] sm:$0x1]
  %v28 = vld [vmem:[%s1 + $0x7] sm:$0x1]
  %v29 = vld [vmem:[%s1 + $0x8] sm:$0x1]
  %v30 = vld [vmem:[%s0] sm:$0xf]
  %v31 = vld [vmem:[%s0 + $0x4] sm:$0xf]
  %v32 = vld [vmem:[%s0 + $0xc] sm:$0xf]
  %v33 = vld [vmem:[%s0 + $0x10] sm:$0xf]
  %v34 = vld [vmem:[%s0 + $0x18] sm:$0xf]
  %v35 = vld [vmem:[%s0 + $0x1c] sm:$0xf]
  %v36 = vld [vmem:[%s0 + $0x24] sm:$0xf]
  %v37 = vld [vmem:[%s0 + $0x28] sm:$0xf]
  %v38 = vld [vmem:[%s0 + $0x30] sm:$0xf]
  %v39 = vld [vmem:[%s0 + $0x34] sm:$0xf]
  %v40 = vld [vmem:[%s0 + $0x3c] sm:$0xf]
  %v41 = vld [vmem:[%s0 + $0x40] sm:$0xf]
  %v42 = vld [vmem:[%s0 + $0x48] sm:$0xf]
  %v43 = vld [vmem:[%s0 + $0x4c] sm:$0xf]
  %v44 = vld [vmem:[%s0 + $0x54] sm:$0xf]
  %v45 = vld [vmem:[%s0 + $0x58] sm:$0xf]
  %v46 = vld [vmem:[%s0 + $0x60] sm:$0xf]
  %v47 = vld [vmem:[%s0 + $0x64] sm:$0xf]
  %v48 = vld [vmem:[%s0 + $0x6c] sm:$0xf]
  %v49 = vld [vmem:[%s0 + $0x70] sm:$0xf]
  %v50 = vld [vmem:[%s0 + $0x78] sm:$0xf]
  %v51 = vld [vmem:[%s0 + $0x7c] sm:$0xf]
  %v52 = vld [vmem:[%s0 + $0x84] sm:$0xf]
  %v53 = vld [vmem:[%s0 + $0x88] sm:$0xf]
  %v54 = vld [vmem:[%s0 + $0x90] sm:$0xf]
  %v55 = vld [vmem:[%s0 + $0x94] sm:$0xf]
  %v56 = vld [vmem:[%s0 + $0x9c] sm:$0xf]
  %v57 = vld [vmem:[%s0 + $0xa0] sm:$0xf]
  %v58 = vld [vmem:[%s0 + $0xa8] sm:$0xf]
  %v59 = vld [vmem:[%s0 + $0xac] sm:$0xf]
  %v60 = vld [vmem:[%s0 + $0xb4] sm:$0xf]
  %v61 = vld [vmem:[%s0 + $0xb8] sm:$0xf]
  %v62 = vld [vmem:[%s0 + $0xd8] sm:$0xf]
  %v63 = vld [vmem:[%s0 + $0xdc] sm:$0xf]
  %v64 = vld [vmem:[%s0 + $0xe4] sm:$0xf]
  %v65 = vld [vmem:[%s0 + $0xe8] sm:$0xf]
  %v66 = vld [vmem:[%s0 + $0xf0] sm:$0xf]
  %v67 = vld [vmem:[%s0 + $0xf4] sm:$0xf]
  %v68 = vld [vmem:[%s0 + $0xfc] sm:$0xf]
  %v69 = vld [vmem:[%s0 + $0x100] sm:$0xf]
  %v70 = vld [vmem:[%s0 + $0x108] sm:$0xf]
  %v71 = vld [vmem:[%s0 + $0x10c] sm:$0xf]
  %v72 = vld [vmem:[%s0 + $0x114] sm:$0xf]
  %v73 = vld [vmem:[%s0 + $0x118] sm:$0xf]
  %v74 = vld [vmem:[%s0 + $0x120] sm:$0xf]
  %v75 = vld [vmem:[%s0 + $0x124] sm:$0xf]
  %v76 = vld [vmem:[%s0 + $0x12c] sm:$0xf]
  %v77 = vld [vmem:[%s0 + $0x130] sm:$0xf]
  %v78 = vld [vmem:[%s0 + $0x138] sm:$0xf]
  %v79 = vld [vmem:[%s0 + $0x13c] sm:$0xf]
  %v80 = vld [vmem:[%s0 + $0x144] sm:$0xf]
  %v81 = vld [vmem:[%s0 + $0x148] sm:$0xf]
  %v82 = vld [vmem:[%s0 + $0x150] sm:$0xf]
  %v83 = vld [vmem:[%s0 + $0x154] sm:$0xf]
  %v84 = vld [vmem:[%s0 + $0x15c] sm:$0xf]
  %v85 = vld [vmem:[%s0 + $0x160] sm:$0xf]
  %v86 = vld [vmem:[%s0 + $0x168] sm:$0xf]
  %v87 = vld [vmem:[%s0 + $0x16c] sm:$0xf]
  %v88 = vld [vmem:[%s0 + $0x174] sm:$0xf]
  %v89 = vld [vmem:[%s0 + $0x178] sm:$0xf]
  %v90 = vld [vmem:[%s0 + $0x180] sm:$0xf]
  %v91 = vld [vmem:[%s0 + $0x184] sm:$0xf]
  %v92 = vld [vmem:[%s0 + $0x18c] sm:$0xf]
  %v93 = vld [vmem:[%s0 + $0x190] sm:$0xf]
  %v94 = vunpack.c.l.bf16 %v30
  %v95 = vunpack.c.l.bf16 %v31
  %v96 = vunpack.c.l.bf16 %v32
  %v97 = vunpack.c.l.bf16 %v33
  %v98 = vunpack.c.l.bf16 %v34
  %v99 = vunpack.c.l.bf16 %v35
  %v100 = vunpack.c.l.bf16 %v36
  %v101 = vunpack.c.l.bf16 %v37
  %v102 = vunpack.c.l.bf16 %v38
  %v103 = vunpack.c.l.bf16 %v39
  %v104 = vunpack.c.l.bf16 %v40
  %v105 = vunpack.c.l.bf16 %v41
  %v106 = vunpack.c.l.bf16 %v42
  %v107 = vunpack.c.l.bf16 %v43
  %v108 = vunpack.c.l.bf16 %v44
  %v109 = vunpack.c.l.bf16 %v45
  %v110 = vunpack.c.l.bf16 %v46
  %v111 = vunpack.c.l.bf16 %v47
  %v112 = vunpack.c.l.bf16 %v48
  %v113 = vunpack.c.l.bf16 %v49
  %v114 = vunpack.c.l.bf16 %v50
  %v115 = vunpack.c.l.bf16 %v51
  %v116 = vunpack.c.l.bf16 %v52
  %v117 = vunpack.c.l.bf16 %v53
  %v118 = vunpack.c.l.bf16 %v54
  %v119 = vunpack.c.l.bf16 %v55
  %v120 = vunpack.c.l.bf16 %v56
  %v121 = vunpack.c.l.bf16 %v57
  %v122 = vunpack.c.l.bf16 %v58
  %v123 = vunpack.c.l.bf16 %v59
  %v124 = vunpack.c.l.bf16 %v60
  %v125 = vunpack.c.l.bf16 %v61
  %v126 = vunpack.c.l.bf16 %v62
  %v127 = vunpack.c.l.bf16 %v63
  %v128 = vunpack.c.l.bf16 %v64
  %v129 = vunpack.c.l.bf16 %v65
  %v130 = vunpack.c.l.bf16 %v66
  %v131 = vunpack.c.l.bf16 %v67
  %v132 = vunpack.c.l.bf16 %v68
  %v133 = vunpack.c.l.bf16 %v69
  %v134 = vunpack.c.l.bf16 %v70
  %v135 = vunpack.c.l.bf16 %v71
  %v136 = vunpack.c.l.bf16 %v72
  %v137 = vunpack.c.l.bf16 %v73
  %v138 = vunpack.c.l.bf16 %v74
  %v139 = vunpack.c.l.bf16 %v75
  %v140 = vunpack.c.l.bf16 %v76
  %v141 = vunpack.c.l.bf16 %v77
  %v142 = vunpack.c.l.bf16 %v78
  %v143 = vunpack.c.l.bf16 %v79
  %v144 = vunpack.c.l.bf16 %v80
  %v145 = vunpack.c.l.bf16 %v81
  %v146 = vunpack.c.l.bf16 %v82
  %v147 = vunpack.c.l.bf16 %v83
  %v148 = vunpack.c.l.bf16 %v84
  %v149 = vunpack.c.l.bf16 %v85
  %v150 = vunpack.c.l.bf16 %v86
  %v151 = vunpack.c.l.bf16 %v87
  %v152 = vunpack.c.l.bf16 %v88
  %v153 = vunpack.c.l.bf16 %v89
  %v154 = vunpack.c.l.bf16 %v90
  %v155 = vunpack.c.l.bf16 %v91
  %v156 = vunpack.c.l.bf16 %v92
  %v157 = vunpack.c.l.bf16 %v93
  %v159 = vlaneseq
  %v160 = vshrl.u32 %v159, 7
  %v161 = vsub.s32 0, %v160
  %v162 = vrot.slane %v21, %v161
  %v164 = vmul.f32 %v94, %v162
  %v165 = vmul.f32 %v95, %v162
  %v166 = vmul.f32 %v96, %v162
  %v167 = vmul.f32 %v97, %v162
  %v168 = vmul.f32 %v98, %v162
  %v169 = vmul.f32 %v99, %v162
  %v170 = vmul.f32 %v100, %v162
  %v171 = vmul.f32 %v101, %v162
  %v172 = vmul.f32 %v102, %v162
  %v173 = vmul.f32 %v103, %v162
  %v174 = vmul.f32 %v104, %v162
  %v175 = vmul.f32 %v105, %v162
  %v176 = vmul.f32 %v106, %v162
  %v177 = vmul.f32 %v107, %v162
  %v178 = vmul.f32 %v108, %v162
  %v179 = vmul.f32 %v109, %v162
  %v180 = vmul.f32 %v110, %v162
  %v181 = vmul.f32 %v111, %v162
  %v182 = vmul.f32 %v112, %v162
  %v183 = vmul.f32 %v113, %v162
  %v184 = vmul.f32 %v114, %v162
  %v185 = vmul.f32 %v115, %v162
  %v186 = vmul.f32 %v116, %v162
  %v187 = vmul.f32 %v117, %v162
  %v188 = vmul.f32 %v118, %v162
  %v189 = vmul.f32 %v119, %v162
  %v190 = vmul.f32 %v120, %v162
  %v191 = vmul.f32 %v121, %v162
  %v192 = vmul.f32 %v122, %v162
  %v193 = vmul.f32 %v123, %v162
  %v194 = vmul.f32 %v124, %v162
  %v195 = vmul.f32 %v125, %v162
  %v196 = vmul.f32 %v126, %v162
  %v197 = vmul.f32 %v127, %v162
  %v198 = vmul.f32 %v128, %v162
  %v199 = vmul.f32 %v129, %v162
  %v200 = vmul.f32 %v130, %v162
  %v201 = vmul.f32 %v131, %v162
  %v202 = vmul.f32 %v132, %v162
  %v203 = vmul.f32 %v133, %v162
  %v204 = vmul.f32 %v134, %v162
  %v205 = vmul.f32 %v135, %v162
  %v206 = vmul.f32 %v136, %v162
  %v207 = vmul.f32 %v137, %v162
  %v208 = vmul.f32 %v138, %v162
  %v209 = vmul.f32 %v139, %v162
  %v210 = vmul.f32 %v140, %v162
  %v211 = vmul.f32 %v141, %v162
  %v212 = vmul.f32 %v142, %v162
  %v213 = vmul.f32 %v143, %v162
  %v214 = vmul.f32 %v144, %v162
  %v215 = vmul.f32 %v145, %v162
  %v216 = vmul.f32 %v146, %v162
  %v217 = vmul.f32 %v147, %v162
  %v218 = vmul.f32 %v148, %v162
  %v219 = vmul.f32 %v149, %v162
  %v220 = vmul.f32 %v150, %v162
  %v221 = vmul.f32 %v151, %v162
  %v222 = vmul.f32 %v152, %v162
  %v223 = vmul.f32 %v153, %v162
  %v224 = vmul.f32 %v154, %v162
  %v225 = vmul.f32 %v155, %v162
  %v226 = vmul.f32 %v156, %v162
  %v227 = vmul.f32 %v157, %v162
  %v228 = vld [vmem:[%s0 + $0x8] sm:$0x1]
  %v229 = vld [vmem:[%s0 + $0x14] sm:$0x1]
  %v230 = vld [vmem:[%s0 + $0x20] sm:$0x1]
  %v231 = vld [vmem:[%s0 + $0x2c] sm:$0x1]
  %v232 = vld [vmem:[%s0 + $0x38] sm:$0x1]
  %v233 = vld [vmem:[%s0 + $0x44] sm:$0x1]
  %v234 = vld [vmem:[%s0 + $0x50] sm:$0x1]
  %v235 = vld [vmem:[%s0 + $0x5c] sm:$0x1]
  %v236 = vld [vmem:[%s0 + $0x68] sm:$0x1]
  %v237 = vld [vmem:[%s0 + $0x74] sm:$0x1]
  %v238 = vld [vmem:[%s0 + $0x80] sm:$0x1]
  %v239 = vld [vmem:[%s0 + $0x8c] sm:$0x1]
  %v240 = vld [vmem:[%s0 + $0x98] sm:$0x1]
  %v241 = vld [vmem:[%s0 + $0xa4] sm:$0x1]
  %v242 = vld [vmem:[%s0 + $0xb0] sm:$0x1]
  %v243 = vld [vmem:[%s0 + $0xbc] sm:$0x1]
  %v244 = vld [vmem:[%s0 + $0xe0] sm:$0x1]
  %v245 = vld [vmem:[%s0 + $0xec] sm:$0x1]
  %v246 = vld [vmem:[%s0 + $0xf8] sm:$0x1]
  %v247 = vld [vmem:[%s0 + $0x104] sm:$0x1]
  %v248 = vld [vmem:[%s0 + $0x110] sm:$0x1]
  %v249 = vld [vmem:[%s0 + $0x11c] sm:$0x1]
  %v250 = vld [vmem:[%s0 + $0x128] sm:$0x1]
  %v251 = vld [vmem:[%s0 + $0x134] sm:$0x1]
  %v252 = vld [vmem:[%s0 + $0x140] sm:$0x1]
  %v253 = vld [vmem:[%s0 + $0x14c] sm:$0x1]
  %v254 = vld [vmem:[%s0 + $0x158] sm:$0x1]
  %v255 = vld [vmem:[%s0 + $0x164] sm:$0x1]
  %v256 = vld [vmem:[%s0 + $0x170] sm:$0x1]
  %v257 = vld [vmem:[%s0 + $0x17c] sm:$0x1]
  %v258 = vld [vmem:[%s0 + $0x188] sm:$0x1]
  %v259 = vld [vmem:[%s0 + $0x194] sm:$0x1]
  %v260 = vunpack.c.l.bf16 %v228
  %v261 = vunpack.c.l.bf16 %v229
  %v262 = vunpack.c.l.bf16 %v230
  %v263 = vunpack.c.l.bf16 %v231
  %v264 = vunpack.c.l.bf16 %v232
  %v265 = vunpack.c.l.bf16 %v233
  %v266 = vunpack.c.l.bf16 %v234
  %v267 = vunpack.c.l.bf16 %v235
  %v268 = vunpack.c.l.bf16 %v236
  %v269 = vunpack.c.l.bf16 %v237
  %v270 = vunpack.c.l.bf16 %v238
  %v271 = vunpack.c.l.bf16 %v239
  %v272 = vunpack.c.l.bf16 %v240
  %v273 = vunpack.c.l.bf16 %v241
  %v274 = vunpack.c.l.bf16 %v242
  %v275 = vunpack.c.l.bf16 %v243
  %v276 = vunpack.c.l.bf16 %v244
  %v277 = vunpack.c.l.bf16 %v245
  %v278 = vunpack.c.l.bf16 %v246
  %v279 = vunpack.c.l.bf16 %v247
  %v280 = vunpack.c.l.bf16 %v248
  %v281 = vunpack.c.l.bf16 %v249
  %v282 = vunpack.c.l.bf16 %v250
  %v283 = vunpack.c.l.bf16 %v251
  %v284 = vunpack.c.l.bf16 %v252
  %v285 = vunpack.c.l.bf16 %v253
  %v286 = vunpack.c.l.bf16 %v254
  %v287 = vunpack.c.l.bf16 %v255
  %v288 = vunpack.c.l.bf16 %v256
  %v289 = vunpack.c.l.bf16 %v257
  %v290 = vunpack.c.l.bf16 %v258
  %v291 = vunpack.c.l.bf16 %v259
  %v293 = vlaneseq
  %v294 = vshrl.u32 %v293, 7
  %v295 = vsub.s32 0, %v294
  %v296 = vrot.slane %v22, %v295
  %v298 = vmul.f32 %v94, %v296
  %v299 = vmul.f32 %v95, %v296
  %v300 = vmul.f32 %v260, %v296
  %v301 = vmul.f32 %v96, %v296
  %v302 = vmul.f32 %v97, %v296
  %v303 = vmul.f32 %v261, %v296
  %v304 = vmul.f32 %v98, %v296
  %v305 = vmul.f32 %v99, %v296
  %v306 = vmul.f32 %v262, %v296
  %v307 = vmul.f32 %v100, %v296
  %v308 = vmul.f32 %v101, %v296
  %v309 = vmul.f32 %v263, %v296
  %v310 = vmul.f32 %v102, %v296
  %v311 = vmul.f32 %v103, %v296
  %v312 = vmul.f32 %v264, %v296
  %v313 = vmul.f32 %v104, %v296
  %v314 = vmul.f32 %v105, %v296
  %v315 = vmul.f32 %v265, %v296
  %v316 = vmul.f32 %v106, %v296
  %v317 = vmul.f32 %v107, %v296
  %v318 = vmul.f32 %v266, %v296
  %v319 = vmul.f32 %v108, %v296
  %v320 = vmul.f32 %v109, %v296
  %v321 = vmul.f32 %v267, %v296
  %v322 = vmul.f32 %v110, %v296
  %v323 = vmul.f32 %v111, %v296
  %v324 = vmul.f32 %v268, %v296
  %v325 = vmul.f32 %v112, %v296
  %v326 = vmul.f32 %v113, %v296
  %v327 = vmul.f32 %v269, %v296
  %v328 = vmul.f32 %v114, %v296
  %v329 = vmul.f32 %v115, %v296
  %v330 = vmul.f32 %v270, %v296
  %v331 = vmul.f32 %v116, %v296
  %v332 = vmul.f32 %v117, %v296
  %v333 = vmul.f32 %v271, %v296
  %v334 = vmul.f32 %v118, %v296
  %v335 = vmul.f32 %v119, %v296
  %v336 = vmul.f32 %v272, %v296
  %v337 = vmul.f32 %v120, %v296
  %v338 = vmul.f32 %v121, %v296
  %v339 = vmul.f32 %v273, %v296
  %v340 = vmul.f32 %v122, %v296
  %v341 = vmul.f32 %v123, %v296
  %v342 = vmul.f32 %v274, %v296
  %v343 = vmul.f32 %v124, %v296
  %v344 = vmul.f32 %v125, %v296
  %v345 = vmul.f32 %v275, %v296
  %v346 = vmul.f32 %v126, %v296
  %v347 = vmul.f32 %v127, %v296
  %v348 = vmul.f32 %v276, %v296
  %v349 = vmul.f32 %v128, %v296
  %v350 = vmul.f32 %v129, %v296
  %v351 = vmul.f32 %v277, %v296
  %v352 = vmul.f32 %v130, %v296
  %v353 = vmul.f32 %v131, %v296
  %v354 = vmul.f32 %v278, %v296
  %v355 = vmul.f32 %v132, %v296
  %v356 = vmul.f32 %v133, %v296
  %v357 = vmul.f32 %v279, %v296
  %v358 = vmul.f32 %v134, %v296
  %v359 = vmul.f32 %v135, %v296
  %v360 = vmul.f32 %v280, %v296
  %v361 = vmul.f32 %v136, %v296
  %v362 = vmul.f32 %v137, %v296
  %v363 = vmul.f32 %v281, %v296
  %v364 = vmul.f32 %v138, %v296
  %v365 = vmul.f32 %v139, %v296
  %v366 = vmul.f32 %v282, %v296
  %v367 = vmul.f32 %v140, %v296
  %v368 = vmul.f32 %v141, %v296
  %v369 = vmul.f32 %v283, %v296
  %v370 = vmul.f32 %v142, %v296
  %v371 = vmul.f32 %v143, %v296
  %v372 = vmul.f32 %v284, %v296
  %v373 = vmul.f32 %v144, %v296
  %v374 = vmul.f32 %v145, %v296
  %v375 = vmul.f32 %v285, %v296
  %v376 = vmul.f32 %v146, %v296
  %v377 = vmul.f32 %v147, %v296
  %v378 = vmul.f32 %v286, %v296
  %v379 = vmul.f32 %v148, %v296
  %v380 = vmul.f32 %v149, %v296
  %v381 = vmul.f32 %v287, %v296
  %v382 = vmul.f32 %v150, %v296
  %v383 = vmul.f32 %v151, %v296
  %v384 = vmul.f32 %v288, %v296
  %v385 = vmul.f32 %v152, %v296
  %v386 = vmul.f32 %v153, %v296
  %v387 = vmul.f32 %v289, %v296
  %v388 = vmul.f32 %v154, %v296
  %v389 = vmul.f32 %v155, %v296
  %v390 = vmul.f32 %v290, %v296
  %v391 = vmul.f32 %v156, %v296
  %v392 = vmul.f32 %v157, %v296
  %v393 = vmul.f32 %v291, %v296
  %vm490 = vcmask 1046528
  %v491 = vrot.slane %v298, 1
  %v492 = vrot.slane %v299, 1
  %v493 = vsel %vm490, %v491, %v492
  %v494 = vrot.slane %v300, 1
  %v495 = vsel %vm490, %v492, %v494
  %v496 = vrot.slane %v301, 1
  %v497 = vrot.slane %v302, 1
  %v498 = vsel %vm490, %v496, %v497
  %v499 = vrot.slane %v303, 1
  %v500 = vsel %vm490, %v497, %v499
  %v501 = vrot.slane %v304, 1
  %v502 = vrot.slane %v305, 1
  %v503 = vsel %vm490, %v501, %v502
  %v504 = vrot.slane %v306, 1
  %v505 = vsel %vm490, %v502, %v504
  %v506 = vrot.slane %v307, 1
  %v507 = vrot.slane %v308, 1
  %v508 = vsel %vm490, %v506, %v507
  %v509 = vrot.slane %v309, 1
  %v510 = vsel %vm490, %v507, %v509
  %v511 = vrot.slane %v310, 1
  %v512 = vrot.slane %v311, 1
  %v513 = vsel %vm490, %v511, %v512
  %v514 = vrot.slane %v312, 1
  %v515 = vsel %vm490, %v512, %v514
  %v516 = vrot.slane %v313, 1
  %v517 = vrot.slane %v314, 1
  %v518 = vsel %vm490, %v516, %v517
  %v519 = vrot.slane %v315, 1
  %v520 = vsel %vm490, %v517, %v519
  %v521 = vrot.slane %v316, 1
  %v522 = vrot.slane %v317, 1
  %v523 = vsel %vm490, %v521, %v522
  %v524 = vrot.slane %v318, 1
  %v525 = vsel %vm490, %v522, %v524
  %v526 = vrot.slane %v319, 1
  %v527 = vrot.slane %v320, 1
  %v528 = vsel %vm490, %v526, %v527
  %v529 = vrot.slane %v321, 1
  %v530 = vsel %vm490, %v527, %v529
  %v531 = vrot.slane %v322, 1
  %v532 = vrot.slane %v323, 1
  %v533 = vsel %vm490, %v531, %v532
  %v534 = vrot.slane %v324, 1
  %v535 = vsel %vm490, %v532, %v534
  %v536 = vrot.slane %v325, 1
  %v537 = vrot.slane %v326, 1
  %v538 = vsel %vm490, %v536, %v537
  %v539 = vrot.slane %v327, 1
  %v540 = vsel %vm490, %v537, %v539
  %v541 = vrot.slane %v328, 1
  %v542 = vrot.slane %v329, 1
  %v543 = vsel %vm490, %v541, %v542
  %v544 = vrot.slane %v330, 1
  %v545 = vsel %vm490, %v542, %v544
  %v546 = vrot.slane %v331, 1
  %v547 = vrot.slane %v332, 1
  %v548 = vsel %vm490, %v546, %v547
  %v549 = vrot.slane %v333, 1
  %v550 = vsel %vm490, %v547, %v549
  %v551 = vrot.slane %v334, 1
  %v552 = vrot.slane %v335, 1
  %v553 = vsel %vm490, %v551, %v552
  %v554 = vrot.slane %v336, 1
  %v555 = vsel %vm490, %v552, %v554
  %v556 = vrot.slane %v337, 1
  %v557 = vrot.slane %v338, 1
  %v558 = vsel %vm490, %v556, %v557
  %v559 = vrot.slane %v339, 1
  %v560 = vsel %vm490, %v557, %v559
  %v561 = vrot.slane %v340, 1
  %v562 = vrot.slane %v341, 1
  %v563 = vsel %vm490, %v561, %v562
  %v564 = vrot.slane %v342, 1
  %v565 = vsel %vm490, %v562, %v564
  %v566 = vrot.slane %v343, 1
  %v567 = vrot.slane %v344, 1
  %v568 = vsel %vm490, %v566, %v567
  %v569 = vrot.slane %v345, 1
  %v570 = vsel %vm490, %v567, %v569
  %v571 = vrot.slane %v346, 1
  %v572 = vrot.slane %v347, 1
  %v573 = vsel %vm490, %v571, %v572
  %v574 = vrot.slane %v348, 1
  %v575 = vsel %vm490, %v572, %v574
  %v576 = vrot.slane %v349, 1
  %v577 = vrot.slane %v350, 1
  %v578 = vsel %vm490, %v576, %v577
  %v579 = vrot.slane %v351, 1
  %v580 = vsel %vm490, %v577, %v579
  %v581 = vrot.slane %v352, 1
  %v582 = vrot.slane %v353, 1
  %v583 = vsel %vm490, %v581, %v582
  %v584 = vrot.slane %v354, 1
  %v585 = vsel %vm490, %v582, %v584
  %v586 = vrot.slane %v355, 1
  %v587 = vrot.slane %v356, 1
  %v588 = vsel %vm490, %v586, %v587
  %v589 = vrot.slane %v357, 1
  %v590 = vsel %vm490, %v587, %v589
  %v591 = vrot.slane %v358, 1
  %v592 = vrot.slane %v359, 1
  %v593 = vsel %vm490, %v591, %v592
  %v594 = vrot.slane %v360, 1
  %v595 = vsel %vm490, %v592, %v594
  %v596 = vrot.slane %v361, 1
  %v597 = vrot.slane %v362, 1
  %v598 = vsel %vm490, %v596, %v597
  %v599 = vrot.slane %v363, 1
  %v600 = vsel %vm490, %v597, %v599
  %v601 = vrot.slane %v364, 1
  %v602 = vrot.slane %v365, 1
  %v603 = vsel %vm490, %v601, %v602
  %v604 = vrot.slane %v366, 1
  %v605 = vsel %vm490, %v602, %v604
  %v606 = vrot.slane %v367, 1
  %v607 = vrot.slane %v368, 1
  %v608 = vsel %vm490, %v606, %v607
  %v609 = vrot.slane %v369, 1
  %v610 = vsel %vm490, %v607, %v609
  %v611 = vrot.slane %v370, 1
  %v612 = vrot.slane %v371, 1
  %v613 = vsel %vm490, %v611, %v612
  %v614 = vrot.slane %v372, 1
  %v615 = vsel %vm490, %v612, %v614
  %v616 = vrot.slane %v373, 1
  %v617 = vrot.slane %v374, 1
  %v618 = vsel %vm490, %v616, %v617
  %v619 = vrot.slane %v375, 1
  %v620 = vsel %vm490, %v617, %v619
  %v621 = vrot.slane %v376, 1
  %v622 = vrot.slane %v377, 1
  %v623 = vsel %vm490, %v621, %v622
  %v624 = vrot.slane %v378, 1
  %v625 = vsel %vm490, %v622, %v624
  %v626 = vrot.slane %v379, 1
  %v627 = vrot.slane %v380, 1
  %v628 = vsel %vm490, %v626, %v627
  %v629 = vrot.slane %v381, 1
  %v630 = vsel %vm490, %v627, %v629
  %v631 = vrot.slane %v382, 1
  %v632 = vrot.slane %v383, 1
  %v633 = vsel %vm490, %v631, %v632
  %v634 = vrot.slane %v384, 1
  %v635 = vsel %vm490, %v632, %v634
  %v636 = vrot.slane %v385, 1
  %v637 = vrot.slane %v386, 1
  %v638 = vsel %vm490, %v636, %v637
  %v639 = vrot.slane %v387, 1
  %v640 = vsel %vm490, %v637, %v639
  %v641 = vrot.slane %v388, 1
  %v642 = vrot.slane %v389, 1
  %v643 = vsel %vm490, %v641, %v642
  %v644 = vrot.slane %v390, 1
  %v645 = vsel %vm490, %v642, %v644
  %v646 = vrot.slane %v391, 1
  %v647 = vrot.slane %v392, 1
  %v648 = vsel %vm490, %v646, %v647
  %v649 = vrot.slane %v393, 1
  %v650 = vsel %vm490, %v647, %v649
  %v715 = vadd.f32 %v164, %v493
  %v716 = vadd.f32 %v165, %v495
  %v717 = vadd.f32 %v166, %v498
  %v718 = vadd.f32 %v167, %v500
  %v719 = vadd.f32 %v168, %v503
  %v720 = vadd.f32 %v169, %v505
  %v721 = vadd.f32 %v170, %v508
  %v722 = vadd.f32 %v171, %v510
  %v723 = vadd.f32 %v172, %v513
  %v724 = vadd.f32 %v173, %v515
  %v725 = vadd.f32 %v174, %v518
  %v726 = vadd.f32 %v175, %v520
  %v727 = vadd.f32 %v176, %v523
  %v728 = vadd.f32 %v177, %v525
  %v729 = vadd.f32 %v178, %v528
  %v730 = vadd.f32 %v179, %v530
  %v731 = vadd.f32 %v180, %v533
  %v732 = vadd.f32 %v181, %v535
  %v733 = vadd.f32 %v182, %v538
  %v734 = vadd.f32 %v183, %v540
  %v735 = vadd.f32 %v184, %v543
  %v736 = vadd.f32 %v185, %v545
  %v737 = vadd.f32 %v186, %v548
  %v738 = vadd.f32 %v187, %v550
  %v739 = vadd.f32 %v188, %v553
  %v740 = vadd.f32 %v189, %v555
  %v741 = vadd.f32 %v190, %v558
  %v742 = vadd.f32 %v191, %v560
  %v743 = vadd.f32 %v192, %v563
  %v744 = vadd.f32 %v193, %v565
  %v745 = vadd.f32 %v194, %v568
  %v746 = vadd.f32 %v195, %v570
  %v747 = vadd.f32 %v196, %v573
  %v748 = vadd.f32 %v197, %v575
  %v749 = vadd.f32 %v198, %v578
  %v750 = vadd.f32 %v199, %v580
  %v751 = vadd.f32 %v200, %v583
  %v752 = vadd.f32 %v201, %v585
  %v753 = vadd.f32 %v202, %v588
  %v754 = vadd.f32 %v203, %v590
  %v755 = vadd.f32 %v204, %v593
  %v756 = vadd.f32 %v205, %v595
  %v757 = vadd.f32 %v206, %v598
  %v758 = vadd.f32 %v207, %v600
  %v759 = vadd.f32 %v208, %v603
  %v760 = vadd.f32 %v209, %v605
  %v761 = vadd.f32 %v210, %v608
  %v762 = vadd.f32 %v211, %v610
  %v763 = vadd.f32 %v212, %v613
  %v764 = vadd.f32 %v213, %v615
  %v765 = vadd.f32 %v214, %v618
  %v766 = vadd.f32 %v215, %v620
  %v767 = vadd.f32 %v216, %v623
  %v768 = vadd.f32 %v217, %v625
  %v769 = vadd.f32 %v218, %v628
  %v770 = vadd.f32 %v219, %v630
  %v771 = vadd.f32 %v220, %v633
  %v772 = vadd.f32 %v221, %v635
  %v773 = vadd.f32 %v222, %v638
  %v774 = vadd.f32 %v223, %v640
  %v775 = vadd.f32 %v224, %v643
  %v776 = vadd.f32 %v225, %v645
  %v777 = vadd.f32 %v226, %v648
  %v778 = vadd.f32 %v227, %v650
  %v779 = vld [vmem:[%s0] sm:$0xe]
  %v780 = vld [vmem:[%s0 + $0xc] sm:$0xe]
  %v781 = vld [vmem:[%s0 + $0x18] sm:$0xe]
  %v782 = vld [vmem:[%s0 + $0x24] sm:$0xe]
  %v783 = vld [vmem:[%s0 + $0x30] sm:$0xe]
  %v784 = vld [vmem:[%s0 + $0x3c] sm:$0xe]
  %v785 = vld [vmem:[%s0 + $0x48] sm:$0xe]
  %v786 = vld [vmem:[%s0 + $0x54] sm:$0xe]
  %v787 = vld [vmem:[%s0 + $0x60] sm:$0xe]
  %v788 = vld [vmem:[%s0 + $0x6c] sm:$0xe]
  %v789 = vld [vmem:[%s0 + $0x78] sm:$0xe]
  %v790 = vld [vmem:[%s0 + $0x84] sm:$0xe]
  %v791 = vld [vmem:[%s0 + $0x90] sm:$0xe]
  %v792 = vld [vmem:[%s0 + $0x9c] sm:$0xe]
  %v793 = vld [vmem:[%s0 + $0xa8] sm:$0xe]
  %v794 = vld [vmem:[%s0 + $0xb4] sm:$0xe]
  %v795 = vld [vmem:[%s0 + $0xd8] sm:$0xe]
  %v796 = vld [vmem:[%s0 + $0xe4] sm:$0xe]
  %v797 = vld [vmem:[%s0 + $0xf0] sm:$0xe]
  %v798 = vld [vmem:[%s0 + $0xfc] sm:$0xe]
  %v799 = vld [vmem:[%s0 + $0x108] sm:$0xe]
  %v800 = vld [vmem:[%s0 + $0x114] sm:$0xe]
  %v801 = vld [vmem:[%s0 + $0x120] sm:$0xe]
  %v802 = vld [vmem:[%s0 + $0x12c] sm:$0xe]
  %v803 = vld [vmem:[%s0 + $0x138] sm:$0xe]
  %v804 = vld [vmem:[%s0 + $0x144] sm:$0xe]
  %v805 = vld [vmem:[%s0 + $0x150] sm:$0xe]
  %v806 = vld [vmem:[%s0 + $0x15c] sm:$0xe]
  %v807 = vld [vmem:[%s0 + $0x168] sm:$0xe]
  %v808 = vld [vmem:[%s0 + $0x174] sm:$0xe]
  %v809 = vld [vmem:[%s0 + $0x180] sm:$0xe]
  %v810 = vld [vmem:[%s0 + $0x18c] sm:$0xe]
  %v811 = vunpack.c.l.bf16 %v779
  %v812 = vunpack.c.l.bf16 %v780
  %v813 = vunpack.c.l.bf16 %v781
  %v814 = vunpack.c.l.bf16 %v782
  %v815 = vunpack.c.l.bf16 %v783
  %v816 = vunpack.c.l.bf16 %v784
  %v817 = vunpack.c.l.bf16 %v785
  %v818 = vunpack.c.l.bf16 %v786
  %v819 = vunpack.c.l.bf16 %v787
  %v820 = vunpack.c.l.bf16 %v788
  %v821 = vunpack.c.l.bf16 %v789
  %v822 = vunpack.c.l.bf16 %v790
  %v823 = vunpack.c.l.bf16 %v791
  %v824 = vunpack.c.l.bf16 %v792
  %v825 = vunpack.c.l.bf16 %v793
  %v826 = vunpack.c.l.bf16 %v794
  %v827 = vunpack.c.l.bf16 %v795
  %v828 = vunpack.c.l.bf16 %v796
  %v829 = vunpack.c.l.bf16 %v797
  %v830 = vunpack.c.l.bf16 %v798
  %v831 = vunpack.c.l.bf16 %v799
  %v832 = vunpack.c.l.bf16 %v800
  %v833 = vunpack.c.l.bf16 %v801
  %v834 = vunpack.c.l.bf16 %v802
  %v835 = vunpack.c.l.bf16 %v803
  %v836 = vunpack.c.l.bf16 %v804
  %v837 = vunpack.c.l.bf16 %v805
  %v838 = vunpack.c.l.bf16 %v806
  %v839 = vunpack.c.l.bf16 %v807
  %v840 = vunpack.c.l.bf16 %v808
  %v841 = vunpack.c.l.bf16 %v809
  %v842 = vunpack.c.l.bf16 %v810
  %v844 = vlaneseq
  %v845 = vshrl.u32 %v844, 7
  %v846 = vsub.s32 0, %v845
  %v847 = vrot.slane %v23, %v846
  %v849 = vmul.f32 %v811, %v847
  %v850 = vmul.f32 %v95, %v847
  %v851 = vmul.f32 %v260, %v847
  %v852 = vmul.f32 %v812, %v847
  %v853 = vmul.f32 %v97, %v847
  %v854 = vmul.f32 %v261, %v847
  %v855 = vmul.f32 %v813, %v847
  %v856 = vmul.f32 %v99, %v847
  %v857 = vmul.f32 %v262, %v847
  %v858 = vmul.f32 %v814, %v847
  %v859 = vmul.f32 %v101, %v847
  %v860 = vmul.f32 %v263, %v847
  %v861 = vmul.f32 %v815, %v847
  %v862 = vmul.f32 %v103, %v847
  %v863 = vmul.f32 %v264, %v847
  %v864 = vmul.f32 %v816, %v847
  %v865 = vmul.f32 %v105, %v847
  %v866 = vmul.f32 %v265, %v847
  %v867 = vmul.f32 %v817, %v847
  %v868 = vmul.f32 %v107, %v847
  %v869 = vmul.f32 %v266, %v847
  %v870 = vmul.f32 %v818, %v847
  %v871 = vmul.f32 %v109, %v847
  %v872 = vmul.f32 %v267, %v847
  %v873 = vmul.f32 %v819, %v847
  %v874 = vmul.f32 %v111, %v847
  %v875 = vmul.f32 %v268, %v847
  %v876 = vmul.f32 %v820, %v847
  %v877 = vmul.f32 %v113, %v847
  %v878 = vmul.f32 %v269, %v847
  %v879 = vmul.f32 %v821, %v847
  %v880 = vmul.f32 %v115, %v847
  %v881 = vmul.f32 %v270, %v847
  %v882 = vmul.f32 %v822, %v847
  %v883 = vmul.f32 %v117, %v847
  %v884 = vmul.f32 %v271, %v847
  %v885 = vmul.f32 %v823, %v847
  %v886 = vmul.f32 %v119, %v847
  %v887 = vmul.f32 %v272, %v847
  %v888 = vmul.f32 %v824, %v847
  %v889 = vmul.f32 %v121, %v847
  %v890 = vmul.f32 %v273, %v847
  %v891 = vmul.f32 %v825, %v847
  %v892 = vmul.f32 %v123, %v847
  %v893 = vmul.f32 %v274, %v847
  %v894 = vmul.f32 %v826, %v847
  %v895 = vmul.f32 %v125, %v847
  %v896 = vmul.f32 %v275, %v847
  %v897 = vmul.f32 %v827, %v847
  %v898 = vmul.f32 %v127, %v847
  %v899 = vmul.f32 %v276, %v847
  %v900 = vmul.f32 %v828, %v847
  %v901 = vmul.f32 %v129, %v847
  %v902 = vmul.f32 %v277, %v847
  %v903 = vmul.f32 %v829, %v847
  %v904 = vmul.f32 %v131, %v847
  %v905 = vmul.f32 %v278, %v847
  %v906 = vmul.f32 %v830, %v847
  %v907 = vmul.f32 %v133, %v847
  %v908 = vmul.f32 %v279, %v847
  %v909 = vmul.f32 %v831, %v847
  %v910 = vmul.f32 %v135, %v847
  %v911 = vmul.f32 %v280, %v847
  %v912 = vmul.f32 %v832, %v847
  %v913 = vmul.f32 %v137, %v847
  %v914 = vmul.f32 %v281, %v847
  %v915 = vmul.f32 %v833, %v847
  %v916 = vmul.f32 %v139, %v847
  %v917 = vmul.f32 %v282, %v847
  %v918 = vmul.f32 %v834, %v847
  %v919 = vmul.f32 %v141, %v847
  %v920 = vmul.f32 %v283, %v847
  %v921 = vmul.f32 %v835, %v847
  %v922 = vmul.f32 %v143, %v847
  %v923 = vmul.f32 %v284, %v847
  %v924 = vmul.f32 %v836, %v847
  %v925 = vmul.f32 %v145, %v847
  %v926 = vmul.f32 %v285, %v847
  %v927 = vmul.f32 %v837, %v847
  %v928 = vmul.f32 %v147, %v847
  %v929 = vmul.f32 %v286, %v847
  %v930 = vmul.f32 %v838, %v847
  %v931 = vmul.f32 %v149, %v847
  %v932 = vmul.f32 %v287, %v847
  %v933 = vmul.f32 %v839, %v847
  %v934 = vmul.f32 %v151, %v847
  %v935 = vmul.f32 %v288, %v847
  %v936 = vmul.f32 %v840, %v847
  %v937 = vmul.f32 %v153, %v847
  %v938 = vmul.f32 %v289, %v847
  %v939 = vmul.f32 %v841, %v847
  %v940 = vmul.f32 %v155, %v847
  %v941 = vmul.f32 %v290, %v847
  %v942 = vmul.f32 %v842, %v847
  %v943 = vmul.f32 %v157, %v847
  %v944 = vmul.f32 %v291, %v847
  %vm1041 = vcmask 1045504
  %v1042 = vrot.slane %v849, 2
  %v1043 = vrot.slane %v850, 2
  %v1044 = vsel %vm1041, %v1042, %v1043
  %v1045 = vrot.slane %v851, 2
  %v1046 = vsel %vm1041, %v1043, %v1045
  %v1047 = vrot.slane %v852, 2
  %v1048 = vrot.slane %v853, 2
  %v1049 = vsel %vm1041, %v1047, %v1048
  %v1050 = vrot.slane %v854, 2
  %v1051 = vsel %vm1041, %v1048, %v1050
  %v1052 = vrot.slane %v855, 2
  %v1053 = vrot.slane %v856, 2
  %v1054 = vsel %vm1041, %v1052, %v1053
  %v1055 = vrot.slane %v857, 2
  %v1056 = vsel %vm1041, %v1053, %v1055
  %v1057 = vrot.slane %v858, 2
  %v1058 = vrot.slane %v859, 2
  %v1059 = vsel %vm1041, %v1057, %v1058
  %v1060 = vrot.slane %v860, 2
  %v1061 = vsel %vm1041, %v1058, %v1060
  %v1062 = vrot.slane %v861, 2
  %v1063 = vrot.slane %v862, 2
  %v1064 = vsel %vm1041, %v1062, %v1063
  %v1065 = vrot.slane %v863, 2
  %v1066 = vsel %vm1041, %v1063, %v1065
  %v1067 = vrot.slane %v864, 2
  %v1068 = vrot.slane %v865, 2
  %v1069 = vsel %vm1041, %v1067, %v1068
  %v1070 = vrot.slane %v866, 2
  %v1071 = vsel %vm1041, %v1068, %v1070
  %v1072 = vrot.slane %v867, 2
  %v1073 = vrot.slane %v868, 2
  %v1074 = vsel %vm1041, %v1072, %v1073
  %v1075 = vrot.slane %v869, 2
  %v1076 = vsel %vm1041, %v1073, %v1075
  %v1077 = vrot.slane %v870, 2
  %v1078 = vrot.slane %v871, 2
  %v1079 = vsel %vm1041, %v1077, %v1078
  %v1080 = vrot.slane %v872, 2
  %v1081 = vsel %vm1041, %v1078, %v1080
  %v1082 = vrot.slane %v873, 2
  %v1083 = vrot.slane %v874, 2
  %v1084 = vsel %vm1041, %v1082, %v1083
  %v1085 = vrot.slane %v875, 2
  %v1086 = vsel %vm1041, %v1083, %v1085
  %v1087 = vrot.slane %v876, 2
  %v1088 = vrot.slane %v877, 2
  %v1089 = vsel %vm1041, %v1087, %v1088
  %v1090 = vrot.slane %v878, 2
  %v1091 = vsel %vm1041, %v1088, %v1090
  %v1092 = vrot.slane %v879, 2
  %v1093 = vrot.slane %v880, 2
  %v1094 = vsel %vm1041, %v1092, %v1093
  %v1095 = vrot.slane %v881, 2
  %v1096 = vsel %vm1041, %v1093, %v1095
  %v1097 = vrot.slane %v882, 2
  %v1098 = vrot.slane %v883, 2
  %v1099 = vsel %vm1041, %v1097, %v1098
  %v1100 = vrot.slane %v884, 2
  %v1101 = vsel %vm1041, %v1098, %v1100
  %v1102 = vrot.slane %v885, 2
  %v1103 = vrot.slane %v886, 2
  %v1104 = vsel %vm1041, %v1102, %v1103
  %v1105 = vrot.slane %v887, 2
  %v1106 = vsel %vm1041, %v1103, %v1105
  %v1107 = vrot.slane %v888, 2
  %v1108 = vrot.slane %v889, 2
  %v1109 = vsel %vm1041, %v1107, %v1108
  %v1110 = vrot.slane %v890, 2
  %v1111 = vsel %vm1041, %v1108, %v1110
  %v1112 = vrot.slane %v891, 2
  %v1113 = vrot.slane %v892, 2
  %v1114 = vsel %vm1041, %v1112, %v1113
  %v1115 = vrot.slane %v893, 2
  %v1116 = vsel %vm1041, %v1113, %v1115
  %v1117 = vrot.slane %v894, 2
  %v1118 = vrot.slane %v895, 2
  %v1119 = vsel %vm1041, %v1117, %v1118
  %v1120 = vrot.slane %v896, 2
  %v1121 = vsel %vm1041, %v1118, %v1120
  %v1122 = vrot.slane %v897, 2
  %v1123 = vrot.slane %v898, 2
  %v1124 = vsel %vm1041, %v1122, %v1123
  %v1125 = vrot.slane %v899, 2
  %v1126 = vsel %vm1041, %v1123, %v1125
  %v1127 = vrot.slane %v900, 2
  %v1128 = vrot.slane %v901, 2
  %v1129 = vsel %vm1041, %v1127, %v1128
  %v1130 = vrot.slane %v902, 2
  %v1131 = vsel %vm1041, %v1128, %v1130
  %v1132 = vrot.slane %v903, 2
  %v1133 = vrot.slane %v904, 2
  %v1134 = vsel %vm1041, %v1132, %v1133
  %v1135 = vrot.slane %v905, 2
  %v1136 = vsel %vm1041, %v1133, %v1135
  %v1137 = vrot.slane %v906, 2
  %v1138 = vrot.slane %v907, 2
  %v1139 = vsel %vm1041, %v1137, %v1138
  %v1140 = vrot.slane %v908, 2
  %v1141 = vsel %vm1041, %v1138, %v1140
  %v1142 = vrot.slane %v909, 2
  %v1143 = vrot.slane %v910, 2
  %v1144 = vsel %vm1041, %v1142, %v1143
  %v1145 = vrot.slane %v911, 2
  %v1146 = vsel %vm1041, %v1143, %v1145
  %v1147 = vrot.slane %v912, 2
  %v1148 = vrot.slane %v913, 2
  %v1149 = vsel %vm1041, %v1147, %v1148
  %v1150 = vrot.slane %v914, 2
  %v1151 = vsel %vm1041, %v1148, %v1150
  %v1152 = vrot.slane %v915, 2
  %v1153 = vrot.slane %v916, 2
  %v1154 = vsel %vm1041, %v1152, %v1153
  %v1155 = vrot.slane %v917, 2
  %v1156 = vsel %vm1041, %v1153, %v1155
  %v1157 = vrot.slane %v918, 2
  %v1158 = vrot.slane %v919, 2
  %v1159 = vsel %vm1041, %v1157, %v1158
  %v1160 = vrot.slane %v920, 2
  %v1161 = vsel %vm1041, %v1158, %v1160
  %v1162 = vrot.slane %v921, 2
  %v1163 = vrot.slane %v922, 2
  %v1164 = vsel %vm1041, %v1162, %v1163
  %v1165 = vrot.slane %v923, 2
  %v1166 = vsel %vm1041, %v1163, %v1165
  %v1167 = vrot.slane %v924, 2
  %v1168 = vrot.slane %v925, 2
  %v1169 = vsel %vm1041, %v1167, %v1168
  %v1170 = vrot.slane %v926, 2
  %v1171 = vsel %vm1041, %v1168, %v1170
  %v1172 = vrot.slane %v927, 2
  %v1173 = vrot.slane %v928, 2
  %v1174 = vsel %vm1041, %v1172, %v1173
  %v1175 = vrot.slane %v929, 2
  %v1176 = vsel %vm1041, %v1173, %v1175
  %v1177 = vrot.slane %v930, 2
  %v1178 = vrot.slane %v931, 2
  %v1179 = vsel %vm1041, %v1177, %v1178
  %v1180 = vrot.slane %v932, 2
  %v1181 = vsel %vm1041, %v1178, %v1180
  %v1182 = vrot.slane %v933, 2
  %v1183 = vrot.slane %v934, 2
  %v1184 = vsel %vm1041, %v1182, %v1183
  %v1185 = vrot.slane %v935, 2
  %v1186 = vsel %vm1041, %v1183, %v1185
  %v1187 = vrot.slane %v936, 2
  %v1188 = vrot.slane %v937, 2
  %v1189 = vsel %vm1041, %v1187, %v1188
  %v1190 = vrot.slane %v938, 2
  %v1191 = vsel %vm1041, %v1188, %v1190
  %v1192 = vrot.slane %v939, 2
  %v1193 = vrot.slane %v940, 2
  %v1194 = vsel %vm1041, %v1192, %v1193
  %v1195 = vrot.slane %v941, 2
  %v1196 = vsel %vm1041, %v1193, %v1195
  %v1197 = vrot.slane %v942, 2
  %v1198 = vrot.slane %v943, 2
  %v1199 = vsel %vm1041, %v1197, %v1198
  %v1200 = vrot.slane %v944, 2
  %v1201 = vsel %vm1041, %v1198, %v1200
  %v1266 = vadd.f32 %v715, %v1044
  %v1267 = vadd.f32 %v716, %v1046
  %v1268 = vadd.f32 %v717, %v1049
  %v1269 = vadd.f32 %v718, %v1051
  %v1270 = vadd.f32 %v719, %v1054
  %v1271 = vadd.f32 %v720, %v1056
  %v1272 = vadd.f32 %v721, %v1059
  %v1273 = vadd.f32 %v722, %v1061
  %v1274 = vadd.f32 %v723, %v1064
  %v1275 = vadd.f32 %v724, %v1066
  %v1276 = vadd.f32 %v725, %v1069
  %v1277 = vadd.f32 %v726, %v1071
  %v1278 = vadd.f32 %v727, %v1074
  %v1279 = vadd.f32 %v728, %v1076
  %v1280 = vadd.f32 %v729, %v1079
  %v1281 = vadd.f32 %v730, %v1081
  %v1282 = vadd.f32 %v731, %v1084
  %v1283 = vadd.f32 %v732, %v1086
  %v1284 = vadd.f32 %v733, %v1089
  %v1285 = vadd.f32 %v734, %v1091
  %v1286 = vadd.f32 %v735, %v1094
  %v1287 = vadd.f32 %v736, %v1096
  %v1288 = vadd.f32 %v737, %v1099
  %v1289 = vadd.f32 %v738, %v1101
  %v1290 = vadd.f32 %v739, %v1104
  %v1291 = vadd.f32 %v740, %v1106
  %v1292 = vadd.f32 %v741, %v1109
  %v1293 = vadd.f32 %v742, %v1111
  %v1294 = vadd.f32 %v743, %v1114
  %v1295 = vadd.f32 %v744, %v1116
  %v1296 = vadd.f32 %v745, %v1119
  %v1297 = vadd.f32 %v746, %v1121
  %v1298 = vadd.f32 %v747, %v1124
  %v1299 = vadd.f32 %v748, %v1126
  %v1300 = vadd.f32 %v749, %v1129
  %v1301 = vadd.f32 %v750, %v1131
  %v1302 = vadd.f32 %v751, %v1134
  %v1303 = vadd.f32 %v752, %v1136
  %v1304 = vadd.f32 %v753, %v1139
  %v1305 = vadd.f32 %v754, %v1141
  %v1306 = vadd.f32 %v755, %v1144
  %v1307 = vadd.f32 %v756, %v1146
  %v1308 = vadd.f32 %v757, %v1149
  %v1309 = vadd.f32 %v758, %v1151
  %v1310 = vadd.f32 %v759, %v1154
  %v1311 = vadd.f32 %v760, %v1156
  %v1312 = vadd.f32 %v761, %v1159
  %v1313 = vadd.f32 %v762, %v1161
  %v1314 = vadd.f32 %v763, %v1164
  %v1315 = vadd.f32 %v764, %v1166
  %v1316 = vadd.f32 %v765, %v1169
  %v1317 = vadd.f32 %v766, %v1171
  %v1318 = vadd.f32 %v767, %v1174
  %v1319 = vadd.f32 %v768, %v1176
  %v1320 = vadd.f32 %v769, %v1179
  %v1321 = vadd.f32 %v770, %v1181
  %v1322 = vadd.f32 %v771, %v1184
  %v1323 = vadd.f32 %v772, %v1186
  %v1324 = vadd.f32 %v773, %v1189
  %v1325 = vadd.f32 %v774, %v1191
  %v1326 = vadd.f32 %v775, %v1194
  %v1327 = vadd.f32 %v776, %v1196
  %v1328 = vadd.f32 %v777, %v1199
  %v1329 = vadd.f32 %v778, %v1201
  %s1330 = scalar_lea.vmem %s0, 12
  %v1331 = vld [vmem:[%s1330] sm:$0xf]
  %v1332 = vld [vmem:[%s1330 + $0x4] sm:$0xf]
  %v1333 = vld [vmem:[%s1330 + $0xc] sm:$0xf]
  %v1334 = vld [vmem:[%s1330 + $0x10] sm:$0xf]
  %v1335 = vld [vmem:[%s1330 + $0x18] sm:$0xf]
  %v1336 = vld [vmem:[%s1330 + $0x1c] sm:$0xf]
  %v1337 = vld [vmem:[%s1330 + $0x24] sm:$0xf]
  %v1338 = vld [vmem:[%s1330 + $0x28] sm:$0xf]
  %v1339 = vld [vmem:[%s1330 + $0x30] sm:$0xf]
  %v1340 = vld [vmem:[%s1330 + $0x34] sm:$0xf]
  %v1341 = vld [vmem:[%s1330 + $0x3c] sm:$0xf]
  %v1342 = vld [vmem:[%s1330 + $0x40] sm:$0xf]
  %v1343 = vld [vmem:[%s1330 + $0x48] sm:$0xf]
  %v1344 = vld [vmem:[%s1330 + $0x4c] sm:$0xf]
  %v1345 = vld [vmem:[%s1330 + $0x54] sm:$0xf]
  %v1346 = vld [vmem:[%s1330 + $0x58] sm:$0xf]
  %v1347 = vld [vmem:[%s1330 + $0x60] sm:$0xf]
  %v1348 = vld [vmem:[%s1330 + $0x64] sm:$0xf]
  %v1349 = vld [vmem:[%s1330 + $0x6c] sm:$0xf]
  %v1350 = vld [vmem:[%s1330 + $0x70] sm:$0xf]
  %v1351 = vld [vmem:[%s1330 + $0x78] sm:$0xf]
  %v1352 = vld [vmem:[%s1330 + $0x7c] sm:$0xf]
  %v1353 = vld [vmem:[%s1330 + $0x84] sm:$0xf]
  %v1354 = vld [vmem:[%s1330 + $0x88] sm:$0xf]
  %v1355 = vld [vmem:[%s1330 + $0x90] sm:$0xf]
  %v1356 = vld [vmem:[%s1330 + $0x94] sm:$0xf]
  %v1357 = vld [vmem:[%s1330 + $0x9c] sm:$0xf]
  %v1358 = vld [vmem:[%s1330 + $0xa0] sm:$0xf]
  %v1359 = vld [vmem:[%s1330 + $0xa8] sm:$0xf]
  %v1360 = vld [vmem:[%s1330 + $0xac] sm:$0xf]
  %v1361 = vld [vmem:[%s1330 + $0xb4] sm:$0xf]
  %v1362 = vld [vmem:[%s1330 + $0xb8] sm:$0xf]
  %v1363 = vld [vmem:[%s1330 + $0xd8] sm:$0xf]
  %v1364 = vld [vmem:[%s1330 + $0xdc] sm:$0xf]
  %v1365 = vld [vmem:[%s1330 + $0xe4] sm:$0xf]
  %v1366 = vld [vmem:[%s1330 + $0xe8] sm:$0xf]
  %v1367 = vld [vmem:[%s1330 + $0xf0] sm:$0xf]
  %v1368 = vld [vmem:[%s1330 + $0xf4] sm:$0xf]
  %v1369 = vld [vmem:[%s1330 + $0xfc] sm:$0xf]
  %v1370 = vld [vmem:[%s1330 + $0x100] sm:$0xf]
  %v1371 = vld [vmem:[%s1330 + $0x108] sm:$0xf]
  %v1372 = vld [vmem:[%s1330 + $0x10c] sm:$0xf]
  %v1373 = vld [vmem:[%s1330 + $0x114] sm:$0xf]
  %v1374 = vld [vmem:[%s1330 + $0x118] sm:$0xf]
  %v1375 = vld [vmem:[%s1330 + $0x120] sm:$0xf]
  %v1376 = vld [vmem:[%s1330 + $0x124] sm:$0xf]
  %v1377 = vld [vmem:[%s1330 + $0x12c] sm:$0xf]
  %v1378 = vld [vmem:[%s1330 + $0x130] sm:$0xf]
  %v1379 = vld [vmem:[%s1330 + $0x138] sm:$0xf]
  %v1380 = vld [vmem:[%s1330 + $0x13c] sm:$0xf]
  %v1381 = vld [vmem:[%s1330 + $0x144] sm:$0xf]
  %v1382 = vld [vmem:[%s1330 + $0x148] sm:$0xf]
  %v1383 = vld [vmem:[%s1330 + $0x150] sm:$0xf]
  %v1384 = vld [vmem:[%s1330 + $0x154] sm:$0xf]
  %v1385 = vld [vmem:[%s1330 + $0x15c] sm:$0xf]
  %v1386 = vld [vmem:[%s1330 + $0x160] sm:$0xf]
  %v1387 = vld [vmem:[%s1330 + $0x168] sm:$0xf]
  %v1388 = vld [vmem:[%s1330 + $0x16c] sm:$0xf]
  %v1389 = vld [vmem:[%s1330 + $0x174] sm:$0xf]
  %v1390 = vld [vmem:[%s1330 + $0x178] sm:$0xf]
  %v1391 = vld [vmem:[%s1330 + $0x180] sm:$0xf]
  %v1392 = vld [vmem:[%s1330 + $0x184] sm:$0xf]
  %v1393 = vld [vmem:[%s1330 + $0x18c] sm:$0xf]
  %v1394 = vld [vmem:[%s1330 + $0x190] sm:$0xf]
  %v1395 = vunpack.c.l.bf16 %v1331
  %v1396 = vunpack.c.l.bf16 %v1332
  %v1397 = vunpack.c.l.bf16 %v1333
  %v1398 = vunpack.c.l.bf16 %v1334
  %v1399 = vunpack.c.l.bf16 %v1335
  %v1400 = vunpack.c.l.bf16 %v1336
  %v1401 = vunpack.c.l.bf16 %v1337
  %v1402 = vunpack.c.l.bf16 %v1338
  %v1403 = vunpack.c.l.bf16 %v1339
  %v1404 = vunpack.c.l.bf16 %v1340
  %v1405 = vunpack.c.l.bf16 %v1341
  %v1406 = vunpack.c.l.bf16 %v1342
  %v1407 = vunpack.c.l.bf16 %v1343
  %v1408 = vunpack.c.l.bf16 %v1344
  %v1409 = vunpack.c.l.bf16 %v1345
  %v1410 = vunpack.c.l.bf16 %v1346
  %v1411 = vunpack.c.l.bf16 %v1347
  %v1412 = vunpack.c.l.bf16 %v1348
  %v1413 = vunpack.c.l.bf16 %v1349
  %v1414 = vunpack.c.l.bf16 %v1350
  %v1415 = vunpack.c.l.bf16 %v1351
  %v1416 = vunpack.c.l.bf16 %v1352
  %v1417 = vunpack.c.l.bf16 %v1353
  %v1418 = vunpack.c.l.bf16 %v1354
  %v1419 = vunpack.c.l.bf16 %v1355
  %v1420 = vunpack.c.l.bf16 %v1356
  %v1421 = vunpack.c.l.bf16 %v1357
  %v1422 = vunpack.c.l.bf16 %v1358
  %v1423 = vunpack.c.l.bf16 %v1359
  %v1424 = vunpack.c.l.bf16 %v1360
  %v1425 = vunpack.c.l.bf16 %v1361
  %v1426 = vunpack.c.l.bf16 %v1362
  %v1427 = vunpack.c.l.bf16 %v1363
  %v1428 = vunpack.c.l.bf16 %v1364
  %v1429 = vunpack.c.l.bf16 %v1365
  %v1430 = vunpack.c.l.bf16 %v1366
  %v1431 = vunpack.c.l.bf16 %v1367
  %v1432 = vunpack.c.l.bf16 %v1368
  %v1433 = vunpack.c.l.bf16 %v1369
  %v1434 = vunpack.c.l.bf16 %v1370
  %v1435 = vunpack.c.l.bf16 %v1371
  %v1436 = vunpack.c.l.bf16 %v1372
  %v1437 = vunpack.c.l.bf16 %v1373
  %v1438 = vunpack.c.l.bf16 %v1374
  %v1439 = vunpack.c.l.bf16 %v1375
  %v1440 = vunpack.c.l.bf16 %v1376
  %v1441 = vunpack.c.l.bf16 %v1377
  %v1442 = vunpack.c.l.bf16 %v1378
  %v1443 = vunpack.c.l.bf16 %v1379
  %v1444 = vunpack.c.l.bf16 %v1380
  %v1445 = vunpack.c.l.bf16 %v1381
  %v1446 = vunpack.c.l.bf16 %v1382
  %v1447 = vunpack.c.l.bf16 %v1383
  %v1448 = vunpack.c.l.bf16 %v1384
  %v1449 = vunpack.c.l.bf16 %v1385
  %v1450 = vunpack.c.l.bf16 %v1386
  %v1451 = vunpack.c.l.bf16 %v1387
  %v1452 = vunpack.c.l.bf16 %v1388
  %v1453 = vunpack.c.l.bf16 %v1389
  %v1454 = vunpack.c.l.bf16 %v1390
  %v1455 = vunpack.c.l.bf16 %v1391
  %v1456 = vunpack.c.l.bf16 %v1392
  %v1457 = vunpack.c.l.bf16 %v1393
  %v1458 = vunpack.c.l.bf16 %v1394
  %v1460 = vlaneseq
  %v1461 = vshrl.u32 %v1460, 7
  %v1462 = vsub.s32 0, %v1461
  %v1463 = vrot.slane %v24, %v1462
  %v1465 = vmul.f32 %v1395, %v1463
  %v1466 = vmul.f32 %v1396, %v1463
  %v1467 = vmul.f32 %v1397, %v1463
  %v1468 = vmul.f32 %v1398, %v1463
  %v1469 = vmul.f32 %v1399, %v1463
  %v1470 = vmul.f32 %v1400, %v1463
  %v1471 = vmul.f32 %v1401, %v1463
  %v1472 = vmul.f32 %v1402, %v1463
  %v1473 = vmul.f32 %v1403, %v1463
  %v1474 = vmul.f32 %v1404, %v1463
  %v1475 = vmul.f32 %v1405, %v1463
  %v1476 = vmul.f32 %v1406, %v1463
  %v1477 = vmul.f32 %v1407, %v1463
  %v1478 = vmul.f32 %v1408, %v1463
  %v1479 = vmul.f32 %v1409, %v1463
  %v1480 = vmul.f32 %v1410, %v1463
  %v1481 = vmul.f32 %v1411, %v1463
  %v1482 = vmul.f32 %v1412, %v1463
  %v1483 = vmul.f32 %v1413, %v1463
  %v1484 = vmul.f32 %v1414, %v1463
  %v1485 = vmul.f32 %v1415, %v1463
  %v1486 = vmul.f32 %v1416, %v1463
  %v1487 = vmul.f32 %v1417, %v1463
  %v1488 = vmul.f32 %v1418, %v1463
  %v1489 = vmul.f32 %v1419, %v1463
  %v1490 = vmul.f32 %v1420, %v1463
  %v1491 = vmul.f32 %v1421, %v1463
  %v1492 = vmul.f32 %v1422, %v1463
  %v1493 = vmul.f32 %v1423, %v1463
  %v1494 = vmul.f32 %v1424, %v1463
  %v1495 = vmul.f32 %v1425, %v1463
  %v1496 = vmul.f32 %v1426, %v1463
  %v1497 = vmul.f32 %v1427, %v1463
  %v1498 = vmul.f32 %v1428, %v1463
  %v1499 = vmul.f32 %v1429, %v1463
  %v1500 = vmul.f32 %v1430, %v1463
  %v1501 = vmul.f32 %v1431, %v1463
  %v1502 = vmul.f32 %v1432, %v1463
  %v1503 = vmul.f32 %v1433, %v1463
  %v1504 = vmul.f32 %v1434, %v1463
  %v1505 = vmul.f32 %v1435, %v1463
  %v1506 = vmul.f32 %v1436, %v1463
  %v1507 = vmul.f32 %v1437, %v1463
  %v1508 = vmul.f32 %v1438, %v1463
  %v1509 = vmul.f32 %v1439, %v1463
  %v1510 = vmul.f32 %v1440, %v1463
  %v1511 = vmul.f32 %v1441, %v1463
  %v1512 = vmul.f32 %v1442, %v1463
  %v1513 = vmul.f32 %v1443, %v1463
  %v1514 = vmul.f32 %v1444, %v1463
  %v1515 = vmul.f32 %v1445, %v1463
  %v1516 = vmul.f32 %v1446, %v1463
  %v1517 = vmul.f32 %v1447, %v1463
  %v1518 = vmul.f32 %v1448, %v1463
  %v1519 = vmul.f32 %v1449, %v1463
  %v1520 = vmul.f32 %v1450, %v1463
  %v1521 = vmul.f32 %v1451, %v1463
  %v1522 = vmul.f32 %v1452, %v1463
  %v1523 = vmul.f32 %v1453, %v1463
  %v1524 = vmul.f32 %v1454, %v1463
  %v1525 = vmul.f32 %v1455, %v1463
  %v1526 = vmul.f32 %v1456, %v1463
  %v1527 = vmul.f32 %v1457, %v1463
  %v1528 = vmul.f32 %v1458, %v1463
  %v1529 = vadd.f32 %v1266, %v1465
  %v1530 = vadd.f32 %v1267, %v1466
  %v1531 = vadd.f32 %v1268, %v1467
  %v1532 = vadd.f32 %v1269, %v1468
  %v1533 = vadd.f32 %v1270, %v1469
  %v1534 = vadd.f32 %v1271, %v1470
  %v1535 = vadd.f32 %v1272, %v1471
  %v1536 = vadd.f32 %v1273, %v1472
  %v1537 = vadd.f32 %v1274, %v1473
  %v1538 = vadd.f32 %v1275, %v1474
  %v1539 = vadd.f32 %v1276, %v1475
  %v1540 = vadd.f32 %v1277, %v1476
  %v1541 = vadd.f32 %v1278, %v1477
  %v1542 = vadd.f32 %v1279, %v1478
  %v1543 = vadd.f32 %v1280, %v1479
  %v1544 = vadd.f32 %v1281, %v1480
  %v1545 = vadd.f32 %v1282, %v1481
  %v1546 = vadd.f32 %v1283, %v1482
  %v1547 = vadd.f32 %v1284, %v1483
  %v1548 = vadd.f32 %v1285, %v1484
  %v1549 = vadd.f32 %v1286, %v1485
  %v1550 = vadd.f32 %v1287, %v1486
  %v1551 = vadd.f32 %v1288, %v1487
  %v1552 = vadd.f32 %v1289, %v1488
  %v1553 = vadd.f32 %v1290, %v1489
  %v1554 = vadd.f32 %v1291, %v1490
  %v1555 = vadd.f32 %v1292, %v1491
  %v1556 = vadd.f32 %v1293, %v1492
  %v1557 = vadd.f32 %v1294, %v1493
  %v1558 = vadd.f32 %v1295, %v1494
  %v1559 = vadd.f32 %v1296, %v1495
  %v1560 = vadd.f32 %v1297, %v1496
  %v1561 = vadd.f32 %v1298, %v1497
  %v1562 = vadd.f32 %v1299, %v1498
  %v1563 = vadd.f32 %v1300, %v1499
  %v1564 = vadd.f32 %v1301, %v1500
  %v1565 = vadd.f32 %v1302, %v1501
  %v1566 = vadd.f32 %v1303, %v1502
  %v1567 = vadd.f32 %v1304, %v1503
  %v1568 = vadd.f32 %v1305, %v1504
  %v1569 = vadd.f32 %v1306, %v1505
  %v1570 = vadd.f32 %v1307, %v1506
  %v1571 = vadd.f32 %v1308, %v1507
  %v1572 = vadd.f32 %v1309, %v1508
  %v1573 = vadd.f32 %v1310, %v1509
  %v1574 = vadd.f32 %v1311, %v1510
  %v1575 = vadd.f32 %v1312, %v1511
  %v1576 = vadd.f32 %v1313, %v1512
  %v1577 = vadd.f32 %v1314, %v1513
  %v1578 = vadd.f32 %v1315, %v1514
  %v1579 = vadd.f32 %v1316, %v1515
  %v1580 = vadd.f32 %v1317, %v1516
  %v1581 = vadd.f32 %v1318, %v1517
  %v1582 = vadd.f32 %v1319, %v1518
  %v1583 = vadd.f32 %v1320, %v1519
  %v1584 = vadd.f32 %v1321, %v1520
  %v1585 = vadd.f32 %v1322, %v1521
  %v1586 = vadd.f32 %v1323, %v1522
  %v1587 = vadd.f32 %v1324, %v1523
  %v1588 = vadd.f32 %v1325, %v1524
  %v1589 = vadd.f32 %v1326, %v1525
  %v1590 = vadd.f32 %v1327, %v1526
  %v1591 = vadd.f32 %v1328, %v1527
  %v1592 = vadd.f32 %v1329, %v1528
  %v1593 = vld [vmem:[%s1330 + $0x8] sm:$0x1]
  %v1594 = vld [vmem:[%s1330 + $0x14] sm:$0x1]
  %v1595 = vld [vmem:[%s1330 + $0x20] sm:$0x1]
  %v1596 = vld [vmem:[%s1330 + $0x2c] sm:$0x1]
  %v1597 = vld [vmem:[%s1330 + $0x38] sm:$0x1]
  %v1598 = vld [vmem:[%s1330 + $0x44] sm:$0x1]
  %v1599 = vld [vmem:[%s1330 + $0x50] sm:$0x1]
  %v1600 = vld [vmem:[%s1330 + $0x5c] sm:$0x1]
  %v1601 = vld [vmem:[%s1330 + $0x68] sm:$0x1]
  %v1602 = vld [vmem:[%s1330 + $0x74] sm:$0x1]
  %v1603 = vld [vmem:[%s1330 + $0x80] sm:$0x1]
  %v1604 = vld [vmem:[%s1330 + $0x8c] sm:$0x1]
  %v1605 = vld [vmem:[%s1330 + $0x98] sm:$0x1]
  %v1606 = vld [vmem:[%s1330 + $0xa4] sm:$0x1]
  %v1607 = vld [vmem:[%s1330 + $0xb0] sm:$0x1]
  %v1608 = vld [vmem:[%s1330 + $0xbc] sm:$0x1]
  %v1609 = vld [vmem:[%s1330 + $0xe0] sm:$0x1]
  %v1610 = vld [vmem:[%s1330 + $0xec] sm:$0x1]
  %v1611 = vld [vmem:[%s1330 + $0xf8] sm:$0x1]
  %v1612 = vld [vmem:[%s1330 + $0x104] sm:$0x1]
  %v1613 = vld [vmem:[%s1330 + $0x110] sm:$0x1]
  %v1614 = vld [vmem:[%s1330 + $0x11c] sm:$0x1]
  %v1615 = vld [vmem:[%s1330 + $0x128] sm:$0x1]
  %v1616 = vld [vmem:[%s1330 + $0x134] sm:$0x1]
  %v1617 = vld [vmem:[%s1330 + $0x140] sm:$0x1]
  %v1618 = vld [vmem:[%s1330 + $0x14c] sm:$0x1]
  %v1619 = vld [vmem:[%s1330 + $0x158] sm:$0x1]
  %v1620 = vld [vmem:[%s1330 + $0x164] sm:$0x1]
  %v1621 = vld [vmem:[%s1330 + $0x170] sm:$0x1]
  %v1622 = vld [vmem:[%s1330 + $0x17c] sm:$0x1]
  %v1623 = vld [vmem:[%s1330 + $0x188] sm:$0x1]
  %v1624 = vld [vmem:[%s1330 + $0x194] sm:$0x1]
  %v1625 = vunpack.c.l.bf16 %v1593
  %v1626 = vunpack.c.l.bf16 %v1594
  %v1627 = vunpack.c.l.bf16 %v1595
  %v1628 = vunpack.c.l.bf16 %v1596
  %v1629 = vunpack.c.l.bf16 %v1597
  %v1630 = vunpack.c.l.bf16 %v1598
  %v1631 = vunpack.c.l.bf16 %v1599
  %v1632 = vunpack.c.l.bf16 %v1600
  %v1633 = vunpack.c.l.bf16 %v1601
  %v1634 = vunpack.c.l.bf16 %v1602
  %v1635 = vunpack.c.l.bf16 %v1603
  %v1636 = vunpack.c.l.bf16 %v1604
  %v1637 = vunpack.c.l.bf16 %v1605
  %v1638 = vunpack.c.l.bf16 %v1606
  %v1639 = vunpack.c.l.bf16 %v1607
  %v1640 = vunpack.c.l.bf16 %v1608
  %v1641 = vunpack.c.l.bf16 %v1609
  %v1642 = vunpack.c.l.bf16 %v1610
  %v1643 = vunpack.c.l.bf16 %v1611
  %v1644 = vunpack.c.l.bf16 %v1612
  %v1645 = vunpack.c.l.bf16 %v1613
  %v1646 = vunpack.c.l.bf16 %v1614
  %v1647 = vunpack.c.l.bf16 %v1615
  %v1648 = vunpack.c.l.bf16 %v1616
  %v1649 = vunpack.c.l.bf16 %v1617
  %v1650 = vunpack.c.l.bf16 %v1618
  %v1651 = vunpack.c.l.bf16 %v1619
  %v1652 = vunpack.c.l.bf16 %v1620
  %v1653 = vunpack.c.l.bf16 %v1621
  %v1654 = vunpack.c.l.bf16 %v1622
  %v1655 = vunpack.c.l.bf16 %v1623
  %v1656 = vunpack.c.l.bf16 %v1624
  %v1658 = vlaneseq
  %v1659 = vshrl.u32 %v1658, 7
  %v1660 = vsub.s32 0, %v1659
  %v1661 = vrot.slane %v25, %v1660
  %v1663 = vmul.f32 %v1395, %v1661
  %v1664 = vmul.f32 %v1396, %v1661
  %v1665 = vmul.f32 %v1625, %v1661
  %v1666 = vmul.f32 %v1397, %v1661
  %v1667 = vmul.f32 %v1398, %v1661
  %v1668 = vmul.f32 %v1626, %v1661
  %v1669 = vmul.f32 %v1399, %v1661
  %v1670 = vmul.f32 %v1400, %v1661
  %v1671 = vmul.f32 %v1627, %v1661
  %v1672 = vmul.f32 %v1401, %v1661
  %v1673 = vmul.f32 %v1402, %v1661
  %v1674 = vmul.f32 %v1628, %v1661
  %v1675 = vmul.f32 %v1403, %v1661
  %v1676 = vmul.f32 %v1404, %v1661
  %v1677 = vmul.f32 %v1629, %v1661
  %v1678 = vmul.f32 %v1405, %v1661
  %v1679 = vmul.f32 %v1406, %v1661
  %v1680 = vmul.f32 %v1630, %v1661
  %v1681 = vmul.f32 %v1407, %v1661
  %v1682 = vmul.f32 %v1408, %v1661
  %v1683 = vmul.f32 %v1631, %v1661
  %v1684 = vmul.f32 %v1409, %v1661
  %v1685 = vmul.f32 %v1410, %v1661
  %v1686 = vmul.f32 %v1632, %v1661
  %v1687 = vmul.f32 %v1411, %v1661
  %v1688 = vmul.f32 %v1412, %v1661
  %v1689 = vmul.f32 %v1633, %v1661
  %v1690 = vmul.f32 %v1413, %v1661
  %v1691 = vmul.f32 %v1414, %v1661
  %v1692 = vmul.f32 %v1634, %v1661
  %v1693 = vmul.f32 %v1415, %v1661
  %v1694 = vmul.f32 %v1416, %v1661
  %v1695 = vmul.f32 %v1635, %v1661
  %v1696 = vmul.f32 %v1417, %v1661
  %v1697 = vmul.f32 %v1418, %v1661
  %v1698 = vmul.f32 %v1636, %v1661
  %v1699 = vmul.f32 %v1419, %v1661
  %v1700 = vmul.f32 %v1420, %v1661
  %v1701 = vmul.f32 %v1637, %v1661
  %v1702 = vmul.f32 %v1421, %v1661
  %v1703 = vmul.f32 %v1422, %v1661
  %v1704 = vmul.f32 %v1638, %v1661
  %v1705 = vmul.f32 %v1423, %v1661
  %v1706 = vmul.f32 %v1424, %v1661
  %v1707 = vmul.f32 %v1639, %v1661
  %v1708 = vmul.f32 %v1425, %v1661
  %v1709 = vmul.f32 %v1426, %v1661
  %v1710 = vmul.f32 %v1640, %v1661
  %v1711 = vmul.f32 %v1427, %v1661
  %v1712 = vmul.f32 %v1428, %v1661
  %v1713 = vmul.f32 %v1641, %v1661
  %v1714 = vmul.f32 %v1429, %v1661
  %v1715 = vmul.f32 %v1430, %v1661
  %v1716 = vmul.f32 %v1642, %v1661
  %v1717 = vmul.f32 %v1431, %v1661
  %v1718 = vmul.f32 %v1432, %v1661
  %v1719 = vmul.f32 %v1643, %v1661
  %v1720 = vmul.f32 %v1433, %v1661
  %v1721 = vmul.f32 %v1434, %v1661
  %v1722 = vmul.f32 %v1644, %v1661
  %v1723 = vmul.f32 %v1435, %v1661
  %v1724 = vmul.f32 %v1436, %v1661
  %v1725 = vmul.f32 %v1645, %v1661
  %v1726 = vmul.f32 %v1437, %v1661
  %v1727 = vmul.f32 %v1438, %v1661
  %v1728 = vmul.f32 %v1646, %v1661
  %v1729 = vmul.f32 %v1439, %v1661
  %v1730 = vmul.f32 %v1440, %v1661
  %v1731 = vmul.f32 %v1647, %v1661
  %v1732 = vmul.f32 %v1441, %v1661
  %v1733 = vmul.f32 %v1442, %v1661
  %v1734 = vmul.f32 %v1648, %v1661
  %v1735 = vmul.f32 %v1443, %v1661
  %v1736 = vmul.f32 %v1444, %v1661
  %v1737 = vmul.f32 %v1649, %v1661
  %v1738 = vmul.f32 %v1445, %v1661
  %v1739 = vmul.f32 %v1446, %v1661
  %v1740 = vmul.f32 %v1650, %v1661
  %v1741 = vmul.f32 %v1447, %v1661
  %v1742 = vmul.f32 %v1448, %v1661
  %v1743 = vmul.f32 %v1651, %v1661
  %v1744 = vmul.f32 %v1449, %v1661
  %v1745 = vmul.f32 %v1450, %v1661
  %v1746 = vmul.f32 %v1652, %v1661
  %v1747 = vmul.f32 %v1451, %v1661
  %v1748 = vmul.f32 %v1452, %v1661
  %v1749 = vmul.f32 %v1653, %v1661
  %v1750 = vmul.f32 %v1453, %v1661
  %v1751 = vmul.f32 %v1454, %v1661
  %v1752 = vmul.f32 %v1654, %v1661
  %v1753 = vmul.f32 %v1455, %v1661
  %v1754 = vmul.f32 %v1456, %v1661
  %v1755 = vmul.f32 %v1655, %v1661
  %v1756 = vmul.f32 %v1457, %v1661
  %v1757 = vmul.f32 %v1458, %v1661
  %v1758 = vmul.f32 %v1656, %v1661
  %v1855 = vrot.slane %v1663, 1
  %v1856 = vrot.slane %v1664, 1
  %v1857 = vsel %vm490, %v1855, %v1856
  %v1858 = vrot.slane %v1665, 1
  %v1859 = vsel %vm490, %v1856, %v1858
  %v1860 = vrot.slane %v1666, 1
  %v1861 = vrot.slane %v1667, 1
  %v1862 = vsel %vm490, %v1860, %v1861
  %v1863 = vrot.slane %v1668, 1
  %v1864 = vsel %vm490, %v1861, %v1863
  %v1865 = vrot.slane %v1669, 1
  %v1866 = vrot.slane %v1670, 1
  %v1867 = vsel %vm490, %v1865, %v1866
  %v1868 = vrot.slane %v1671, 1
  %v1869 = vsel %vm490, %v1866, %v1868
  %v1870 = vrot.slane %v1672, 1
  %v1871 = vrot.slane %v1673, 1
  %v1872 = vsel %vm490, %v1870, %v1871
  %v1873 = vrot.slane %v1674, 1
  %v1874 = vsel %vm490, %v1871, %v1873
  %v1875 = vrot.slane %v1675, 1
  %v1876 = vrot.slane %v1676, 1
  %v1877 = vsel %vm490, %v1875, %v1876
  %v1878 = vrot.slane %v1677, 1
  %v1879 = vsel %vm490, %v1876, %v1878
  %v1880 = vrot.slane %v1678, 1
  %v1881 = vrot.slane %v1679, 1
  %v1882 = vsel %vm490, %v1880, %v1881
  %v1883 = vrot.slane %v1680, 1
  %v1884 = vsel %vm490, %v1881, %v1883
  %v1885 = vrot.slane %v1681, 1
  %v1886 = vrot.slane %v1682, 1
  %v1887 = vsel %vm490, %v1885, %v1886
  %v1888 = vrot.slane %v1683, 1
  %v1889 = vsel %vm490, %v1886, %v1888
  %v1890 = vrot.slane %v1684, 1
  %v1891 = vrot.slane %v1685, 1
  %v1892 = vsel %vm490, %v1890, %v1891
  %v1893 = vrot.slane %v1686, 1
  %v1894 = vsel %vm490, %v1891, %v1893
  %v1895 = vrot.slane %v1687, 1
  %v1896 = vrot.slane %v1688, 1
  %v1897 = vsel %vm490, %v1895, %v1896
  %v1898 = vrot.slane %v1689, 1
  %v1899 = vsel %vm490, %v1896, %v1898
  %v1900 = vrot.slane %v1690, 1
  %v1901 = vrot.slane %v1691, 1
  %v1902 = vsel %vm490, %v1900, %v1901
  %v1903 = vrot.slane %v1692, 1
  %v1904 = vsel %vm490, %v1901, %v1903
  %v1905 = vrot.slane %v1693, 1
  %v1906 = vrot.slane %v1694, 1
  %v1907 = vsel %vm490, %v1905, %v1906
  %v1908 = vrot.slane %v1695, 1
  %v1909 = vsel %vm490, %v1906, %v1908
  %v1910 = vrot.slane %v1696, 1
  %v1911 = vrot.slane %v1697, 1
  %v1912 = vsel %vm490, %v1910, %v1911
  %v1913 = vrot.slane %v1698, 1
  %v1914 = vsel %vm490, %v1911, %v1913
  %v1915 = vrot.slane %v1699, 1
  %v1916 = vrot.slane %v1700, 1
  %v1917 = vsel %vm490, %v1915, %v1916
  %v1918 = vrot.slane %v1701, 1
  %v1919 = vsel %vm490, %v1916, %v1918
  %v1920 = vrot.slane %v1702, 1
  %v1921 = vrot.slane %v1703, 1
  %v1922 = vsel %vm490, %v1920, %v1921
  %v1923 = vrot.slane %v1704, 1
  %v1924 = vsel %vm490, %v1921, %v1923
  %v1925 = vrot.slane %v1705, 1
  %v1926 = vrot.slane %v1706, 1
  %v1927 = vsel %vm490, %v1925, %v1926
  %v1928 = vrot.slane %v1707, 1
  %v1929 = vsel %vm490, %v1926, %v1928
  %v1930 = vrot.slane %v1708, 1
  %v1931 = vrot.slane %v1709, 1
  %v1932 = vsel %vm490, %v1930, %v1931
  %v1933 = vrot.slane %v1710, 1
  %v1934 = vsel %vm490, %v1931, %v1933
  %v1935 = vrot.slane %v1711, 1
  %v1936 = vrot.slane %v1712, 1
  %v1937 = vsel %vm490, %v1935, %v1936
  %v1938 = vrot.slane %v1713, 1
  %v1939 = vsel %vm490, %v1936, %v1938
  %v1940 = vrot.slane %v1714, 1
  %v1941 = vrot.slane %v1715, 1
  %v1942 = vsel %vm490, %v1940, %v1941
  %v1943 = vrot.slane %v1716, 1
  %v1944 = vsel %vm490, %v1941, %v1943
  %v1945 = vrot.slane %v1717, 1
  %v1946 = vrot.slane %v1718, 1
  %v1947 = vsel %vm490, %v1945, %v1946
  %v1948 = vrot.slane %v1719, 1
  %v1949 = vsel %vm490, %v1946, %v1948
  %v1950 = vrot.slane %v1720, 1
  %v1951 = vrot.slane %v1721, 1
  %v1952 = vsel %vm490, %v1950, %v1951
  %v1953 = vrot.slane %v1722, 1
  %v1954 = vsel %vm490, %v1951, %v1953
  %v1955 = vrot.slane %v1723, 1
  %v1956 = vrot.slane %v1724, 1
  %v1957 = vsel %vm490, %v1955, %v1956
  %v1958 = vrot.slane %v1725, 1
  %v1959 = vsel %vm490, %v1956, %v1958
  %v1960 = vrot.slane %v1726, 1
  %v1961 = vrot.slane %v1727, 1
  %v1962 = vsel %vm490, %v1960, %v1961
  %v1963 = vrot.slane %v1728, 1
  %v1964 = vsel %vm490, %v1961, %v1963
  %v1965 = vrot.slane %v1729, 1
  %v1966 = vrot.slane %v1730, 1
  %v1967 = vsel %vm490, %v1965, %v1966
  %v1968 = vrot.slane %v1731, 1
  %v1969 = vsel %vm490, %v1966, %v1968
  %v1970 = vrot.slane %v1732, 1
  %v1971 = vrot.slane %v1733, 1
  %v1972 = vsel %vm490, %v1970, %v1971
  %v1973 = vrot.slane %v1734, 1
  %v1974 = vsel %vm490, %v1971, %v1973
  %v1975 = vrot.slane %v1735, 1
  %v1976 = vrot.slane %v1736, 1
  %v1977 = vsel %vm490, %v1975, %v1976
  %v1978 = vrot.slane %v1737, 1
  %v1979 = vsel %vm490, %v1976, %v1978
  %v1980 = vrot.slane %v1738, 1
  %v1981 = vrot.slane %v1739, 1
  %v1982 = vsel %vm490, %v1980, %v1981
  %v1983 = vrot.slane %v1740, 1
  %v1984 = vsel %vm490, %v1981, %v1983
  %v1985 = vrot.slane %v1741, 1
  %v1986 = vrot.slane %v1742, 1
  %v1987 = vsel %vm490, %v1985, %v1986
  %v1988 = vrot.slane %v1743, 1
  %v1989 = vsel %vm490, %v1986, %v1988
  %v1990 = vrot.slane %v1744, 1
  %v1991 = vrot.slane %v1745, 1
  %v1992 = vsel %vm490, %v1990, %v1991
  %v1993 = vrot.slane %v1746, 1
  %v1994 = vsel %vm490, %v1991, %v1993
  %v1995 = vrot.slane %v1747, 1
  %v1996 = vrot.slane %v1748, 1
  %v1997 = vsel %vm490, %v1995, %v1996
  %v1998 = vrot.slane %v1749, 1
  %v1999 = vsel %vm490, %v1996, %v1998
  %v2000 = vrot.slane %v1750, 1
  %v2001 = vrot.slane %v1751, 1
  %v2002 = vsel %vm490, %v2000, %v2001
  %v2003 = vrot.slane %v1752, 1
  %v2004 = vsel %vm490, %v2001, %v2003
  %v2005 = vrot.slane %v1753, 1
  %v2006 = vrot.slane %v1754, 1
  %v2007 = vsel %vm490, %v2005, %v2006
  %v2008 = vrot.slane %v1755, 1
  %v2009 = vsel %vm490, %v2006, %v2008
  %v2010 = vrot.slane %v1756, 1
  %v2011 = vrot.slane %v1757, 1
  %v2012 = vsel %vm490, %v2010, %v2011
  %v2013 = vrot.slane %v1758, 1
  %v2014 = vsel %vm490, %v2011, %v2013
  %v2079 = vadd.f32 %v1529, %v1857
  %v2080 = vadd.f32 %v1530, %v1859
  %v2081 = vadd.f32 %v1531, %v1862
  %v2082 = vadd.f32 %v1532, %v1864
  %v2083 = vadd.f32 %v1533, %v1867
  %v2084 = vadd.f32 %v1534, %v1869
  %v2085 = vadd.f32 %v1535, %v1872
  %v2086 = vadd.f32 %v1536, %v1874
  %v2087 = vadd.f32 %v1537, %v1877
  %v2088 = vadd.f32 %v1538, %v1879
  %v2089 = vadd.f32 %v1539, %v1882
  %v2090 = vadd.f32 %v1540, %v1884
  %v2091 = vadd.f32 %v1541, %v1887
  %v2092 = vadd.f32 %v1542, %v1889
  %v2093 = vadd.f32 %v1543, %v1892
  %v2094 = vadd.f32 %v1544, %v1894
  %v2095 = vadd.f32 %v1545, %v1897
  %v2096 = vadd.f32 %v1546, %v1899
  %v2097 = vadd.f32 %v1547, %v1902
  %v2098 = vadd.f32 %v1548, %v1904
  %v2099 = vadd.f32 %v1549, %v1907
  %v2100 = vadd.f32 %v1550, %v1909
  %v2101 = vadd.f32 %v1551, %v1912
  %v2102 = vadd.f32 %v1552, %v1914
  %v2103 = vadd.f32 %v1553, %v1917
  %v2104 = vadd.f32 %v1554, %v1919
  %v2105 = vadd.f32 %v1555, %v1922
  %v2106 = vadd.f32 %v1556, %v1924
  %v2107 = vadd.f32 %v1557, %v1927
  %v2108 = vadd.f32 %v1558, %v1929
  %v2109 = vadd.f32 %v1559, %v1932
  %v2110 = vadd.f32 %v1560, %v1934
  %v2111 = vadd.f32 %v1561, %v1937
  %v2112 = vadd.f32 %v1562, %v1939
  %v2113 = vadd.f32 %v1563, %v1942
  %v2114 = vadd.f32 %v1564, %v1944
  %v2115 = vadd.f32 %v1565, %v1947
  %v2116 = vadd.f32 %v1566, %v1949
  %v2117 = vadd.f32 %v1567, %v1952
  %v2118 = vadd.f32 %v1568, %v1954
  %v2119 = vadd.f32 %v1569, %v1957
  %v2120 = vadd.f32 %v1570, %v1959
  %v2121 = vadd.f32 %v1571, %v1962
  %v2122 = vadd.f32 %v1572, %v1964
  %v2123 = vadd.f32 %v1573, %v1967
  %v2124 = vadd.f32 %v1574, %v1969
  %v2125 = vadd.f32 %v1575, %v1972
  %v2126 = vadd.f32 %v1576, %v1974
  %v2127 = vadd.f32 %v1577, %v1977
  %v2128 = vadd.f32 %v1578, %v1979
  %v2129 = vadd.f32 %v1579, %v1982
  %v2130 = vadd.f32 %v1580, %v1984
  %v2131 = vadd.f32 %v1581, %v1987
  %v2132 = vadd.f32 %v1582, %v1989
  %v2133 = vadd.f32 %v1583, %v1992
  %v2134 = vadd.f32 %v1584, %v1994
  %v2135 = vadd.f32 %v1585, %v1997
  %v2136 = vadd.f32 %v1586, %v1999
  %v2137 = vadd.f32 %v1587, %v2002
  %v2138 = vadd.f32 %v1588, %v2004
  %v2139 = vadd.f32 %v1589, %v2007
  %v2140 = vadd.f32 %v1590, %v2009
  %v2141 = vadd.f32 %v1591, %v2012
  %v2142 = vadd.f32 %v1592, %v2014
  %v2143 = vld [vmem:[%s1330] sm:$0xe]
  %v2144 = vld [vmem:[%s1330 + $0xc] sm:$0xe]
  %v2145 = vld [vmem:[%s1330 + $0x18] sm:$0xe]
  %v2146 = vld [vmem:[%s1330 + $0x24] sm:$0xe]
  %v2147 = vld [vmem:[%s1330 + $0x30] sm:$0xe]
  %v2148 = vld [vmem:[%s1330 + $0x3c] sm:$0xe]
  %v2149 = vld [vmem:[%s1330 + $0x48] sm:$0xe]
  %v2150 = vld [vmem:[%s1330 + $0x54] sm:$0xe]
  %v2151 = vld [vmem:[%s1330 + $0x60] sm:$0xe]
  %v2152 = vld [vmem:[%s1330 + $0x6c] sm:$0xe]
  %v2153 = vld [vmem:[%s1330 + $0x78] sm:$0xe]
  %v2154 = vld [vmem:[%s1330 + $0x84] sm:$0xe]
  %v2155 = vld [vmem:[%s1330 + $0x90] sm:$0xe]
  %v2156 = vld [vmem:[%s1330 + $0x9c] sm:$0xe]
  %v2157 = vld [vmem:[%s1330 + $0xa8] sm:$0xe]
  %v2158 = vld [vmem:[%s1330 + $0xb4] sm:$0xe]
  %v2159 = vld [vmem:[%s1330 + $0xd8] sm:$0xe]
  %v2160 = vld [vmem:[%s1330 + $0xe4] sm:$0xe]
  %v2161 = vld [vmem:[%s1330 + $0xf0] sm:$0xe]
  %v2162 = vld [vmem:[%s1330 + $0xfc] sm:$0xe]
  %v2163 = vld [vmem:[%s1330 + $0x108] sm:$0xe]
  %v2164 = vld [vmem:[%s1330 + $0x114] sm:$0xe]
  %v2165 = vld [vmem:[%s1330 + $0x120] sm:$0xe]
  %v2166 = vld [vmem:[%s1330 + $0x12c] sm:$0xe]
  %v2167 = vld [vmem:[%s1330 + $0x138] sm:$0xe]
  %v2168 = vld [vmem:[%s1330 + $0x144] sm:$0xe]
  %v2169 = vld [vmem:[%s1330 + $0x150] sm:$0xe]
  %v2170 = vld [vmem:[%s1330 + $0x15c] sm:$0xe]
  %v2171 = vld [vmem:[%s1330 + $0x168] sm:$0xe]
  %v2172 = vld [vmem:[%s1330 + $0x174] sm:$0xe]
  %v2173 = vld [vmem:[%s1330 + $0x180] sm:$0xe]
  %v2174 = vld [vmem:[%s1330 + $0x18c] sm:$0xe]
  %v2175 = vunpack.c.l.bf16 %v2143
  %v2176 = vunpack.c.l.bf16 %v2144
  %v2177 = vunpack.c.l.bf16 %v2145
  %v2178 = vunpack.c.l.bf16 %v2146
  %v2179 = vunpack.c.l.bf16 %v2147
  %v2180 = vunpack.c.l.bf16 %v2148
  %v2181 = vunpack.c.l.bf16 %v2149
  %v2182 = vunpack.c.l.bf16 %v2150
  %v2183 = vunpack.c.l.bf16 %v2151
  %v2184 = vunpack.c.l.bf16 %v2152
  %v2185 = vunpack.c.l.bf16 %v2153
  %v2186 = vunpack.c.l.bf16 %v2154
  %v2187 = vunpack.c.l.bf16 %v2155
  %v2188 = vunpack.c.l.bf16 %v2156
  %v2189 = vunpack.c.l.bf16 %v2157
  %v2190 = vunpack.c.l.bf16 %v2158
  %v2191 = vunpack.c.l.bf16 %v2159
  %v2192 = vunpack.c.l.bf16 %v2160
  %v2193 = vunpack.c.l.bf16 %v2161
  %v2194 = vunpack.c.l.bf16 %v2162
  %v2195 = vunpack.c.l.bf16 %v2163
  %v2196 = vunpack.c.l.bf16 %v2164
  %v2197 = vunpack.c.l.bf16 %v2165
  %v2198 = vunpack.c.l.bf16 %v2166
  %v2199 = vunpack.c.l.bf16 %v2167
  %v2200 = vunpack.c.l.bf16 %v2168
  %v2201 = vunpack.c.l.bf16 %v2169
  %v2202 = vunpack.c.l.bf16 %v2170
  %v2203 = vunpack.c.l.bf16 %v2171
  %v2204 = vunpack.c.l.bf16 %v2172
  %v2205 = vunpack.c.l.bf16 %v2173
  %v2206 = vunpack.c.l.bf16 %v2174
  %v2208 = vlaneseq
  %v2209 = vshrl.u32 %v2208, 7
  %v2210 = vsub.s32 0, %v2209
  %v2211 = vrot.slane %v26, %v2210
  %v2213 = vmul.f32 %v2175, %v2211
  %v2214 = vmul.f32 %v1396, %v2211
  %v2215 = vmul.f32 %v1625, %v2211
  %v2216 = vmul.f32 %v2176, %v2211
  %v2217 = vmul.f32 %v1398, %v2211
  %v2218 = vmul.f32 %v1626, %v2211
  %v2219 = vmul.f32 %v2177, %v2211
  %v2220 = vmul.f32 %v1400, %v2211
  %v2221 = vmul.f32 %v1627, %v2211
  %v2222 = vmul.f32 %v2178, %v2211
  %v2223 = vmul.f32 %v1402, %v2211
  %v2224 = vmul.f32 %v1628, %v2211
  %v2225 = vmul.f32 %v2179, %v2211
  %v2226 = vmul.f32 %v1404, %v2211
  %v2227 = vmul.f32 %v1629, %v2211
  %v2228 = vmul.f32 %v2180, %v2211
  %v2229 = vmul.f32 %v1406, %v2211
  %v2230 = vmul.f32 %v1630, %v2211
  %v2231 = vmul.f32 %v2181, %v2211
  %v2232 = vmul.f32 %v1408, %v2211
  %v2233 = vmul.f32 %v1631, %v2211
  %v2234 = vmul.f32 %v2182, %v2211
  %v2235 = vmul.f32 %v1410, %v2211
  %v2236 = vmul.f32 %v1632, %v2211
  %v2237 = vmul.f32 %v2183, %v2211
  %v2238 = vmul.f32 %v1412, %v2211
  %v2239 = vmul.f32 %v1633, %v2211
  %v2240 = vmul.f32 %v2184, %v2211
  %v2241 = vmul.f32 %v1414, %v2211
  %v2242 = vmul.f32 %v1634, %v2211
  %v2243 = vmul.f32 %v2185, %v2211
  %v2244 = vmul.f32 %v1416, %v2211
  %v2245 = vmul.f32 %v1635, %v2211
  %v2246 = vmul.f32 %v2186, %v2211
  %v2247 = vmul.f32 %v1418, %v2211
  %v2248 = vmul.f32 %v1636, %v2211
  %v2249 = vmul.f32 %v2187, %v2211
  %v2250 = vmul.f32 %v1420, %v2211
  %v2251 = vmul.f32 %v1637, %v2211
  %v2252 = vmul.f32 %v2188, %v2211
  %v2253 = vmul.f32 %v1422, %v2211
  %v2254 = vmul.f32 %v1638, %v2211
  %v2255 = vmul.f32 %v2189, %v2211
  %v2256 = vmul.f32 %v1424, %v2211
  %v2257 = vmul.f32 %v1639, %v2211
  %v2258 = vmul.f32 %v2190, %v2211
  %v2259 = vmul.f32 %v1426, %v2211
  %v2260 = vmul.f32 %v1640, %v2211
  %v2261 = vmul.f32 %v2191, %v2211
  %v2262 = vmul.f32 %v1428, %v2211
  %v2263 = vmul.f32 %v1641, %v2211
  %v2264 = vmul.f32 %v2192, %v2211
  %v2265 = vmul.f32 %v1430, %v2211
  %v2266 = vmul.f32 %v1642, %v2211
  %v2267 = vmul.f32 %v2193, %v2211
  %v2268 = vmul.f32 %v1432, %v2211
  %v2269 = vmul.f32 %v1643, %v2211
  %v2270 = vmul.f32 %v2194, %v2211
  %v2271 = vmul.f32 %v1434, %v2211
  %v2272 = vmul.f32 %v1644, %v2211
  %v2273 = vmul.f32 %v2195, %v2211
  %v2274 = vmul.f32 %v1436, %v2211
  %v2275 = vmul.f32 %v1645, %v2211
  %v2276 = vmul.f32 %v2196, %v2211
  %v2277 = vmul.f32 %v1438, %v2211
  %v2278 = vmul.f32 %v1646, %v2211
  %v2279 = vmul.f32 %v2197, %v2211
  %v2280 = vmul.f32 %v1440, %v2211
  %v2281 = vmul.f32 %v1647, %v2211
  %v2282 = vmul.f32 %v2198, %v2211
  %v2283 = vmul.f32 %v1442, %v2211
  %v2284 = vmul.f32 %v1648, %v2211
  %v2285 = vmul.f32 %v2199, %v2211
  %v2286 = vmul.f32 %v1444, %v2211
  %v2287 = vmul.f32 %v1649, %v2211
  %v2288 = vmul.f32 %v2200, %v2211
  %v2289 = vmul.f32 %v1446, %v2211
  %v2290 = vmul.f32 %v1650, %v2211
  %v2291 = vmul.f32 %v2201, %v2211
  %v2292 = vmul.f32 %v1448, %v2211
  %v2293 = vmul.f32 %v1651, %v2211
  %v2294 = vmul.f32 %v2202, %v2211
  %v2295 = vmul.f32 %v1450, %v2211
  %v2296 = vmul.f32 %v1652, %v2211
  %v2297 = vmul.f32 %v2203, %v2211
  %v2298 = vmul.f32 %v1452, %v2211
  %v2299 = vmul.f32 %v1653, %v2211
  %v2300 = vmul.f32 %v2204, %v2211
  %v2301 = vmul.f32 %v1454, %v2211
  %v2302 = vmul.f32 %v1654, %v2211
  %v2303 = vmul.f32 %v2205, %v2211
  %v2304 = vmul.f32 %v1456, %v2211
  %v2305 = vmul.f32 %v1655, %v2211
  %v2306 = vmul.f32 %v2206, %v2211
  %v2307 = vmul.f32 %v1458, %v2211
  %v2308 = vmul.f32 %v1656, %v2211
  %v2405 = vrot.slane %v2213, 2
  %v2406 = vrot.slane %v2214, 2
  %v2407 = vsel %vm1041, %v2405, %v2406
  %v2408 = vrot.slane %v2215, 2
  %v2409 = vsel %vm1041, %v2406, %v2408
  %v2410 = vrot.slane %v2216, 2
  %v2411 = vrot.slane %v2217, 2
  %v2412 = vsel %vm1041, %v2410, %v2411
  %v2413 = vrot.slane %v2218, 2
  %v2414 = vsel %vm1041, %v2411, %v2413
  %v2415 = vrot.slane %v2219, 2
  %v2416 = vrot.slane %v2220, 2
  %v2417 = vsel %vm1041, %v2415, %v2416
  %v2418 = vrot.slane %v2221, 2
  %v2419 = vsel %vm1041, %v2416, %v2418
  %v2420 = vrot.slane %v2222, 2
  %v2421 = vrot.slane %v2223, 2
  %v2422 = vsel %vm1041, %v2420, %v2421
  %v2423 = vrot.slane %v2224, 2
  %v2424 = vsel %vm1041, %v2421, %v2423
  %v2425 = vrot.slane %v2225, 2
  %v2426 = vrot.slane %v2226, 2
  %v2427 = vsel %vm1041, %v2425, %v2426
  %v2428 = vrot.slane %v2227, 2
  %v2429 = vsel %vm1041, %v2426, %v2428
  %v2430 = vrot.slane %v2228, 2
  %v2431 = vrot.slane %v2229, 2
  %v2432 = vsel %vm1041, %v2430, %v2431
  %v2433 = vrot.slane %v2230, 2
  %v2434 = vsel %vm1041, %v2431, %v2433
  %v2435 = vrot.slane %v2231, 2
  %v2436 = vrot.slane %v2232, 2
  %v2437 = vsel %vm1041, %v2435, %v2436
  %v2438 = vrot.slane %v2233, 2
  %v2439 = vsel %vm1041, %v2436, %v2438
  %v2440 = vrot.slane %v2234, 2
  %v2441 = vrot.slane %v2235, 2
  %v2442 = vsel %vm1041, %v2440, %v2441
  %v2443 = vrot.slane %v2236, 2
  %v2444 = vsel %vm1041, %v2441, %v2443
  %v2445 = vrot.slane %v2237, 2
  %v2446 = vrot.slane %v2238, 2
  %v2447 = vsel %vm1041, %v2445, %v2446
  %v2448 = vrot.slane %v2239, 2
  %v2449 = vsel %vm1041, %v2446, %v2448
  %v2450 = vrot.slane %v2240, 2
  %v2451 = vrot.slane %v2241, 2
  %v2452 = vsel %vm1041, %v2450, %v2451
  %v2453 = vrot.slane %v2242, 2
  %v2454 = vsel %vm1041, %v2451, %v2453
  %v2455 = vrot.slane %v2243, 2
  %v2456 = vrot.slane %v2244, 2
  %v2457 = vsel %vm1041, %v2455, %v2456
  %v2458 = vrot.slane %v2245, 2
  %v2459 = vsel %vm1041, %v2456, %v2458
  %v2460 = vrot.slane %v2246, 2
  %v2461 = vrot.slane %v2247, 2
  %v2462 = vsel %vm1041, %v2460, %v2461
  %v2463 = vrot.slane %v2248, 2
  %v2464 = vsel %vm1041, %v2461, %v2463
  %v2465 = vrot.slane %v2249, 2
  %v2466 = vrot.slane %v2250, 2
  %v2467 = vsel %vm1041, %v2465, %v2466
  %v2468 = vrot.slane %v2251, 2
  %v2469 = vsel %vm1041, %v2466, %v2468
  %v2470 = vrot.slane %v2252, 2
  %v2471 = vrot.slane %v2253, 2
  %v2472 = vsel %vm1041, %v2470, %v2471
  %v2473 = vrot.slane %v2254, 2
  %v2474 = vsel %vm1041, %v2471, %v2473
  %v2475 = vrot.slane %v2255, 2
  %v2476 = vrot.slane %v2256, 2
  %v2477 = vsel %vm1041, %v2475, %v2476
  %v2478 = vrot.slane %v2257, 2
  %v2479 = vsel %vm1041, %v2476, %v2478
  %v2480 = vrot.slane %v2258, 2
  %v2481 = vrot.slane %v2259, 2
  %v2482 = vsel %vm1041, %v2480, %v2481
  %v2483 = vrot.slane %v2260, 2
  %v2484 = vsel %vm1041, %v2481, %v2483
  %v2485 = vrot.slane %v2261, 2
  %v2486 = vrot.slane %v2262, 2
  %v2487 = vsel %vm1041, %v2485, %v2486
  %v2488 = vrot.slane %v2263, 2
  %v2489 = vsel %vm1041, %v2486, %v2488
  %v2490 = vrot.slane %v2264, 2
  %v2491 = vrot.slane %v2265, 2
  %v2492 = vsel %vm1041, %v2490, %v2491
  %v2493 = vrot.slane %v2266, 2
  %v2494 = vsel %vm1041, %v2491, %v2493
  %v2495 = vrot.slane %v2267, 2
  %v2496 = vrot.slane %v2268, 2
  %v2497 = vsel %vm1041, %v2495, %v2496
  %v2498 = vrot.slane %v2269, 2
  %v2499 = vsel %vm1041, %v2496, %v2498
  %v2500 = vrot.slane %v2270, 2
  %v2501 = vrot.slane %v2271, 2
  %v2502 = vsel %vm1041, %v2500, %v2501
  %v2503 = vrot.slane %v2272, 2
  %v2504 = vsel %vm1041, %v2501, %v2503
  %v2505 = vrot.slane %v2273, 2
  %v2506 = vrot.slane %v2274, 2
  %v2507 = vsel %vm1041, %v2505, %v2506
  %v2508 = vrot.slane %v2275, 2
  %v2509 = vsel %vm1041, %v2506, %v2508
  %v2510 = vrot.slane %v2276, 2
  %v2511 = vrot.slane %v2277, 2
  %v2512 = vsel %vm1041, %v2510, %v2511
  %v2513 = vrot.slane %v2278, 2
  %v2514 = vsel %vm1041, %v2511, %v2513
  %v2515 = vrot.slane %v2279, 2
  %v2516 = vrot.slane %v2280, 2
  %v2517 = vsel %vm1041, %v2515, %v2516
  %v2518 = vrot.slane %v2281, 2
  %v2519 = vsel %vm1041, %v2516, %v2518
  %v2520 = vrot.slane %v2282, 2
  %v2521 = vrot.slane %v2283, 2
  %v2522 = vsel %vm1041, %v2520, %v2521
  %v2523 = vrot.slane %v2284, 2
  %v2524 = vsel %vm1041, %v2521, %v2523
  %v2525 = vrot.slane %v2285, 2
  %v2526 = vrot.slane %v2286, 2
  %v2527 = vsel %vm1041, %v2525, %v2526
  %v2528 = vrot.slane %v2287, 2
  %v2529 = vsel %vm1041, %v2526, %v2528
  %v2530 = vrot.slane %v2288, 2
  %v2531 = vrot.slane %v2289, 2
  %v2532 = vsel %vm1041, %v2530, %v2531
  %v2533 = vrot.slane %v2290, 2
  %v2534 = vsel %vm1041, %v2531, %v2533
  %v2535 = vrot.slane %v2291, 2
  %v2536 = vrot.slane %v2292, 2
  %v2537 = vsel %vm1041, %v2535, %v2536
  %v2538 = vrot.slane %v2293, 2
  %v2539 = vsel %vm1041, %v2536, %v2538
  %v2540 = vrot.slane %v2294, 2
  %v2541 = vrot.slane %v2295, 2
  %v2542 = vsel %vm1041, %v2540, %v2541
  %v2543 = vrot.slane %v2296, 2
  %v2544 = vsel %vm1041, %v2541, %v2543
  %v2545 = vrot.slane %v2297, 2
  %v2546 = vrot.slane %v2298, 2
  %v2547 = vsel %vm1041, %v2545, %v2546
  %v2548 = vrot.slane %v2299, 2
  %v2549 = vsel %vm1041, %v2546, %v2548
  %v2550 = vrot.slane %v2300, 2
  %v2551 = vrot.slane %v2301, 2
  %v2552 = vsel %vm1041, %v2550, %v2551
  %v2553 = vrot.slane %v2302, 2
  %v2554 = vsel %vm1041, %v2551, %v2553
  %v2555 = vrot.slane %v2303, 2
  %v2556 = vrot.slane %v2304, 2
  %v2557 = vsel %vm1041, %v2555, %v2556
  %v2558 = vrot.slane %v2305, 2
  %v2559 = vsel %vm1041, %v2556, %v2558
  %v2560 = vrot.slane %v2306, 2
  %v2561 = vrot.slane %v2307, 2
  %v2562 = vsel %vm1041, %v2560, %v2561
  %v2563 = vrot.slane %v2308, 2
  %v2564 = vsel %vm1041, %v2561, %v2563
  %v2629 = vadd.f32 %v2079, %v2407
  %v2630 = vadd.f32 %v2080, %v2409
  %v2631 = vadd.f32 %v2081, %v2412
  %v2632 = vadd.f32 %v2082, %v2414
  %v2633 = vadd.f32 %v2083, %v2417
  %v2634 = vadd.f32 %v2084, %v2419
  %v2635 = vadd.f32 %v2085, %v2422
  %v2636 = vadd.f32 %v2086, %v2424
  %v2637 = vadd.f32 %v2087, %v2427
  %v2638 = vadd.f32 %v2088, %v2429
  %v2639 = vadd.f32 %v2089, %v2432
  %v2640 = vadd.f32 %v2090, %v2434
  %v2641 = vadd.f32 %v2091, %v2437
  %v2642 = vadd.f32 %v2092, %v2439
  %v2643 = vadd.f32 %v2093, %v2442
  %v2644 = vadd.f32 %v2094, %v2444
  %v2645 = vadd.f32 %v2095, %v2447
  %v2646 = vadd.f32 %v2096, %v2449
  %v2647 = vadd.f32 %v2097, %v2452
  %v2648 = vadd.f32 %v2098, %v2454
  %v2649 = vadd.f32 %v2099, %v2457
  %v2650 = vadd.f32 %v2100, %v2459
  %v2651 = vadd.f32 %v2101, %v2462
  %v2652 = vadd.f32 %v2102, %v2464
  %v2653 = vadd.f32 %v2103, %v2467
  %v2654 = vadd.f32 %v2104, %v2469
  %v2655 = vadd.f32 %v2105, %v2472
  %v2656 = vadd.f32 %v2106, %v2474
  %v2657 = vadd.f32 %v2107, %v2477
  %v2658 = vadd.f32 %v2108, %v2479
  %v2659 = vadd.f32 %v2109, %v2482
  %v2660 = vadd.f32 %v2110, %v2484
  %v2661 = vadd.f32 %v2111, %v2487
  %v2662 = vadd.f32 %v2112, %v2489
  %v2663 = vadd.f32 %v2113, %v2492
  %v2664 = vadd.f32 %v2114, %v2494
  %v2665 = vadd.f32 %v2115, %v2497
  %v2666 = vadd.f32 %v2116, %v2499
  %v2667 = vadd.f32 %v2117, %v2502
  %v2668 = vadd.f32 %v2118, %v2504
  %v2669 = vadd.f32 %v2119, %v2507
  %v2670 = vadd.f32 %v2120, %v2509
  %v2671 = vadd.f32 %v2121, %v2512
  %v2672 = vadd.f32 %v2122, %v2514
  %v2673 = vadd.f32 %v2123, %v2517
  %v2674 = vadd.f32 %v2124, %v2519
  %v2675 = vadd.f32 %v2125, %v2522
  %v2676 = vadd.f32 %v2126, %v2524
  %v2677 = vadd.f32 %v2127, %v2527
  %v2678 = vadd.f32 %v2128, %v2529
  %v2679 = vadd.f32 %v2129, %v2532
  %v2680 = vadd.f32 %v2130, %v2534
  %v2681 = vadd.f32 %v2131, %v2537
  %v2682 = vadd.f32 %v2132, %v2539
  %v2683 = vadd.f32 %v2133, %v2542
  %v2684 = vadd.f32 %v2134, %v2544
  %v2685 = vadd.f32 %v2135, %v2547
  %v2686 = vadd.f32 %v2136, %v2549
  %v2687 = vadd.f32 %v2137, %v2552
  %v2688 = vadd.f32 %v2138, %v2554
  %v2689 = vadd.f32 %v2139, %v2557
  %v2690 = vadd.f32 %v2140, %v2559
  %v2691 = vadd.f32 %v2141, %v2562
  %v2692 = vadd.f32 %v2142, %v2564
  %s2693 = scalar_lea.vmem %s0, 24
  %v2694 = vld [vmem:[%s2693] sm:$0xf]
  %v2695 = vld [vmem:[%s2693 + $0x4] sm:$0xf]
  %v2696 = vld [vmem:[%s2693 + $0xc] sm:$0xf]
  %v2697 = vld [vmem:[%s2693 + $0x10] sm:$0xf]
  %v2698 = vld [vmem:[%s2693 + $0x18] sm:$0xf]
  %v2699 = vld [vmem:[%s2693 + $0x1c] sm:$0xf]
  %v2700 = vld [vmem:[%s2693 + $0x24] sm:$0xf]
  %v2701 = vld [vmem:[%s2693 + $0x28] sm:$0xf]
  %v2702 = vld [vmem:[%s2693 + $0x30] sm:$0xf]
  %v2703 = vld [vmem:[%s2693 + $0x34] sm:$0xf]
  %v2704 = vld [vmem:[%s2693 + $0x3c] sm:$0xf]
  %v2705 = vld [vmem:[%s2693 + $0x40] sm:$0xf]
  %v2706 = vld [vmem:[%s2693 + $0x48] sm:$0xf]
  %v2707 = vld [vmem:[%s2693 + $0x4c] sm:$0xf]
  %v2708 = vld [vmem:[%s2693 + $0x54] sm:$0xf]
  %v2709 = vld [vmem:[%s2693 + $0x58] sm:$0xf]
  %v2710 = vld [vmem:[%s2693 + $0x60] sm:$0xf]
  %v2711 = vld [vmem:[%s2693 + $0x64] sm:$0xf]
  %v2712 = vld [vmem:[%s2693 + $0x6c] sm:$0xf]
  %v2713 = vld [vmem:[%s2693 + $0x70] sm:$0xf]
  %v2714 = vld [vmem:[%s2693 + $0x78] sm:$0xf]
  %v2715 = vld [vmem:[%s2693 + $0x7c] sm:$0xf]
  %v2716 = vld [vmem:[%s2693 + $0x84] sm:$0xf]
  %v2717 = vld [vmem:[%s2693 + $0x88] sm:$0xf]
  %v2718 = vld [vmem:[%s2693 + $0x90] sm:$0xf]
  %v2719 = vld [vmem:[%s2693 + $0x94] sm:$0xf]
  %v2720 = vld [vmem:[%s2693 + $0x9c] sm:$0xf]
  %v2721 = vld [vmem:[%s2693 + $0xa0] sm:$0xf]
  %v2722 = vld [vmem:[%s2693 + $0xa8] sm:$0xf]
  %v2723 = vld [vmem:[%s2693 + $0xac] sm:$0xf]
  %v2724 = vld [vmem:[%s2693 + $0xb4] sm:$0xf]
  %v2725 = vld [vmem:[%s2693 + $0xb8] sm:$0xf]
  %v2726 = vld [vmem:[%s2693 + $0xd8] sm:$0xf]
  %v2727 = vld [vmem:[%s2693 + $0xdc] sm:$0xf]
  %v2728 = vld [vmem:[%s2693 + $0xe4] sm:$0xf]
  %v2729 = vld [vmem:[%s2693 + $0xe8] sm:$0xf]
  %v2730 = vld [vmem:[%s2693 + $0xf0] sm:$0xf]
  %v2731 = vld [vmem:[%s2693 + $0xf4] sm:$0xf]
  %v2732 = vld [vmem:[%s2693 + $0xfc] sm:$0xf]
  %v2733 = vld [vmem:[%s2693 + $0x100] sm:$0xf]
  %v2734 = vld [vmem:[%s2693 + $0x108] sm:$0xf]
  %v2735 = vld [vmem:[%s2693 + $0x10c] sm:$0xf]
  %v2736 = vld [vmem:[%s2693 + $0x114] sm:$0xf]
  %v2737 = vld [vmem:[%s2693 + $0x118] sm:$0xf]
  %v2738 = vld [vmem:[%s2693 + $0x120] sm:$0xf]
  %v2739 = vld [vmem:[%s2693 + $0x124] sm:$0xf]
  %v2740 = vld [vmem:[%s2693 + $0x12c] sm:$0xf]
  %v2741 = vld [vmem:[%s2693 + $0x130] sm:$0xf]
  %v2742 = vld [vmem:[%s2693 + $0x138] sm:$0xf]
  %v2743 = vld [vmem:[%s2693 + $0x13c] sm:$0xf]
  %v2744 = vld [vmem:[%s2693 + $0x144] sm:$0xf]
  %v2745 = vld [vmem:[%s2693 + $0x148] sm:$0xf]
  %v2746 = vld [vmem:[%s2693 + $0x150] sm:$0xf]
  %v2747 = vld [vmem:[%s2693 + $0x154] sm:$0xf]
  %v2748 = vld [vmem:[%s2693 + $0x15c] sm:$0xf]
  %v2749 = vld [vmem:[%s2693 + $0x160] sm:$0xf]
  %v2750 = vld [vmem:[%s2693 + $0x168] sm:$0xf]
  %v2751 = vld [vmem:[%s2693 + $0x16c] sm:$0xf]
  %v2752 = vld [vmem:[%s2693 + $0x174] sm:$0xf]
  %v2753 = vld [vmem:[%s2693 + $0x178] sm:$0xf]
  %v2754 = vld [vmem:[%s2693 + $0x180] sm:$0xf]
  %v2755 = vld [vmem:[%s2693 + $0x184] sm:$0xf]
  %v2756 = vld [vmem:[%s2693 + $0x18c] sm:$0xf]
  %v2757 = vld [vmem:[%s2693 + $0x190] sm:$0xf]
  %v2758 = vunpack.c.l.bf16 %v2694
  %v2759 = vunpack.c.l.bf16 %v2695
  %v2760 = vunpack.c.l.bf16 %v2696
  %v2761 = vunpack.c.l.bf16 %v2697
  %v2762 = vunpack.c.l.bf16 %v2698
  %v2763 = vunpack.c.l.bf16 %v2699
  %v2764 = vunpack.c.l.bf16 %v2700
  %v2765 = vunpack.c.l.bf16 %v2701
  %v2766 = vunpack.c.l.bf16 %v2702
  %v2767 = vunpack.c.l.bf16 %v2703
  %v2768 = vunpack.c.l.bf16 %v2704
  %v2769 = vunpack.c.l.bf16 %v2705
  %v2770 = vunpack.c.l.bf16 %v2706
  %v2771 = vunpack.c.l.bf16 %v2707
  %v2772 = vunpack.c.l.bf16 %v2708
  %v2773 = vunpack.c.l.bf16 %v2709
  %v2774 = vunpack.c.l.bf16 %v2710
  %v2775 = vunpack.c.l.bf16 %v2711
  %v2776 = vunpack.c.l.bf16 %v2712
  %v2777 = vunpack.c.l.bf16 %v2713
  %v2778 = vunpack.c.l.bf16 %v2714
  %v2779 = vunpack.c.l.bf16 %v2715
  %v2780 = vunpack.c.l.bf16 %v2716
  %v2781 = vunpack.c.l.bf16 %v2717
  %v2782 = vunpack.c.l.bf16 %v2718
  %v2783 = vunpack.c.l.bf16 %v2719
  %v2784 = vunpack.c.l.bf16 %v2720
  %v2785 = vunpack.c.l.bf16 %v2721
  %v2786 = vunpack.c.l.bf16 %v2722
  %v2787 = vunpack.c.l.bf16 %v2723
  %v2788 = vunpack.c.l.bf16 %v2724
  %v2789 = vunpack.c.l.bf16 %v2725
  %v2790 = vunpack.c.l.bf16 %v2726
  %v2791 = vunpack.c.l.bf16 %v2727
  %v2792 = vunpack.c.l.bf16 %v2728
  %v2793 = vunpack.c.l.bf16 %v2729
  %v2794 = vunpack.c.l.bf16 %v2730
  %v2795 = vunpack.c.l.bf16 %v2731
  %v2796 = vunpack.c.l.bf16 %v2732
  %v2797 = vunpack.c.l.bf16 %v2733
  %v2798 = vunpack.c.l.bf16 %v2734
  %v2799 = vunpack.c.l.bf16 %v2735
  %v2800 = vunpack.c.l.bf16 %v2736
  %v2801 = vunpack.c.l.bf16 %v2737
  %v2802 = vunpack.c.l.bf16 %v2738
  %v2803 = vunpack.c.l.bf16 %v2739
  %v2804 = vunpack.c.l.bf16 %v2740
  %v2805 = vunpack.c.l.bf16 %v2741
  %v2806 = vunpack.c.l.bf16 %v2742
  %v2807 = vunpack.c.l.bf16 %v2743
  %v2808 = vunpack.c.l.bf16 %v2744
  %v2809 = vunpack.c.l.bf16 %v2745
  %v2810 = vunpack.c.l.bf16 %v2746
  %v2811 = vunpack.c.l.bf16 %v2747
  %v2812 = vunpack.c.l.bf16 %v2748
  %v2813 = vunpack.c.l.bf16 %v2749
  %v2814 = vunpack.c.l.bf16 %v2750
  %v2815 = vunpack.c.l.bf16 %v2751
  %v2816 = vunpack.c.l.bf16 %v2752
  %v2817 = vunpack.c.l.bf16 %v2753
  %v2818 = vunpack.c.l.bf16 %v2754
  %v2819 = vunpack.c.l.bf16 %v2755
  %v2820 = vunpack.c.l.bf16 %v2756
  %v2821 = vunpack.c.l.bf16 %v2757
  %v2823 = vlaneseq
  %v2824 = vshrl.u32 %v2823, 7
  %v2825 = vsub.s32 0, %v2824
  %v2826 = vrot.slane %v27, %v2825
  %v2828 = vmul.f32 %v2758, %v2826
  %v2829 = vmul.f32 %v2759, %v2826
  %v2830 = vmul.f32 %v2760, %v2826
  %v2831 = vmul.f32 %v2761, %v2826
  %v2832 = vmul.f32 %v2762, %v2826
  %v2833 = vmul.f32 %v2763, %v2826
  %v2834 = vmul.f32 %v2764, %v2826
  %v2835 = vmul.f32 %v2765, %v2826
  %v2836 = vmul.f32 %v2766, %v2826
  %v2837 = vmul.f32 %v2767, %v2826
  %v2838 = vmul.f32 %v2768, %v2826
  %v2839 = vmul.f32 %v2769, %v2826
  %v2840 = vmul.f32 %v2770, %v2826
  %v2841 = vmul.f32 %v2771, %v2826
  %v2842 = vmul.f32 %v2772, %v2826
  %v2843 = vmul.f32 %v2773, %v2826
  %v2844 = vmul.f32 %v2774, %v2826
  %v2845 = vmul.f32 %v2775, %v2826
  %v2846 = vmul.f32 %v2776, %v2826
  %v2847 = vmul.f32 %v2777, %v2826
  %v2848 = vmul.f32 %v2778, %v2826
  %v2849 = vmul.f32 %v2779, %v2826
  %v2850 = vmul.f32 %v2780, %v2826
  %v2851 = vmul.f32 %v2781, %v2826
  %v2852 = vmul.f32 %v2782, %v2826
  %v2853 = vmul.f32 %v2783, %v2826
  %v2854 = vmul.f32 %v2784, %v2826
  %v2855 = vmul.f32 %v2785, %v2826
  %v2856 = vmul.f32 %v2786, %v2826
  %v2857 = vmul.f32 %v2787, %v2826
  %v2858 = vmul.f32 %v2788, %v2826
  %v2859 = vmul.f32 %v2789, %v2826
  %v2860 = vmul.f32 %v2790, %v2826
  %v2861 = vmul.f32 %v2791, %v2826
  %v2862 = vmul.f32 %v2792, %v2826
  %v2863 = vmul.f32 %v2793, %v2826
  %v2864 = vmul.f32 %v2794, %v2826
  %v2865 = vmul.f32 %v2795, %v2826
  %v2866 = vmul.f32 %v2796, %v2826
  %v2867 = vmul.f32 %v2797, %v2826
  %v2868 = vmul.f32 %v2798, %v2826
  %v2869 = vmul.f32 %v2799, %v2826
  %v2870 = vmul.f32 %v2800, %v2826
  %v2871 = vmul.f32 %v2801, %v2826
  %v2872 = vmul.f32 %v2802, %v2826
  %v2873 = vmul.f32 %v2803, %v2826
  %v2874 = vmul.f32 %v2804, %v2826
  %v2875 = vmul.f32 %v2805, %v2826
  %v2876 = vmul.f32 %v2806, %v2826
  %v2877 = vmul.f32 %v2807, %v2826
  %v2878 = vmul.f32 %v2808, %v2826
  %v2879 = vmul.f32 %v2809, %v2826
  %v2880 = vmul.f32 %v2810, %v2826
  %v2881 = vmul.f32 %v2811, %v2826
  %v2882 = vmul.f32 %v2812, %v2826
  %v2883 = vmul.f32 %v2813, %v2826
  %v2884 = vmul.f32 %v2814, %v2826
  %v2885 = vmul.f32 %v2815, %v2826
  %v2886 = vmul.f32 %v2816, %v2826
  %v2887 = vmul.f32 %v2817, %v2826
  %v2888 = vmul.f32 %v2818, %v2826
  %v2889 = vmul.f32 %v2819, %v2826
  %v2890 = vmul.f32 %v2820, %v2826
  %v2891 = vmul.f32 %v2821, %v2826
  %v2892 = vadd.f32 %v2629, %v2828
  %v2893 = vadd.f32 %v2630, %v2829
  %v2894 = vadd.f32 %v2631, %v2830
  %v2895 = vadd.f32 %v2632, %v2831
  %v2896 = vadd.f32 %v2633, %v2832
  %v2897 = vadd.f32 %v2634, %v2833
  %v2898 = vadd.f32 %v2635, %v2834
  %v2899 = vadd.f32 %v2636, %v2835
  %v2900 = vadd.f32 %v2637, %v2836
  %v2901 = vadd.f32 %v2638, %v2837
  %v2902 = vadd.f32 %v2639, %v2838
  %v2903 = vadd.f32 %v2640, %v2839
  %v2904 = vadd.f32 %v2641, %v2840
  %v2905 = vadd.f32 %v2642, %v2841
  %v2906 = vadd.f32 %v2643, %v2842
  %v2907 = vadd.f32 %v2644, %v2843
  %v2908 = vadd.f32 %v2645, %v2844
  %v2909 = vadd.f32 %v2646, %v2845
  %v2910 = vadd.f32 %v2647, %v2846
  %v2911 = vadd.f32 %v2648, %v2847
  %v2912 = vadd.f32 %v2649, %v2848
  %v2913 = vadd.f32 %v2650, %v2849
  %v2914 = vadd.f32 %v2651, %v2850
  %v2915 = vadd.f32 %v2652, %v2851
  %v2916 = vadd.f32 %v2653, %v2852
  %v2917 = vadd.f32 %v2654, %v2853
  %v2918 = vadd.f32 %v2655, %v2854
  %v2919 = vadd.f32 %v2656, %v2855
  %v2920 = vadd.f32 %v2657, %v2856
  %v2921 = vadd.f32 %v2658, %v2857
  %v2922 = vadd.f32 %v2659, %v2858
  %v2923 = vadd.f32 %v2660, %v2859
  %v2924 = vadd.f32 %v2661, %v2860
  %v2925 = vadd.f32 %v2662, %v2861
  %v2926 = vadd.f32 %v2663, %v2862
  %v2927 = vadd.f32 %v2664, %v2863
  %v2928 = vadd.f32 %v2665, %v2864
  %v2929 = vadd.f32 %v2666, %v2865
  %v2930 = vadd.f32 %v2667, %v2866
  %v2931 = vadd.f32 %v2668, %v2867
  %v2932 = vadd.f32 %v2669, %v2868
  %v2933 = vadd.f32 %v2670, %v2869
  %v2934 = vadd.f32 %v2671, %v2870
  %v2935 = vadd.f32 %v2672, %v2871
  %v2936 = vadd.f32 %v2673, %v2872
  %v2937 = vadd.f32 %v2674, %v2873
  %v2938 = vadd.f32 %v2675, %v2874
  %v2939 = vadd.f32 %v2676, %v2875
  %v2940 = vadd.f32 %v2677, %v2876
  %v2941 = vadd.f32 %v2678, %v2877
  %v2942 = vadd.f32 %v2679, %v2878
  %v2943 = vadd.f32 %v2680, %v2879
  %v2944 = vadd.f32 %v2681, %v2880
  %v2945 = vadd.f32 %v2682, %v2881
  %v2946 = vadd.f32 %v2683, %v2882
  %v2947 = vadd.f32 %v2684, %v2883
  %v2948 = vadd.f32 %v2685, %v2884
  %v2949 = vadd.f32 %v2686, %v2885
  %v2950 = vadd.f32 %v2687, %v2886
  %v2951 = vadd.f32 %v2688, %v2887
  %v2952 = vadd.f32 %v2689, %v2888
  %v2953 = vadd.f32 %v2690, %v2889
  %v2954 = vadd.f32 %v2691, %v2890
  %v2955 = vadd.f32 %v2692, %v2891
  %v2956 = vld [vmem:[%s2693 + $0x8] sm:$0x1]
  %v2957 = vld [vmem:[%s2693 + $0x14] sm:$0x1]
  %v2958 = vld [vmem:[%s2693 + $0x20] sm:$0x1]
  %v2959 = vld [vmem:[%s2693 + $0x2c] sm:$0x1]
  %v2960 = vld [vmem:[%s2693 + $0x38] sm:$0x1]
  %v2961 = vld [vmem:[%s2693 + $0x44] sm:$0x1]
  %v2962 = vld [vmem:[%s2693 + $0x50] sm:$0x1]
  %v2963 = vld [vmem:[%s2693 + $0x5c] sm:$0x1]
  %v2964 = vld [vmem:[%s2693 + $0x68] sm:$0x1]
  %v2965 = vld [vmem:[%s2693 + $0x74] sm:$0x1]
  %v2966 = vld [vmem:[%s2693 + $0x80] sm:$0x1]
  %v2967 = vld [vmem:[%s2693 + $0x8c] sm:$0x1]
  %v2968 = vld [vmem:[%s2693 + $0x98] sm:$0x1]
  %v2969 = vld [vmem:[%s2693 + $0xa4] sm:$0x1]
  %v2970 = vld [vmem:[%s2693 + $0xb0] sm:$0x1]
  %v2971 = vld [vmem:[%s2693 + $0xbc] sm:$0x1]
  %v2972 = vld [vmem:[%s2693 + $0xe0] sm:$0x1]
  %v2973 = vld [vmem:[%s2693 + $0xec] sm:$0x1]
  %v2974 = vld [vmem:[%s2693 + $0xf8] sm:$0x1]
  %v2975 = vld [vmem:[%s2693 + $0x104] sm:$0x1]
  %v2976 = vld [vmem:[%s2693 + $0x110] sm:$0x1]
  %v2977 = vld [vmem:[%s2693 + $0x11c] sm:$0x1]
  %v2978 = vld [vmem:[%s2693 + $0x128] sm:$0x1]
  %v2979 = vld [vmem:[%s2693 + $0x134] sm:$0x1]
  %v2980 = vld [vmem:[%s2693 + $0x140] sm:$0x1]
  %v2981 = vld [vmem:[%s2693 + $0x14c] sm:$0x1]
  %v2982 = vld [vmem:[%s2693 + $0x158] sm:$0x1]
  %v2983 = vld [vmem:[%s2693 + $0x164] sm:$0x1]
  %v2984 = vld [vmem:[%s2693 + $0x170] sm:$0x1]
  %v2985 = vld [vmem:[%s2693 + $0x17c] sm:$0x1]
  %v2986 = vld [vmem:[%s2693 + $0x188] sm:$0x1]
  %v2987 = vld [vmem:[%s2693 + $0x194] sm:$0x1]
  %v2988 = vunpack.c.l.bf16 %v2956
  %v2989 = vunpack.c.l.bf16 %v2957
  %v2990 = vunpack.c.l.bf16 %v2958
  %v2991 = vunpack.c.l.bf16 %v2959
  %v2992 = vunpack.c.l.bf16 %v2960
  %v2993 = vunpack.c.l.bf16 %v2961
  %v2994 = vunpack.c.l.bf16 %v2962
  %v2995 = vunpack.c.l.bf16 %v2963
  %v2996 = vunpack.c.l.bf16 %v2964
  %v2997 = vunpack.c.l.bf16 %v2965
  %v2998 = vunpack.c.l.bf16 %v2966
  %v2999 = vunpack.c.l.bf16 %v2967
  %v3000 = vunpack.c.l.bf16 %v2968
  %v3001 = vunpack.c.l.bf16 %v2969
  %v3002 = vunpack.c.l.bf16 %v2970
  %v3003 = vunpack.c.l.bf16 %v2971
  %v3004 = vunpack.c.l.bf16 %v2972
  %v3005 = vunpack.c.l.bf16 %v2973
  %v3006 = vunpack.c.l.bf16 %v2974
  %v3007 = vunpack.c.l.bf16 %v2975
  %v3008 = vunpack.c.l.bf16 %v2976
  %v3009 = vunpack.c.l.bf16 %v2977
  %v3010 = vunpack.c.l.bf16 %v2978
  %v3011 = vunpack.c.l.bf16 %v2979
  %v3012 = vunpack.c.l.bf16 %v2980
  %v3013 = vunpack.c.l.bf16 %v2981
  %v3014 = vunpack.c.l.bf16 %v2982
  %v3015 = vunpack.c.l.bf16 %v2983
  %v3016 = vunpack.c.l.bf16 %v2984
  %v3017 = vunpack.c.l.bf16 %v2985
  %v3018 = vunpack.c.l.bf16 %v2986
  %v3019 = vunpack.c.l.bf16 %v2987
  %v3021 = vlaneseq
  %v3022 = vshrl.u32 %v3021, 7
  %v3023 = vsub.s32 0, %v3022
  %v3024 = vrot.slane %v28, %v3023
  %v3026 = vmul.f32 %v2758, %v3024
  %v3027 = vmul.f32 %v2759, %v3024
  %v3028 = vmul.f32 %v2988, %v3024
  %v3029 = vmul.f32 %v2760, %v3024
  %v3030 = vmul.f32 %v2761, %v3024
  %v3031 = vmul.f32 %v2989, %v3024
  %v3032 = vmul.f32 %v2762, %v3024
  %v3033 = vmul.f32 %v2763, %v3024
  %v3034 = vmul.f32 %v2990, %v3024
  %v3035 = vmul.f32 %v2764, %v3024
  %v3036 = vmul.f32 %v2765, %v3024
  %v3037 = vmul.f32 %v2991, %v3024
  %v3038 = vmul.f32 %v2766, %v3024
  %v3039 = vmul.f32 %v2767, %v3024
  %v3040 = vmul.f32 %v2992, %v3024
  %v3041 = vmul.f32 %v2768, %v3024
  %v3042 = vmul.f32 %v2769, %v3024
  %v3043 = vmul.f32 %v2993, %v3024
  %v3044 = vmul.f32 %v2770, %v3024
  %v3045 = vmul.f32 %v2771, %v3024
  %v3046 = vmul.f32 %v2994, %v3024
  %v3047 = vmul.f32 %v2772, %v3024
  %v3048 = vmul.f32 %v2773, %v3024
  %v3049 = vmul.f32 %v2995, %v3024
  %v3050 = vmul.f32 %v2774, %v3024
  %v3051 = vmul.f32 %v2775, %v3024
  %v3052 = vmul.f32 %v2996, %v3024
  %v3053 = vmul.f32 %v2776, %v3024
  %v3054 = vmul.f32 %v2777, %v3024
  %v3055 = vmul.f32 %v2997, %v3024
  %v3056 = vmul.f32 %v2778, %v3024
  %v3057 = vmul.f32 %v2779, %v3024
  %v3058 = vmul.f32 %v2998, %v3024
  %v3059 = vmul.f32 %v2780, %v3024
  %v3060 = vmul.f32 %v2781, %v3024
  %v3061 = vmul.f32 %v2999, %v3024
  %v3062 = vmul.f32 %v2782, %v3024
  %v3063 = vmul.f32 %v2783, %v3024
  %v3064 = vmul.f32 %v3000, %v3024
  %v3065 = vmul.f32 %v2784, %v3024
  %v3066 = vmul.f32 %v2785, %v3024
  %v3067 = vmul.f32 %v3001, %v3024
  %v3068 = vmul.f32 %v2786, %v3024
  %v3069 = vmul.f32 %v2787, %v3024
  %v3070 = vmul.f32 %v3002, %v3024
  %v3071 = vmul.f32 %v2788, %v3024
  %v3072 = vmul.f32 %v2789, %v3024
  %v3073 = vmul.f32 %v3003, %v3024
  %v3074 = vmul.f32 %v2790, %v3024
  %v3075 = vmul.f32 %v2791, %v3024
  %v3076 = vmul.f32 %v3004, %v3024
  %v3077 = vmul.f32 %v2792, %v3024
  %v3078 = vmul.f32 %v2793, %v3024
  %v3079 = vmul.f32 %v3005, %v3024
  %v3080 = vmul.f32 %v2794, %v3024
  %v3081 = vmul.f32 %v2795, %v3024
  %v3082 = vmul.f32 %v3006, %v3024
  %v3083 = vmul.f32 %v2796, %v3024
  %v3084 = vmul.f32 %v2797, %v3024
  %v3085 = vmul.f32 %v3007, %v3024
  %v3086 = vmul.f32 %v2798, %v3024
  %v3087 = vmul.f32 %v2799, %v3024
  %v3088 = vmul.f32 %v3008, %v3024
  %v3089 = vmul.f32 %v2800, %v3024
  %v3090 = vmul.f32 %v2801, %v3024
  %v3091 = vmul.f32 %v3009, %v3024
  %v3092 = vmul.f32 %v2802, %v3024
  %v3093 = vmul.f32 %v2803, %v3024
  %v3094 = vmul.f32 %v3010, %v3024
  %v3095 = vmul.f32 %v2804, %v3024
  %v3096 = vmul.f32 %v2805, %v3024
  %v3097 = vmul.f32 %v3011, %v3024
  %v3098 = vmul.f32 %v2806, %v3024
  %v3099 = vmul.f32 %v2807, %v3024
  %v3100 = vmul.f32 %v3012, %v3024
  %v3101 = vmul.f32 %v2808, %v3024
  %v3102 = vmul.f32 %v2809, %v3024
  %v3103 = vmul.f32 %v3013, %v3024
  %v3104 = vmul.f32 %v2810, %v3024
  %v3105 = vmul.f32 %v2811, %v3024
  %v3106 = vmul.f32 %v3014, %v3024
  %v3107 = vmul.f32 %v2812, %v3024
  %v3108 = vmul.f32 %v2813, %v3024
  %v3109 = vmul.f32 %v3015, %v3024
  %v3110 = vmul.f32 %v2814, %v3024
  %v3111 = vmul.f32 %v2815, %v3024
  %v3112 = vmul.f32 %v3016, %v3024
  %v3113 = vmul.f32 %v2816, %v3024
  %v3114 = vmul.f32 %v2817, %v3024
  %v3115 = vmul.f32 %v3017, %v3024
  %v3116 = vmul.f32 %v2818, %v3024
  %v3117 = vmul.f32 %v2819, %v3024
  %v3118 = vmul.f32 %v3018, %v3024
  %v3119 = vmul.f32 %v2820, %v3024
  %v3120 = vmul.f32 %v2821, %v3024
  %v3121 = vmul.f32 %v3019, %v3024
  %v3218 = vrot.slane %v3026, 1
  %v3219 = vrot.slane %v3027, 1
  %v3220 = vsel %vm490, %v3218, %v3219
  %v3221 = vrot.slane %v3028, 1
  %v3222 = vsel %vm490, %v3219, %v3221
  %v3223 = vrot.slane %v3029, 1
  %v3224 = vrot.slane %v3030, 1
  %v3225 = vsel %vm490, %v3223, %v3224
  %v3226 = vrot.slane %v3031, 1
  %v3227 = vsel %vm490, %v3224, %v3226
  %v3228 = vrot.slane %v3032, 1
  %v3229 = vrot.slane %v3033, 1
  %v3230 = vsel %vm490, %v3228, %v3229
  %v3231 = vrot.slane %v3034, 1
  %v3232 = vsel %vm490, %v3229, %v3231
  %v3233 = vrot.slane %v3035, 1
  %v3234 = vrot.slane %v3036, 1
  %v3235 = vsel %vm490, %v3233, %v3234
  %v3236 = vrot.slane %v3037, 1
  %v3237 = vsel %vm490, %v3234, %v3236
  %v3238 = vrot.slane %v3038, 1
  %v3239 = vrot.slane %v3039, 1
  %v3240 = vsel %vm490, %v3238, %v3239
  %v3241 = vrot.slane %v3040, 1
  %v3242 = vsel %vm490, %v3239, %v3241
  %v3243 = vrot.slane %v3041, 1
  %v3244 = vrot.slane %v3042, 1
  %v3245 = vsel %vm490, %v3243, %v3244
  %v3246 = vrot.slane %v3043, 1
  %v3247 = vsel %vm490, %v3244, %v3246
  %v3248 = vrot.slane %v3044, 1
  %v3249 = vrot.slane %v3045, 1
  %v3250 = vsel %vm490, %v3248, %v3249
  %v3251 = vrot.slane %v3046, 1
  %v3252 = vsel %vm490, %v3249, %v3251
  %v3253 = vrot.slane %v3047, 1
  %v3254 = vrot.slane %v3048, 1
  %v3255 = vsel %vm490, %v3253, %v3254
  %v3256 = vrot.slane %v3049, 1
  %v3257 = vsel %vm490, %v3254, %v3256
  %v3258 = vrot.slane %v3050, 1
  %v3259 = vrot.slane %v3051, 1
  %v3260 = vsel %vm490, %v3258, %v3259
  %v3261 = vrot.slane %v3052, 1
  %v3262 = vsel %vm490, %v3259, %v3261
  %v3263 = vrot.slane %v3053, 1
  %v3264 = vrot.slane %v3054, 1
  %v3265 = vsel %vm490, %v3263, %v3264
  %v3266 = vrot.slane %v3055, 1
  %v3267 = vsel %vm490, %v3264, %v3266
  %v3268 = vrot.slane %v3056, 1
  %v3269 = vrot.slane %v3057, 1
  %v3270 = vsel %vm490, %v3268, %v3269
  %v3271 = vrot.slane %v3058, 1
  %v3272 = vsel %vm490, %v3269, %v3271
  %v3273 = vrot.slane %v3059, 1
  %v3274 = vrot.slane %v3060, 1
  %v3275 = vsel %vm490, %v3273, %v3274
  %v3276 = vrot.slane %v3061, 1
  %v3277 = vsel %vm490, %v3274, %v3276
  %v3278 = vrot.slane %v3062, 1
  %v3279 = vrot.slane %v3063, 1
  %v3280 = vsel %vm490, %v3278, %v3279
  %v3281 = vrot.slane %v3064, 1
  %v3282 = vsel %vm490, %v3279, %v3281
  %v3283 = vrot.slane %v3065, 1
  %v3284 = vrot.slane %v3066, 1
  %v3285 = vsel %vm490, %v3283, %v3284
  %v3286 = vrot.slane %v3067, 1
  %v3287 = vsel %vm490, %v3284, %v3286
  %v3288 = vrot.slane %v3068, 1
  %v3289 = vrot.slane %v3069, 1
  %v3290 = vsel %vm490, %v3288, %v3289
  %v3291 = vrot.slane %v3070, 1
  %v3292 = vsel %vm490, %v3289, %v3291
  %v3293 = vrot.slane %v3071, 1
  %v3294 = vrot.slane %v3072, 1
  %v3295 = vsel %vm490, %v3293, %v3294
  %v3296 = vrot.slane %v3073, 1
  %v3297 = vsel %vm490, %v3294, %v3296
  %v3298 = vrot.slane %v3074, 1
  %v3299 = vrot.slane %v3075, 1
  %v3300 = vsel %vm490, %v3298, %v3299
  %v3301 = vrot.slane %v3076, 1
  %v3302 = vsel %vm490, %v3299, %v3301
  %v3303 = vrot.slane %v3077, 1
  %v3304 = vrot.slane %v3078, 1
  %v3305 = vsel %vm490, %v3303, %v3304
  %v3306 = vrot.slane %v3079, 1
  %v3307 = vsel %vm490, %v3304, %v3306
  %v3308 = vrot.slane %v3080, 1
  %v3309 = vrot.slane %v3081, 1
  %v3310 = vsel %vm490, %v3308, %v3309
  %v3311 = vrot.slane %v3082, 1
  %v3312 = vsel %vm490, %v3309, %v3311
  %v3313 = vrot.slane %v3083, 1
  %v3314 = vrot.slane %v3084, 1
  %v3315 = vsel %vm490, %v3313, %v3314
  %v3316 = vrot.slane %v3085, 1
  %v3317 = vsel %vm490, %v3314, %v3316
  %v3318 = vrot.slane %v3086, 1
  %v3319 = vrot.slane %v3087, 1
  %v3320 = vsel %vm490, %v3318, %v3319
  %v3321 = vrot.slane %v3088, 1
  %v3322 = vsel %vm490, %v3319, %v3321
  %v3323 = vrot.slane %v3089, 1
  %v3324 = vrot.slane %v3090, 1
  %v3325 = vsel %vm490, %v3323, %v3324
  %v3326 = vrot.slane %v3091, 1
  %v3327 = vsel %vm490, %v3324, %v3326
  %v3328 = vrot.slane %v3092, 1
  %v3329 = vrot.slane %v3093, 1
  %v3330 = vsel %vm490, %v3328, %v3329
  %v3331 = vrot.slane %v3094, 1
  %v3332 = vsel %vm490, %v3329, %v3331
  %v3333 = vrot.slane %v3095, 1
  %v3334 = vrot.slane %v3096, 1
  %v3335 = vsel %vm490, %v3333, %v3334
  %v3336 = vrot.slane %v3097, 1
  %v3337 = vsel %vm490, %v3334, %v3336
  %v3338 = vrot.slane %v3098, 1
  %v3339 = vrot.slane %v3099, 1
  %v3340 = vsel %vm490, %v3338, %v3339
  %v3341 = vrot.slane %v3100, 1
  %v3342 = vsel %vm490, %v3339, %v3341
  %v3343 = vrot.slane %v3101, 1
  %v3344 = vrot.slane %v3102, 1
  %v3345 = vsel %vm490, %v3343, %v3344
  %v3346 = vrot.slane %v3103, 1
  %v3347 = vsel %vm490, %v3344, %v3346
  %v3348 = vrot.slane %v3104, 1
  %v3349 = vrot.slane %v3105, 1
  %v3350 = vsel %vm490, %v3348, %v3349
  %v3351 = vrot.slane %v3106, 1
  %v3352 = vsel %vm490, %v3349, %v3351
  %v3353 = vrot.slane %v3107, 1
  %v3354 = vrot.slane %v3108, 1
  %v3355 = vsel %vm490, %v3353, %v3354
  %v3356 = vrot.slane %v3109, 1
  %v3357 = vsel %vm490, %v3354, %v3356
  %v3358 = vrot.slane %v3110, 1
  %v3359 = vrot.slane %v3111, 1
  %v3360 = vsel %vm490, %v3358, %v3359
  %v3361 = vrot.slane %v3112, 1
  %v3362 = vsel %vm490, %v3359, %v3361
  %v3363 = vrot.slane %v3113, 1
  %v3364 = vrot.slane %v3114, 1
  %v3365 = vsel %vm490, %v3363, %v3364
  %v3366 = vrot.slane %v3115, 1
  %v3367 = vsel %vm490, %v3364, %v3366
  %v3368 = vrot.slane %v3116, 1
  %v3369 = vrot.slane %v3117, 1
  %v3370 = vsel %vm490, %v3368, %v3369
  %v3371 = vrot.slane %v3118, 1
  %v3372 = vsel %vm490, %v3369, %v3371
  %v3373 = vrot.slane %v3119, 1
  %v3374 = vrot.slane %v3120, 1
  %v3375 = vsel %vm490, %v3373, %v3374
  %v3376 = vrot.slane %v3121, 1
  %v3377 = vsel %vm490, %v3374, %v3376
  %v3442 = vadd.f32 %v2892, %v3220
  %v3443 = vadd.f32 %v2893, %v3222
  %v3444 = vadd.f32 %v2894, %v3225
  %v3445 = vadd.f32 %v2895, %v3227
  %v3446 = vadd.f32 %v2896, %v3230
  %v3447 = vadd.f32 %v2897, %v3232
  %v3448 = vadd.f32 %v2898, %v3235
  %v3449 = vadd.f32 %v2899, %v3237
  %v3450 = vadd.f32 %v2900, %v3240
  %v3451 = vadd.f32 %v2901, %v3242
  %v3452 = vadd.f32 %v2902, %v3245
  %v3453 = vadd.f32 %v2903, %v3247
  %v3454 = vadd.f32 %v2904, %v3250
  %v3455 = vadd.f32 %v2905, %v3252
  %v3456 = vadd.f32 %v2906, %v3255
  %v3457 = vadd.f32 %v2907, %v3257
  %v3458 = vadd.f32 %v2908, %v3260
  %v3459 = vadd.f32 %v2909, %v3262
  %v3460 = vadd.f32 %v2910, %v3265
  %v3461 = vadd.f32 %v2911, %v3267
  %v3462 = vadd.f32 %v2912, %v3270
  %v3463 = vadd.f32 %v2913, %v3272
  %v3464 = vadd.f32 %v2914, %v3275
  %v3465 = vadd.f32 %v2915, %v3277
  %v3466 = vadd.f32 %v2916, %v3280
  %v3467 = vadd.f32 %v2917, %v3282
  %v3468 = vadd.f32 %v2918, %v3285
  %v3469 = vadd.f32 %v2919, %v3287
  %v3470 = vadd.f32 %v2920, %v3290
  %v3471 = vadd.f32 %v2921, %v3292
  %v3472 = vadd.f32 %v2922, %v3295
  %v3473 = vadd.f32 %v2923, %v3297
  %v3474 = vadd.f32 %v2924, %v3300
  %v3475 = vadd.f32 %v2925, %v3302
  %v3476 = vadd.f32 %v2926, %v3305
  %v3477 = vadd.f32 %v2927, %v3307
  %v3478 = vadd.f32 %v2928, %v3310
  %v3479 = vadd.f32 %v2929, %v3312
  %v3480 = vadd.f32 %v2930, %v3315
  %v3481 = vadd.f32 %v2931, %v3317
  %v3482 = vadd.f32 %v2932, %v3320
  %v3483 = vadd.f32 %v2933, %v3322
  %v3484 = vadd.f32 %v2934, %v3325
  %v3485 = vadd.f32 %v2935, %v3327
  %v3486 = vadd.f32 %v2936, %v3330
  %v3487 = vadd.f32 %v2937, %v3332
  %v3488 = vadd.f32 %v2938, %v3335
  %v3489 = vadd.f32 %v2939, %v3337
  %v3490 = vadd.f32 %v2940, %v3340
  %v3491 = vadd.f32 %v2941, %v3342
  %v3492 = vadd.f32 %v2942, %v3345
  %v3493 = vadd.f32 %v2943, %v3347
  %v3494 = vadd.f32 %v2944, %v3350
  %v3495 = vadd.f32 %v2945, %v3352
  %v3496 = vadd.f32 %v2946, %v3355
  %v3497 = vadd.f32 %v2947, %v3357
  %v3498 = vadd.f32 %v2948, %v3360
  %v3499 = vadd.f32 %v2949, %v3362
  %v3500 = vadd.f32 %v2950, %v3365
  %v3501 = vadd.f32 %v2951, %v3367
  %v3502 = vadd.f32 %v2952, %v3370
  %v3503 = vadd.f32 %v2953, %v3372
  %v3504 = vadd.f32 %v2954, %v3375
  %v3505 = vadd.f32 %v2955, %v3377
  %v3506 = vld [vmem:[%s2693] sm:$0xe]
  %v3507 = vld [vmem:[%s2693 + $0xc] sm:$0xe]
  %v3508 = vld [vmem:[%s2693 + $0x18] sm:$0xe]
  %v3509 = vld [vmem:[%s2693 + $0x24] sm:$0xe]
  %v3510 = vld [vmem:[%s2693 + $0x30] sm:$0xe]
  %v3511 = vld [vmem:[%s2693 + $0x3c] sm:$0xe]
  %v3512 = vld [vmem:[%s2693 + $0x48] sm:$0xe]
  %v3513 = vld [vmem:[%s2693 + $0x54] sm:$0xe]
  %v3514 = vld [vmem:[%s2693 + $0x60] sm:$0xe]
  %v3515 = vld [vmem:[%s2693 + $0x6c] sm:$0xe]
  %v3516 = vld [vmem:[%s2693 + $0x78] sm:$0xe]
  %v3517 = vld [vmem:[%s2693 + $0x84] sm:$0xe]
  %v3518 = vld [vmem:[%s2693 + $0x90] sm:$0xe]
  %v3519 = vld [vmem:[%s2693 + $0x9c] sm:$0xe]
  %v3520 = vld [vmem:[%s2693 + $0xa8] sm:$0xe]
  %v3521 = vld [vmem:[%s2693 + $0xb4] sm:$0xe]
  %v3522 = vld [vmem:[%s2693 + $0xd8] sm:$0xe]
  %v3523 = vld [vmem:[%s2693 + $0xe4] sm:$0xe]
  %v3524 = vld [vmem:[%s2693 + $0xf0] sm:$0xe]
  %v3525 = vld [vmem:[%s2693 + $0xfc] sm:$0xe]
  %v3526 = vld [vmem:[%s2693 + $0x108] sm:$0xe]
  %v3527 = vld [vmem:[%s2693 + $0x114] sm:$0xe]
  %v3528 = vld [vmem:[%s2693 + $0x120] sm:$0xe]
  %v3529 = vld [vmem:[%s2693 + $0x12c] sm:$0xe]
  %v3530 = vld [vmem:[%s2693 + $0x138] sm:$0xe]
  %v3531 = vld [vmem:[%s2693 + $0x144] sm:$0xe]
  %v3532 = vld [vmem:[%s2693 + $0x150] sm:$0xe]
  %v3533 = vld [vmem:[%s2693 + $0x15c] sm:$0xe]
  %v3534 = vld [vmem:[%s2693 + $0x168] sm:$0xe]
  %v3535 = vld [vmem:[%s2693 + $0x174] sm:$0xe]
  %v3536 = vld [vmem:[%s2693 + $0x180] sm:$0xe]
  %v3537 = vld [vmem:[%s2693 + $0x18c] sm:$0xe]
  %v3538 = vunpack.c.l.bf16 %v3506
  %v3539 = vunpack.c.l.bf16 %v3507
  %v3540 = vunpack.c.l.bf16 %v3508
  %v3541 = vunpack.c.l.bf16 %v3509
  %v3542 = vunpack.c.l.bf16 %v3510
  %v3543 = vunpack.c.l.bf16 %v3511
  %v3544 = vunpack.c.l.bf16 %v3512
  %v3545 = vunpack.c.l.bf16 %v3513
  %v3546 = vunpack.c.l.bf16 %v3514
  %v3547 = vunpack.c.l.bf16 %v3515
  %v3548 = vunpack.c.l.bf16 %v3516
  %v3549 = vunpack.c.l.bf16 %v3517
  %v3550 = vunpack.c.l.bf16 %v3518
  %v3551 = vunpack.c.l.bf16 %v3519
  %v3552 = vunpack.c.l.bf16 %v3520
  %v3553 = vunpack.c.l.bf16 %v3521
  %v3554 = vunpack.c.l.bf16 %v3522
  %v3555 = vunpack.c.l.bf16 %v3523
  %v3556 = vunpack.c.l.bf16 %v3524
  %v3557 = vunpack.c.l.bf16 %v3525
  %v3558 = vunpack.c.l.bf16 %v3526
  %v3559 = vunpack.c.l.bf16 %v3527
  %v3560 = vunpack.c.l.bf16 %v3528
  %v3561 = vunpack.c.l.bf16 %v3529
  %v3562 = vunpack.c.l.bf16 %v3530
  %v3563 = vunpack.c.l.bf16 %v3531
  %v3564 = vunpack.c.l.bf16 %v3532
  %v3565 = vunpack.c.l.bf16 %v3533
  %v3566 = vunpack.c.l.bf16 %v3534
  %v3567 = vunpack.c.l.bf16 %v3535
  %v3568 = vunpack.c.l.bf16 %v3536
  %v3569 = vunpack.c.l.bf16 %v3537
  %v3571 = vlaneseq
  %v3572 = vshrl.u32 %v3571, 7
  %v3573 = vsub.s32 0, %v3572
  %v3574 = vrot.slane %v29, %v3573
  %v3576 = vmul.f32 %v3538, %v3574
  %v3577 = vmul.f32 %v2759, %v3574
  %v3578 = vmul.f32 %v2988, %v3574
  %v3579 = vmul.f32 %v3539, %v3574
  %v3580 = vmul.f32 %v2761, %v3574
  %v3581 = vmul.f32 %v2989, %v3574
  %v3582 = vmul.f32 %v3540, %v3574
  %v3583 = vmul.f32 %v2763, %v3574
  %v3584 = vmul.f32 %v2990, %v3574
  %v3585 = vmul.f32 %v3541, %v3574
  %v3586 = vmul.f32 %v2765, %v3574
  %v3587 = vmul.f32 %v2991, %v3574
  %v3588 = vmul.f32 %v3542, %v3574
  %v3589 = vmul.f32 %v2767, %v3574
  %v3590 = vmul.f32 %v2992, %v3574
  %v3591 = vmul.f32 %v3543, %v3574
  %v3592 = vmul.f32 %v2769, %v3574
  %v3593 = vmul.f32 %v2993, %v3574
  %v3594 = vmul.f32 %v3544, %v3574
  %v3595 = vmul.f32 %v2771, %v3574
  %v3596 = vmul.f32 %v2994, %v3574
  %v3597 = vmul.f32 %v3545, %v3574
  %v3598 = vmul.f32 %v2773, %v3574
  %v3599 = vmul.f32 %v2995, %v3574
  %v3600 = vmul.f32 %v3546, %v3574
  %v3601 = vmul.f32 %v2775, %v3574
  %v3602 = vmul.f32 %v2996, %v3574
  %v3603 = vmul.f32 %v3547, %v3574
  %v3604 = vmul.f32 %v2777, %v3574
  %v3605 = vmul.f32 %v2997, %v3574
  %v3606 = vmul.f32 %v3548, %v3574
  %v3607 = vmul.f32 %v2779, %v3574
  %v3608 = vmul.f32 %v2998, %v3574
  %v3609 = vmul.f32 %v3549, %v3574
  %v3610 = vmul.f32 %v2781, %v3574
  %v3611 = vmul.f32 %v2999, %v3574
  %v3612 = vmul.f32 %v3550, %v3574
  %v3613 = vmul.f32 %v2783, %v3574
  %v3614 = vmul.f32 %v3000, %v3574
  %v3615 = vmul.f32 %v3551, %v3574
  %v3616 = vmul.f32 %v2785, %v3574
  %v3617 = vmul.f32 %v3001, %v3574
  %v3618 = vmul.f32 %v3552, %v3574
  %v3619 = vmul.f32 %v2787, %v3574
  %v3620 = vmul.f32 %v3002, %v3574
  %v3621 = vmul.f32 %v3553, %v3574
  %v3622 = vmul.f32 %v2789, %v3574
  %v3623 = vmul.f32 %v3003, %v3574
  %v3624 = vmul.f32 %v3554, %v3574
  %v3625 = vmul.f32 %v2791, %v3574
  %v3626 = vmul.f32 %v3004, %v3574
  %v3627 = vmul.f32 %v3555, %v3574
  %v3628 = vmul.f32 %v2793, %v3574
  %v3629 = vmul.f32 %v3005, %v3574
  %v3630 = vmul.f32 %v3556, %v3574
  %v3631 = vmul.f32 %v2795, %v3574
  %v3632 = vmul.f32 %v3006, %v3574
  %v3633 = vmul.f32 %v3557, %v3574
  %v3634 = vmul.f32 %v2797, %v3574
  %v3635 = vmul.f32 %v3007, %v3574
  %v3636 = vmul.f32 %v3558, %v3574
  %v3637 = vmul.f32 %v2799, %v3574
  %v3638 = vmul.f32 %v3008, %v3574
  %v3639 = vmul.f32 %v3559, %v3574
  %v3640 = vmul.f32 %v2801, %v3574
  %v3641 = vmul.f32 %v3009, %v3574
  %v3642 = vmul.f32 %v3560, %v3574
  %v3643 = vmul.f32 %v2803, %v3574
  %v3644 = vmul.f32 %v3010, %v3574
  %v3645 = vmul.f32 %v3561, %v3574
  %v3646 = vmul.f32 %v2805, %v3574
  %v3647 = vmul.f32 %v3011, %v3574
  %v3648 = vmul.f32 %v3562, %v3574
  %v3649 = vmul.f32 %v2807, %v3574
  %v3650 = vmul.f32 %v3012, %v3574
  %v3651 = vmul.f32 %v3563, %v3574
  %v3652 = vmul.f32 %v2809, %v3574
  %v3653 = vmul.f32 %v3013, %v3574
  %v3654 = vmul.f32 %v3564, %v3574
  %v3655 = vmul.f32 %v2811, %v3574
  %v3656 = vmul.f32 %v3014, %v3574
  %v3657 = vmul.f32 %v3565, %v3574
  %v3658 = vmul.f32 %v2813, %v3574
  %v3659 = vmul.f32 %v3015, %v3574
  %v3660 = vmul.f32 %v3566, %v3574
  %v3661 = vmul.f32 %v2815, %v3574
  %v3662 = vmul.f32 %v3016, %v3574
  %v3663 = vmul.f32 %v3567, %v3574
  %v3664 = vmul.f32 %v2817, %v3574
  %v3665 = vmul.f32 %v3017, %v3574
  %v3666 = vmul.f32 %v3568, %v3574
  %v3667 = vmul.f32 %v2819, %v3574
  %v3668 = vmul.f32 %v3018, %v3574
  %v3669 = vmul.f32 %v3569, %v3574
  %v3670 = vmul.f32 %v2821, %v3574
  %v3671 = vmul.f32 %v3019, %v3574
  %v3768 = vrot.slane %v3576, 2
  %v3769 = vrot.slane %v3577, 2
  %v3770 = vsel %vm1041, %v3768, %v3769
  %v3771 = vrot.slane %v3578, 2
  %v3772 = vsel %vm1041, %v3769, %v3771
  %v3773 = vrot.slane %v3579, 2
  %v3774 = vrot.slane %v3580, 2
  %v3775 = vsel %vm1041, %v3773, %v3774
  %v3776 = vrot.slane %v3581, 2
  %v3777 = vsel %vm1041, %v3774, %v3776
  %v3778 = vrot.slane %v3582, 2
  %v3779 = vrot.slane %v3583, 2
  %v3780 = vsel %vm1041, %v3778, %v3779
  %v3781 = vrot.slane %v3584, 2
  %v3782 = vsel %vm1041, %v3779, %v3781
  %v3783 = vrot.slane %v3585, 2
  %v3784 = vrot.slane %v3586, 2
  %v3785 = vsel %vm1041, %v3783, %v3784
  %v3786 = vrot.slane %v3587, 2
  %v3787 = vsel %vm1041, %v3784, %v3786
  %v3788 = vrot.slane %v3588, 2
  %v3789 = vrot.slane %v3589, 2
  %v3790 = vsel %vm1041, %v3788, %v3789
  %v3791 = vrot.slane %v3590, 2
  %v3792 = vsel %vm1041, %v3789, %v3791
  %v3793 = vrot.slane %v3591, 2
  %v3794 = vrot.slane %v3592, 2
  %v3795 = vsel %vm1041, %v3793, %v3794
  %v3796 = vrot.slane %v3593, 2
  %v3797 = vsel %vm1041, %v3794, %v3796
  %v3798 = vrot.slane %v3594, 2
  %v3799 = vrot.slane %v3595, 2
  %v3800 = vsel %vm1041, %v3798, %v3799
  %v3801 = vrot.slane %v3596, 2
  %v3802 = vsel %vm1041, %v3799, %v3801
  %v3803 = vrot.slane %v3597, 2
  %v3804 = vrot.slane %v3598, 2
  %v3805 = vsel %vm1041, %v3803, %v3804
  %v3806 = vrot.slane %v3599, 2
  %v3807 = vsel %vm1041, %v3804, %v3806
  %v3808 = vrot.slane %v3600, 2
  %v3809 = vrot.slane %v3601, 2
  %v3810 = vsel %vm1041, %v3808, %v3809
  %v3811 = vrot.slane %v3602, 2
  %v3812 = vsel %vm1041, %v3809, %v3811
  %v3813 = vrot.slane %v3603, 2
  %v3814 = vrot.slane %v3604, 2
  %v3815 = vsel %vm1041, %v3813, %v3814
  %v3816 = vrot.slane %v3605, 2
  %v3817 = vsel %vm1041, %v3814, %v3816
  %v3818 = vrot.slane %v3606, 2
  %v3819 = vrot.slane %v3607, 2
  %v3820 = vsel %vm1041, %v3818, %v3819
  %v3821 = vrot.slane %v3608, 2
  %v3822 = vsel %vm1041, %v3819, %v3821
  %v3823 = vrot.slane %v3609, 2
  %v3824 = vrot.slane %v3610, 2
  %v3825 = vsel %vm1041, %v3823, %v3824
  %v3826 = vrot.slane %v3611, 2
  %v3827 = vsel %vm1041, %v3824, %v3826
  %v3828 = vrot.slane %v3612, 2
  %v3829 = vrot.slane %v3613, 2
  %v3830 = vsel %vm1041, %v3828, %v3829
  %v3831 = vrot.slane %v3614, 2
  %v3832 = vsel %vm1041, %v3829, %v3831
  %v3833 = vrot.slane %v3615, 2
  %v3834 = vrot.slane %v3616, 2
  %v3835 = vsel %vm1041, %v3833, %v3834
  %v3836 = vrot.slane %v3617, 2
  %v3837 = vsel %vm1041, %v3834, %v3836
  %v3838 = vrot.slane %v3618, 2
  %v3839 = vrot.slane %v3619, 2
  %v3840 = vsel %vm1041, %v3838, %v3839
  %v3841 = vrot.slane %v3620, 2
  %v3842 = vsel %vm1041, %v3839, %v3841
  %v3843 = vrot.slane %v3621, 2
  %v3844 = vrot.slane %v3622, 2
  %v3845 = vsel %vm1041, %v3843, %v3844
  %v3846 = vrot.slane %v3623, 2
  %v3847 = vsel %vm1041, %v3844, %v3846
  %v3848 = vrot.slane %v3624, 2
  %v3849 = vrot.slane %v3625, 2
  %v3850 = vsel %vm1041, %v3848, %v3849
  %v3851 = vrot.slane %v3626, 2
  %v3852 = vsel %vm1041, %v3849, %v3851
  %v3853 = vrot.slane %v3627, 2
  %v3854 = vrot.slane %v3628, 2
  %v3855 = vsel %vm1041, %v3853, %v3854
  %v3856 = vrot.slane %v3629, 2
  %v3857 = vsel %vm1041, %v3854, %v3856
  %v3858 = vrot.slane %v3630, 2
  %v3859 = vrot.slane %v3631, 2
  %v3860 = vsel %vm1041, %v3858, %v3859
  %v3861 = vrot.slane %v3632, 2
  %v3862 = vsel %vm1041, %v3859, %v3861
  %v3863 = vrot.slane %v3633, 2
  %v3864 = vrot.slane %v3634, 2
  %v3865 = vsel %vm1041, %v3863, %v3864
  %v3866 = vrot.slane %v3635, 2
  %v3867 = vsel %vm1041, %v3864, %v3866
  %v3868 = vrot.slane %v3636, 2
  %v3869 = vrot.slane %v3637, 2
  %v3870 = vsel %vm1041, %v3868, %v3869
  %v3871 = vrot.slane %v3638, 2
  %v3872 = vsel %vm1041, %v3869, %v3871
  %v3873 = vrot.slane %v3639, 2
  %v3874 = vrot.slane %v3640, 2
  %v3875 = vsel %vm1041, %v3873, %v3874
  %v3876 = vrot.slane %v3641, 2
  %v3877 = vsel %vm1041, %v3874, %v3876
  %v3878 = vrot.slane %v3642, 2
  %v3879 = vrot.slane %v3643, 2
  %v3880 = vsel %vm1041, %v3878, %v3879
  %v3881 = vrot.slane %v3644, 2
  %v3882 = vsel %vm1041, %v3879, %v3881
  %v3883 = vrot.slane %v3645, 2
  %v3884 = vrot.slane %v3646, 2
  %v3885 = vsel %vm1041, %v3883, %v3884
  %v3886 = vrot.slane %v3647, 2
  %v3887 = vsel %vm1041, %v3884, %v3886
  %v3888 = vrot.slane %v3648, 2
  %v3889 = vrot.slane %v3649, 2
  %v3890 = vsel %vm1041, %v3888, %v3889
  %v3891 = vrot.slane %v3650, 2
  %v3892 = vsel %vm1041, %v3889, %v3891
  %v3893 = vrot.slane %v3651, 2
  %v3894 = vrot.slane %v3652, 2
  %v3895 = vsel %vm1041, %v3893, %v3894
  %v3896 = vrot.slane %v3653, 2
  %v3897 = vsel %vm1041, %v3894, %v3896
  %v3898 = vrot.slane %v3654, 2
  %v3899 = vrot.slane %v3655, 2
  %v3900 = vsel %vm1041, %v3898, %v3899
  %v3901 = vrot.slane %v3656, 2
  %v3902 = vsel %vm1041, %v3899, %v3901
  %v3903 = vrot.slane %v3657, 2
  %v3904 = vrot.slane %v3658, 2
  %v3905 = vsel %vm1041, %v3903, %v3904
  %v3906 = vrot.slane %v3659, 2
  %v3907 = vsel %vm1041, %v3904, %v3906
  %v3908 = vrot.slane %v3660, 2
  %v3909 = vrot.slane %v3661, 2
  %v3910 = vsel %vm1041, %v3908, %v3909
  %v3911 = vrot.slane %v3662, 2
  %v3912 = vsel %vm1041, %v3909, %v3911
  %v3913 = vrot.slane %v3663, 2
  %v3914 = vrot.slane %v3664, 2
  %v3915 = vsel %vm1041, %v3913, %v3914
  %v3916 = vrot.slane %v3665, 2
  %v3917 = vsel %vm1041, %v3914, %v3916
  %v3918 = vrot.slane %v3666, 2
  %v3919 = vrot.slane %v3667, 2
  %v3920 = vsel %vm1041, %v3918, %v3919
  %v3921 = vrot.slane %v3668, 2
  %v3922 = vsel %vm1041, %v3919, %v3921
  %v3923 = vrot.slane %v3669, 2
  %v3924 = vrot.slane %v3670, 2
  %v3925 = vsel %vm1041, %v3923, %v3924
  %v3926 = vrot.slane %v3671, 2
  %v3927 = vsel %vm1041, %v3924, %v3926
  %v3992 = vadd.f32 %v3442, %v3770
  %v3993 = vadd.f32 %v3443, %v3772
  %v3994 = vadd.f32 %v3444, %v3775
  %v3995 = vadd.f32 %v3445, %v3777
  %v3996 = vadd.f32 %v3446, %v3780
  %v3997 = vadd.f32 %v3447, %v3782
  %v3998 = vadd.f32 %v3448, %v3785
  %v3999 = vadd.f32 %v3449, %v3787
  %v4000 = vadd.f32 %v3450, %v3790
  %v4001 = vadd.f32 %v3451, %v3792
  %v4002 = vadd.f32 %v3452, %v3795
  %v4003 = vadd.f32 %v3453, %v3797
  %v4004 = vadd.f32 %v3454, %v3800
  %v4005 = vadd.f32 %v3455, %v3802
  %v4006 = vadd.f32 %v3456, %v3805
  %v4007 = vadd.f32 %v3457, %v3807
  %v4008 = vadd.f32 %v3458, %v3810
  %v4009 = vadd.f32 %v3459, %v3812
  %v4010 = vadd.f32 %v3460, %v3815
  %v4011 = vadd.f32 %v3461, %v3817
  %v4012 = vadd.f32 %v3462, %v3820
  %v4013 = vadd.f32 %v3463, %v3822
  %v4014 = vadd.f32 %v3464, %v3825
  %v4015 = vadd.f32 %v3465, %v3827
  %v4016 = vadd.f32 %v3466, %v3830
  %v4017 = vadd.f32 %v3467, %v3832
  %v4018 = vadd.f32 %v3468, %v3835
  %v4019 = vadd.f32 %v3469, %v3837
  %v4020 = vadd.f32 %v3470, %v3840
  %v4021 = vadd.f32 %v3471, %v3842
  %v4022 = vadd.f32 %v3472, %v3845
  %v4023 = vadd.f32 %v3473, %v3847
  %v4024 = vadd.f32 %v3474, %v3850
  %v4025 = vadd.f32 %v3475, %v3852
  %v4026 = vadd.f32 %v3476, %v3855
  %v4027 = vadd.f32 %v3477, %v3857
  %v4028 = vadd.f32 %v3478, %v3860
  %v4029 = vadd.f32 %v3479, %v3862
  %v4030 = vadd.f32 %v3480, %v3865
  %v4031 = vadd.f32 %v3481, %v3867
  %v4032 = vadd.f32 %v3482, %v3870
  %v4033 = vadd.f32 %v3483, %v3872
  %v4034 = vadd.f32 %v3484, %v3875
  %v4035 = vadd.f32 %v3485, %v3877
  %v4036 = vadd.f32 %v3486, %v3880
  %v4037 = vadd.f32 %v3487, %v3882
  %v4038 = vadd.f32 %v3488, %v3885
  %v4039 = vadd.f32 %v3489, %v3887
  %v4040 = vadd.f32 %v3490, %v3890
  %v4041 = vadd.f32 %v3491, %v3892
  %v4042 = vadd.f32 %v3492, %v3895
  %v4043 = vadd.f32 %v3493, %v3897
  %v4044 = vadd.f32 %v3494, %v3900
  %v4045 = vadd.f32 %v3495, %v3902
  %v4046 = vadd.f32 %v3496, %v3905
  %v4047 = vadd.f32 %v3497, %v3907
  %v4048 = vadd.f32 %v3498, %v3910
  %v4049 = vadd.f32 %v3499, %v3912
  %v4050 = vadd.f32 %v3500, %v3915
  %v4051 = vadd.f32 %v3501, %v3917
  %v4052 = vadd.f32 %v3502, %v3920
  %v4053 = vadd.f32 %v3503, %v3922
  %v4054 = vadd.f32 %v3504, %v3925
  %v4055 = vadd.f32 %v3505, %v3927
  %v4056 = vld [vmem:[%s2] sm:$0x1]
  %v4058 = vlaneseq
  %v4059 = vshrl.u32 %v4058, 7
  %v4060 = vsub.s32 0, %v4059
  %v4061 = vrot.slane %v4056, %v4060
  %v4063 = vadd.f32 %v3992, %v4061
  %v4064 = vadd.f32 %v3993, %v4061
  %v4065 = vadd.f32 %v3994, %v4061
  %v4066 = vadd.f32 %v3995, %v4061
  %v4067 = vadd.f32 %v3996, %v4061
  %v4068 = vadd.f32 %v3997, %v4061
  %v4069 = vadd.f32 %v3998, %v4061
  %v4070 = vadd.f32 %v3999, %v4061
  %v4071 = vadd.f32 %v4000, %v4061
  %v4072 = vadd.f32 %v4001, %v4061
  %v4073 = vadd.f32 %v4002, %v4061
  %v4074 = vadd.f32 %v4003, %v4061
  %v4075 = vadd.f32 %v4004, %v4061
  %v4076 = vadd.f32 %v4005, %v4061
  %v4077 = vadd.f32 %v4006, %v4061
  %v4078 = vadd.f32 %v4007, %v4061
  %v4079 = vadd.f32 %v4008, %v4061
  %v4080 = vadd.f32 %v4009, %v4061
  %v4081 = vadd.f32 %v4010, %v4061
  %v4082 = vadd.f32 %v4011, %v4061
  %v4083 = vadd.f32 %v4012, %v4061
  %v4084 = vadd.f32 %v4013, %v4061
  %v4085 = vadd.f32 %v4014, %v4061
  %v4086 = vadd.f32 %v4015, %v4061
  %v4087 = vadd.f32 %v4016, %v4061
  %v4088 = vadd.f32 %v4017, %v4061
  %v4089 = vadd.f32 %v4018, %v4061
  %v4090 = vadd.f32 %v4019, %v4061
  %v4091 = vadd.f32 %v4020, %v4061
  %v4092 = vadd.f32 %v4021, %v4061
  %v4093 = vadd.f32 %v4022, %v4061
  %v4094 = vadd.f32 %v4023, %v4061
  %v4095 = vadd.f32 %v4024, %v4061
  %v4096 = vadd.f32 %v4025, %v4061
  %v4097 = vadd.f32 %v4026, %v4061
  %v4098 = vadd.f32 %v4027, %v4061
  %v4099 = vadd.f32 %v4028, %v4061
  %v4100 = vadd.f32 %v4029, %v4061
  %v4101 = vadd.f32 %v4030, %v4061
  %v4102 = vadd.f32 %v4031, %v4061
  %v4103 = vadd.f32 %v4032, %v4061
  %v4104 = vadd.f32 %v4033, %v4061
  %v4105 = vadd.f32 %v4034, %v4061
  %v4106 = vadd.f32 %v4035, %v4061
  %v4107 = vadd.f32 %v4036, %v4061
  %v4108 = vadd.f32 %v4037, %v4061
  %v4109 = vadd.f32 %v4038, %v4061
  %v4110 = vadd.f32 %v4039, %v4061
  %v4111 = vadd.f32 %v4040, %v4061
  %v4112 = vadd.f32 %v4041, %v4061
  %v4113 = vadd.f32 %v4042, %v4061
  %v4114 = vadd.f32 %v4043, %v4061
  %v4115 = vadd.f32 %v4044, %v4061
  %v4116 = vadd.f32 %v4045, %v4061
  %v4117 = vadd.f32 %v4046, %v4061
  %v4118 = vadd.f32 %v4047, %v4061
  %v4119 = vadd.f32 %v4048, %v4061
  %v4120 = vadd.f32 %v4049, %v4061
  %v4121 = vadd.f32 %v4050, %v4061
  %v4122 = vadd.f32 %v4051, %v4061
  %v4123 = vadd.f32 %v4052, %v4061
  %v4124 = vadd.f32 %v4053, %v4061
  %v4125 = vadd.f32 %v4054, %v4061
  %v4126 = vadd.f32 %v4055, %v4061
  %v4127 = vmax.f32 %v4063, 0.0
  %v4128 = vmax.f32 %v4064, 0.0
  %v4129 = vmax.f32 %v4065, 0.0
  %v4130 = vmax.f32 %v4066, 0.0
  %v4131 = vmax.f32 %v4067, 0.0
  %v4132 = vmax.f32 %v4068, 0.0
  %v4133 = vmax.f32 %v4069, 0.0
  %v4134 = vmax.f32 %v4070, 0.0
  %v4135 = vmax.f32 %v4071, 0.0
  %v4136 = vmax.f32 %v4072, 0.0
  %v4137 = vmax.f32 %v4073, 0.0
  %v4138 = vmax.f32 %v4074, 0.0
  %v4139 = vmax.f32 %v4075, 0.0
  %v4140 = vmax.f32 %v4076, 0.0
  %v4141 = vmax.f32 %v4077, 0.0
  %v4142 = vmax.f32 %v4078, 0.0
  %v4143 = vmax.f32 %v4079, 0.0
  %v4144 = vmax.f32 %v4080, 0.0
  %v4145 = vmax.f32 %v4081, 0.0
  %v4146 = vmax.f32 %v4082, 0.0
  %v4147 = vmax.f32 %v4083, 0.0
  %v4148 = vmax.f32 %v4084, 0.0
  %v4149 = vmax.f32 %v4085, 0.0
  %v4150 = vmax.f32 %v4086, 0.0
  %v4151 = vmax.f32 %v4087, 0.0
  %v4152 = vmax.f32 %v4088, 0.0
  %v4153 = vmax.f32 %v4089, 0.0
  %v4154 = vmax.f32 %v4090, 0.0
  %v4155 = vmax.f32 %v4091, 0.0
  %v4156 = vmax.f32 %v4092, 0.0
  %v4157 = vmax.f32 %v4093, 0.0
  %v4158 = vmax.f32 %v4094, 0.0
  %v4159 = vmax.f32 %v4095, 0.0
  %v4160 = vmax.f32 %v4096, 0.0
  %v4161 = vmax.f32 %v4097, 0.0
  %v4162 = vmax.f32 %v4098, 0.0
  %v4163 = vmax.f32 %v4099, 0.0
  %v4164 = vmax.f32 %v4100, 0.0
  %v4165 = vmax.f32 %v4101, 0.0
  %v4166 = vmax.f32 %v4102, 0.0
  %v4167 = vmax.f32 %v4103, 0.0
  %v4168 = vmax.f32 %v4104, 0.0
  %v4169 = vmax.f32 %v4105, 0.0
  %v4170 = vmax.f32 %v4106, 0.0
  %v4171 = vmax.f32 %v4107, 0.0
  %v4172 = vmax.f32 %v4108, 0.0
  %v4173 = vmax.f32 %v4109, 0.0
  %v4174 = vmax.f32 %v4110, 0.0
  %v4175 = vmax.f32 %v4111, 0.0
  %v4176 = vmax.f32 %v4112, 0.0
  %v4177 = vmax.f32 %v4113, 0.0
  %v4178 = vmax.f32 %v4114, 0.0
  %v4179 = vmax.f32 %v4115, 0.0
  %v4180 = vmax.f32 %v4116, 0.0
  %v4181 = vmax.f32 %v4117, 0.0
  %v4182 = vmax.f32 %v4118, 0.0
  %v4183 = vmax.f32 %v4119, 0.0
  %v4184 = vmax.f32 %v4120, 0.0
  %v4185 = vmax.f32 %v4121, 0.0
  %v4186 = vmax.f32 %v4122, 0.0
  %v4187 = vmax.f32 %v4123, 0.0
  %v4188 = vmax.f32 %v4124, 0.0
  %v4189 = vmax.f32 %v4125, 0.0
  %v4190 = vmax.f32 %v4126, 0.0
  %v4191 = vpack.c.bf16 %v4128, %v4127
  %v4192 = vpack.c.bf16 %v4130, %v4129
  %v4193 = vpack.c.bf16 %v4132, %v4131
  %v4194 = vpack.c.bf16 %v4134, %v4133
  %v4195 = vpack.c.bf16 %v4136, %v4135
  %v4196 = vpack.c.bf16 %v4138, %v4137
  %v4197 = vpack.c.bf16 %v4140, %v4139
  %v4198 = vpack.c.bf16 %v4142, %v4141
  %v4199 = vpack.c.bf16 %v4144, %v4143
  %v4200 = vpack.c.bf16 %v4146, %v4145
  %v4201 = vpack.c.bf16 %v4148, %v4147
  %v4202 = vpack.c.bf16 %v4150, %v4149
  %v4203 = vpack.c.bf16 %v4152, %v4151
  %v4204 = vpack.c.bf16 %v4154, %v4153
  %v4205 = vpack.c.bf16 %v4156, %v4155
  %v4206 = vpack.c.bf16 %v4158, %v4157
  %v4207 = vpack.c.bf16 %v4160, %v4159
  %v4208 = vpack.c.bf16 %v4162, %v4161
  %v4209 = vpack.c.bf16 %v4164, %v4163
  %v4210 = vpack.c.bf16 %v4166, %v4165
  %v4211 = vpack.c.bf16 %v4168, %v4167
  %v4212 = vpack.c.bf16 %v4170, %v4169
  %v4213 = vpack.c.bf16 %v4172, %v4171
  %v4214 = vpack.c.bf16 %v4174, %v4173
  %v4215 = vpack.c.bf16 %v4176, %v4175
  %v4216 = vpack.c.bf16 %v4178, %v4177
  %v4217 = vpack.c.bf16 %v4180, %v4179
  %v4218 = vpack.c.bf16 %v4182, %v4181
  %v4219 = vpack.c.bf16 %v4184, %v4183
  %v4220 = vpack.c.bf16 %v4186, %v4185
  %v4221 = vpack.c.bf16 %v4188, %v4187
  %v4222 = vpack.c.bf16 %v4190, %v4189
  %v4223 = vld [vmem:[%s3] sm:$0xf]
  %v4224 = vld [vmem:[%s4] sm:$0x1]
  %v4226 = vlaneseq
  %v4227 = vshrl.u32 %v4226, 7
  %v4228 = vsub.s32 0, %v4227
  %v4229 = vrot.slane %v4224, %v4228
  %vm4231 = vcmask 64512
  %v4233 = vsel %vm4231, %v4191, 0
  %v4236 = vsel %vm4231, %v4192, 0
  %v4239 = vsel %vm4231, %v4193, 0
  %v4242 = vsel %vm4231, %v4194, 0
  %v4245 = vsel %vm4231, %v4195, 0
  %v4248 = vsel %vm4231, %v4196, 0
  %v4251 = vsel %vm4231, %v4197, 0
  %v4254 = vsel %vm4231, %v4198, 0
  %v4257 = vsel %vm4231, %v4199, 0
  %v4260 = vsel %vm4231, %v4200, 0
  %v4263 = vsel %vm4231, %v4201, 0
  %v4266 = vsel %vm4231, %v4202, 0
  %v4269 = vsel %vm4231, %v4203, 0
  %v4272 = vsel %vm4231, %v4204, 0
  %v4275 = vsel %vm4231, %v4205, 0
  %v4278 = vsel %vm4231, %v4206, 0
  %v4281 = vsel %vm4231, %v4207, 0
  %v4284 = vsel %vm4231, %v4208, 0
  %v4287 = vsel %vm4231, %v4209, 0
  %v4290 = vsel %vm4231, %v4210, 0
  %v4293 = vsel %vm4231, %v4211, 0
  %v4296 = vsel %vm4231, %v4212, 0
  %v4299 = vsel %vm4231, %v4213, 0
  %v4302 = vsel %vm4231, %v4214, 0
  %v4305 = vsel %vm4231, %v4215, 0
  %v4308 = vsel %vm4231, %v4216, 0
  %v4311 = vsel %vm4231, %v4217, 0
  %v4314 = vsel %vm4231, %v4218, 0
  %v4317 = vsel %vm4231, %v4219, 0
  %v4320 = vsel %vm4231, %v4220, 0
  %v4323 = vsel %vm4231, %v4221, 0
  %v4326 = vsel %vm4231, %v4222, 0
  %vm4328 = vcmask 1043456
  %v4330 = vsel %vm4328, %v4223, 0
  %4332 = vmatprep.subr.bf16.mxu0 0
  %4333 = vmatpush1.bf16.msra.mxu0 0
  %4334 = vmatprep.subr.bf16.mxu0 0
  %4335 = vmatpush1.bf16.msra.mxu0 0
  %4336 = vmatprep.subr.bf16.mxu0 0
  %4337 = vmatpush1.bf16.msra.mxu0 0
  %4338 = vmatprep.subr.bf16.mxu0 0
  %4339 = vmatpush1.bf16.msra.mxu0 0
  %4340 = vmatprep.subr.bf16.mxu0 0
  %4341 = vmatpush1.bf16.msra.mxu0 0
  %4342 = vmatprep.subr.bf16.mxu0 0
  %4343 = vmatpush1.bf16.msra.mxu0 0
  %4344 = vmatprep.subr.bf16.mxu0 0
  %4345 = vmatpush1.bf16.msra.mxu0 0
  %4346 = vmatprep.subr.bf16.mxu0 0
  %4347 = vmatpush1.bf16.msra.mxu0 %v4330
  %4348 = vmatprep.subr.bf16.mxu0 0
  %4349 = vmatpush2.bf16.msra.mxu0 0
  %4350 = vmatprep.subr.bf16.mxu0 0
  %4351 = vmatpush2.bf16.msra.mxu0 0
  %4352 = vmatprep.subr.bf16.mxu0 0
  %4353 = vmatpush2.bf16.msra.mxu0 0
  %4354 = vmatprep.subr.bf16.mxu0 0
  %4355 = vmatpush2.bf16.msra.mxu0 0
  %4356 = vmatprep.subr.bf16.mxu0 0
  %4357 = vmatpush2.bf16.msra.mxu0 0
  %4358 = vmatprep.subr.bf16.mxu0 0
  %4359 = vmatpush2.bf16.msra.mxu0 0
  %4360 = vmatprep.subr.bf16.mxu0 0
  %4361 = vmatpush2.bf16.msra.mxu0 0
  %4362 = vmatprep.subr.bf16.mxu0 0
  %4363 = vmatpush2.bf16.msra.mxu0 0
  %4364 = vmatprep.mubr.bf16.mxu0 0
  %4365 = vmatmul.mubr.bf16.gmra.mxu0 %v4233
  %v4366 = vpop.f32.mrf.mxu0
  %v4367 = vadd.f32 %v4229, %v4366
  %v4368 = vpop.f32.mrf.mxu0
  %v4369 = vpop.f32.mrf.mxu0
  %v4370 = vadd.f32 %v4229, %v4369
  %v4371 = vpop.f32.mrf.mxu0
  %4372 = vmatprep.mubr.bf16.mxu0 0
  %4373 = vmatmul.mubr.bf16.gmra.mxu0 %v4236
  %v4374 = vpop.f32.mrf.mxu0
  %v4375 = vadd.f32 %v4229, %v4374
  %v4376 = vpop.f32.mrf.mxu0
  %v4377 = vpop.f32.mrf.mxu0
  %v4378 = vadd.f32 %v4229, %v4377
  %v4379 = vpop.f32.mrf.mxu0
  %4380 = vmatprep.mubr.bf16.mxu0 0
  %4381 = vmatmul.mubr.bf16.gmra.mxu0 %v4239
  %v4382 = vpop.f32.mrf.mxu0
  %v4383 = vadd.f32 %v4229, %v4382
  %v4384 = vpop.f32.mrf.mxu0
  %v4385 = vpop.f32.mrf.mxu0
  %v4386 = vadd.f32 %v4229, %v4385
  %v4387 = vpop.f32.mrf.mxu0
  %4388 = vmatprep.mubr.bf16.mxu0 0
  %4389 = vmatmul.mubr.bf16.gmra.mxu0 %v4242
  %v4390 = vpop.f32.mrf.mxu0
  %v4391 = vadd.f32 %v4229, %v4390
  %v4392 = vpop.f32.mrf.mxu0
  %v4393 = vpop.f32.mrf.mxu0
  %v4394 = vadd.f32 %v4229, %v4393
  %v4395 = vpop.f32.mrf.mxu0
  %4396 = vmatprep.mubr.bf16.mxu0 0
  %4397 = vmatmul.mubr.bf16.gmra.mxu0 %v4245
  %v4398 = vpop.f32.mrf.mxu0
  %v4399 = vadd.f32 %v4229, %v4398
  %v4400 = vpop.f32.mrf.mxu0
  %v4401 = vpop.f32.mrf.mxu0
  %v4402 = vadd.f32 %v4229, %v4401
  %v4403 = vpop.f32.mrf.mxu0
  %4404 = vmatprep.mubr.bf16.mxu0 0
  %4405 = vmatmul.mubr.bf16.gmra.mxu0 %v4248
  %v4406 = vpop.f32.mrf.mxu0
  %v4407 = vadd.f32 %v4229, %v4406
  %v4408 = vpop.f32.mrf.mxu0
  %v4409 = vpop.f32.mrf.mxu0
  %v4410 = vadd.f32 %v4229, %v4409
  %v4411 = vpop.f32.mrf.mxu0
  %4412 = vmatprep.mubr.bf16.mxu0 0
  %4413 = vmatmul.mubr.bf16.gmra.mxu0 %v4251
  %v4414 = vpop.f32.mrf.mxu0
  %v4415 = vadd.f32 %v4229, %v4414
  %v4416 = vpop.f32.mrf.mxu0
  %v4417 = vpop.f32.mrf.mxu0
  %v4418 = vadd.f32 %v4229, %v4417
  %v4419 = vpop.f32.mrf.mxu0
  %4420 = vmatprep.mubr.bf16.mxu0 0
  %4421 = vmatmul.mubr.bf16.gmra.mxu0 %v4254
  %v4422 = vpop.f32.mrf.mxu0
  %v4423 = vadd.f32 %v4229, %v4422
  %v4424 = vpop.f32.mrf.mxu0
  %v4425 = vpop.f32.mrf.mxu0
  %v4426 = vadd.f32 %v4229, %v4425
  %v4427 = vpop.f32.mrf.mxu0
  %4428 = vmatprep.mubr.bf16.mxu0 0
  %4429 = vmatmul.mubr.bf16.gmra.mxu0 %v4257
  %v4430 = vpop.f32.mrf.mxu0
  %v4431 = vadd.f32 %v4229, %v4430
  %v4432 = vpop.f32.mrf.mxu0
  %v4433 = vpop.f32.mrf.mxu0
  %v4434 = vadd.f32 %v4229, %v4433
  %v4435 = vpop.f32.mrf.mxu0
  %4436 = vmatprep.mubr.bf16.mxu0 0
  %4437 = vmatmul.mubr.bf16.gmra.mxu0 %v4260
  %v4438 = vpop.f32.mrf.mxu0
  %v4439 = vadd.f32 %v4229, %v4438
  %v4440 = vpop.f32.mrf.mxu0
  %v4441 = vpop.f32.mrf.mxu0
  %v4442 = vadd.f32 %v4229, %v4441
  %v4443 = vpop.f32.mrf.mxu0
  %4444 = vmatprep.mubr.bf16.mxu0 0
  %4445 = vmatmul.mubr.bf16.gmra.mxu0 %v4263
  %v4446 = vpop.f32.mrf.mxu0
  %v4447 = vadd.f32 %v4229, %v4446
  %v4448 = vpop.f32.mrf.mxu0
  %v4449 = vpop.f32.mrf.mxu0
  %v4450 = vadd.f32 %v4229, %v4449
  %v4451 = vpop.f32.mrf.mxu0
  %4452 = vmatprep.mubr.bf16.mxu0 0
  %4453 = vmatmul.mubr.bf16.gmra.mxu0 %v4266
  %v4454 = vpop.f32.mrf.mxu0
  %v4455 = vadd.f32 %v4229, %v4454
  %v4456 = vpop.f32.mrf.mxu0
  %v4457 = vpop.f32.mrf.mxu0
  %v4458 = vadd.f32 %v4229, %v4457
  %v4459 = vpop.f32.mrf.mxu0
  %4460 = vmatprep.mubr.bf16.mxu0 0
  %4461 = vmatmul.mubr.bf16.gmra.mxu0 %v4269
  %v4462 = vpop.f32.mrf.mxu0
  %v4463 = vadd.f32 %v4229, %v4462
  %v4464 = vpop.f32.mrf.mxu0
  %v4465 = vpop.f32.mrf.mxu0
  %v4466 = vadd.f32 %v4229, %v4465
  %v4467 = vpop.f32.mrf.mxu0
  %4468 = vmatprep.mubr.bf16.mxu0 0
  %4469 = vmatmul.mubr.bf16.gmra.mxu0 %v4272
  %v4470 = vpop.f32.mrf.mxu0
  %v4471 = vadd.f32 %v4229, %v4470
  %v4472 = vpop.f32.mrf.mxu0
  %v4473 = vpop.f32.mrf.mxu0
  %v4474 = vadd.f32 %v4229, %v4473
  %v4475 = vpop.f32.mrf.mxu0
  %4476 = vmatprep.mubr.bf16.mxu0 0
  %4477 = vmatmul.mubr.bf16.gmra.mxu0 %v4275
  %v4478 = vpop.f32.mrf.mxu0
  %v4479 = vadd.f32 %v4229, %v4478
  %v4480 = vpop.f32.mrf.mxu0
  %v4481 = vpop.f32.mrf.mxu0
  %v4482 = vadd.f32 %v4229, %v4481
  %v4483 = vpop.f32.mrf.mxu0
  %4484 = vmatprep.mubr.bf16.mxu0 0
  %4485 = vmatmul.mubr.bf16.gmra.mxu0 %v4278
  %v4486 = vpop.f32.mrf.mxu0
  %v4487 = vadd.f32 %v4229, %v4486
  %v4488 = vpop.f32.mrf.mxu0
  %v4489 = vpop.f32.mrf.mxu0
  %v4490 = vadd.f32 %v4229, %v4489
  %v4491 = vpop.f32.mrf.mxu0
  %4492 = vmatprep.mubr.bf16.mxu0 0
  %4493 = vmatmul.mubr.bf16.gmra.mxu0 %v4281
  %v4494 = vpop.f32.mrf.mxu0
  %v4495 = vadd.f32 %v4229, %v4494
  %v4496 = vpop.f32.mrf.mxu0
  %v4497 = vpop.f32.mrf.mxu0
  %v4498 = vadd.f32 %v4229, %v4497
  %v4499 = vpop.f32.mrf.mxu0
  %4500 = vmatprep.mubr.bf16.mxu0 0
  %4501 = vmatmul.mubr.bf16.gmra.mxu0 %v4284
  %v4502 = vpop.f32.mrf.mxu0
  %v4503 = vadd.f32 %v4229, %v4502
  %v4504 = vpop.f32.mrf.mxu0
  %v4505 = vpop.f32.mrf.mxu0
  %v4506 = vadd.f32 %v4229, %v4505
  %v4507 = vpop.f32.mrf.mxu0
  %4508 = vmatprep.mubr.bf16.mxu0 0
  %4509 = vmatmul.mubr.bf16.gmra.mxu0 %v4287
  %v4510 = vpop.f32.mrf.mxu0
  %v4511 = vadd.f32 %v4229, %v4510
  %v4512 = vpop.f32.mrf.mxu0
  %v4513 = vpop.f32.mrf.mxu0
  %v4514 = vadd.f32 %v4229, %v4513
  %v4515 = vpop.f32.mrf.mxu0
  %4516 = vmatprep.mubr.bf16.mxu0 0
  %4517 = vmatmul.mubr.bf16.gmra.mxu0 %v4290
  %v4518 = vpop.f32.mrf.mxu0
  %v4519 = vadd.f32 %v4229, %v4518
  %v4520 = vpop.f32.mrf.mxu0
  %v4521 = vpop.f32.mrf.mxu0
  %v4522 = vadd.f32 %v4229, %v4521
  %v4523 = vpop.f32.mrf.mxu0
  %4524 = vmatprep.mubr.bf16.mxu0 0
  %4525 = vmatmul.mubr.bf16.gmra.mxu0 %v4293
  %v4526 = vpop.f32.mrf.mxu0
  %v4527 = vadd.f32 %v4229, %v4526
  %v4528 = vpop.f32.mrf.mxu0
  %v4529 = vpop.f32.mrf.mxu0
  %v4530 = vadd.f32 %v4229, %v4529
  %v4531 = vpop.f32.mrf.mxu0
  %4532 = vmatprep.mubr.bf16.mxu0 0
  %4533 = vmatmul.mubr.bf16.gmra.mxu0 %v4296
  %v4534 = vpop.f32.mrf.mxu0
  %v4535 = vadd.f32 %v4229, %v4534
  %v4536 = vpop.f32.mrf.mxu0
  %v4537 = vpop.f32.mrf.mxu0
  %v4538 = vadd.f32 %v4229, %v4537
  %v4539 = vpop.f32.mrf.mxu0
  %4540 = vmatprep.mubr.bf16.mxu0 0
  %4541 = vmatmul.mubr.bf16.gmra.mxu0 %v4299
  %v4542 = vpop.f32.mrf.mxu0
  %v4543 = vadd.f32 %v4229, %v4542
  %v4544 = vpop.f32.mrf.mxu0
  %v4545 = vpop.f32.mrf.mxu0
  %v4546 = vadd.f32 %v4229, %v4545
  %v4547 = vpop.f32.mrf.mxu0
  %4548 = vmatprep.mubr.bf16.mxu0 0
  %4549 = vmatmul.mubr.bf16.gmra.mxu0 %v4302
  %v4550 = vpop.f32.mrf.mxu0
  %v4551 = vadd.f32 %v4229, %v4550
  %v4552 = vpop.f32.mrf.mxu0
  %v4553 = vpop.f32.mrf.mxu0
  %v4554 = vadd.f32 %v4229, %v4553
  %v4555 = vpop.f32.mrf.mxu0
  %4556 = vmatprep.mubr.bf16.mxu0 0
  %4557 = vmatmul.mubr.bf16.gmra.mxu0 %v4305
  %v4558 = vpop.f32.mrf.mxu0
  %v4559 = vadd.f32 %v4229, %v4558
  %v4560 = vpop.f32.mrf.mxu0
  %v4561 = vpop.f32.mrf.mxu0
  %v4562 = vadd.f32 %v4229, %v4561
  %v4563 = vpop.f32.mrf.mxu0
  %4564 = vmatprep.mubr.bf16.mxu0 0
  %4565 = vmatmul.mubr.bf16.gmra.mxu0 %v4308
  %v4566 = vpop.f32.mrf.mxu0
  %v4567 = vadd.f32 %v4229, %v4566
  %v4568 = vpop.f32.mrf.mxu0
  %v4569 = vpop.f32.mrf.mxu0
  %v4570 = vadd.f32 %v4229, %v4569
  %v4571 = vpop.f32.mrf.mxu0
  %4572 = vmatprep.mubr.bf16.mxu0 0
  %4573 = vmatmul.mubr.bf16.gmra.mxu0 %v4311
  %v4574 = vpop.f32.mrf.mxu0
  %v4575 = vadd.f32 %v4229, %v4574
  %v4576 = vpop.f32.mrf.mxu0
  %v4577 = vpop.f32.mrf.mxu0
  %v4578 = vadd.f32 %v4229, %v4577
  %v4579 = vpop.f32.mrf.mxu0
  %4580 = vmatprep.mubr.bf16.mxu0 0
  %4581 = vmatmul.mubr.bf16.gmra.mxu0 %v4314
  %v4582 = vpop.f32.mrf.mxu0
  %v4583 = vadd.f32 %v4229, %v4582
  %v4584 = vpop.f32.mrf.mxu0
  %v4585 = vpop.f32.mrf.mxu0
  %v4586 = vadd.f32 %v4229, %v4585
  %v4587 = vpop.f32.mrf.mxu0
  %4588 = vmatprep.mubr.bf16.mxu0 0
  %4589 = vmatmul.mubr.bf16.gmra.mxu0 %v4317
  %v4590 = vpop.f32.mrf.mxu0
  %v4591 = vadd.f32 %v4229, %v4590
  %v4592 = vpop.f32.mrf.mxu0
  %v4593 = vpop.f32.mrf.mxu0
  %v4594 = vadd.f32 %v4229, %v4593
  %v4595 = vpop.f32.mrf.mxu0
  %4596 = vmatprep.mubr.bf16.mxu0 0
  %4597 = vmatmul.mubr.bf16.gmra.mxu0 %v4320
  %v4598 = vpop.f32.mrf.mxu0
  %v4599 = vadd.f32 %v4229, %v4598
  %v4600 = vpop.f32.mrf.mxu0
  %v4601 = vpop.f32.mrf.mxu0
  %v4602 = vadd.f32 %v4229, %v4601
  %v4603 = vpop.f32.mrf.mxu0
  %4604 = vmatprep.mubr.bf16.mxu0 0
  %4605 = vmatmul.mubr.bf16.gmra.mxu0 %v4323
  %v4606 = vpop.f32.mrf.mxu0
  %v4607 = vadd.f32 %v4229, %v4606
  %v4608 = vpop.f32.mrf.mxu0
  %v4609 = vpop.f32.mrf.mxu0
  %v4610 = vadd.f32 %v4229, %v4609
  %v4611 = vpop.f32.mrf.mxu0
  %4612 = vmatprep.mubr.bf16.mxu0 0
  %4613 = vmatmul.mubr.bf16.gmra.mxu0 %v4326
  %v4614 = vpop.f32.mrf.mxu0
  %v4615 = vadd.f32 %v4229, %v4614
  %v4616 = vpop.f32.mrf.mxu0
  %v4617 = vpop.f32.mrf.mxu0
  %v4618 = vadd.f32 %v4229, %v4617
  %v4619 = vpop.f32.mrf.mxu0
  %4620 = vdwg.mxu0
  %v4621 = vmax.f32 %v4367, 0.0
  %v4622 = vmax.f32 %v4370, 0.0
  %v4623 = vmax.f32 %v4375, 0.0
  %v4624 = vmax.f32 %v4378, 0.0
  %v4625 = vmax.f32 %v4383, 0.0
  %v4626 = vmax.f32 %v4386, 0.0
  %v4627 = vmax.f32 %v4391, 0.0
  %v4628 = vmax.f32 %v4394, 0.0
  %v4629 = vmax.f32 %v4399, 0.0
  %v4630 = vmax.f32 %v4402, 0.0
  %v4631 = vmax.f32 %v4407, 0.0
  %v4632 = vmax.f32 %v4410, 0.0
  %v4633 = vmax.f32 %v4415, 0.0
  %v4634 = vmax.f32 %v4418, 0.0
  %v4635 = vmax.f32 %v4423, 0.0
  %v4636 = vmax.f32 %v4426, 0.0
  %v4637 = vmax.f32 %v4431, 0.0
  %v4638 = vmax.f32 %v4434, 0.0
  %v4639 = vmax.f32 %v4439, 0.0
  %v4640 = vmax.f32 %v4442, 0.0
  %v4641 = vmax.f32 %v4447, 0.0
  %v4642 = vmax.f32 %v4450, 0.0
  %v4643 = vmax.f32 %v4455, 0.0
  %v4644 = vmax.f32 %v4458, 0.0
  %v4645 = vmax.f32 %v4463, 0.0
  %v4646 = vmax.f32 %v4466, 0.0
  %v4647 = vmax.f32 %v4471, 0.0
  %v4648 = vmax.f32 %v4474, 0.0
  %v4649 = vmax.f32 %v4479, 0.0
  %v4650 = vmax.f32 %v4482, 0.0
  %v4651 = vmax.f32 %v4487, 0.0
  %v4652 = vmax.f32 %v4490, 0.0
  %v4653 = vmax.f32 %v4495, 0.0
  %v4654 = vmax.f32 %v4498, 0.0
  %v4655 = vmax.f32 %v4503, 0.0
  %v4656 = vmax.f32 %v4506, 0.0
  %v4657 = vmax.f32 %v4511, 0.0
  %v4658 = vmax.f32 %v4514, 0.0
  %v4659 = vmax.f32 %v4519, 0.0
  %v4660 = vmax.f32 %v4522, 0.0
  %v4661 = vmax.f32 %v4527, 0.0
  %v4662 = vmax.f32 %v4530, 0.0
  %v4663 = vmax.f32 %v4535, 0.0
  %v4664 = vmax.f32 %v4538, 0.0
  %v4665 = vmax.f32 %v4543, 0.0
  %v4666 = vmax.f32 %v4546, 0.0
  %v4667 = vmax.f32 %v4551, 0.0
  %v4668 = vmax.f32 %v4554, 0.0
  %v4669 = vmax.f32 %v4559, 0.0
  %v4670 = vmax.f32 %v4562, 0.0
  %v4671 = vmax.f32 %v4567, 0.0
  %v4672 = vmax.f32 %v4570, 0.0
  %v4673 = vmax.f32 %v4575, 0.0
  %v4674 = vmax.f32 %v4578, 0.0
  %v4675 = vmax.f32 %v4583, 0.0
  %v4676 = vmax.f32 %v4586, 0.0
  %v4677 = vmax.f32 %v4591, 0.0
  %v4678 = vmax.f32 %v4594, 0.0
  %v4679 = vmax.f32 %v4599, 0.0
  %v4680 = vmax.f32 %v4602, 0.0
  %v4681 = vmax.f32 %v4607, 0.0
  %v4682 = vmax.f32 %v4610, 0.0
  %v4683 = vmax.f32 %v4615, 0.0
  %v4684 = vmax.f32 %v4618, 0.0
  %v4685 = vpack.c.bf16 %v4622, %v4621
  %v4686 = vpack.c.bf16 %v4624, %v4623
  %v4687 = vpack.c.bf16 %v4626, %v4625
  %v4688 = vpack.c.bf16 %v4628, %v4627
  %v4689 = vpack.c.bf16 %v4630, %v4629
  %v4690 = vpack.c.bf16 %v4632, %v4631
  %v4691 = vpack.c.bf16 %v4634, %v4633
  %v4692 = vpack.c.bf16 %v4636, %v4635
  %v4693 = vpack.c.bf16 %v4638, %v4637
  %v4694 = vpack.c.bf16 %v4640, %v4639
  %v4695 = vpack.c.bf16 %v4642, %v4641
  %v4696 = vpack.c.bf16 %v4644, %v4643
  %v4697 = vpack.c.bf16 %v4646, %v4645
  %v4698 = vpack.c.bf16 %v4648, %v4647
  %v4699 = vpack.c.bf16 %v4650, %v4649
  %v4700 = vpack.c.bf16 %v4652, %v4651
  %v4701 = vpack.c.bf16 %v4654, %v4653
  %v4702 = vpack.c.bf16 %v4656, %v4655
  %v4703 = vpack.c.bf16 %v4658, %v4657
  %v4704 = vpack.c.bf16 %v4660, %v4659
  %v4705 = vpack.c.bf16 %v4662, %v4661
  %v4706 = vpack.c.bf16 %v4664, %v4663
  %v4707 = vpack.c.bf16 %v4666, %v4665
  %v4708 = vpack.c.bf16 %v4668, %v4667
  %v4709 = vpack.c.bf16 %v4670, %v4669
  %v4710 = vpack.c.bf16 %v4672, %v4671
  %v4711 = vpack.c.bf16 %v4674, %v4673
  %v4712 = vpack.c.bf16 %v4676, %v4675
  %v4713 = vpack.c.bf16 %v4678, %v4677
  %v4714 = vpack.c.bf16 %v4680, %v4679
  %v4715 = vpack.c.bf16 %v4682, %v4681
  %v4716 = vpack.c.bf16 %v4684, %v4683
  %v4749 = vunpack.c.l.b16 %v4685
  %v4750 = vunpack.c.h.b16 %v4685
  %v4751 = vunpack.c.l.b16 %v4686
  %v4752 = vunpack.c.h.b16 %v4686
  %v4753 = vunpack.c.l.b16 %v4687
  %v4754 = vunpack.c.h.b16 %v4687
  %v4755 = vunpack.c.l.b16 %v4688
  %v4756 = vunpack.c.h.b16 %v4688
  %v4757 = vunpack.c.l.b16 %v4689
  %v4758 = vunpack.c.h.b16 %v4689
  %v4759 = vunpack.c.l.b16 %v4690
  %v4760 = vunpack.c.h.b16 %v4690
  %v4761 = vunpack.c.l.b16 %v4691
  %v4762 = vunpack.c.h.b16 %v4691
  %v4763 = vunpack.c.l.b16 %v4692
  %v4764 = vunpack.c.h.b16 %v4692
  %v4765 = vunpack.c.l.b16 %v4693
  %v4766 = vunpack.c.h.b16 %v4693
  %v4767 = vunpack.c.l.b16 %v4694
  %v4768 = vunpack.c.h.b16 %v4694
  %v4769 = vunpack.c.l.b16 %v4695
  %v4770 = vunpack.c.h.b16 %v4695
  %v4771 = vunpack.c.l.b16 %v4696
  %v4772 = vunpack.c.h.b16 %v4696
  %v4773 = vunpack.c.l.b16 %v4697
  %v4774 = vunpack.c.h.b16 %v4697
  %v4775 = vunpack.c.l.b16 %v4698
  %v4776 = vunpack.c.h.b16 %v4698
  %v4777 = vunpack.c.l.b16 %v4699
  %v4778 = vunpack.c.h.b16 %v4699
  %v4779 = vunpack.c.l.b16 %v4700
  %v4780 = vunpack.c.h.b16 %v4700
  %v4781 = vunpack.c.l.b16 %v4701
  %v4782 = vunpack.c.h.b16 %v4701
  %v4783 = vunpack.c.l.b16 %v4702
  %v4784 = vunpack.c.h.b16 %v4702
  %v4785 = vunpack.c.l.b16 %v4703
  %v4786 = vunpack.c.h.b16 %v4703
  %v4787 = vunpack.c.l.b16 %v4704
  %v4788 = vunpack.c.h.b16 %v4704
  %v4789 = vunpack.c.l.b16 %v4705
  %v4790 = vunpack.c.h.b16 %v4705
  %v4791 = vunpack.c.l.b16 %v4706
  %v4792 = vunpack.c.h.b16 %v4706
  %v4793 = vunpack.c.l.b16 %v4707
  %v4794 = vunpack.c.h.b16 %v4707
  %v4795 = vunpack.c.l.b16 %v4708
  %v4796 = vunpack.c.h.b16 %v4708
  %v4797 = vunpack.c.l.b16 %v4709
  %v4798 = vunpack.c.h.b16 %v4709
  %v4799 = vunpack.c.l.b16 %v4710
  %v4800 = vunpack.c.h.b16 %v4710
  %v4801 = vunpack.c.l.b16 %v4711
  %v4802 = vunpack.c.h.b16 %v4711
  %v4803 = vunpack.c.l.b16 %v4712
  %v4804 = vunpack.c.h.b16 %v4712
  %v4805 = vunpack.c.l.b16 %v4713
  %v4806 = vunpack.c.h.b16 %v4713
  %v4807 = vunpack.c.l.b16 %v4714
  %v4808 = vunpack.c.h.b16 %v4714
  %v4809 = vunpack.c.l.b16 %v4715
  %v4810 = vunpack.c.h.b16 %v4715
  %v4811 = vunpack.c.l.b16 %v4716
  %v4812 = vunpack.c.h.b16 %v4716
  %v4813 = vpack.c.b16 %v4749, %v4749
  %v4814 = vpack.c.b16 %v4750, %v4750
  %v4815 = vpack.c.b16 %v4751, %v4751
  %v4816 = vpack.c.b16 %v4752, %v4752
  %v4817 = vpack.c.b16 %v4753, %v4753
  %v4818 = vpack.c.b16 %v4754, %v4754
  %v4819 = vpack.c.b16 %v4755, %v4755
  %v4820 = vpack.c.b16 %v4756, %v4756
  %v4821 = vpack.c.b16 %v4757, %v4757
  %v4822 = vpack.c.b16 %v4758, %v4758
  %v4823 = vpack.c.b16 %v4759, %v4759
  %v4824 = vpack.c.b16 %v4760, %v4760
  %v4825 = vpack.c.b16 %v4761, %v4761
  %v4826 = vpack.c.b16 %v4762, %v4762
  %v4827 = vpack.c.b16 %v4763, %v4763
  %v4828 = vpack.c.b16 %v4764, %v4764
  %v4829 = vpack.c.b16 %v4765, %v4765
  %v4830 = vpack.c.b16 %v4766, %v4766
  %v4831 = vpack.c.b16 %v4767, %v4767
  %v4832 = vpack.c.b16 %v4768, %v4768
  %v4833 = vpack.c.b16 %v4769, %v4769
  %v4834 = vpack.c.b16 %v4770, %v4770
  %v4835 = vpack.c.b16 %v4771, %v4771
  %v4836 = vpack.c.b16 %v4772, %v4772
  %v4837 = vpack.c.b16 %v4773, %v4773
  %v4838 = vpack.c.b16 %v4774, %v4774
  %v4839 = vpack.c.b16 %v4775, %v4775
  %v4840 = vpack.c.b16 %v4776, %v4776
  %v4841 = vpack.c.b16 %v4777, %v4777
  %v4842 = vpack.c.b16 %v4778, %v4778
  %v4843 = vpack.c.b16 %v4779, %v4779
  %v4844 = vpack.c.b16 %v4780, %v4780
  %v4845 = vpack.c.b16 %v4781, %v4781
  %v4846 = vpack.c.b16 %v4782, %v4782
  %v4847 = vpack.c.b16 %v4783, %v4783
  %v4848 = vpack.c.b16 %v4784, %v4784
  %v4849 = vpack.c.b16 %v4785, %v4785
  %v4850 = vpack.c.b16 %v4786, %v4786
  %v4851 = vpack.c.b16 %v4787, %v4787
  %v4852 = vpack.c.b16 %v4788, %v4788
  %v4853 = vpack.c.b16 %v4789, %v4789
  %v4854 = vpack.c.b16 %v4790, %v4790
  %v4855 = vpack.c.b16 %v4791, %v4791
  %v4856 = vpack.c.b16 %v4792, %v4792
  %v4857 = vpack.c.b16 %v4793, %v4793
  %v4858 = vpack.c.b16 %v4794, %v4794
  %v4859 = vpack.c.b16 %v4795, %v4795
  %v4860 = vpack.c.b16 %v4796, %v4796
  %v4861 = vpack.c.b16 %v4797, %v4797
  %v4862 = vpack.c.b16 %v4798, %v4798
  %v4863 = vpack.c.b16 %v4799, %v4799
  %v4864 = vpack.c.b16 %v4800, %v4800
  %v4865 = vpack.c.b16 %v4801, %v4801
  %v4866 = vpack.c.b16 %v4802, %v4802
  %v4867 = vpack.c.b16 %v4803, %v4803
  %v4868 = vpack.c.b16 %v4804, %v4804
  %v4869 = vpack.c.b16 %v4805, %v4805
  %v4870 = vpack.c.b16 %v4806, %v4806
  %v4871 = vpack.c.b16 %v4807, %v4807
  %v4872 = vpack.c.b16 %v4808, %v4808
  %v4873 = vpack.c.b16 %v4809, %v4809
  %v4874 = vpack.c.b16 %v4810, %v4810
  %v4875 = vpack.c.b16 %v4811, %v4811
  %v4876 = vpack.c.b16 %v4812, %v4812
  %vm4941 = vcmask 125952
  %4942 = vst.msk [vmem:[%s5] sm:$0xf] %vm4941, %v4813
  %4943 = vst.msk [vmem:[%s5 + $0x4] sm:$0xf] %vm4941, %v4814
  %4944 = vst.msk [vmem:[%s5 + $0x8] sm:$0xf] %vm4941, %v4815
  %4945 = vst.msk [vmem:[%s5 + $0xc] sm:$0xf] %vm4941, %v4816
  %4946 = vst.msk [vmem:[%s5 + $0x10] sm:$0xf] %vm4941, %v4817
  %4947 = vst.msk [vmem:[%s5 + $0x14] sm:$0xf] %vm4941, %v4818
  %4948 = vst.msk [vmem:[%s5 + $0x18] sm:$0xf] %vm4941, %v4819
  %4949 = vst.msk [vmem:[%s5 + $0x1c] sm:$0xf] %vm4941, %v4820
  %4950 = vst.msk [vmem:[%s5 + $0x20] sm:$0xf] %vm4941, %v4821
  %4951 = vst.msk [vmem:[%s5 + $0x24] sm:$0xf] %vm4941, %v4822
  %4952 = vst.msk [vmem:[%s5 + $0x28] sm:$0xf] %vm4941, %v4823
  %4953 = vst.msk [vmem:[%s5 + $0x2c] sm:$0xf] %vm4941, %v4824
  %4954 = vst.msk [vmem:[%s5 + $0x30] sm:$0xf] %vm4941, %v4825
  %4955 = vst.msk [vmem:[%s5 + $0x34] sm:$0xf] %vm4941, %v4826
  %4956 = vst.msk [vmem:[%s5 + $0x38] sm:$0xf] %vm4941, %v4827
  %4957 = vst.msk [vmem:[%s5 + $0x3c] sm:$0xf] %vm4941, %v4828
  %4958 = vst.msk [vmem:[%s5 + $0x40] sm:$0xf] %vm4941, %v4829
  %4959 = vst.msk [vmem:[%s5 + $0x44] sm:$0xf] %vm4941, %v4830
  %4960 = vst.msk [vmem:[%s5 + $0x48] sm:$0xf] %vm4941, %v4831
  %4961 = vst.msk [vmem:[%s5 + $0x4c] sm:$0xf] %vm4941, %v4832
  %4962 = vst.msk [vmem:[%s5 + $0x50] sm:$0xf] %vm4941, %v4833
  %4963 = vst.msk [vmem:[%s5 + $0x54] sm:$0xf] %vm4941, %v4834
  %4964 = vst.msk [vmem:[%s5 + $0x58] sm:$0xf] %vm4941, %v4835
  %4965 = vst.msk [vmem:[%s5 + $0x5c] sm:$0xf] %vm4941, %v4836
  %4966 = vst.msk [vmem:[%s5 + $0x60] sm:$0xf] %vm4941, %v4837
  %4967 = vst.msk [vmem:[%s5 + $0x64] sm:$0xf] %vm4941, %v4838
  %4968 = vst.msk [vmem:[%s5 + $0x68] sm:$0xf] %vm4941, %v4839
  %4969 = vst.msk [vmem:[%s5 + $0x6c] sm:$0xf] %vm4941, %v4840
  %4970 = vst.msk [vmem:[%s5 + $0x70] sm:$0xf] %vm4941, %v4841
  %4971 = vst.msk [vmem:[%s5 + $0x74] sm:$0xf] %vm4941, %v4842
  %4972 = vst.msk [vmem:[%s5 + $0x78] sm:$0xf] %vm4941, %v4843
  %4973 = vst.msk [vmem:[%s5 + $0x7c] sm:$0xf] %vm4941, %v4844
  %4974 = vst.msk [vmem:[%s5 + $0x80] sm:$0xf] %vm4941, %v4845
  %4975 = vst.msk [vmem:[%s5 + $0x84] sm:$0xf] %vm4941, %v4846
  %4976 = vst.msk [vmem:[%s5 + $0x88] sm:$0xf] %vm4941, %v4847
  %4977 = vst.msk [vmem:[%s5 + $0x8c] sm:$0xf] %vm4941, %v4848
  %4978 = vst.msk [vmem:[%s5 + $0x90] sm:$0xf] %vm4941, %v4849
  %4979 = vst.msk [vmem:[%s5 + $0x94] sm:$0xf] %vm4941, %v4850
  %4980 = vst.msk [vmem:[%s5 + $0x98] sm:$0xf] %vm4941, %v4851
  %4981 = vst.msk [vmem:[%s5 + $0x9c] sm:$0xf] %vm4941, %v4852
  %4982 = vst.msk [vmem:[%s5 + $0xa0] sm:$0xf] %vm4941, %v4853
  %4983 = vst.msk [vmem:[%s5 + $0xa4] sm:$0xf] %vm4941, %v4854
  %4984 = vst.msk [vmem:[%s5 + $0xa8] sm:$0xf] %vm4941, %v4855
  %4985 = vst.msk [vmem:[%s5 + $0xac] sm:$0xf] %vm4941, %v4856
  %4986 = vst.msk [vmem:[%s5 + $0xb0] sm:$0xf] %vm4941, %v4857
  %4987 = vst.msk [vmem:[%s5 + $0xb4] sm:$0xf] %vm4941, %v4858
  %4988 = vst.msk [vmem:[%s5 + $0xb8] sm:$0xf] %vm4941, %v4859
  %4989 = vst.msk [vmem:[%s5 + $0xbc] sm:$0xf] %vm4941, %v4860
  %4990 = vst.msk [vmem:[%s5 + $0xc0] sm:$0xf] %vm4941, %v4861
  %4991 = vst.msk [vmem:[%s5 + $0xc4] sm:$0xf] %vm4941, %v4862
  %4992 = vst.msk [vmem:[%s5 + $0xc8] sm:$0xf] %vm4941, %v4863
  %4993 = vst.msk [vmem:[%s5 + $0xcc] sm:$0xf] %vm4941, %v4864
  %4994 = vst.msk [vmem:[%s5 + $0xd0] sm:$0xf] %vm4941, %v4865
  %4995 = vst.msk [vmem:[%s5 + $0xd4] sm:$0xf] %vm4941, %v4866
  %4996 = vst.msk [vmem:[%s5 + $0xd8] sm:$0xf] %vm4941, %v4867
  %4997 = vst.msk [vmem:[%s5 + $0xdc] sm:$0xf] %vm4941, %v4868
  %4998 = vst.msk [vmem:[%s5 + $0xe0] sm:$0xf] %vm4941, %v4869
  %4999 = vst.msk [vmem:[%s5 + $0xe4] sm:$0xf] %vm4941, %v4870
  %5000 = vst.msk [vmem:[%s5 + $0xe8] sm:$0xf] %vm4941, %v4871
  %5001 = vst.msk [vmem:[%s5 + $0xec] sm:$0xf] %vm4941, %v4872
  %5002 = vst.msk [vmem:[%s5 + $0xf0] sm:$0xf] %vm4941, %v4873
  %5003 = vst.msk [vmem:[%s5 + $0xf4] sm:$0xf] %vm4941, %v4874
  %5004 = vst.msk [vmem:[%s5 + $0xf8] sm:$0xf] %vm4941, %v4875
  %5005 = vst.msk [vmem:[%s5 + $0xfc] sm:$0xf] %vm4941, %v4876
  // Predicated region
  $region22: #{_lambda_.15} parent=0 // pred_check
    _
  $region23: #{_lambda_.15} parent=0 // pred_check_branch
    %5007 = sbr.rel (0) target = $region25
  $region24: #{_lambda_.15} parent=0 // pred_region
    _
  $region25: #{_lambda_.15} parent=0 // pred_fallthru
    _
  // Predicated region
  $region26: #{_lambda_.15} parent=0 // pred_check
    _
  $region27: #{_lambda_.15} parent=0 // pred_check_branch
    %5009 = sbr.rel (0) target = $region29
  $region28: #{_lambda_.15} parent=0 // pred_region
    _
  $region29: #{_lambda_.15} parent=0 // pred_fallthru
    _

// kernel: _lambda_.21
$region0: #{_lambda_.21}
  #allocation0 [shape = 'u32[]', space=smem, size = 0x4, offset = 0x4, fixed_abs, tag = 'smem constant byte address 0x4 - core index']
  #allocation1 [shape = 'u32[144,128]{1,0:T(1,128)}', space=vmem, size = 0x12000, scoped, tag = 'internal scratch']
  %s0 = inlined_call_operand.vmem [shape: bf16[2,4,4,128], index: 0, kind: input, shape index: {}]
  %s1 = inlined_call_operand.vmem [shape: f32[9,1,1,1,128], index: 1, kind: input, shape index: {}]
  %s2 = inlined_call_operand.vmem [shape: f32[1,1,1,128], index: 2, kind: input, shape index: {}]
  %s3 = inlined_call_operand.vmem [shape: bf16[128,128], index: 3, kind: input, shape index: {}]
  %s4 = inlined_call_operand.vmem [shape: f32[1,128], index: 4, kind: input, shape index: {}]
  %s5 = inlined_call_operand.vmem [shape: bf16[8,128], index: 5, kind: output, shape index: {}]
  %s6 = sld [smem:[#allocation0]]
  $region30: #{_lambda_.21} parent=0
    _
  %s8 = ssub.s32 1, %s6
  %s9 = scalar_select 0, %s8, %s6
  // Predicated region
  $region2: #{_lambda_.21} parent=0 // pred_check
    _
  $region3: #{_lambda_.21} parent=0 // pred_check_branch
    %11 = sbr.rel (0) target = $region5
  $region4: #{_lambda_.21} parent=0 // pred_region
    _
  $region5: #{_lambda_.21} parent=0 // pred_fallthru
    _
  // Predicated region
  $region6: #{_lambda_.21} parent=0 // pred_check
    _
  $region7: #{_lambda_.21} parent=0 // pred_check_branch
    %13 = sbr.rel (0) target = $region9
  $region8: #{_lambda_.21} parent=0 // pred_region
    _
  $region9: #{_lambda_.21} parent=0 // pred_fallthru
    _
  // Predicated region
  $region10: #{_lambda_.21} parent=0 // pred_check
    _
  $region11: #{_lambda_.21} parent=0 // pred_check_branch
    %15 = sbr.rel (0) target = $region13
  $region12: #{_lambda_.21} parent=0 // pred_region
    _
  $region13: #{_lambda_.21} parent=0 // pred_fallthru
    _
  // Predicated region
  $region14: #{_lambda_.21} parent=0 // pred_check
    _
  $region15: #{_lambda_.21} parent=0 // pred_check_branch
    %17 = sbr.rel (0) target = $region17
  $region16: #{_lambda_.21} parent=0 // pred_region
    _
  $region17: #{_lambda_.21} parent=0 // pred_fallthru
    _
  // Predicated region
  $region18: #{_lambda_.21} parent=0 // pred_check
    _
  $region19: #{_lambda_.21} parent=0 // pred_check_branch
    %19 = sbr.rel (0) target = $region21
  $region20: #{_lambda_.21} parent=0 // pred_region
    _
  $region21: #{_lambda_.21} parent=0 // pred_fallthru
    _
  %v21 = vld [vmem:[%s1] sm:$0x1]
  %v22 = vld [vmem:[%s1 + $0x1] sm:$0x1]
  %v23 = vld [vmem:[%s1 + $0x2] sm:$0x1]
  %v24 = vld [vmem:[%s1 + $0x3] sm:$0x1]
  %v25 = vld [vmem:[%s1 + $0x4] sm:$0x1]
  %v26 = vld [vmem:[%s1 + $0x5] sm:$0x1]
  %v27 = vld [vmem:[%s1 + $0x6] sm:$0x1]
  %v28 = vld [vmem:[%s1 + $0x7] sm:$0x1]
  %v29 = vld [vmem:[%s1 + $0x8] sm:$0x1]
  %v30 = vld [vmem:[%s0] sm:$0x1]
  %v31 = vld [vmem:[%s0 + $0x2] sm:$0x1]
  %v32 = vld [vmem:[%s0 + $0x8] sm:$0x1]
  %v33 = vld [vmem:[%s0 + $0xa] sm:$0x1]
  %v34 = vunpack.c.l.bf16 %v30
  %v35 = vunpack.c.l.bf16 %v31
  %v36 = vunpack.c.l.bf16 %v32
  %v37 = vunpack.c.l.bf16 %v33
  %v39 = vlaneseq
  %v40 = vshrl.u32 %v39, 7
  %v41 = vsub.s32 0, %v40
  %v42 = vrot.slane %v21, %v41
  %v44 = vmul.f32 %v34, %v42
  %v45 = vmul.f32 %v35, %v42
  %v46 = vmul.f32 %v36, %v42
  %v47 = vmul.f32 %v37, %v42
  %v48 = vld [vmem:[%s0] sm:$0x3]
  %v49 = vld [vmem:[%s0 + $0x2] sm:$0x3]
  %v50 = vld [vmem:[%s0 + $0x8] sm:$0x3]
  %v51 = vld [vmem:[%s0 + $0xa] sm:$0x3]
  %v52 = vunpack.c.l.bf16 %v48
  %v53 = vunpack.c.l.bf16 %v49
  %v54 = vunpack.c.l.bf16 %v50
  %v55 = vunpack.c.l.bf16 %v51
  %v57 = vlaneseq
  %v58 = vshrl.u32 %v57, 7
  %v59 = vsub.s32 0, %v58
  %v60 = vrot.slane %v22, %v59
  %v62 = vmul.f32 %v52, %v60
  %v63 = vmul.f32 %v53, %v60
  %v64 = vmul.f32 %v54, %v60
  %v65 = vmul.f32 %v55, %v60
  %v70 = vrot.slane %v62, 5
  %v71 = vrot.slane %v70, 4
  %v72 = vrot.slane %v63, 5
  %v73 = vrot.slane %v72, 4
  %v74 = vrot.slane %v64, 5
  %v75 = vrot.slane %v74, 4
  %v76 = vrot.slane %v65, 5
  %v77 = vrot.slane %v76, 4
  %v82 = vadd.f32 %v44, %v71
  %v83 = vadd.f32 %v45, %v73
  %v84 = vadd.f32 %v46, %v75
  %v85 = vadd.f32 %v47, %v77
  %v86 = vld [vmem:[%s0] sm:$0x2]
  %v87 = vld [vmem:[%s0 + $0x2] sm:$0x2]
  %v88 = vld [vmem:[%s0 + $0x8] sm:$0x2]
  %v89 = vld [vmem:[%s0 + $0xa] sm:$0x2]
  %v90 = vunpack.c.l.bf16 %v86
  %v91 = vunpack.c.l.bf16 %v87
  %v92 = vunpack.c.l.bf16 %v88
  %v93 = vunpack.c.l.bf16 %v89
  %v95 = vlaneseq
  %v96 = vshrl.u32 %v95, 7
  %v97 = vsub.s32 0, %v96
  %v98 = vrot.slane %v23, %v97
  %v100 = vmul.f32 %v90, %v98
  %v101 = vmul.f32 %v91, %v98
  %v102 = vmul.f32 %v92, %v98
  %v103 = vmul.f32 %v93, %v98
  %v108 = vrot.slane %v100, 6
  %v109 = vrot.slane %v108, 4
  %v110 = vrot.slane %v101, 6
  %v111 = vrot.slane %v110, 4
  %v112 = vrot.slane %v102, 6
  %v113 = vrot.slane %v112, 4
  %v114 = vrot.slane %v103, 6
  %v115 = vrot.slane %v114, 4
  %v120 = vadd.f32 %v82, %v109
  %v121 = vadd.f32 %v83, %v111
  %v122 = vadd.f32 %v84, %v113
  %v123 = vadd.f32 %v85, %v115
  %s124 = scalar_lea.vmem %s0, 2
  %v125 = vld [vmem:[%s124] sm:$0x1]
  %v126 = vld [vmem:[%s124 + $0x2] sm:$0x1]
  %v127 = vld [vmem:[%s124 + $0x8] sm:$0x1]
  %v128 = vld [vmem:[%s124 + $0xa] sm:$0x1]
  %v129 = vunpack.c.l.bf16 %v125
  %v130 = vunpack.c.l.bf16 %v126
  %v131 = vunpack.c.l.bf16 %v127
  %v132 = vunpack.c.l.bf16 %v128
  %v134 = vlaneseq
  %v135 = vshrl.u32 %v134, 7
  %v136 = vsub.s32 0, %v135
  %v137 = vrot.slane %v24, %v136
  %v139 = vmul.f32 %v129, %v137
  %v140 = vmul.f32 %v130, %v137
  %v141 = vmul.f32 %v131, %v137
  %v142 = vmul.f32 %v132, %v137
  %v143 = vadd.f32 %v120, %v139
  %v144 = vadd.f32 %v121, %v140
  %v145 = vadd.f32 %v122, %v141
  %v146 = vadd.f32 %v123, %v142
  %v147 = vld [vmem:[%s124] sm:$0x3]
  %v148 = vld [vmem:[%s124 + $0x2] sm:$0x3]
  %v149 = vld [vmem:[%s124 + $0x8] sm:$0x3]
  %v150 = vld [vmem:[%s124 + $0xa] sm:$0x3]
  %v151 = vunpack.c.l.bf16 %v147
  %v152 = vunpack.c.l.bf16 %v148
  %v153 = vunpack.c.l.bf16 %v149
  %v154 = vunpack.c.l.bf16 %v150
  %v156 = vlaneseq
  %v157 = vshrl.u32 %v156, 7
  %v158 = vsub.s32 0, %v157
  %v159 = vrot.slane %v25, %v158
  %v161 = vmul.f32 %v151, %v159
  %v162 = vmul.f32 %v152, %v159
  %v163 = vmul.f32 %v153, %v159
  %v164 = vmul.f32 %v154, %v159
  %v169 = vrot.slane %v161, 5
  %v170 = vrot.slane %v169, 4
  %v171 = vrot.slane %v162, 5
  %v172 = vrot.slane %v171, 4
  %v173 = vrot.slane %v163, 5
  %v174 = vrot.slane %v173, 4
  %v175 = vrot.slane %v164, 5
  %v176 = vrot.slane %v175, 4
  %v181 = vadd.f32 %v143, %v170
  %v182 = vadd.f32 %v144, %v172
  %v183 = vadd.f32 %v145, %v174
  %v184 = vadd.f32 %v146, %v176
  %v185 = vld [vmem:[%s124] sm:$0x2]
  %v186 = vld [vmem:[%s124 + $0x2] sm:$0x2]
  %v187 = vld [vmem:[%s124 + $0x8] sm:$0x2]
  %v188 = vld [vmem:[%s124 + $0xa] sm:$0x2]
  %v189 = vunpack.c.l.bf16 %v185
  %v190 = vunpack.c.l.bf16 %v186
  %v191 = vunpack.c.l.bf16 %v187
  %v192 = vunpack.c.l.bf16 %v188
  %v194 = vlaneseq
  %v195 = vshrl.u32 %v194, 7
  %v196 = vsub.s32 0, %v195
  %v197 = vrot.slane %v26, %v196
  %v199 = vmul.f32 %v189, %v197
  %v200 = vmul.f32 %v190, %v197
  %v201 = vmul.f32 %v191, %v197
  %v202 = vmul.f32 %v192, %v197
  %v207 = vrot.slane %v199, 6
  %v208 = vrot.slane %v207, 4
  %v209 = vrot.slane %v200, 6
  %v210 = vrot.slane %v209, 4
  %v211 = vrot.slane %v201, 6
  %v212 = vrot.slane %v211, 4
  %v213 = vrot.slane %v202, 6
  %v214 = vrot.slane %v213, 4
  %v219 = vadd.f32 %v181, %v208
  %v220 = vadd.f32 %v182, %v210
  %v221 = vadd.f32 %v183, %v212
  %v222 = vadd.f32 %v184, %v214
  %s223 = scalar_lea.vmem %s0, 4
  %v224 = vld [vmem:[%s223] sm:$0x1]
  %v225 = vld [vmem:[%s223 + $0x2] sm:$0x1]
  %v226 = vld [vmem:[%s223 + $0x8] sm:$0x1]
  %v227 = vld [vmem:[%s223 + $0xa] sm:$0x1]
  %v228 = vunpack.c.l.bf16 %v224
  %v229 = vunpack.c.l.bf16 %v225
  %v230 = vunpack.c.l.bf16 %v226
  %v231 = vunpack.c.l.bf16 %v227
  %v233 = vlaneseq
  %v234 = vshrl.u32 %v233, 7
  %v235 = vsub.s32 0, %v234
  %v236 = vrot.slane %v27, %v235
  %v238 = vmul.f32 %v228, %v236
  %v239 = vmul.f32 %v229, %v236
  %v240 = vmul.f32 %v230, %v236
  %v241 = vmul.f32 %v231, %v236
  %v242 = vadd.f32 %v219, %v238
  %v243 = vadd.f32 %v220, %v239
  %v244 = vadd.f32 %v221, %v240
  %v245 = vadd.f32 %v222, %v241
  %v246 = vld [vmem:[%s223] sm:$0x3]
  %v247 = vld [vmem:[%s223 + $0x2] sm:$0x3]
  %v248 = vld [vmem:[%s223 + $0x8] sm:$0x3]
  %v249 = vld [vmem:[%s223 + $0xa] sm:$0x3]
  %v250 = vunpack.c.l.bf16 %v246
  %v251 = vunpack.c.l.bf16 %v247
  %v252 = vunpack.c.l.bf16 %v248
  %v253 = vunpack.c.l.bf16 %v249
  %v255 = vlaneseq
  %v256 = vshrl.u32 %v255, 7
  %v257 = vsub.s32 0, %v256
  %v258 = vrot.slane %v28, %v257
  %v260 = vmul.f32 %v250, %v258
  %v261 = vmul.f32 %v251, %v258
  %v262 = vmul.f32 %v252, %v258
  %v263 = vmul.f32 %v253, %v258
  %v268 = vrot.slane %v260, 5
  %v269 = vrot.slane %v268, 4
  %v270 = vrot.slane %v261, 5
  %v271 = vrot.slane %v270, 4
  %v272 = vrot.slane %v262, 5
  %v273 = vrot.slane %v272, 4
  %v274 = vrot.slane %v263, 5
  %v275 = vrot.slane %v274, 4
  %v280 = vadd.f32 %v242, %v269
  %v281 = vadd.f32 %v243, %v271
  %v282 = vadd.f32 %v244, %v273
  %v283 = vadd.f32 %v245, %v275
  %v284 = vld [vmem:[%s223] sm:$0x2]
  %v285 = vld [vmem:[%s223 + $0x2] sm:$0x2]
  %v286 = vld [vmem:[%s223 + $0x8] sm:$0x2]
  %v287 = vld [vmem:[%s223 + $0xa] sm:$0x2]
  %v288 = vunpack.c.l.bf16 %v284
  %v289 = vunpack.c.l.bf16 %v285
  %v290 = vunpack.c.l.bf16 %v286
  %v291 = vunpack.c.l.bf16 %v287
  %v293 = vlaneseq
  %v294 = vshrl.u32 %v293, 7
  %v295 = vsub.s32 0, %v294
  %v296 = vrot.slane %v29, %v295
  %v298 = vmul.f32 %v288, %v296
  %v299 = vmul.f32 %v289, %v296
  %v300 = vmul.f32 %v290, %v296
  %v301 = vmul.f32 %v291, %v296
  %v306 = vrot.slane %v298, 6
  %v307 = vrot.slane %v306, 4
  %v308 = vrot.slane %v299, 6
  %v309 = vrot.slane %v308, 4
  %v310 = vrot.slane %v300, 6
  %v311 = vrot.slane %v310, 4
  %v312 = vrot.slane %v301, 6
  %v313 = vrot.slane %v312, 4
  %v318 = vadd.f32 %v280, %v307
  %v319 = vadd.f32 %v281, %v309
  %v320 = vadd.f32 %v282, %v311
  %v321 = vadd.f32 %v283, %v313
  %v322 = vld [vmem:[%s2] sm:$0x1]
  %v324 = vlaneseq
  %v325 = vshrl.u32 %v324, 7
  %v326 = vsub.s32 0, %v325
  %v327 = vrot.slane %v322, %v326
  %v329 = vadd.f32 %v318, %v327
  %v330 = vadd.f32 %v319, %v327
  %v331 = vadd.f32 %v320, %v327
  %v332 = vadd.f32 %v321, %v327
  %v333 = vmax.f32 %v329, 0.0
  %v334 = vmax.f32 %v330, 0.0
  %v335 = vmax.f32 %v331, 0.0
  %v336 = vmax.f32 %v332, 0.0
  %v341 = vcombine.low %v333, %v334
  %v342 = vcombine.low %v335, %v336
  %v344 = vunpack.c.l.s4 1983009808
  %v345 = vunpack.c.0.s8 %v344
  %v346 = vlaneseq
  %v347 = vshrl.u32 %v346, 7
  %v348 = vsub.s32 %v345, %v347
  %v349 = vrot.slane %v341, %v348
  %v351 = vunpack.c.l.s4 1983009808
  %v352 = vunpack.c.0.s8 %v351
  %v353 = vlaneseq
  %v354 = vshrl.u32 %v353, 7
  %v355 = vsub.s32 %v352, %v354
  %v356 = vrot.slane %v342, %v355
  %v357 = vcombine.low %v349, %v356
  %v359 = vpack.c.bf16 %v357, %v357
  %v360 = vld [vmem:[%s3] sm:$0xf]
  %v361 = vld [vmem:[%s3 + $0x4] sm:$0xf]
  %v362 = vld [vmem:[%s3 + $0x8] sm:$0xf]
  %v363 = vld [vmem:[%s3 + $0xc] sm:$0xf]
  %v364 = vld [vmem:[%s3 + $0x10] sm:$0xf]
  %v365 = vld [vmem:[%s3 + $0x14] sm:$0xf]
  %v366 = vld [vmem:[%s3 + $0x18] sm:$0xf]
  %v367 = vld [vmem:[%s3 + $0x1c] sm:$0xf]
  %v368 = vld [vmem:[%s3 + $0x20] sm:$0xf]
  %v369 = vld [vmem:[%s3 + $0x24] sm:$0xf]
  %v370 = vld [vmem:[%s3 + $0x28] sm:$0xf]
  %v371 = vld [vmem:[%s3 + $0x2c] sm:$0xf]
  %v372 = vld [vmem:[%s3 + $0x30] sm:$0xf]
  %v373 = vld [vmem:[%s3 + $0x34] sm:$0xf]
  %v374 = vld [vmem:[%s3 + $0x38] sm:$0xf]
  %v375 = vld [vmem:[%s3 + $0x3c] sm:$0xf]
  %v376 = vld [vmem:[%s4] sm:$0x1]
  %v378 = vlaneseq
  %v379 = vshrl.u32 %v378, 7
  %v380 = vsub.s32 0, %v379
  %v381 = vrot.slane %v376, %v380
  %v399 = vunpack.c.l.b16 %v360
  %v400 = vunpack.c.l.b16 %v361
  %v401 = vunpack.c.l.b16 %v362
  %v402 = vunpack.c.l.b16 %v363
  %v403 = vunpack.c.l.b16 %v364
  %v404 = vunpack.c.l.b16 %v365
  %v405 = vunpack.c.l.b16 %v366
  %v406 = vunpack.c.l.b16 %v367
  %v407 = vunpack.c.l.b16 %v368
  %v408 = vunpack.c.l.b16 %v369
  %v409 = vunpack.c.l.b16 %v370
  %v410 = vunpack.c.l.b16 %v371
  %v411 = vunpack.c.l.b16 %v372
  %v412 = vunpack.c.l.b16 %v373
  %v413 = vunpack.c.l.b16 %v374
  %v414 = vunpack.c.l.b16 %v375
  %v415 = vpack.c.b16 %v400, %v399
  %v416 = vpack.c.b16 %v402, %v401
  %v417 = vpack.c.b16 %v404, %v403
  %v418 = vpack.c.b16 %v406, %v405
  %v419 = vpack.c.b16 %v408, %v407
  %v420 = vpack.c.b16 %v410, %v409
  %v421 = vpack.c.b16 %v412, %v411
  %v422 = vpack.c.b16 %v414, %v413
  %431 = vmatprep.subr.bf16.mxu0 0
  %432 = vmatpush1.bf16.msra.mxu0 %v422
  %433 = vmatprep.subr.bf16.mxu0 0
  %434 = vmatpush1.bf16.msra.mxu0 %v421
  %435 = vmatprep.subr.bf16.mxu0 0
  %436 = vmatpush1.bf16.msra.mxu0 %v420
  %437 = vmatprep.subr.bf16.mxu0 0
  %438 = vmatpush1.bf16.msra.mxu0 %v419
  %439 = vmatprep.subr.bf16.mxu0 0
  %440 = vmatpush1.bf16.msra.mxu0 %v418
  %441 = vmatprep.subr.bf16.mxu0 0
  %442 = vmatpush1.bf16.msra.mxu0 %v417
  %443 = vmatprep.subr.bf16.mxu0 0
  %444 = vmatpush1.bf16.msra.mxu0 %v416
  %445 = vmatprep.subr.bf16.mxu0 0
  %446 = vmatpush1.bf16.msra.mxu0 %v415
  %447 = vmatprep.subr.bf16.mxu0 0
  %448 = vmatpush2.bf16.msra.mxu0 0
  %449 = vmatprep.subr.bf16.mxu0 0
  %450 = vmatpush2.bf16.msra.mxu0 0
  %451 = vmatprep.subr.bf16.mxu0 0
  %452 = vmatpush2.bf16.msra.mxu0 0
  %453 = vmatprep.subr.bf16.mxu0 0
  %454 = vmatpush2.bf16.msra.mxu0 0
  %455 = vmatprep.subr.bf16.mxu0 0
  %456 = vmatpush2.bf16.msra.mxu0 0
  %457 = vmatprep.subr.bf16.mxu0 0
  %458 = vmatpush2.bf16.msra.mxu0 0
  %459 = vmatprep.subr.bf16.mxu0 0
  %460 = vmatpush2.bf16.msra.mxu0 0
  %461 = vmatprep.subr.bf16.mxu0 0
  %462 = vmatpush2.bf16.msra.mxu0 0
  %463 = vmatprep.mubr.bf16.mxu0 0
  %464 = vmatmul.mubr.bf16.gmra.mxu0 %v359
  %v465 = vpop.f32.mrf.mxu0
  %v466 = vadd.f32 %v381, %v465
  %v467 = vpop.f32.mrf.mxu0
  %v468 = vpop.f32.mrf.mxu0
  %v469 = vpop.f32.mrf.mxu0
  %470 = vdwg.mxu0
  %v471 = vmax.f32 %v466, 0.0
  %v472 = vpack.c.bf16 %v471, %v471
  %473 = vst [vmem:[%s5] sm:$0xf] %v472
  // Predicated region
  $region22: #{_lambda_.21} parent=0 // pred_check
    _
  $region23: #{_lambda_.21} parent=0 // pred_check_branch
    %475 = sbr.rel (0) target = $region25
  $region24: #{_lambda_.21} parent=0 // pred_region
    _
  $region25: #{_lambda_.21} parent=0 // pred_fallthru
    _
  // Predicated region
  $region26: #{_lambda_.21} parent=0 // pred_check
    _
  $region27: #{_lambda_.21} parent=0 // pred_check_branch
    %477 = sbr.rel (0) target = $region29
  $region28: #{_lambda_.21} parent=0 // pred_region
    _
  $region29: #{_lambda_.21} parent=0 // pred_fallthru
    _

// kernel: _lambda_.20
$region0: #{_lambda_.20}
  #allocation0 [shape = 'u32[]', space=smem, size = 0x4, offset = 0x4, fixed_abs, tag = 'smem constant byte address 0x4 - core index']
  #allocation1 [shape = 'u32[144,128]{1,0:T(1,128)}', space=vmem, size = 0x12000, scoped, tag = 'internal scratch']
  %s0 = inlined_call_operand.vmem [shape: bf16[9,8,64], index: 0, kind: input, shape index: {}]
  %s1 = inlined_call_operand.vmem [shape: f32[9,1,64], index: 1, kind: input, shape index: {}]
  %s2 = inlined_call_operand.vmem [shape: f32[1,64], index: 2, kind: input, shape index: {}]
  %s3 = inlined_call_operand.vmem [shape: bf16[64,128], index: 3, kind: input, shape index: {}]
  %s4 = inlined_call_operand.vmem [shape: f32[1,128], index: 4, kind: input, shape index: {}]
  %s5 = inlined_call_operand.vmem [shape: bf16[8,128], index: 5, kind: output, shape index: {}]
  %s6 = sld [smem:[#allocation0]]
  $region30: #{_lambda_.20} parent=0
    _
  %s8 = ssub.s32 1, %s6
  %s9 = scalar_select 0, %s8, %s6
  // Predicated region
  $region2: #{_lambda_.20} parent=0 // pred_check
    _
  $region3: #{_lambda_.20} parent=0 // pred_check_branch
    %11 = sbr.rel (0) target = $region5
  $region4: #{_lambda_.20} parent=0 // pred_region
    _
  $region5: #{_lambda_.20} parent=0 // pred_fallthru
    _
  // Predicated region
  $region6: #{_lambda_.20} parent=0 // pred_check
    _
  $region7: #{_lambda_.20} parent=0 // pred_check_branch
    %13 = sbr.rel (0) target = $region9
  $region8: #{_lambda_.20} parent=0 // pred_region
    _
  $region9: #{_lambda_.20} parent=0 // pred_fallthru
    _
  // Predicated region
  $region10: #{_lambda_.20} parent=0 // pred_check
    _
  $region11: #{_lambda_.20} parent=0 // pred_check_branch
    %15 = sbr.rel (0) target = $region13
  $region12: #{_lambda_.20} parent=0 // pred_region
    _
  $region13: #{_lambda_.20} parent=0 // pred_fallthru
    _
  // Predicated region
  $region14: #{_lambda_.20} parent=0 // pred_check
    _
  $region15: #{_lambda_.20} parent=0 // pred_check_branch
    %17 = sbr.rel (0) target = $region17
  $region16: #{_lambda_.20} parent=0 // pred_region
    _
  $region17: #{_lambda_.20} parent=0 // pred_fallthru
    _
  // Predicated region
  $region18: #{_lambda_.20} parent=0 // pred_check
    _
  $region19: #{_lambda_.20} parent=0 // pred_check_branch
    %19 = sbr.rel (0) target = $region21
  $region20: #{_lambda_.20} parent=0 // pred_region
    _
  $region21: #{_lambda_.20} parent=0 // pred_fallthru
    _
  %v21 = vld [vmem:[%s0] sm:$0xf]
  %v22 = vunpack.c.l.bf16 %v21
  %v23 = vld [vmem:[%s1] sm:$0x1]
  %v25 = vlaneseq
  %v26 = vshrl.u32 %v25, 7
  %v27 = vsub.s32 0, %v26
  %v28 = vrot.slane %v23, %v27
  %v30 = vmul.f32 %v22, %v28
  %s31 = scalar_lea.vmem %s0, 4
  %v32 = vld [vmem:[%s31] sm:$0xf]
  %v33 = vunpack.c.l.bf16 %v32
  %s34 = scalar_lea.vmem %s1, 1
  %v35 = vld [vmem:[%s34] sm:$0x1]
  %v37 = vlaneseq
  %v38 = vshrl.u32 %v37, 7
  %v39 = vsub.s32 0, %v38
  %v40 = vrot.slane %v35, %v39
  %v42 = vmul.f32 %v33, %v40
  %v43 = vadd.f32 %v30, %v42
  %s44 = scalar_lea.vmem %s0, 8
  %v45 = vld [vmem:[%s44] sm:$0xf]
  %v46 = vunpack.c.l.bf16 %v45
  %s47 = scalar_lea.vmem %s1, 2
  %v48 = vld [vmem:[%s47] sm:$0x1]
  %v50 = vlaneseq
  %v51 = vshrl.u32 %v50, 7
  %v52 = vsub.s32 0, %v51
  %v53 = vrot.slane %v48, %v52
  %v55 = vmul.f32 %v46, %v53
  %v56 = vadd.f32 %v43, %v55
  %s57 = scalar_lea.vmem %s0, 12
  %v58 = vld [vmem:[%s57] sm:$0xf]
  %v59 = vunpack.c.l.bf16 %v58
  %s60 = scalar_lea.vmem %s1, 3
  %v61 = vld [vmem:[%s60] sm:$0x1]
  %v63 = vlaneseq
  %v64 = vshrl.u32 %v63, 7
  %v65 = vsub.s32 0, %v64
  %v66 = vrot.slane %v61, %v65
  %v68 = vmul.f32 %v59, %v66
  %v69 = vadd.f32 %v56, %v68
  %s70 = scalar_lea.vmem %s0, 16
  %v71 = vld [vmem:[%s70] sm:$0xf]
  %v72 = vunpack.c.l.bf16 %v71
  %s73 = scalar_lea.vmem %s1, 4
  %v74 = vld [vmem:[%s73] sm:$0x1]
  %v76 = vlaneseq
  %v77 = vshrl.u32 %v76, 7
  %v78 = vsub.s32 0, %v77
  %v79 = vrot.slane %v74, %v78
  %v81 = vmul.f32 %v72, %v79
  %v82 = vadd.f32 %v69, %v81
  %s83 = scalar_lea.vmem %s0, 20
  %v84 = vld [vmem:[%s83] sm:$0xf]
  %v85 = vunpack.c.l.bf16 %v84
  %s86 = scalar_lea.vmem %s1, 5
  %v87 = vld [vmem:[%s86] sm:$0x1]
  %v89 = vlaneseq
  %v90 = vshrl.u32 %v89, 7
  %v91 = vsub.s32 0, %v90
  %v92 = vrot.slane %v87, %v91
  %v94 = vmul.f32 %v85, %v92
  %v95 = vadd.f32 %v82, %v94
  %s96 = scalar_lea.vmem %s0, 24
  %v97 = vld [vmem:[%s96] sm:$0xf]
  %v98 = vunpack.c.l.bf16 %v97
  %s99 = scalar_lea.vmem %s1, 6
  %v100 = vld [vmem:[%s99] sm:$0x1]
  %v102 = vlaneseq
  %v103 = vshrl.u32 %v102, 7
  %v104 = vsub.s32 0, %v103
  %v105 = vrot.slane %v100, %v104
  %v107 = vmul.f32 %v98, %v105
  %v108 = vadd.f32 %v95, %v107
  %s109 = scalar_lea.vmem %s0, 28
  %v110 = vld [vmem:[%s109] sm:$0xf]
  %v111 = vunpack.c.l.bf16 %v110
  %s112 = scalar_lea.vmem %s1, 7
  %v113 = vld [vmem:[%s112] sm:$0x1]
  %v115 = vlaneseq
  %v116 = vshrl.u32 %v115, 7
  %v117 = vsub.s32 0, %v116
  %v118 = vrot.slane %v113, %v117
  %v120 = vmul.f32 %v111, %v118
  %v121 = vadd.f32 %v108, %v120
  %s122 = scalar_lea.vmem %s0, 32
  %v123 = vld [vmem:[%s122] sm:$0xf]
  %v124 = vunpack.c.l.bf16 %v123
  %s125 = scalar_lea.vmem %s1, 8
  %v126 = vld [vmem:[%s125] sm:$0x1]
  %v128 = vlaneseq
  %v129 = vshrl.u32 %v128, 7
  %v130 = vsub.s32 0, %v129
  %v131 = vrot.slane %v126, %v130
  %v133 = vmul.f32 %v124, %v131
  %v134 = vadd.f32 %v121, %v133
  %v135 = vld [vmem:[%s2] sm:$0x1]
  %v137 = vlaneseq
  %v138 = vshrl.u32 %v137, 7
  %v139 = vsub.s32 0, %v138
  %v140 = vrot.slane %v135, %v139
  %v142 = vadd.f32 %v134, %v140
  %v143 = vmax.f32 %v142, 0.0
  %v144 = vpack.c.bf16 %v143, %v143
  %v145 = vld [vmem:[%s3] sm:$0xf]
  %v146 = vld [vmem:[%s3 + $0x4] sm:$0xf]
  %v147 = vld [vmem:[%s3 + $0x8] sm:$0xf]
  %v148 = vld [vmem:[%s3 + $0xc] sm:$0xf]
  %v149 = vld [vmem:[%s3 + $0x10] sm:$0xf]
  %v150 = vld [vmem:[%s3 + $0x14] sm:$0xf]
  %v151 = vld [vmem:[%s3 + $0x18] sm:$0xf]
  %v152 = vld [vmem:[%s3 + $0x1c] sm:$0xf]
  %v153 = vld [vmem:[%s4] sm:$0x1]
  %v155 = vlaneseq
  %v156 = vshrl.u32 %v155, 7
  %v157 = vsub.s32 0, %v156
  %v158 = vrot.slane %v153, %v157
  %v168 = vunpack.c.l.b16 %v145
  %v169 = vunpack.c.l.b16 %v146
  %v170 = vunpack.c.l.b16 %v147
  %v171 = vunpack.c.l.b16 %v148
  %v172 = vunpack.c.l.b16 %v149
  %v173 = vunpack.c.l.b16 %v150
  %v174 = vunpack.c.l.b16 %v151
  %v175 = vunpack.c.l.b16 %v152
  %v176 = vpack.c.b16 %v169, %v168
  %v177 = vpack.c.b16 %v171, %v170
  %v178 = vpack.c.b16 %v173, %v172
  %v179 = vpack.c.b16 %v175, %v174
  %vm184 = vcmask 523264
  %v186 = vsel %vm184, %v144, 0
  %188 = vmatprep.subr.bf16.mxu0 0
  %189 = vmatpush1.bf16.msra.mxu0 0
  %190 = vmatprep.subr.bf16.mxu0 0
  %191 = vmatpush1.bf16.msra.mxu0 0
  %192 = vmatprep.subr.bf16.mxu0 0
  %193 = vmatpush1.bf16.msra.mxu0 0
  %194 = vmatprep.subr.bf16.mxu0 0
  %195 = vmatpush1.bf16.msra.mxu0 0
  %196 = vmatprep.subr.bf16.mxu0 0
  %197 = vmatpush1.bf16.msra.mxu0 %v179
  %198 = vmatprep.subr.bf16.mxu0 0
  %199 = vmatpush1.bf16.msra.mxu0 %v178
  %200 = vmatprep.subr.bf16.mxu0 0
  %201 = vmatpush1.bf16.msra.mxu0 %v177
  %202 = vmatprep.subr.bf16.mxu0 0
  %203 = vmatpush1.bf16.msra.mxu0 %v176
  %204 = vmatprep.subr.bf16.mxu0 0
  %205 = vmatpush2.bf16.msra.mxu0 0
  %206 = vmatprep.subr.bf16.mxu0 0
  %207 = vmatpush2.bf16.msra.mxu0 0
  %208 = vmatprep.subr.bf16.mxu0 0
  %209 = vmatpush2.bf16.msra.mxu0 0
  %210 = vmatprep.subr.bf16.mxu0 0
  %211 = vmatpush2.bf16.msra.mxu0 0
  %212 = vmatprep.subr.bf16.mxu0 0
  %213 = vmatpush2.bf16.msra.mxu0 0
  %214 = vmatprep.subr.bf16.mxu0 0
  %215 = vmatpush2.bf16.msra.mxu0 0
  %216 = vmatprep.subr.bf16.mxu0 0
  %217 = vmatpush2.bf16.msra.mxu0 0
  %218 = vmatprep.subr.bf16.mxu0 0
  %219 = vmatpush2.bf16.msra.mxu0 0
  %220 = vmatprep.mubr.bf16.mxu0 0
  %221 = vmatmul.mubr.bf16.gmra.mxu0 %v186
  %v222 = vpop.f32.mrf.mxu0
  %v223 = vadd.f32 %v158, %v222
  %v224 = vpop.f32.mrf.mxu0
  %v225 = vpop.f32.mrf.mxu0
  %v226 = vpop.f32.mrf.mxu0
  %227 = vdwg.mxu0
  %v228 = vmax.f32 %v223, 0.0
  %v229 = vpack.c.bf16 %v228, %v228
  %230 = vst [vmem:[%s5] sm:$0xf] %v229
  // Predicated region
  $region22: #{_lambda_.20} parent=0 // pred_check
    _
  $region23: #{_lambda_.20} parent=0 // pred_check_branch
    %232 = sbr.rel (0) target = $region25
  $region24: #{_lambda_.20} parent=0 // pred_region
    _
  $region25: #{_lambda_.20} parent=0 // pred_fallthru
    _
  // Predicated region
  $region26: #{_lambda_.20} parent=0 // pred_check
    _
  $region27: #{_lambda_.20} parent=0 // pred_check_branch
    %234 = sbr.rel (0) target = $region29
  $region28: #{_lambda_.20} parent=0 // pred_region
    _
  $region29: #{_lambda_.20} parent=0 // pred_fallthru
    _

// kernel: _lambda_.26
$region0: #{_lambda_.26}
  #allocation0 [shape = 'u32[]', space=smem, size = 0x4, offset = 0x4, fixed_abs, tag = 'smem constant byte address 0x4 - core index']
  #allocation1 [shape = 'u32[144,128]{1,0:T(1,128)}', space=vmem, size = 0x12000, scoped, tag = 'internal scratch']
  %s0 = inlined_call_operand.vmem [shape: bf16[9,2,128], index: 0, kind: input, shape index: {}]
  %s1 = inlined_call_operand.vmem [shape: f32[9,1,128], index: 1, kind: input, shape index: {}]
  %s2 = inlined_call_operand.vmem [shape: f32[1,128], index: 2, kind: input, shape index: {}]
  %s3 = inlined_call_operand.vmem [shape: bf16[128,256], index: 3, kind: input, shape index: {}]
  %s4 = inlined_call_operand.vmem [shape: f32[1,256], index: 4, kind: input, shape index: {}]
  %s5 = inlined_call_operand.vmem [shape: bf16[2,256], index: 5, kind: output, shape index: {}]
  %s6 = sld [smem:[#allocation0]]
  $region30: #{_lambda_.26} parent=0
    _
  %s8 = ssub.s32 1, %s6
  %s9 = scalar_select 0, %s8, %s6
  // Predicated region
  $region2: #{_lambda_.26} parent=0 // pred_check
    _
  $region3: #{_lambda_.26} parent=0 // pred_check_branch
    %11 = sbr.rel (0) target = $region5
  $region4: #{_lambda_.26} parent=0 // pred_region
    _
  $region5: #{_lambda_.26} parent=0 // pred_fallthru
    _
  // Predicated region
  $region6: #{_lambda_.26} parent=0 // pred_check
    _
  $region7: #{_lambda_.26} parent=0 // pred_check_branch
    %13 = sbr.rel (0) target = $region9
  $region8: #{_lambda_.26} parent=0 // pred_region
    _
  $region9: #{_lambda_.26} parent=0 // pred_fallthru
    _
  // Predicated region
  $region10: #{_lambda_.26} parent=0 // pred_check
    _
  $region11: #{_lambda_.26} parent=0 // pred_check_branch
    %15 = sbr.rel (0) target = $region13
  $region12: #{_lambda_.26} parent=0 // pred_region
    _
  $region13: #{_lambda_.26} parent=0 // pred_fallthru
    _
  // Predicated region
  $region14: #{_lambda_.26} parent=0 // pred_check
    _
  $region15: #{_lambda_.26} parent=0 // pred_check_branch
    %17 = sbr.rel (0) target = $region17
  $region16: #{_lambda_.26} parent=0 // pred_region
    _
  $region17: #{_lambda_.26} parent=0 // pred_fallthru
    _
  // Predicated region
  $region18: #{_lambda_.26} parent=0 // pred_check
    _
  $region19: #{_lambda_.26} parent=0 // pred_check_branch
    %19 = sbr.rel (0) target = $region21
  $region20: #{_lambda_.26} parent=0 // pred_region
    _
  $region21: #{_lambda_.26} parent=0 // pred_fallthru
    _
  %v21 = vld [vmem:[%s0] sm:$0x1]
  %v22 = vunpack.c.l.bf16 %v21
  %v23 = vld [vmem:[%s1] sm:$0x1]
  %v25 = vlaneseq
  %v26 = vshrl.u32 %v25, 7
  %v27 = vsub.s32 0, %v26
  %v28 = vrot.slane %v23, %v27
  %v30 = vmul.f32 %v22, %v28
  %s31 = scalar_lea.vmem %s0, 1
  %v32 = vld [vmem:[%s31] sm:$0x1]
  %v33 = vunpack.c.l.bf16 %v32
  %s34 = scalar_lea.vmem %s1, 1
  %v35 = vld [vmem:[%s34] sm:$0x1]
  %v37 = vlaneseq
  %v38 = vshrl.u32 %v37, 7
  %v39 = vsub.s32 0, %v38
  %v40 = vrot.slane %v35, %v39
  %v42 = vmul.f32 %v33, %v40
  %v43 = vadd.f32 %v30, %v42
  %s44 = scalar_lea.vmem %s0, 2
  %v45 = vld [vmem:[%s44] sm:$0x1]
  %v46 = vunpack.c.l.bf16 %v45
  %s47 = scalar_lea.vmem %s1, 2
  %v48 = vld [vmem:[%s47] sm:$0x1]
  %v50 = vlaneseq
  %v51 = vshrl.u32 %v50, 7
  %v52 = vsub.s32 0, %v51
  %v53 = vrot.slane %v48, %v52
  %v55 = vmul.f32 %v46, %v53
  %v56 = vadd.f32 %v43, %v55
  %s57 = scalar_lea.vmem %s0, 3
  %v58 = vld [vmem:[%s57] sm:$0x1]
  %v59 = vunpack.c.l.bf16 %v58
  %s60 = scalar_lea.vmem %s1, 3
  %v61 = vld [vmem:[%s60] sm:$0x1]
  %v63 = vlaneseq
  %v64 = vshrl.u32 %v63, 7
  %v65 = vsub.s32 0, %v64
  %v66 = vrot.slane %v61, %v65
  %v68 = vmul.f32 %v59, %v66
  %v69 = vadd.f32 %v56, %v68
  %s70 = scalar_lea.vmem %s0, 4
  %v71 = vld [vmem:[%s70] sm:$0x1]
  %v72 = vunpack.c.l.bf16 %v71
  %s73 = scalar_lea.vmem %s1, 4
  %v74 = vld [vmem:[%s73] sm:$0x1]
  %v76 = vlaneseq
  %v77 = vshrl.u32 %v76, 7
  %v78 = vsub.s32 0, %v77
  %v79 = vrot.slane %v74, %v78
  %v81 = vmul.f32 %v72, %v79
  %v82 = vadd.f32 %v69, %v81
  %s83 = scalar_lea.vmem %s0, 5
  %v84 = vld [vmem:[%s83] sm:$0x1]
  %v85 = vunpack.c.l.bf16 %v84
  %s86 = scalar_lea.vmem %s1, 5
  %v87 = vld [vmem:[%s86] sm:$0x1]
  %v89 = vlaneseq
  %v90 = vshrl.u32 %v89, 7
  %v91 = vsub.s32 0, %v90
  %v92 = vrot.slane %v87, %v91
  %v94 = vmul.f32 %v85, %v92
  %v95 = vadd.f32 %v82, %v94
  %s96 = scalar_lea.vmem %s0, 6
  %v97 = vld [vmem:[%s96] sm:$0x1]
  %v98 = vunpack.c.l.bf16 %v97
  %s99 = scalar_lea.vmem %s1, 6
  %v100 = vld [vmem:[%s99] sm:$0x1]
  %v102 = vlaneseq
  %v103 = vshrl.u32 %v102, 7
  %v104 = vsub.s32 0, %v103
  %v105 = vrot.slane %v100, %v104
  %v107 = vmul.f32 %v98, %v105
  %v108 = vadd.f32 %v95, %v107
  %s109 = scalar_lea.vmem %s0, 7
  %v110 = vld [vmem:[%s109] sm:$0x1]
  %v111 = vunpack.c.l.bf16 %v110
  %s112 = scalar_lea.vmem %s1, 7
  %v113 = vld [vmem:[%s112] sm:$0x1]
  %v115 = vlaneseq
  %v116 = vshrl.u32 %v115, 7
  %v117 = vsub.s32 0, %v116
  %v118 = vrot.slane %v113, %v117
  %v120 = vmul.f32 %v111, %v118
  %v121 = vadd.f32 %v108, %v120
  %s122 = scalar_lea.vmem %s0, 8
  %v123 = vld [vmem:[%s122] sm:$0x1]
  %v124 = vunpack.c.l.bf16 %v123
  %s125 = scalar_lea.vmem %s1, 8
  %v126 = vld [vmem:[%s125] sm:$0x1]
  %v128 = vlaneseq
  %v129 = vshrl.u32 %v128, 7
  %v130 = vsub.s32 0, %v129
  %v131 = vrot.slane %v126, %v130
  %v133 = vmul.f32 %v124, %v131
  %v134 = vadd.f32 %v121, %v133
  %v135 = vld [vmem:[%s2] sm:$0x1]
  %v137 = vlaneseq
  %v138 = vshrl.u32 %v137, 7
  %v139 = vsub.s32 0, %v138
  %v140 = vrot.slane %v135, %v139
  %v142 = vadd.f32 %v134, %v140
  %v143 = vmax.f32 %v142, 0.0
  %v144 = vpack.c.bf16 %v143, %v143
  %v145 = vld [vmem:[%s3] sm:$0xff]
  %v146 = vld [vmem:[%s3 + $0x8] sm:$0xff]
  %v147 = vld [vmem:[%s3 + $0x10] sm:$0xff]
  %v148 = vld [vmem:[%s3 + $0x18] sm:$0xff]
  %v149 = vld [vmem:[%s3 + $0x20] sm:$0xff]
  %v150 = vld [vmem:[%s3 + $0x28] sm:$0xff]
  %v151 = vld [vmem:[%s3 + $0x30] sm:$0xff]
  %v152 = vld [vmem:[%s3 + $0x38] sm:$0xff]
  %v153 = vld [vmem:[%s3 + $0x40] sm:$0xff]
  %v154 = vld [vmem:[%s3 + $0x48] sm:$0xff]
  %v155 = vld [vmem:[%s3 + $0x50] sm:$0xff]
  %v156 = vld [vmem:[%s3 + $0x58] sm:$0xff]
  %v157 = vld [vmem:[%s3 + $0x60] sm:$0xff]
  %v158 = vld [vmem:[%s3 + $0x68] sm:$0xff]
  %v159 = vld [vmem:[%s3 + $0x70] sm:$0xff]
  %v160 = vld [vmem:[%s3 + $0x78] sm:$0xff]
  %v161 = vld [vmem:[%s4] sm:$0x3]
  %v163 = vlaneseq
  %v164 = vshrl.u32 %v163, 7
  %v165 = vsub.s32 0, %v164
  %v166 = vrot.slane %v161, %v165
  %v167 = vlaneseq
  %v168 = vshrl.u32 %v167, 7
  %v169 = vsub.s32 1, %v168
  %v170 = vrot.slane %v161, %v169
  %v189 = vunpack.c.l.b16 %v145
  %v190 = vunpack.c.h.b16 %v145
  %v191 = vunpack.c.l.b16 %v146
  %v192 = vunpack.c.h.b16 %v146
  %v193 = vunpack.c.l.b16 %v147
  %v194 = vunpack.c.h.b16 %v147
  %v195 = vunpack.c.l.b16 %v148
  %v196 = vunpack.c.h.b16 %v148
  %v197 = vunpack.c.l.b16 %v149
  %v198 = vunpack.c.h.b16 %v149
  %v199 = vunpack.c.l.b16 %v150
  %v200 = vunpack.c.h.b16 %v150
  %v201 = vunpack.c.l.b16 %v151
  %v202 = vunpack.c.h.b16 %v151
  %v203 = vunpack.c.l.b16 %v152
  %v204 = vunpack.c.h.b16 %v152
  %v205 = vunpack.c.l.b16 %v153
  %v206 = vunpack.c.h.b16 %v153
  %v207 = vunpack.c.l.b16 %v154
  %v208 = vunpack.c.h.b16 %v154
  %v209 = vunpack.c.l.b16 %v155
  %v210 = vunpack.c.h.b16 %v155
  %v211 = vunpack.c.l.b16 %v156
  %v212 = vunpack.c.h.b16 %v156
  %v213 = vunpack.c.l.b16 %v157
  %v214 = vunpack.c.h.b16 %v157
  %v215 = vunpack.c.l.b16 %v158
  %v216 = vunpack.c.h.b16 %v158
  %v217 = vunpack.c.l.b16 %v159
  %v218 = vunpack.c.h.b16 %v159
  %v219 = vunpack.c.l.b16 %v160
  %v220 = vunpack.c.h.b16 %v160
  %v221 = vpack.c.b16 %v191, %v189
  %v222 = vpack.c.b16 %v192, %v190
  %v223 = vpack.c.b16 %v195, %v193
  %v224 = vpack.c.b16 %v196, %v194
  %v225 = vpack.c.b16 %v199, %v197
  %v226 = vpack.c.b16 %v200, %v198
  %v227 = vpack.c.b16 %v203, %v201
  %v228 = vpack.c.b16 %v204, %v202
  %v229 = vpack.c.b16 %v207, %v205
  %v230 = vpack.c.b16 %v208, %v206
  %v231 = vpack.c.b16 %v211, %v209
  %v232 = vpack.c.b16 %v212, %v210
  %v233 = vpack.c.b16 %v215, %v213
  %v234 = vpack.c.b16 %v216, %v214
  %v235 = vpack.c.b16 %v219, %v217
  %v236 = vpack.c.b16 %v220, %v218
  %253 = vmatprep.subr.bf16.mxu0 %v236
  %254 = vmatpush1.bf16.msra.mxu0 %v235
  %255 = vmatprep.subr.bf16.mxu0 %v234
  %256 = vmatpush1.bf16.msra.mxu0 %v233
  %257 = vmatprep.subr.bf16.mxu0 %v232
  %258 = vmatpush1.bf16.msra.mxu0 %v231
  %259 = vmatprep.subr.bf16.mxu0 %v230
  %260 = vmatpush1.bf16.msra.mxu0 %v229
  %261 = vmatprep.subr.bf16.mxu0 %v228
  %262 = vmatpush1.bf16.msra.mxu0 %v227
  %263 = vmatprep.subr.bf16.mxu0 %v226
  %264 = vmatpush1.bf16.msra.mxu0 %v225
  %265 = vmatprep.subr.bf16.mxu0 %v224
  %266 = vmatpush1.bf16.msra.mxu0 %v223
  %267 = vmatprep.subr.bf16.mxu0 %v222
  %268 = vmatpush1.bf16.msra.mxu0 %v221
  %269 = vmatprep.subr.bf16.mxu0 0
  %270 = vmatpush2.bf16.msra.mxu0 0
  %271 = vmatprep.subr.bf16.mxu0 0
  %272 = vmatpush2.bf16.msra.mxu0 0
  %273 = vmatprep.subr.bf16.mxu0 0
  %274 = vmatpush2.bf16.msra.mxu0 0
  %275 = vmatprep.subr.bf16.mxu0 0
  %276 = vmatpush2.bf16.msra.mxu0 0
  %277 = vmatprep.subr.bf16.mxu0 0
  %278 = vmatpush2.bf16.msra.mxu0 0
  %279 = vmatprep.subr.bf16.mxu0 0
  %280 = vmatpush2.bf16.msra.mxu0 0
  %281 = vmatprep.subr.bf16.mxu0 0
  %282 = vmatpush2.bf16.msra.mxu0 0
  %283 = vmatprep.subr.bf16.mxu0 0
  %284 = vmatpush2.bf16.msra.mxu0 0
  %285 = vmatprep.mubr.bf16.mxu0 0
  %286 = vmatmul.mubr.bf16.gmra.mxu0 %v144
  %v287 = vpop.f32.mrf.mxu0
  %v288 = vadd.f32 %v166, %v287
  %v289 = vpop.f32.mrf.mxu0
  %v290 = vadd.f32 %v170, %v289
  %v291 = vpop.f32.mrf.mxu0
  %v292 = vpop.f32.mrf.mxu0
  %293 = vdwg.mxu0
  %v294 = vmax.f32 %v288, 0.0
  %v295 = vmax.f32 %v290, 0.0
  %v296 = vpack.c.bf16 %v294, %v294
  %v297 = vpack.c.bf16 %v295, %v295
  %v300 = vcombine.low %v296, %v297
  %v302 = vunpack.c.l.s4 1966171168
  %v303 = vunpack.c.0.s8 %v302
  %v304 = vlaneseq
  %v305 = vshrl.u32 %v304, 7
  %v306 = vsub.s32 %v303, %v305
  %v307 = vrot.slane %v300, %v306
  %v309 = vunpack.c.l.s4 1966171168
  %v310 = vunpack.c.0.s8 %v309
  %v311 = vlaneseq
  %v312 = vshrl.u32 %v311, 7
  %v313 = vsub.s32 %v310, %v312
  %v314 = vrot.slane %v307, %v313
  %316 = vst [vmem:[%s5] sm:$0x3] %v314
  // Predicated region
  $region22: #{_lambda_.26} parent=0 // pred_check
    _
  $region23: #{_lambda_.26} parent=0 // pred_check_branch
    %318 = sbr.rel (0) target = $region25
  $region24: #{_lambda_.26} parent=0 // pred_region
    _
  $region25: #{_lambda_.26} parent=0 // pred_fallthru
    _
  // Predicated region
  $region26: #{_lambda_.26} parent=0 // pred_check
    _
  $region27: #{_lambda_.26} parent=0 // pred_check_branch
    %320 = sbr.rel (0) target = $region29
  $region28: #{_lambda_.26} parent=0 // pred_region
    _
  $region29: #{_lambda_.26} parent=0 // pred_fallthru
    _

// kernel: _lambda_.27
$region0: #{_lambda_.27}
  #allocation0 [shape = 'u32[]', space=smem, size = 0x4, offset = 0x4, fixed_abs, tag = 'smem constant byte address 0x4 - core index']
  #allocation1 [shape = 'u32[144,128]{1,0:T(1,128)}', space=vmem, size = 0x12000, scoped, tag = 'internal scratch']
  %s0 = inlined_call_operand.vmem [shape: bf16[2,3,3,256], index: 0, kind: input, shape index: {}]
  %s1 = inlined_call_operand.vmem [shape: f32[9,1,1,1,256], index: 1, kind: input, shape index: {}]
  %s2 = inlined_call_operand.vmem [shape: f32[1,1,1,256], index: 2, kind: input, shape index: {}]
  %s3 = inlined_call_operand.vmem [shape: bf16[256,256], index: 3, kind: input, shape index: {}]
  %s4 = inlined_call_operand.vmem [shape: f32[1,256], index: 4, kind: input, shape index: {}]
  %s5 = inlined_call_operand.vmem [shape: f32[256,2], index: 5, kind: input, shape index: {}]
  %s6 = inlined_call_operand.vmem [shape: f32[1,2], index: 6, kind: input, shape index: {}]
  %s7 = inlined_call_operand.hbm [shape: f32[2,2], index: 7, kind: output, shape index: {}]
  %s8 = sld [smem:[#allocation0]]
  $region38: #{_lambda_.27} parent=0
    _
  %s10 = ssub.s32 1, %s8
  %s11 = scalar_select 0, %s10, %s8
  $region1: #{_lambda_.27} parent=0
    #allocation2 [shape = 'u8[1024]{0}', space=vmem, size = 0x400, scoped, tag = 'output window, operand 0, single buffered']
    #allocation3 [shape = 's32[1]{0}', space=sflag, size = 0x4, scoped, tag = 'scoped memory for _lambda_.27']
    %12 = vsyncpa [#allocation3], 0
    // Predicated region
    $region2: #{_lambda_.27} parent=1 // pred_check
      _
    $region3: #{_lambda_.27} parent=1 // pred_check_branch
      %14 = sbr.rel (0) target = $region5
    $region4: #{_lambda_.27} parent=1 // pred_region
      _
    $region5: #{_lambda_.27} parent=1 // pred_fallthru
      _
    // Predicated region
    $region6: #{_lambda_.27} parent=1 // pred_check
      _
    $region7: #{_lambda_.27} parent=1 // pred_check_branch
      %16 = sbr.rel (0) target = $region9
    $region8: #{_lambda_.27} parent=1 // pred_region
      _
    $region9: #{_lambda_.27} parent=1 // pred_fallthru
      _
    // Predicated region
    $region10: #{_lambda_.27} parent=1 // pred_check
      _
    $region11: #{_lambda_.27} parent=1 // pred_check_branch
      %18 = sbr.rel (0) target = $region13
    $region12: #{_lambda_.27} parent=1 // pred_region
      _
    $region13: #{_lambda_.27} parent=1 // pred_fallthru
      _
    // Predicated region
    $region14: #{_lambda_.27} parent=1 // pred_check
      _
    $region15: #{_lambda_.27} parent=1 // pred_check_branch
      %20 = sbr.rel (0) target = $region17
    $region16: #{_lambda_.27} parent=1 // pred_region
      _
    $region17: #{_lambda_.27} parent=1 // pred_fallthru
      _
    // Predicated region
    $region18: #{_lambda_.27} parent=1 // pred_check
      _
    $region19: #{_lambda_.27} parent=1 // pred_check_branch
      %22 = sbr.rel (0) target = $region21
    $region20: #{_lambda_.27} parent=1 // pred_region
      _
    $region21: #{_lambda_.27} parent=1 // pred_fallthru
      _
    // Predicated region
    $region22: #{_lambda_.27} parent=1 // pred_check
      _
    $region23: #{_lambda_.27} parent=1 // pred_check_branch
      %24 = sbr.rel (0) target = $region25
    $region24: #{_lambda_.27} parent=1 // pred_region
      _
    $region25: #{_lambda_.27} parent=1 // pred_fallthru
      _
    // Predicated region
    $region26: #{_lambda_.27} parent=1 // pred_check
      _
    $region27: #{_lambda_.27} parent=1 // pred_check_branch
      %26 = sbr.rel (0) target = $region29
    $region28: #{_lambda_.27} parent=1 // pred_region
      _
    $region29: #{_lambda_.27} parent=1 // pred_fallthru
      _
    %v27 = vld [vmem:[%s1] sm:$0x3]
    %v28 = vld [vmem:[%s1 + $0x2] sm:$0x3]
    %v29 = vld [vmem:[%s1 + $0x4] sm:$0x3]
    %v30 = vld [vmem:[%s1 + $0x6] sm:$0x3]
    %v31 = vld [vmem:[%s1 + $0x8] sm:$0x3]
    %v32 = vld [vmem:[%s1 + $0xa] sm:$0x3]
    %v33 = vld [vmem:[%s1 + $0xc] sm:$0x3]
    %v34 = vld [vmem:[%s1 + $0xe] sm:$0x3]
    %v35 = vld [vmem:[%s1 + $0x10] sm:$0x3]
    %v36 = vld [vmem:[%s0] sm:$0x5]
    %v37 = vld [vmem:[%s0 + $0xc] sm:$0x5]
    %v38 = vunpack.c.l.bf16 %v36
    %v39 = vunpack.c.l.bf16 %v37
    %v42 = vunpack.c.l.s4 286326784
    %v43 = vunpack.c.0.s8 %v42
    %v44 = vlaneseq
    %v45 = vshrl.u32 %v44, 7
    %v46 = vsub.s32 %v43, %v45
    %v47 = vrot.slane %v27, %v46
    %v49 = vmul.f32 %v38, %v47
    %v50 = vmul.f32 %v39, %v47
    %v53 = vunpack.c.l.s4 286326784
    %v54 = vunpack.c.0.s8 %v53
    %v55 = vlaneseq
    %v56 = vshrl.u32 %v55, 7
    %v57 = vsub.s32 %v54, %v56
    %v58 = vrot.slane %v28, %v57
    %v60 = vmul.f32 %v38, %v58
    %v61 = vmul.f32 %v39, %v58
    %v64 = vrot.slane %v60, 5
    %v65 = vrot.slane %v64, 4
    %v66 = vrot.slane %v61, 5
    %v67 = vrot.slane %v66, 4
    %v70 = vadd.f32 %v49, %v65
    %v71 = vadd.f32 %v50, %v67
    %v72 = vld [vmem:[%s0] sm:$0xa]
    %v73 = vld [vmem:[%s0 + $0xc] sm:$0xa]
    %v74 = vunpack.c.l.bf16 %v72
    %v75 = vunpack.c.l.bf16 %v73
    %v78 = vunpack.c.l.s4 286326784
    %v79 = vunpack.c.0.s8 %v78
    %v80 = vlaneseq
    %v81 = vshrl.u32 %v80, 7
    %v82 = vsub.s32 %v79, %v81
    %v83 = vrot.slane %v29, %v82
    %v85 = vmul.f32 %v74, %v83
    %v86 = vmul.f32 %v75, %v83
    %v89 = vrot.slane %v85, 6
    %v90 = vrot.slane %v89, 4
    %v91 = vrot.slane %v86, 6
    %v92 = vrot.slane %v91, 4
    %v95 = vadd.f32 %v70, %v90
    %v96 = vadd.f32 %v71, %v92
    %s97 = scalar_lea.vmem %s0, 4
    %v98 = vld [vmem:[%s97] sm:$0x5]
    %v99 = vld [vmem:[%s97 + $0xc] sm:$0x5]
    %v100 = vunpack.c.l.bf16 %v98
    %v101 = vunpack.c.l.bf16 %v99
    %v104 = vunpack.c.l.s4 286326784
    %v105 = vunpack.c.0.s8 %v104
    %v106 = vlaneseq
    %v107 = vshrl.u32 %v106, 7
    %v108 = vsub.s32 %v105, %v107
    %v109 = vrot.slane %v30, %v108
    %v111 = vmul.f32 %v100, %v109
    %v112 = vmul.f32 %v101, %v109
    %v113 = vadd.f32 %v95, %v111
    %v114 = vadd.f32 %v96, %v112
    %v117 = vunpack.c.l.s4 286326784
    %v118 = vunpack.c.0.s8 %v117
    %v119 = vlaneseq
    %v120 = vshrl.u32 %v119, 7
    %v121 = vsub.s32 %v118, %v120
    %v122 = vrot.slane %v31, %v121
    %v124 = vmul.f32 %v100, %v122
    %v125 = vmul.f32 %v101, %v122
    %v128 = vrot.slane %v124, 5
    %v129 = vrot.slane %v128, 4
    %v130 = vrot.slane %v125, 5
    %v131 = vrot.slane %v130, 4
    %v134 = vadd.f32 %v113, %v129
    %v135 = vadd.f32 %v114, %v131
    %v136 = vld [vmem:[%s97] sm:$0xa]
    %v137 = vld [vmem:[%s97 + $0xc] sm:$0xa]
    %v138 = vunpack.c.l.bf16 %v136
    %v139 = vunpack.c.l.bf16 %v137
    %v142 = vunpack.c.l.s4 286326784
    %v143 = vunpack.c.0.s8 %v142
    %v144 = vlaneseq
    %v145 = vshrl.u32 %v144, 7
    %v146 = vsub.s32 %v143, %v145
    %v147 = vrot.slane %v32, %v146
    %v149 = vmul.f32 %v138, %v147
    %v150 = vmul.f32 %v139, %v147
    %v153 = vrot.slane %v149, 6
    %v154 = vrot.slane %v153, 4
    %v155 = vrot.slane %v150, 6
    %v156 = vrot.slane %v155, 4
    %v159 = vadd.f32 %v134, %v154
    %v160 = vadd.f32 %v135, %v156
    %s161 = scalar_lea.vmem %s0, 8
    %v162 = vld [vmem:[%s161] sm:$0x5]
    %v163 = vld [vmem:[%s161 + $0xc] sm:$0x5]
    %v164 = vunpack.c.l.bf16 %v162
    %v165 = vunpack.c.l.bf16 %v163
    %v168 = vunpack.c.l.s4 286326784
    %v169 = vunpack.c.0.s8 %v168
    %v170 = vlaneseq
    %v171 = vshrl.u32 %v170, 7
    %v172 = vsub.s32 %v169, %v171
    %v173 = vrot.slane %v33, %v172
    %v175 = vmul.f32 %v164, %v173
    %v176 = vmul.f32 %v165, %v173
    %v177 = vadd.f32 %v159, %v175
    %v178 = vadd.f32 %v160, %v176
    %v181 = vunpack.c.l.s4 286326784
    %v182 = vunpack.c.0.s8 %v181
    %v183 = vlaneseq
    %v184 = vshrl.u32 %v183, 7
    %v185 = vsub.s32 %v182, %v184
    %v186 = vrot.slane %v34, %v185
    %v188 = vmul.f32 %v164, %v186
    %v189 = vmul.f32 %v165, %v186
    %v192 = vrot.slane %v188, 5
    %v193 = vrot.slane %v192, 4
    %v194 = vrot.slane %v189, 5
    %v195 = vrot.slane %v194, 4
    %v198 = vadd.f32 %v177, %v193
    %v199 = vadd.f32 %v178, %v195
    %v200 = vld [vmem:[%s161] sm:$0xa]
    %v201 = vld [vmem:[%s161 + $0xc] sm:$0xa]
    %v202 = vunpack.c.l.bf16 %v200
    %v203 = vunpack.c.l.bf16 %v201
    %v206 = vunpack.c.l.s4 286326784
    %v207 = vunpack.c.0.s8 %v206
    %v208 = vlaneseq
    %v209 = vshrl.u32 %v208, 7
    %v210 = vsub.s32 %v207, %v209
    %v211 = vrot.slane %v35, %v210
    %v213 = vmul.f32 %v202, %v211
    %v214 = vmul.f32 %v203, %v211
    %v217 = vrot.slane %v213, 6
    %v218 = vrot.slane %v217, 4
    %v219 = vrot.slane %v214, 6
    %v220 = vrot.slane %v219, 4
    %v223 = vadd.f32 %v198, %v218
    %v224 = vadd.f32 %v199, %v220
    %v225 = vld [vmem:[%s2] sm:$0x3]
    %v228 = vunpack.c.l.s4 286326784
    %v229 = vunpack.c.0.s8 %v228
    %v230 = vlaneseq
    %v231 = vshrl.u32 %v230, 7
    %v232 = vsub.s32 %v229, %v231
    %v233 = vrot.slane %v225, %v232
    %v235 = vadd.f32 %v223, %v233
    %v236 = vadd.f32 %v224, %v233
    %v237 = vmax.f32 %v235, 0.0
    %v238 = vmax.f32 %v236, 0.0
    %v241 = vlaneseq
    %v242 = vshrl.u32 %v241, 7
    %v243 = vsub.s32 0, %v242
    %v244 = vrot.slane %v237, %v243
    %v245 = vlaneseq
    %v246 = vshrl.u32 %v245, 7
    %v247 = vsub.s32 4, %v246
    %v248 = vrot.slane %v237, %v247
    %v249 = vlaneseq
    %v250 = vshrl.u32 %v249, 7
    %v251 = vsub.s32 0, %v250
    %v252 = vrot.slane %v238, %v251
    %v253 = vlaneseq
    %v254 = vshrl.u32 %v253, 7
    %v255 = vsub.s32 4, %v254
    %v256 = vrot.slane %v238, %v255
    %v261 = vpack.c.bf16 %v244, %v244
    %v262 = vpack.c.bf16 %v248, %v248
    %v263 = vpack.c.bf16 %v252, %v252
    %v264 = vpack.c.bf16 %v256, %v256
    %v265 = vld [vmem:[%s3] sm:$0xff]
    %v266 = vld [vmem:[%s3 + $0x8] sm:$0xff]
    %v267 = vld [vmem:[%s3 + $0x10] sm:$0xff]
    %v268 = vld [vmem:[%s3 + $0x18] sm:$0xff]
    %v269 = vld [vmem:[%s3 + $0x20] sm:$0xff]
    %v270 = vld [vmem:[%s3 + $0x28] sm:$0xff]
    %v271 = vld [vmem:[%s3 + $0x30] sm:$0xff]
    %v272 = vld [vmem:[%s3 + $0x38] sm:$0xff]
    %v273 = vld [vmem:[%s3 + $0x40] sm:$0xff]
    %v274 = vld [vmem:[%s3 + $0x48] sm:$0xff]
    %v275 = vld [vmem:[%s3 + $0x50] sm:$0xff]
    %v276 = vld [vmem:[%s3 + $0x58] sm:$0xff]
    %v277 = vld [vmem:[%s3 + $0x60] sm:$0xff]
    %v278 = vld [vmem:[%s3 + $0x68] sm:$0xff]
    %v279 = vld [vmem:[%s3 + $0x70] sm:$0xff]
    %v280 = vld [vmem:[%s3 + $0x78] sm:$0xff]
    %v281 = vld [vmem:[%s3 + $0x80] sm:$0xff]
    %v282 = vld [vmem:[%s3 + $0x88] sm:$0xff]
    %v283 = vld [vmem:[%s3 + $0x90] sm:$0xff]
    %v284 = vld [vmem:[%s3 + $0x98] sm:$0xff]
    %v285 = vld [vmem:[%s3 + $0xa0] sm:$0xff]
    %v286 = vld [vmem:[%s3 + $0xa8] sm:$0xff]
    %v287 = vld [vmem:[%s3 + $0xb0] sm:$0xff]
    %v288 = vld [vmem:[%s3 + $0xb8] sm:$0xff]
    %v289 = vld [vmem:[%s3 + $0xc0] sm:$0xff]
    %v290 = vld [vmem:[%s3 + $0xc8] sm:$0xff]
    %v291 = vld [vmem:[%s3 + $0xd0] sm:$0xff]
    %v292 = vld [vmem:[%s3 + $0xd8] sm:$0xff]
    %v293 = vld [vmem:[%s3 + $0xe0] sm:$0xff]
    %v294 = vld [vmem:[%s3 + $0xe8] sm:$0xff]
    %v295 = vld [vmem:[%s3 + $0xf0] sm:$0xff]
    %v296 = vld [vmem:[%s3 + $0xf8] sm:$0xff]
    %v297 = vld [vmem:[%s4] sm:$0x3]
    %v299 = vlaneseq
    %v300 = vshrl.u32 %v299, 7
    %v301 = vsub.s32 0, %v300
    %v302 = vrot.slane %v297, %v301
    %v303 = vlaneseq
    %v304 = vshrl.u32 %v303, 7
    %v305 = vsub.s32 1, %v304
    %v306 = vrot.slane %v297, %v305
    %v313 = vunpack.c.l.b16 %v261
    %v314 = vunpack.c.l.b16 %v262
    %v315 = vunpack.c.l.b16 %v263
    %v316 = vunpack.c.l.b16 %v264
    %v317 = vrot.slane %v315, 7
    %vm318 = vcmask 1041409
    %v319 = vsel %vm318, %v317, %v313
    %v320 = vrot.slane %v316, 7
    %v321 = vsel %vm318, %v320, %v314
    %v322 = vpack.c.b16 %v319, %v319
    %v323 = vpack.c.b16 %v321, %v321
    %v358 = vunpack.c.l.b16 %v265
    %v359 = vunpack.c.h.b16 %v265
    %v360 = vunpack.c.l.b16 %v266
    %v361 = vunpack.c.h.b16 %v266
    %v362 = vunpack.c.l.b16 %v267
    %v363 = vunpack.c.h.b16 %v267
    %v364 = vunpack.c.l.b16 %v268
    %v365 = vunpack.c.h.b16 %v268
    %v366 = vunpack.c.l.b16 %v269
    %v367 = vunpack.c.h.b16 %v269
    %v368 = vunpack.c.l.b16 %v270
    %v369 = vunpack.c.h.b16 %v270
    %v370 = vunpack.c.l.b16 %v271
    %v371 = vunpack.c.h.b16 %v271
    %v372 = vunpack.c.l.b16 %v272
    %v373 = vunpack.c.h.b16 %v272
    %v374 = vunpack.c.l.b16 %v273
    %v375 = vunpack.c.h.b16 %v273
    %v376 = vunpack.c.l.b16 %v274
    %v377 = vunpack.c.h.b16 %v274
    %v378 = vunpack.c.l.b16 %v275
    %v379 = vunpack.c.h.b16 %v275
    %v380 = vunpack.c.l.b16 %v276
    %v381 = vunpack.c.h.b16 %v276
    %v382 = vunpack.c.l.b16 %v277
    %v383 = vunpack.c.h.b16 %v277
    %v384 = vunpack.c.l.b16 %v278
    %v385 = vunpack.c.h.b16 %v278
    %v386 = vunpack.c.l.b16 %v279
    %v387 = vunpack.c.h.b16 %v279
    %v388 = vunpack.c.l.b16 %v280
    %v389 = vunpack.c.h.b16 %v280
    %v390 = vunpack.c.l.b16 %v281
    %v391 = vunpack.c.h.b16 %v281
    %v392 = vunpack.c.l.b16 %v282
    %v393 = vunpack.c.h.b16 %v282
    %v394 = vunpack.c.l.b16 %v283
    %v395 = vunpack.c.h.b16 %v283
    %v396 = vunpack.c.l.b16 %v284
    %v397 = vunpack.c.h.b16 %v284
    %v398 = vunpack.c.l.b16 %v285
    %v399 = vunpack.c.h.b16 %v285
    %v400 = vunpack.c.l.b16 %v286
    %v401 = vunpack.c.h.b16 %v286
    %v402 = vunpack.c.l.b16 %v287
    %v403 = vunpack.c.h.b16 %v287
    %v404 = vunpack.c.l.b16 %v288
    %v405 = vunpack.c.h.b16 %v288
    %v406 = vunpack.c.l.b16 %v289
    %v407 = vunpack.c.h.b16 %v289
    %v408 = vunpack.c.l.b16 %v290
    %v409 = vunpack.c.h.b16 %v290
    %v410 = vunpack.c.l.b16 %v291
    %v411 = vunpack.c.h.b16 %v291
    %v412 = vunpack.c.l.b16 %v292
    %v413 = vunpack.c.h.b16 %v292
    %v414 = vunpack.c.l.b16 %v293
    %v415 = vunpack.c.h.b16 %v293
    %v416 = vunpack.c.l.b16 %v294
    %v417 = vunpack.c.h.b16 %v294
    %v418 = vunpack.c.l.b16 %v295
    %v419 = vunpack.c.h.b16 %v295
    %v420 = vunpack.c.l.b16 %v296
    %v421 = vunpack.c.h.b16 %v296
    %v422 = vpack.c.b16 %v360, %v358
    %v423 = vpack.c.b16 %v361, %v359
    %v424 = vpack.c.b16 %v364, %v362
    %v425 = vpack.c.b16 %v365, %v363
    %v426 = vpack.c.b16 %v368, %v366
    %v427 = vpack.c.b16 %v369, %v367
    %v428 = vpack.c.b16 %v372, %v370
    %v429 = vpack.c.b16 %v373, %v371
    %v430 = vpack.c.b16 %v376, %v374
    %v431 = vpack.c.b16 %v377, %v375
    %v432 = vpack.c.b16 %v380, %v378
    %v433 = vpack.c.b16 %v381, %v379
    %v434 = vpack.c.b16 %v384, %v382
    %v435 = vpack.c.b16 %v385, %v383
    %v436 = vpack.c.b16 %v388, %v386
    %v437 = vpack.c.b16 %v389, %v387
    %v438 = vpack.c.b16 %v392, %v390
    %v439 = vpack.c.b16 %v393, %v391
    %v440 = vpack.c.b16 %v396, %v394
    %v441 = vpack.c.b16 %v397, %v395
    %v442 = vpack.c.b16 %v400, %v398
    %v443 = vpack.c.b16 %v401, %v399
    %v444 = vpack.c.b16 %v404, %v402
    %v445 = vpack.c.b16 %v405, %v403
    %v446 = vpack.c.b16 %v408, %v406
    %v447 = vpack.c.b16 %v409, %v407
    %v448 = vpack.c.b16 %v412, %v410
    %v449 = vpack.c.b16 %v413, %v411
    %v450 = vpack.c.b16 %v416, %v414
    %v451 = vpack.c.b16 %v417, %v415
    %v452 = vpack.c.b16 %v420, %v418
    %v453 = vpack.c.b16 %v421, %v419
    %486 = vmatprep.subr.bf16.mxu0 %v437
    %487 = vmatpush1.bf16.msra.mxu0 %v436
    %488 = vmatprep.subr.bf16.mxu0 %v435
    %489 = vmatpush1.bf16.msra.mxu0 %v434
    %490 = vmatprep.subr.bf16.mxu0 %v433
    %491 = vmatpush1.bf16.msra.mxu0 %v432
    %492 = vmatprep.subr.bf16.mxu0 %v431
    %493 = vmatpush1.bf16.msra.mxu0 %v430
    %494 = vmatprep.subr.bf16.mxu0 %v429
    %495 = vmatpush1.bf16.msra.mxu0 %v428
    %496 = vmatprep.subr.bf16.mxu0 %v427
    %497 = vmatpush1.bf16.msra.mxu0 %v426
    %498 = vmatprep.subr.bf16.mxu0 %v425
    %499 = vmatpush1.bf16.msra.mxu0 %v424
    %500 = vmatprep.subr.bf16.mxu0 %v423
    %501 = vmatpush1.bf16.msra.mxu0 %v422
    %502 = vmatprep.subr.bf16.mxu0 %v453
    %503 = vmatpush2.bf16.msra.mxu0 %v452
    %504 = vmatprep.subr.bf16.mxu0 %v451
    %505 = vmatpush2.bf16.msra.mxu0 %v450
    %506 = vmatprep.subr.bf16.mxu0 %v449
    %507 = vmatpush2.bf16.msra.mxu0 %v448
    %508 = vmatprep.subr.bf16.mxu0 %v447
    %509 = vmatpush2.bf16.msra.mxu0 %v446
    %510 = vmatprep.subr.bf16.mxu0 %v445
    %511 = vmatpush2.bf16.msra.mxu0 %v444
    %512 = vmatprep.subr.bf16.mxu0 %v443
    %513 = vmatpush2.bf16.msra.mxu0 %v442
    %514 = vmatprep.subr.bf16.mxu0 %v441
    %515 = vmatpush2.bf16.msra.mxu0 %v440
    %516 = vmatprep.subr.bf16.mxu0 %v439
    %517 = vmatpush2.bf16.msra.mxu0 %v438
    %518 = vmatprep.mubr.bf16.mxu0 %v323
    %519 = vmatmul.mubr.bf16.gmra.mxu0 %v322
    %v520 = vpop.f32.mrf.mxu0
    %v521 = vadd.f32 %v302, %v520
    %v522 = vpop.f32.mrf.mxu0
    %v523 = vadd.f32 %v306, %v522
    %v524 = vpop.f32.mrf.mxu0
    %v525 = vpop.f32.mrf.mxu0
    %526 = vdwg.mxu0
    %v527 = vmax.f32 %v521, 0.0
    %v528 = vmax.f32 %v523, 0.0
    %v529 = vld [vmem:[%s5] sm:$0xff]
    %v530 = vld [vmem:[%s5 + $0x8] sm:$0xff]
    %v531 = vld [vmem:[%s5 + $0x10] sm:$0xff]
    %v532 = vld [vmem:[%s5 + $0x18] sm:$0xff]
    %v533 = vld [vmem:[%s5 + $0x20] sm:$0xff]
    %v534 = vld [vmem:[%s5 + $0x28] sm:$0xff]
    %v535 = vld [vmem:[%s5 + $0x30] sm:$0xff]
    %v536 = vld [vmem:[%s5 + $0x38] sm:$0xff]
    %v537 = vld [vmem:[%s5 + $0x40] sm:$0xff]
    %v538 = vld [vmem:[%s5 + $0x48] sm:$0xff]
    %v539 = vld [vmem:[%s5 + $0x50] sm:$0xff]
    %v540 = vld [vmem:[%s5 + $0x58] sm:$0xff]
    %v541 = vld [vmem:[%s5 + $0x60] sm:$0xff]
    %v542 = vld [vmem:[%s5 + $0x68] sm:$0xff]
    %v543 = vld [vmem:[%s5 + $0x70] sm:$0xff]
    %v544 = vld [vmem:[%s5 + $0x78] sm:$0xff]
    %v545 = vld [vmem:[%s5 + $0x80] sm:$0xff]
    %v546 = vld [vmem:[%s5 + $0x88] sm:$0xff]
    %v547 = vld [vmem:[%s5 + $0x90] sm:$0xff]
    %v548 = vld [vmem:[%s5 + $0x98] sm:$0xff]
    %v549 = vld [vmem:[%s5 + $0xa0] sm:$0xff]
    %v550 = vld [vmem:[%s5 + $0xa8] sm:$0xff]
    %v551 = vld [vmem:[%s5 + $0xb0] sm:$0xff]
    %v552 = vld [vmem:[%s5 + $0xb8] sm:$0xff]
    %v553 = vld [vmem:[%s5 + $0xc0] sm:$0xff]
    %v554 = vld [vmem:[%s5 + $0xc8] sm:$0xff]
    %v555 = vld [vmem:[%s5 + $0xd0] sm:$0xff]
    %v556 = vld [vmem:[%s5 + $0xd8] sm:$0xff]
    %v557 = vld [vmem:[%s5 + $0xe0] sm:$0xff]
    %v558 = vld [vmem:[%s5 + $0xe8] sm:$0xff]
    %v559 = vld [vmem:[%s5 + $0xf0] sm:$0xff]
    %v560 = vld [vmem:[%s5 + $0xf8] sm:$0xff]
    %v561 = vld [vmem:[%s6] sm:$0x1]
    %v563 = vlaneseq
    %v564 = vshrl.u32 %v563, 7
    %v565 = vsub.s32 0, %v564
    %v566 = vrot.slane %v561, %v565
    %568 = vmatprep.subr.mxu0 0.0
    %569 = vmatpush1.msra.mxu0 %v544
    %570 = vmatprep.subr.mxu0 0.0
    %571 = vmatpush1.msra.mxu0 %v543
    %572 = vmatprep.subr.mxu0 0.0
    %573 = vmatpush1.msra.mxu0 %v542
    %574 = vmatprep.subr.mxu0 0.0
    %575 = vmatpush1.msra.mxu0 %v541
    %576 = vmatprep.subr.mxu0 0.0
    %577 = vmatpush1.msra.mxu0 %v540
    %578 = vmatprep.subr.mxu0 0.0
    %579 = vmatpush1.msra.mxu0 %v539
    %580 = vmatprep.subr.mxu0 0.0
    %581 = vmatpush1.msra.mxu0 %v538
    %582 = vmatprep.subr.mxu0 0.0
    %583 = vmatpush1.msra.mxu0 %v537
    %584 = vmatprep.subr.mxu0 0.0
    %585 = vmatpush1.msra.mxu0 %v536
    %586 = vmatprep.subr.mxu0 0.0
    %587 = vmatpush1.msra.mxu0 %v535
    %588 = vmatprep.subr.mxu0 0.0
    %589 = vmatpush1.msra.mxu0 %v534
    %590 = vmatprep.subr.mxu0 0.0
    %591 = vmatpush1.msra.mxu0 %v533
    %592 = vmatprep.subr.mxu0 0.0
    %593 = vmatpush1.msra.mxu0 %v532
    %594 = vmatprep.subr.mxu0 0.0
    %595 = vmatpush1.msra.mxu0 %v531
    %596 = vmatprep.subr.mxu0 0.0
    %597 = vmatpush1.msra.mxu0 %v530
    %598 = vmatprep.subr.mxu0 0.0
    %599 = vmatpush1.msra.mxu0 %v529
    %600 = vmatprep.subr.mxu0 0.0
    %601 = vmatpush2.msra.mxu0 %v560
    %602 = vmatprep.subr.mxu0 0.0
    %603 = vmatpush2.msra.mxu0 %v559
    %604 = vmatprep.subr.mxu0 0.0
    %605 = vmatpush2.msra.mxu0 %v558
    %606 = vmatprep.subr.mxu0 0.0
    %607 = vmatpush2.msra.mxu0 %v557
    %608 = vmatprep.subr.mxu0 0.0
    %609 = vmatpush2.msra.mxu0 %v556
    %610 = vmatprep.subr.mxu0 0.0
    %611 = vmatpush2.msra.mxu0 %v555
    %612 = vmatprep.subr.mxu0 0.0
    %613 = vmatpush2.msra.mxu0 %v554
    %614 = vmatprep.subr.mxu0 0.0
    %615 = vmatpush2.msra.mxu0 %v553
    %616 = vmatprep.subr.mxu0 0.0
    %617 = vmatpush2.msra.mxu0 %v552
    %618 = vmatprep.subr.mxu0 0.0
    %619 = vmatpush2.msra.mxu0 %v551
    %620 = vmatprep.subr.mxu0 0.0
    %621 = vmatpush2.msra.mxu0 %v550
    %622 = vmatprep.subr.mxu0 0.0
    %623 = vmatpush2.msra.mxu0 %v549
    %624 = vmatprep.subr.mxu0 0.0
    %625 = vmatpush2.msra.mxu0 %v548
    %626 = vmatprep.subr.mxu0 0.0
    %627 = vmatpush2.msra.mxu0 %v547
    %628 = vmatprep.subr.mxu0 0.0
    %629 = vmatpush2.msra.mxu0 %v546
    %630 = vmatprep.subr.mxu0 0.0
    %631 = vmatpush2.msra.mxu0 %v545
    %632 = vmatprep.mubr.f32.mxu0 %v528
    %633 = vmatmul.mubr.f32.gmra.mxu0 %v527
    %v634 = vpop.f32.mrf.mxu0
    %v635 = vadd.f32 %v566, %v634
    %v636 = vpop.f32.mrf.mxu0
    %637 = vdwg.mxu0
    %vm638 = vcmask 9216
    %v639 = vsel %vm638, %v635, -inf
    %640 = vmax.xlane.f32.xlu0 %v639
    %v641 = vpop.xlane.xlu0 %640
    %v642 = vsub.f32 %v635, %v641
    %v643 = vmul.f32 %v642, 1.442695
    %v644 = vpow.pop %v643
    %v645 = vsel %vm638, %v644, 0.0
    %646 = vadd.xlane.f32.xlu0 %v645
    %v647 = vpop.xlane.xlu0 %646
    %v648 = vrcp.pop %v647
    %v649 = vmul.f32 %v644, %v648
    %650 = vst.msk [vmem:[#allocation2] sm:$0x3] %vm638, %v649
    // Predicated region
    $region30: #{_lambda_.27} parent=1 // pred_check
      _
    $region31: #{_lambda_.27} parent=1 // pred_check_branch
      %652 = sbr.rel (0) target = $region33
    $region32: #{_lambda_.27} parent=1 // pred_region
      %s654 = ssub.s32 32, 32
      %655 = vsyncadd [#allocation3], %s654
      %s657 = sshll.u32 [#allocation2], 4
      %s658 = int_to_ptr.vmem [resolvable:$true] %s657
      %660 = dma.vmem_to_hbm [thread:$0]  %s658, 32, %s7, [#allocation3]
    $region33: #{_lambda_.27} parent=1 // pred_fallthru
      _
    // Predicated region
    $region34: #{_lambda_.27} parent=1 // pred_check
      _
    $region35: #{_lambda_.27} parent=1 // pred_check_branch
      %662 = sbr.rel (0) target = $region37
    $region36: #{_lambda_.27} parent=1 // pred_region
      %663 = dma.done [#allocation3], 32
    $region37: #{_lambda_.27} parent=1 // pred_fallthru
      _
    %664 = vsyncpa [#allocation3], 1

</llo_original>
